<compile_context>
chip_gen: v5e
topology: v5e:2x2
jax: 0.10.0
libtpu: 0.0.40
codegen_flags: <defaults>
</compile_context>

<pallas_src>
import jax
import jax.numpy as jnp
from jax.experimental import pallas as pl
from jax.experimental.pallas import tpu as pltpu

CMID = 32   # conv1 / conv2 output channels
COUT = 64   # conv3 output channels
KH = KW = 3


def _hwio(w_oihw):
    """OIHW -> (kh, kw, ci, co)."""
    return jnp.transpose(w_oihw, (2, 3, 1, 0))


def _build_stage1_weights(w1, w2, W, C, W1, ZW):
    """Toeplitz-over-width weights for the fused conv1|conv2 stage.

    Rows   : kh*(W*C) + w_in*C + c      (matches the kh-expanded input rows)
    Columns: [0:W1*CMID]        conv1  (w_out*CMID + co)
             [W1*CMID:ZW]       zero pad (to a 128-lane multiple)
             [ZW:ZW+W1*CMID]    conv2, then zero pad to 2*ZW
    """
    w1h, w2h = _hwio(w1), _hwio(w2)
    eye = jnp.eye(W1, dtype=jnp.float32)
    kh_blocks = []
    for kh in range(KH):
        band1 = jnp.zeros((W * C, W1 * CMID), jnp.float32)
        band2 = jnp.zeros((W * C, W1 * CMID), jnp.float32)
        for kw in range(KW):
            pad_rows = ((kw * C, W * C - kw * C - W1 * C), (0, 0))
            band1 = band1 + jnp.pad(jnp.kron(eye, w1h[kh, kw]), pad_rows)
            band2 = band2 + jnp.pad(jnp.kron(eye, w2h[kh, kw]), pad_rows)
        col_pad = ((0, 0), (0, ZW - W1 * CMID))
        kh_blocks.append(jnp.concatenate(
            [jnp.pad(band1, col_pad), jnp.pad(band2, col_pad)], axis=1))
    return jnp.concatenate(kh_blocks, axis=0)            # (KH*W*C, 2*ZW)


def _build_conv3_weights(w3, W1, W2, Wo, ZW):
    """Toeplitz-over-width weights for conv3, parity-major output columns.

    Rows   : w_in*CMID + c   (matches the z layout from stage 1), padded to ZW.
    Columns: p*Wo*COUT + w2*COUT + co  with  w_out = 2*w2 + p
             -> W-direction maxpool == max(acc[:, :Wo*COUT], acc[:, Wo*COUT:]).
    """
    w3h = _hwio(w3)                                      # (3, 3, CMID, COUT)
    w_out = jnp.arange(W2)
    cols = (w_out % 2) * Wo + w_out // 2
    t3 = []
    for kh in range(KH):
        acc = jnp.zeros((W1 * CMID, W2 * COUT), jnp.float32)
        for kw in range(KW):
            sel = jnp.zeros((W1, W2), jnp.float32).at[w_out + kw, cols].set(1.0)
            acc = acc + jnp.kron(sel, w3h[kh, kw])
        t3.append(jnp.pad(acc, ((0, ZW - W1 * CMID), (0, 0))))
    return jnp.stack(t3, axis=0)                         # (KH, ZW, W2*COUT)


def make_net_kernel(NB, Hp, K1, ZW, PoolW):
    """Per-grid-step kernel; all shapes are baked-in Python constants."""
    R = NB * Hp                                          # rows per step = (image, h)

    def kernel(x3_ref, t1_ref, bf_ref, t3_ref, b3_ref, out_ref):
        # ---- fused conv1|conv2: one bf16 MXU matmul for the whole NB-image block
        X = x3_ref[...].reshape(R, K1)                                    # bf16
        s = jnp.dot(X, t1_ref[...], preferred_element_type=jnp.float32)
        s = s + bf_ref[...]                                               # (R, 2*ZW) f32

        # ---- elementwise: the conv1 / conv2 halves are vreg-aligned 512-lane slabs
        y = jnp.maximum(s[:, :ZW], 0.0)                   # relu(conv1)
        z = jnp.sqrt(jnp.maximum(s[:, ZW:] + y, 0.0))     # sqrt(relu(conv2 + relu(conv1)))
        z = z.astype(jnp.bfloat16)                        # (R, ZW)

        # ---- conv3: 3 kh taps, each a single bf16 matmul; the kh shift is a
        #      1/2-row sublane slice of a zero-padded copy (no lane concat).
        zp = jnp.concatenate([z, jnp.zeros((KH - 1, ZW), jnp.bfloat16)], axis=0)
        acc = b3_ref[...] + jnp.zeros((R, 2 * PoolW), jnp.float32)
        for kh in range(KH):
            acc = acc + jnp.dot(zp[kh:kh + R, :], t3_ref[kh],
                                preferred_element_type=jnp.float32)

        # ---- 2x2 maxpool
        # W direction: parity-major columns -> max of two aligned 384-lane halves.
        mw = jnp.maximum(acc[:, :PoolW], acc[:, PoolW:])                  # (R, PoolW)
        # H direction: max with the next row (valid on even h rows, the wrapper
        # drops the odd / out-of-range rows).
        mw_dn = jnp.concatenate(
            [mw[1:, :], jnp.zeros((1, PoolW), jnp.float32)], axis=0)
        mh = jnp.maximum(mw, mw_dn)

        out_ref[...] = mh.reshape(NB, Hp, PoolW)          # lane-dense (16, 384) tiles

    return kernel


def net_forward(x_nchw, params):
    """x_nchw: (N, 3, H, W) f32. Returns (N, 64, (H-4)//2, (W-4)//2) f32 (NCHW)."""
    w1, b1, w2, b2, w3, b3 = params
    N, C, H, W = x_nchw.shape
    assert H % 8 == 0, "kernel assumes the input height is a multiple of 8"
    H1, W1 = H - 2, W - 2
    H2, W2 = H1 - 2, W1 - 2
    assert W2 % 2 == 0, "kernel assumes an even pre-pool width"
    Ho, Wo = H2 // 2, W2 // 2
    Hp = H                                    # per-image row count inside the kernel
    K1 = KH * W * C                           # kh-expanded input width  (144)
    ZW = ((W1 * CMID + 127) // 128) * 128     # padded z width           (448 -> 512)
    PoolW = Wo * COUT                         # pooled lane width        (384)

    # ---- images per grid step: keep >= 2 grid steps (dual-TC on v7x) ---------
    NB = N // 2 if (N % 2 == 0 and N >= 2) else 1
    while NB > 16 and NB % 2 == 0:            # cap per-step VMEM for large batches
        NB //= 2
    G = N // NB
    assert NB * G == N

    # ---- wrapper-side layout plumbing (matmul operands in bf16) --------------
    x_rows = jnp.transpose(x_nchw, (0, 2, 3, 1)).reshape(N, H, W * C)
    x_pad = jnp.concatenate(
        [x_rows, jnp.zeros((N, KH - 1, W * C), x_rows.dtype)], axis=1)
    x3 = jnp.concatenate([x_pad[:, kh:kh + Hp] for kh in range(KH)], axis=2)
    x3 = x3.astype(jnp.bfloat16)                                  # (N, Hp, K1)

    t1 = _build_stage1_weights(w1, w2, W, C, W1, ZW).astype(jnp.bfloat16)
    t3 = _build_conv3_weights(w3, W1, W2, Wo, ZW).astype(jnp.bfloat16)

    def _bias_row(b):
        return jnp.pad(jnp.tile(b, W1), (0, ZW - W1 * CMID))
    bf_row = jnp.concatenate([_bias_row(b1), _bias_row(b2)]).reshape(1, 2 * ZW)
    b3_row = jnp.tile(b3, W2).reshape(1, 2 * PoolW)

    kernel = make_net_kernel(NB, Hp, K1, ZW, PoolW)

    out = pl.pallas_call(
        kernel,
        out_shape=jax.ShapeDtypeStruct((N, Hp, PoolW), jnp.float32),
        grid=(G,),
        in_specs=[
            pl.BlockSpec((NB, Hp, K1), lambda g: (g, 0, 0)),
            pl.BlockSpec((K1, 2 * ZW), lambda g: (0, 0)),
            pl.BlockSpec((1, 2 * ZW), lambda g: (0, 0)),
            pl.BlockSpec((KH, ZW, 2 * PoolW), lambda g: (0, 0, 0)),
            pl.BlockSpec((1, 2 * PoolW), lambda g: (0, 0)),
        ],
        out_specs=pl.BlockSpec((NB, Hp, PoolW), lambda g: (g, 0, 0)),
        compiler_params=pltpu.CompilerParams(
            dimension_semantics=("parallel",),
            vmem_limit_bytes=32 << 20,
        ),
    )(x3, t1, bf_row, t3, b3_row)

    # rows 0, 2, ..., 2*Ho-2 of each image carry the pooled result (lanes = (w2, co))
    out = out[:, 0:2 * Ho:2, :].reshape(N, Ho, Wo, COUT)
    return jnp.transpose(out, (0, 3, 1, 2))               # NHWC -> NCHW


def reference_forward(x_nchw, params):
    """Pure-JAX reference.  Conv operands are rounded to bf16 (f32 accumulation),
    matching the kernel's native single-pass MXU precision."""
    w1, b1, w2, b2, w3, b3 = params

    def conv(x, w, b):
        y = jax.lax.conv_general_dilated(
            x.astype(jnp.bfloat16).astype(jnp.float32),
            w.astype(jnp.bfloat16).astype(jnp.float32),
            window_strides=(1, 1), padding="VALID",
            dimension_numbers=("NCHW", "OIHW", "NCHW"),
            precision=jax.lax.Precision.HIGHEST)
        return y + b[None, :, None, None]

    y = jax.nn.relu(conv(x_nchw, w1, b1))
    w = conv(x_nchw, w2, b2)
    z = jnp.sqrt(jax.nn.relu(w + y))
    z = conv(z, w3, b3)
    return jax.lax.reduce_window(
        z, -jnp.inf, jax.lax.max,
        window_dimensions=(1, 1, 2, 2), window_strides=(1, 1, 2, 2),
        padding="VALID")


def init_params(key):
    """Deterministic parameters with the shapes from Net.__init__ (OIHW + bias)."""
    ks = jax.random.split(key, 6)

    def w_init(k, shape):
        fan_in = shape[1] * shape[2] * shape[3]
        return jax.random.normal(k, shape, jnp.float32) * (1.0 / jnp.sqrt(fan_in))

    w1 = w_init(ks[0], (CMID, 3, 3, 3))
    b1 = jax.random.normal(ks[1], (CMID,), jnp.float32) * 0.1
    w2 = w_init(ks[2], (CMID, 3, 3, 3))
    b2 = jax.random.normal(ks[3], (CMID,), jnp.float32) * 0.1
    w3 = w_init(ks[4], (COUT, CMID, 3, 3))
    b3 = jax.random.normal(ks[5], (COUT,), jnp.float32) * 0.1
    return (w1, b1, w2, b2, w3, b3)


if __name__ == "__main__":
    key = jax.random.PRNGKey(0)
    k_x, k_p = jax.random.split(key)

    N, C, H, W = 8, 3, 16, 16
    x = jax.random.normal(k_x, (N, C, H, W), jnp.float32)
    params = init_params(k_p)

    fwd = jax.jit(net_forward)
    out = jax.block_until_ready(fwd(x, params))

    ref = jax.block_until_ready(reference_forward(x, params))
    assert out.shape == (N, COUT, (H - 4) // 2, (W - 4) // 2), out.shape
    max_err = float(jnp.max(jnp.abs(out - ref)))
    assert jnp.allclose(out, ref, atol=2e-2, rtol=2e-2), max_err

    print("KERNEL_OK")
</pallas_src>

<mosaic_0001>
module attributes {stable_mosaic.version = 11 : i64} {
  func.func @kernel(%arg0: i32, %arg1: memref<4x16x144xbf16, #tpu.memory_space<vmem>>, %arg2: memref<144x1024xbf16, #tpu.memory_space<vmem>>, %arg3: memref<1x1024xf32, #tpu.memory_space<vmem>>, %arg4: memref<3x512x768xbf16, #tpu.memory_space<vmem>>, %arg5: memref<1x768xf32, #tpu.memory_space<vmem>>, %arg6: memref<4x16x384xf32, #tpu.memory_space<vmem>>) attributes {dimension_semantics = [#tpu.dimension_semantics<parallel>], iteration_bounds = array<i64: 2>, scalar_prefetch = 0 : i64, scratch_operands = 0 : i64, tpu.core_type = #tpu.core_type<tc>, window_params = [{transform_indices = @transform_0, window_bounds = array<i64: 4, 16, 144>}, {pipeline_mode = #tpu.pipeline_mode<synchronous>, transform_indices = @transform_1, window_bounds = array<i64: 144, 1024>}, {pipeline_mode = #tpu.pipeline_mode<synchronous>, transform_indices = @transform_2, window_bounds = array<i64: 1, 1024>}, {pipeline_mode = #tpu.pipeline_mode<synchronous>, transform_indices = @transform_3, window_bounds = array<i64: 3, 512, 768>}, {pipeline_mode = #tpu.pipeline_mode<synchronous>, transform_indices = @transform_4, window_bounds = array<i64: 1, 768>}, {transform_indices = @transform_5, window_bounds = array<i64: 4, 16, 384>}]} {
    %c0 = arith.constant 0 : index
    %c0_0 = arith.constant 0 : index
    %c0_1 = arith.constant 0 : index
    %0 = vector.load %arg1[%c0, %c0_0, %c0_1] : memref<4x16x144xbf16, #tpu.memory_space<vmem>>, vector<4x16x144xbf16>
    %1 = vector.shape_cast %0 : vector<4x16x144xbf16> to vector<64x144xbf16>
    %c0_2 = arith.constant 0 : index
    %c0_3 = arith.constant 0 : index
    %2 = vector.load %arg2[%c0_2, %c0_3] : memref<144x1024xbf16, #tpu.memory_space<vmem>>, vector<144x1024xbf16>
    %cst = arith.constant dense<0.000000e+00> : vector<64x1024xf32>
    %3 = tpu.matmul %1, %2, %cst {dimension_numbers = #tpu.dot_dimension_numbers<[1], [0], [0], [1], [0, 0, 1, 1], [], []>} : vector<64x144xbf16>, vector<144x1024xbf16>, vector<64x1024xf32> -> vector<64x1024xf32>
    %c0_4 = arith.constant 0 : index
    %c0_5 = arith.constant 0 : index
    %4 = vector.load %arg3[%c0_4, %c0_5] : memref<1x1024xf32, #tpu.memory_space<vmem>>, vector<1x1024xf32>
    %5 = vector.broadcast %4 : vector<1x1024xf32> to vector<64x1024xf32>
    %6 = arith.addf %3, %5 : vector<64x1024xf32>
    %7 = vector.extract_strided_slice %6 {offsets = [0, 0], sizes = [64, 512], strides = [1, 1]} : vector<64x1024xf32> to vector<64x512xf32>
    %cst_6 = arith.constant 0.000000e+00 : f32
    %8 = vector.broadcast %cst_6 : f32 to vector<64x512xf32>
    %9 = arith.maximumf %7, %8 : vector<64x512xf32>
    %10 = vector.extract_strided_slice %6 {offsets = [0, 512], sizes = [64, 512], strides = [1, 1]} : vector<64x1024xf32> to vector<64x512xf32>
    %11 = arith.addf %10, %9 : vector<64x512xf32>
    %cst_7 = arith.constant 0.000000e+00 : f32
    %12 = vector.broadcast %cst_7 : f32 to vector<64x512xf32>
    %13 = arith.maximumf %11, %12 : vector<64x512xf32>
    %14 = math.sqrt %13 : vector<64x512xf32>
    %15 = arith.truncf %14 : vector<64x512xf32> to vector<64x512xbf16>
    %cst_8 = arith.constant 0.000000e+00 : bf16
    %16 = vector.broadcast %cst_8 : bf16 to vector<2x512xbf16>
    %17 = tpu.concatenate %15, %16 in 0 : vector<64x512xbf16>, vector<2x512xbf16> -> vector<66x512xbf16>
    %c0_9 = arith.constant 0 : index
    %c0_10 = arith.constant 0 : index
    %18 = vector.load %arg5[%c0_9, %c0_10] : memref<1x768xf32, #tpu.memory_space<vmem>>, vector<1x768xf32>
    %cst_11 = arith.constant 0.000000e+00 : f32
    %19 = vector.broadcast %cst_11 : f32 to vector<64x768xf32>
    %20 = vector.broadcast %18 : vector<1x768xf32> to vector<64x768xf32>
    %21 = arith.addf %20, %19 : vector<64x768xf32>
    %22 = vector.extract_strided_slice %17 {offsets = [0, 0], sizes = [64, 512], strides = [1, 1]} : vector<66x512xbf16> to vector<64x512xbf16>
    %c0_12 = arith.constant 0 : index
    %c0_13 = arith.constant 0 : index
    %c0_14 = arith.constant 0 : index
    %23 = vector.load %arg4[%c0_12, %c0_13, %c0_14] : memref<3x512x768xbf16, #tpu.memory_space<vmem>>, vector<1x512x768xbf16>
    %24 = vector.shape_cast %23 : vector<1x512x768xbf16> to vector<512x768xbf16>
    %cst_15 = arith.constant dense<0.000000e+00> : vector<64x768xf32>
    %25 = tpu.matmul %22, %24, %cst_15 {dimension_numbers = #tpu.dot_dimension_numbers<[1], [0], [0], [1], [0, 0, 1, 1], [], []>} : vector<64x512xbf16>, vector<512x768xbf16>, vector<64x768xf32> -> vector<64x768xf32>
    %26 = arith.addf %21, %25 : vector<64x768xf32>
    %27 = vector.extract_strided_slice %17 {offsets = [1, 0], sizes = [64, 512], strides = [1, 1]} : vector<66x512xbf16> to vector<64x512xbf16>
    %c1 = arith.constant 1 : index
    %c0_16 = arith.constant 0 : index
    %c0_17 = arith.constant 0 : index
    %28 = vector.load %arg4[%c1, %c0_16, %c0_17] : memref<3x512x768xbf16, #tpu.memory_space<vmem>>, vector<1x512x768xbf16>
    %29 = vector.shape_cast %28 : vector<1x512x768xbf16> to vector<512x768xbf16>
    %cst_18 = arith.constant dense<0.000000e+00> : vector<64x768xf32>
    %30 = tpu.matmul %27, %29, %cst_18 {dimension_numbers = #tpu.dot_dimension_numbers<[1], [0], [0], [1], [0, 0, 1, 1], [], []>} : vector<64x512xbf16>, vector<512x768xbf16>, vector<64x768xf32> -> vector<64x768xf32>
    %31 = arith.addf %26, %30 : vector<64x768xf32>
    %32 = vector.extract_strided_slice %17 {offsets = [2, 0], sizes = [64, 512], strides = [1, 1]} : vector<66x512xbf16> to vector<64x512xbf16>
    %c2 = arith.constant 2 : index
    %c0_19 = arith.constant 0 : index
    %c0_20 = arith.constant 0 : index
    %33 = vector.load %arg4[%c2, %c0_19, %c0_20] : memref<3x512x768xbf16, #tpu.memory_space<vmem>>, vector<1x512x768xbf16>
    %34 = vector.shape_cast %33 : vector<1x512x768xbf16> to vector<512x768xbf16>
    %cst_21 = arith.constant dense<0.000000e+00> : vector<64x768xf32>
    %35 = tpu.matmul %32, %34, %cst_21 {dimension_numbers = #tpu.dot_dimension_numbers<[1], [0], [0], [1], [0, 0, 1, 1], [], []>} : vector<64x512xbf16>, vector<512x768xbf16>, vector<64x768xf32> -> vector<64x768xf32>
    %36 = arith.addf %31, %35 : vector<64x768xf32>
    %37 = vector.extract_strided_slice %36 {offsets = [0, 0], sizes = [64, 384], strides = [1, 1]} : vector<64x768xf32> to vector<64x384xf32>
    %38 = vector.extract_strided_slice %36 {offsets = [0, 384], sizes = [64, 384], strides = [1, 1]} : vector<64x768xf32> to vector<64x384xf32>
    %39 = arith.maximumf %37, %38 : vector<64x384xf32>
    %40 = vector.extract_strided_slice %39 {offsets = [1, 0], sizes = [63, 384], strides = [1, 1]} : vector<64x384xf32> to vector<63x384xf32>
    %cst_22 = arith.constant 0.000000e+00 : f32
    %41 = vector.broadcast %cst_22 : f32 to vector<1x384xf32>
    %42 = tpu.concatenate %40, %41 in 0 : vector<63x384xf32>, vector<1x384xf32> -> vector<64x384xf32>
    %43 = arith.maximumf %39, %42 : vector<64x384xf32>
    %44 = vector.shape_cast %43 : vector<64x384xf32> to vector<4x16x384xf32>
    %c0_23 = arith.constant 0 : index
    %c0_24 = arith.constant 0 : index
    %c0_25 = arith.constant 0 : index
    %45 = vector.load %arg6[%c0_23, %c0_24, %c0_25] : memref<4x16x384xf32, #tpu.memory_space<vmem>>, vector<4x16x384xf32>
    tpu.vector_store %arg6[%c0_23, %c0_24, %c0_25], %44 {strides = array<i32>} : memref<4x16x384xf32, #tpu.memory_space<vmem>>, vector<4x16x384xf32>,
    return
  }
  func.func @transform_0(%arg0: i32) -> (i32, i32, i32) {
    %c0_i32 = arith.constant 0 : i32
    %c0_i32_0 = arith.constant 0 : i32
    %c0_i32_1 = arith.constant 0 : i32
    return %arg0, %c0_i32, %c0_i32_0 : i32, i32, i32
  }
  func.func @transform_1(%arg0: i32) -> (i32, i32) {
    %c0_i32 = arith.constant 0 : i32
    %c0_i32_0 = arith.constant 0 : i32
    %c0_i32_1 = arith.constant 0 : i32
    return %c0_i32, %c0_i32_0 : i32, i32
  }
  func.func @transform_2(%arg0: i32) -> (i32, i32) {
    %c0_i32 = arith.constant 0 : i32
    %c0_i32_0 = arith.constant 0 : i32
    %c0_i32_1 = arith.constant 0 : i32
    return %c0_i32, %c0_i32_0 : i32, i32
  }
  func.func @transform_3(%arg0: i32) -> (i32, i32, i32) {
    %c0_i32 = arith.constant 0 : i32
    %c0_i32_0 = arith.constant 0 : i32
    %c0_i32_1 = arith.constant 0 : i32
    %c0_i32_2 = arith.constant 0 : i32
    return %c0_i32, %c0_i32_0, %c0_i32_1 : i32, i32, i32
  }
  func.func @transform_4(%arg0: i32) -> (i32, i32) {
    %c0_i32 = arith.constant 0 : i32
    %c0_i32_0 = arith.constant 0 : i32
    %c0_i32_1 = arith.constant 0 : i32
    return %c0_i32, %c0_i32_0 : i32, i32
  }
  func.func @transform_5(%arg0: i32) -> (i32, i32, i32) {
    %c0_i32 = arith.constant 0 : i32
    %c0_i32_0 = arith.constant 0 : i32
    %c0_i32_1 = arith.constant 0 : i32
    return %arg0, %c0_i32, %c0_i32_0 : i32, i32, i32
  }
}

</mosaic_0001>

<llo_original>
// kernel: tile.23
$region0: #{tile.23}
  #allocation0 [shape = 's32[1]{0}', space=sflag, size = 0x4, scoped, tag = 'scoped memory for tile.23']
  %s0 = inlined_call_operand.vmem [shape: f32[32], index: 0, kind: input, shape index: {}]
  %s1 = inlined_call_operand.vmem [shape: f32[14,32], index: 1, kind: output, shape index: {}]
  // Predicated region
  $region2: #{tile.23} parent=0 // pred_check
    _
  $region3: #{tile.23} parent=0 // pred_check_branch
    %3 = sbr.rel (0) target = $region5
  $region4: #{tile.23} parent=0 // pred_region
    _
  $region5: #{tile.23} parent=0 // pred_fallthru
    _
  %v4 = vld [vmem:[%s0] ss:$0 sm:$0xff]
  %5 = vst [vmem:[%s1] sm:$0xff] %v4
  %s6 = scalar_lea.vmem %s1, 8
  %7 = vst [vmem:[%s6] sm:$0xff] %v4

// kernel: tile.24
$region0: #{tile.24}
  %s0 = inlined_call_operand.vmem [shape: f32[14,32], index: 0, kind: input, shape index: {}]
  %s1 = inlined_call_operand.vmem [shape: f32[448], index: 1, kind: output, shape index: {}]
  $region1: #{tile.24} parent=0
    #allocation0 [shape = 'u8[4096]{0}', space=vmem, size = 0x1000, scoped, tag = 'scoped mem for output reshape']
    %v2 = vld [vmem:[%s0] ss:$4 sm:$0xf]
    %vm3 = vcmask 261120
    %4 = vst.msk [vmem:[#allocation0] sm:$0xf] %vm3, %v2
    %s5 = scalar_lea.vmem %s0, 3
    %v6 = vld [vmem:[%s5] ss:$4 sm:$0x7]
    %7 = vrot.lane.b32.xlu0 %v6, 96
    %v8 = vpop.permute.xlu0 %7
    %vm9 = vcmask 1048320
    %10 = vst.msk [vmem:[#allocation0] sm:$0x7] %vm9, %v8
    %s11 = scalar_lea.vmem %s0, 2
    %v12 = vld [vmem:[%s11] ss:$4 sm:$0x7]
    %13 = vrot.lane.b32.xlu0 %v12, 64
    %v14 = vpop.permute.xlu0 %13
    %vm15 = vcmask 785920
    %16 = vst.msk [vmem:[#allocation0] sm:$0x7] %vm15, %v14
    %s17 = scalar_lea.vmem %s0, 1
    %v18 = vld [vmem:[%s17] ss:$4 sm:$0xf]
    %19 = vrot.lane.b32.xlu0 %v18, 32
    %v20 = vpop.permute.xlu0 %19
    %vm21 = vcmask 523520
    %22 = vst.msk [vmem:[#allocation0] sm:$0xf] %vm21, %v20
    %s24 = ssub.s32 16, 1
    %v25 = vld [vmem:[#allocation0] sm:%s24]
    %s27 = ssub.s32 16, 1
    %28 = vst [vmem:[%s1] sm:%s27] %v25

// kernel: tile.28
$region0: #{tile.28}
  #allocation0 [shape = 's32[1]{0}', space=sflag, size = 0x4, scoped, tag = 'scoped memory for tile.28']
  %s0 = inlined_call_operand.vmem [shape: f32[64], index: 0, kind: input, shape index: {}]
  %s1 = inlined_call_operand.vmem [shape: f32[12,64], index: 1, kind: output, shape index: {}]
  // Predicated region
  $region2: #{tile.28} parent=0 // pred_check
    _
  $region3: #{tile.28} parent=0 // pred_check_branch
    %3 = sbr.rel (0) target = $region5
  $region4: #{tile.28} parent=0 // pred_region
    _
  $region5: #{tile.28} parent=0 // pred_fallthru
    _
  %v4 = vld [vmem:[%s0] ss:$0 sm:$0xff]
  %5 = vst [vmem:[%s1] sm:$0xff] %v4
  %s6 = scalar_lea.vmem %s1, 8
  %7 = vst [vmem:[%s6] sm:$0xff] %v4

// kernel: tile.29
$region0: #{tile.29}
  %s0 = inlined_call_operand.vmem [shape: f32[12,64], index: 0, kind: input, shape index: {}]
  %s1 = inlined_call_operand.vmem [shape: f32[1,768], index: 1, kind: output, shape index: {}]
  $region1: #{tile.29} parent=0
    #allocation0 [shape = 'u8[24576]{0}', space=vmem, size = 0x6000, scoped, tag = 'scoped mem for output reshape']
    %v2 = vld [vmem:[%s0] ss:$2 sm:$0x3f]
    %vm3 = vcmask 523264
    %4 = vst.msk [vmem:[#allocation0] ss:$8 sm:$0xf] %vm3, %v2
    %5 = vst.msk [vmem:[#allocation0] ss:$8 sm:$0x30] %vm3, %v2
    %s6 = scalar_lea.vmem %s0, 1
    %v7 = vld [vmem:[%s6] ss:$2 sm:$0x3f]
    %8 = vrot.lane.b32.xlu0 %v7, 64
    %v9 = vpop.permute.xlu0 %8
    %vm10 = vcmask 1048064
    %11 = vst.msk [vmem:[#allocation0] ss:$8 sm:$0xf] %vm10, %v9
    %12 = vst.msk [vmem:[#allocation0] ss:$8 sm:$0x30] %vm10, %v9
    %s14 = ssub.s32 2, 1
    %v15 = vld [vmem:[#allocation0] sm:%s14]
    %s17 = ssub.s32 2, 1
    %18 = vst [vmem:[%s1] sm:%s17] %v15
    %s19 = scalar_lea.vmem [#allocation0], 8
    %v20 = vld [vmem:[%s19] sm:%s14]
    %s22 = ssub.s32 2, 1
    %s23 = scalar_lea.vmem %s1, 1
    %24 = vst [vmem:[%s23] sm:%s22] %v20
    %s25 = scalar_lea.vmem [#allocation0], 16
    %v26 = vld [vmem:[%s25] sm:%s14]
    %s28 = ssub.s32 2, 1
    %s29 = scalar_lea.vmem %s1, 2
    %30 = vst [vmem:[%s29] sm:%s28] %v26
    %s31 = scalar_lea.vmem [#allocation0], 24
    %v32 = vld [vmem:[%s31] sm:%s14]
    %s34 = ssub.s32 2, 1
    %s35 = scalar_lea.vmem %s1, 3
    %36 = vst [vmem:[%s35] sm:%s34] %v32
    %s37 = scalar_lea.vmem [#allocation0], 32
    %v38 = vld [vmem:[%s37] sm:%s14]
    %s40 = ssub.s32 2, 1
    %s41 = scalar_lea.vmem %s1, 4
    %42 = vst [vmem:[%s41] sm:%s40] %v38
    %s43 = scalar_lea.vmem [#allocation0], 40
    %v44 = vld [vmem:[%s43] sm:%s14]
    %s46 = ssub.s32 2, 1
    %s47 = scalar_lea.vmem %s1, 5
    %48 = vst [vmem:[%s47] sm:%s46] %v44

// kernel: net_forward.1
$region0: #{net_forward.1}
  #allocation0 [shape = 'u32[]', space=smem, size = 0x4, offset = 0x4, fixed_abs, tag = 'smem constant byte address 0x4 - core index']
  #allocation1 [shape = 'u32[72,128]{1,0:T(1,128)}', space=vmem, size = 0x9000, scoped, tag = 'internal scratch']
  %s0 = inlined_call_operand.vmem [shape: bf16[8,16,144], index: 0, kind: input, shape index: {}]
  %s1 = inlined_call_operand.vmem [shape: bf16[144,1024], index: 1, kind: input, shape index: {}]
  %s2 = inlined_call_operand.vmem [shape: f32[1,1024], index: 2, kind: input, shape index: {}]
  %s3 = inlined_call_operand.vmem [shape: bf16[3,512,768], index: 3, kind: input, shape index: {}]
  %s4 = inlined_call_operand.vmem [shape: f32[1,768], index: 4, kind: input, shape index: {}]
  %s5 = inlined_call_operand.vmem [shape: f32[8,16,384], index: 5, kind: output, shape index: {}]
  %s6 = sld [smem:[#allocation0]]
  $region53: #{net_forward.1} parent=0
    _
  %s8 = ssub.s32 1, %s6
  %s9 = scalar_select 0, %s8, %s6
  loop: start=0, step=1, limit=4
  $region2: #{net_forward.1} parent=0 // loop_pre_header
    _
  $region3: #{net_forward.1} parent=0 // loop_header
    %s11 = sphi 0, %s15
    %p12 = scmp.ge.s32.totalorder %s11, 4
    %s21 = sphi 0, %s23
    %s24 = sphi 0, %s21
    %s25 = sphi 0, %s24
    %s41 = sphi 0, %s25
    %s45 = sphi 0, %s45
    %s47 = sphi 0, %s45
    %s48 = sphi 0, %s47
    %s62 = sphi 0, %s48
    %s66 = sphi 0, %s66
    %s68 = sphi 0, %s66
    %s69 = sphi 0, %s68
    %s83 = sphi 0, %s69
    %s87 = sphi 0, %s87
    %s89 = sphi 0, %s87
    %s90 = sphi 0, %s89
    %s104 = sphi 0, %s90
    %s108 = sphi 0, %s108
    %s110 = sphi 0, %s108
    %s111 = sphi 0, %s110
    %s125 = sphi 0, %s111
    %s131 = sphi 0, %s133
    %s134 = sphi 0, %s131
    %s135 = sphi 0, %s134
    %s151 = sphi 0, %s135
  $region4: #{net_forward.1} parent=0 // loop_header_branch
    %14 = sbr.rel (%p12) target = $region8
  $region5: #{net_forward.1} parent=0 // loop_body
    %s16 = ssub.s32 %s11, 1
    %s17 = ssub.s32 %s11, 2
    %s18 = sadd.s32 %s11, 1
    %s19 = ssub.s32 %s11, %s18
    %p20 = scmp.eq.s32.totalorder %s19, 0
    %s22 = sadd.s32 %s21, 1
    %s23 = scalar_select %p20, %s21, %s22
    %p26 = pneg %p20
    %p27 = scmp.eq.s32.totalorder %s11, 1
    %p28 = por %p26, %p27
    %p29 = scmp.ne.s32.totalorder %s21, %s24
    %p30 = scmp.eq.s32.totalorder %s11, 0
    %p31 = por %p29, %p30
    %p32 = scmp.ne.s32.totalorder %s21, %s24
    %p33 = scmp.eq.s32.totalorder %s16, 1
    %p34 = por %p32, %p33
    %p35 = scmp.ne.s32.totalorder %s24, %s25
    %p36 = scmp.eq.s32.totalorder %s16, 0
    %p37 = por %p35, %p36
    %p38 = scmp.ne.s32.totalorder %s24, %s25
    %p39 = scmp.eq.s32.totalorder %s17, 1
    %p40 = por %p38, %p39
    %p42 = scmp.ne.s32.totalorder %s25, %s41
    %p43 = scmp.eq.s32.totalorder %s17, 0
    %p44 = por %p42, %p43
    %s46 = sadd.s32 %s45, 1
    %p49 = scmp.eq.s32.totalorder %s11, 1
    %p50 = scmp.ne.s32.totalorder %s45, %s47
    %p51 = scmp.eq.s32.totalorder %s11, 0
    %p52 = por %p50, %p51
    %p53 = scmp.ne.s32.totalorder %s45, %s47
    %p54 = scmp.eq.s32.totalorder %s16, 1
    %p55 = por %p53, %p54
    %p56 = scmp.ne.s32.totalorder %s47, %s48
    %p57 = scmp.eq.s32.totalorder %s16, 0
    %p58 = por %p56, %p57
    %p59 = scmp.ne.s32.totalorder %s47, %s48
    %p60 = scmp.eq.s32.totalorder %s17, 1
    %p61 = por %p59, %p60
    %p63 = scmp.ne.s32.totalorder %s48, %s62
    %p64 = scmp.eq.s32.totalorder %s17, 0
    %p65 = por %p63, %p64
    %s67 = sadd.s32 %s66, 1
    %p70 = scmp.eq.s32.totalorder %s11, 1
    %p71 = scmp.ne.s32.totalorder %s66, %s68
    %p72 = scmp.eq.s32.totalorder %s11, 0
    %p73 = por %p71, %p72
    %p74 = scmp.ne.s32.totalorder %s66, %s68
    %p75 = scmp.eq.s32.totalorder %s16, 1
    %p76 = por %p74, %p75
    %p77 = scmp.ne.s32.totalorder %s68, %s69
    %p78 = scmp.eq.s32.totalorder %s16, 0
    %p79 = por %p77, %p78
    %p80 = scmp.ne.s32.totalorder %s68, %s69
    %p81 = scmp.eq.s32.totalorder %s17, 1
    %p82 = por %p80, %p81
    %p84 = scmp.ne.s32.totalorder %s69, %s83
    %p85 = scmp.eq.s32.totalorder %s17, 0
    %p86 = por %p84, %p85
    %s88 = sadd.s32 %s87, 1
    %p91 = scmp.eq.s32.totalorder %s11, 1
    %p92 = scmp.ne.s32.totalorder %s87, %s89
    %p93 = scmp.eq.s32.totalorder %s11, 0
    %p94 = por %p92, %p93
    %p95 = scmp.ne.s32.totalorder %s87, %s89
    %p96 = scmp.eq.s32.totalorder %s16, 1
    %p97 = por %p95, %p96
    %p98 = scmp.ne.s32.totalorder %s89, %s90
    %p99 = scmp.eq.s32.totalorder %s16, 0
    %p100 = por %p98, %p99
    %p101 = scmp.ne.s32.totalorder %s89, %s90
    %p102 = scmp.eq.s32.totalorder %s17, 1
    %p103 = por %p101, %p102
    %p105 = scmp.ne.s32.totalorder %s90, %s104
    %p106 = scmp.eq.s32.totalorder %s17, 0
    %p107 = por %p105, %p106
    %s109 = sadd.s32 %s108, 1
    %p112 = scmp.eq.s32.totalorder %s11, 1
    %p113 = scmp.ne.s32.totalorder %s108, %s110
    %p114 = scmp.eq.s32.totalorder %s11, 0
    %p115 = por %p113, %p114
    %p116 = scmp.ne.s32.totalorder %s108, %s110
    %p117 = scmp.eq.s32.totalorder %s16, 1
    %p118 = por %p116, %p117
    %p119 = scmp.ne.s32.totalorder %s110, %s111
    %p120 = scmp.eq.s32.totalorder %s16, 0
    %p121 = por %p119, %p120
    %p122 = scmp.ne.s32.totalorder %s110, %s111
    %p123 = scmp.eq.s32.totalorder %s17, 1
    %p124 = por %p122, %p123
    %p126 = scmp.ne.s32.totalorder %s111, %s125
    %p127 = scmp.eq.s32.totalorder %s17, 0
    %p128 = por %p126, %p127
    %s129 = ssub.s32 %s11, %s18
    %p130 = scmp.eq.s32.totalorder %s129, 0
    %s132 = sadd.s32 %s131, 1
    %s133 = scalar_select %p130, %s131, %s132
    %p136 = pneg %p130
    %p137 = scmp.eq.s32.totalorder %s11, 1
    %p138 = por %p136, %p137
    %p139 = scmp.ne.s32.totalorder %s131, %s134
    %p140 = scmp.eq.s32.totalorder %s11, 0
    %p141 = por %p139, %p140
    %p142 = scmp.ne.s32.totalorder %s131, %s134
    %p143 = scmp.eq.s32.totalorder %s16, 1
    %p144 = por %p142, %p143
    %p145 = scmp.ne.s32.totalorder %s134, %s135
    %p146 = scmp.eq.s32.totalorder %s16, 0
    %p147 = por %p145, %p146
    %p148 = scmp.ne.s32.totalorder %s134, %s135
    %p149 = scmp.eq.s32.totalorder %s17, 1
    %p150 = por %p148, %p149
    %p152 = scmp.ne.s32.totalorder %s135, %s151
    %p153 = scmp.eq.s32.totalorder %s17, 0
    %p154 = por %p152, %p153
    %p155 = scmp.le.s32.totalorder 1, %s11
    %p156 = scmp.lt.s32.totalorder %s11, 3
    %p157 = pnand %p155, %p156
    %p158 = pneg %p157
    // Predicated region
    $region9: #{net_forward.1} parent=5 // pred_check
      _
    $region10: #{net_forward.1} parent=5 // pred_check_branch
      %160 = sbr.rel (%p157) target = $region12
    $region11: #{net_forward.1} parent=5 // pred_region
      %s161 = ssub.s32 %s11, 1
      // Predicated region
      $region13: #{net_forward.1} parent=11 // pred_check
        %p162 = pneg %p58
      $region14: #{net_forward.1} parent=11 // pred_check_branch
        %164 = sbr.rel (%p162) target = $region16
      $region15: #{net_forward.1} parent=11 // pred_region
        _
      $region16: #{net_forward.1} parent=11 // pred_fallthru
        _
      // Predicated region
      $region17: #{net_forward.1} parent=11 // pred_check
        %p165 = pneg %p79
      $region18: #{net_forward.1} parent=11 // pred_check_branch
        %167 = sbr.rel (%p165) target = $region20
      $region19: #{net_forward.1} parent=11 // pred_region
        _
      $region20: #{net_forward.1} parent=11 // pred_fallthru
        _
      // Predicated region
      $region21: #{net_forward.1} parent=11 // pred_check
        %p168 = pneg %p100
      $region22: #{net_forward.1} parent=11 // pred_check_branch
        %170 = sbr.rel (%p168) target = $region24
      $region23: #{net_forward.1} parent=11 // pred_region
        _
      $region24: #{net_forward.1} parent=11 // pred_fallthru
        _
      // Predicated region
      $region25: #{net_forward.1} parent=11 // pred_check
        %p171 = pneg %p121
      $region26: #{net_forward.1} parent=11 // pred_check_branch
        %173 = sbr.rel (%p171) target = $region28
      $region27: #{net_forward.1} parent=11 // pred_region
        _
      $region28: #{net_forward.1} parent=11 // pred_fallthru
        _
    $region12: #{net_forward.1} parent=5 // pred_fallthru
      _
    %p174 = scmp.lt.s32.totalorder %s11, 2
    // Predicated region
    $region29: #{net_forward.1} parent=5 // pred_check
      %p175 = pneg %p174
    $region30: #{net_forward.1} parent=5 // pred_check_branch
      %177 = sbr.rel (%p175) target = $region32
    $region31: #{net_forward.1} parent=5 // pred_region
      // Predicated region
      $region33: #{net_forward.1} parent=31 // pred_check
        %p178 = pneg %p31
      $region34: #{net_forward.1} parent=31 // pred_check_branch
        %180 = sbr.rel (%p178) target = $region36
      $region35: #{net_forward.1} parent=31 // pred_region
        %s181 = smul.u32 4, %s11
        %p182 = scmp.lt.s32.totalorder %s181, 7
        %s183 = scalar_select %p182, %s181, 7
        %s184 = smul.addr %s183, 4
        %s185 = smul.addr %s184, 4
        %s186 = scalar_lea.vmem %s0, %s185
        %s187 = smul.u32 4, %s11
      $region36: #{net_forward.1} parent=31 // pred_fallthru
        _
    $region32: #{net_forward.1} parent=5 // pred_fallthru
      _
    %p188 = scmp.le.s32.totalorder 1, %s11
    %p189 = scmp.lt.s32.totalorder %s11, 3
    %p190 = pnand %p188, %p189
    %p191 = pneg %p190
    // Predicated region
    $region37: #{net_forward.1} parent=5 // pred_check
      _
    $region38: #{net_forward.1} parent=5 // pred_check_branch
      %193 = sbr.rel (%p190) target = $region40
    $region39: #{net_forward.1} parent=5 // pred_region
      %s194 = ssub.s32 %s11, 1
      %s195 = smul.u32 4, %s16
      %p196 = scmp.lt.s32.totalorder %s195, 7
      %s197 = scalar_select %p196, %s195, 7
      %s198 = smul.addr %s197, 4
      %s199 = smul.addr %s198, 4
      %s200 = scalar_lea.vmem %s0, %s199
      %p201 = pneg %p37
      %p202 = pneg %p34
      %p203 = pneg %p58
      %p204 = pneg %p55
      %p205 = pneg %p79
      %p206 = pneg %p76
      %p207 = pneg %p100
      %p208 = pneg %p97
      %p209 = pneg %p121
      %p210 = pneg %p118
      %p211 = pneg %p147
      %p212 = pneg %p144
      %s213 = smul.u32 4, %s16
      %p214 = scmp.lt.s32.totalorder %s213, 7
      %s215 = scalar_select %p214, %s213, 7
      %s216 = smul.addr %s215, 6
      %s217 = smul.addr %s216, 8
      %s218 = scalar_lea.vmem %s5, %s217
      %s219 = smul.u32 4, %s16
      %p220 = scmp.lt.s32.totalorder %s219, 7
      %s221 = scalar_select %p220, %s219, 7
      %s222 = smul.addr %s221, 4
      %s223 = smul.addr %s222, 4
      %s224 = scalar_lea.vmem %s0, %s223
      %s225 = smul.u32 4, %s16
      %s226 = smul.u32 4, %s16
      %p227 = scmp.lt.s32.totalorder %s226, 7
      %s228 = scalar_select %p227, %s226, 7
      %s229 = smul.addr %s228, 6
      %s230 = smul.addr %s229, 8
      %s231 = scalar_lea.vmem %s5, %s230
      %s232 = smul.u32 4, %s16
      %v234 = vld [vmem:[%s224] sm:$0xff]
      %v235 = vld [vmem:[%s224 + $0x8] sm:$0xff]
      %v236 = vld [vmem:[%s224 + $0x10] sm:$0xff]
      %v237 = vld [vmem:[%s224 + $0x18] sm:$0xff]
      %v238 = vld [vmem:[%s224 + $0x20] sm:$0xff]
      %v239 = vld [vmem:[%s224 + $0x28] sm:$0xff]
      %v240 = vld [vmem:[%s224 + $0x30] sm:$0xff]
      %v241 = vld [vmem:[%s224 + $0x38] sm:$0xff]
      %v242 = vld [vmem:[%s1] sm:$0xff]
      %v243 = vld [vmem:[%s1 + $0x8] sm:$0xff]
      %v244 = vld [vmem:[%s1 + $0x10] sm:$0xff]
      %v245 = vld [vmem:[%s1 + $0x18] sm:$0xff]
      %v246 = vld [vmem:[%s1 + $0x20] sm:$0xff]
      %v247 = vld [vmem:[%s1 + $0x28] sm:$0xff]
      %v248 = vld [vmem:[%s1 + $0x30] sm:$0xff]
      %v249 = vld [vmem:[%s1 + $0x38] sm:$0xff]
      %v250 = vld [vmem:[%s1 + $0x40] sm:$0xff]
      %v251 = vld [vmem:[%s1 + $0x48] sm:$0xff]
      %v252 = vld [vmem:[%s1 + $0x50] sm:$0xff]
      %v253 = vld [vmem:[%s1 + $0x58] sm:$0xff]
      %v254 = vld [vmem:[%s1 + $0x60] sm:$0xff]
      %v255 = vld [vmem:[%s1 + $0x68] sm:$0xff]
      %v256 = vld [vmem:[%s1 + $0x70] sm:$0xff]
      %v257 = vld [vmem:[%s1 + $0x78] sm:$0xff]
      %v258 = vld [vmem:[%s1 + $0x80] sm:$0xff]
      %v259 = vld [vmem:[%s1 + $0x88] sm:$0xff]
      %v260 = vld [vmem:[%s1 + $0x90] sm:$0xff]
      %v261 = vld [vmem:[%s1 + $0x98] sm:$0xff]
      %v262 = vld [vmem:[%s1 + $0xa0] sm:$0xff]
      %v263 = vld [vmem:[%s1 + $0xa8] sm:$0xff]
      %v264 = vld [vmem:[%s1 + $0xb0] sm:$0xff]
      %v265 = vld [vmem:[%s1 + $0xb8] sm:$0xff]
      %v266 = vld [vmem:[%s1 + $0xc0] sm:$0xff]
      %v267 = vld [vmem:[%s1 + $0xc8] sm:$0xff]
      %v268 = vld [vmem:[%s1 + $0xd0] sm:$0xff]
      %v269 = vld [vmem:[%s1 + $0xd8] sm:$0xff]
      %v270 = vld [vmem:[%s1 + $0xe0] sm:$0xff]
      %v271 = vld [vmem:[%s1 + $0xe8] sm:$0xff]
      %v272 = vld [vmem:[%s1 + $0xf0] sm:$0xff]
      %v273 = vld [vmem:[%s1 + $0xf8] sm:$0xff]
      %v274 = vld [vmem:[%s1 + $0x100] sm:$0xff]
      %v275 = vld [vmem:[%s1 + $0x108] sm:$0xff]
      %v276 = vld [vmem:[%s1 + $0x110] sm:$0xff]
      %v277 = vld [vmem:[%s1 + $0x118] sm:$0xff]
      %v278 = vld [vmem:[%s1 + $0x120] sm:$0xff]
      %v279 = vld [vmem:[%s1 + $0x128] sm:$0xff]
      %v280 = vld [vmem:[%s1 + $0x130] sm:$0xff]
      %v281 = vld [vmem:[%s1 + $0x138] sm:$0xff]
      %v282 = vld [vmem:[%s1 + $0x140] sm:$0xff]
      %v283 = vld [vmem:[%s1 + $0x148] sm:$0xff]
      %v284 = vld [vmem:[%s1 + $0x150] sm:$0xff]
      %v285 = vld [vmem:[%s1 + $0x158] sm:$0xff]
      %v286 = vld [vmem:[%s1 + $0x160] sm:$0xff]
      %v287 = vld [vmem:[%s1 + $0x168] sm:$0xff]
      %v288 = vld [vmem:[%s1 + $0x170] sm:$0xff]
      %v289 = vld [vmem:[%s1 + $0x178] sm:$0xff]
      %v290 = vld [vmem:[%s1 + $0x180] sm:$0xff]
      %v291 = vld [vmem:[%s1 + $0x188] sm:$0xff]
      %v292 = vld [vmem:[%s1 + $0x190] sm:$0xff]
      %v293 = vld [vmem:[%s1 + $0x198] sm:$0xff]
      %v294 = vld [vmem:[%s1 + $0x1a0] sm:$0xff]
      %v295 = vld [vmem:[%s1 + $0x1a8] sm:$0xff]
      %v296 = vld [vmem:[%s1 + $0x1b0] sm:$0xff]
      %v297 = vld [vmem:[%s1 + $0x1b8] sm:$0xff]
      %v298 = vld [vmem:[%s1 + $0x1c0] sm:$0xff]
      %v299 = vld [vmem:[%s1 + $0x1c8] sm:$0xff]
      %v300 = vld [vmem:[%s1 + $0x1d0] sm:$0xff]
      %v301 = vld [vmem:[%s1 + $0x1d8] sm:$0xff]
      %v302 = vld [vmem:[%s1 + $0x1e0] sm:$0xff]
      %v303 = vld [vmem:[%s1 + $0x1e8] sm:$0xff]
      %v304 = vld [vmem:[%s1 + $0x1f0] sm:$0xff]
      %v305 = vld [vmem:[%s1 + $0x1f8] sm:$0xff]
      %v306 = vld [vmem:[%s1 + $0x200] sm:$0xff]
      %v307 = vld [vmem:[%s1 + $0x208] sm:$0xff]
      %v308 = vld [vmem:[%s1 + $0x210] sm:$0xff]
      %v309 = vld [vmem:[%s1 + $0x218] sm:$0xff]
      %v310 = vld [vmem:[%s1 + $0x220] sm:$0xff]
      %v311 = vld [vmem:[%s1 + $0x228] sm:$0xff]
      %v312 = vld [vmem:[%s1 + $0x230] sm:$0xff]
      %v313 = vld [vmem:[%s1 + $0x238] sm:$0xff]
      %v314 = vld [vmem:[%s2] sm:$0xff]
      %v316 = vperm.slane %v314, 0
      %v317 = vperm.slane %v314, 1
      %v318 = vperm.slane %v314, 2
      %v319 = vperm.slane %v314, 3
      %v320 = vperm.slane %v314, 4
      %v321 = vperm.slane %v314, 5
      %v322 = vperm.slane %v314, 6
      %v323 = vperm.slane %v314, 7
      %v340 = vunpack.c.l.b16 %v234
      %v341 = vunpack.c.h.b16 %v234
      %v342 = vunpack.c.l.b16 %v235
      %v343 = vunpack.c.h.b16 %v235
      %v344 = vunpack.c.l.b16 %v236
      %v345 = vunpack.c.h.b16 %v236
      %v346 = vunpack.c.l.b16 %v237
      %v347 = vunpack.c.h.b16 %v237
      %v348 = vunpack.c.l.b16 %v238
      %v349 = vunpack.c.h.b16 %v238
      %v350 = vunpack.c.l.b16 %v239
      %v351 = vunpack.c.h.b16 %v239
      %v352 = vunpack.c.l.b16 %v240
      %v353 = vunpack.c.h.b16 %v240
      %v354 = vunpack.c.l.b16 %v241
      %v355 = vunpack.c.h.b16 %v241
      %v356 = vpack.c.b16 %v342, %v340
      %v357 = vpack.c.b16 %v343, %v341
      %v358 = vpack.c.b16 %v346, %v344
      %v359 = vpack.c.b16 %v347, %v345
      %v360 = vpack.c.b16 %v350, %v348
      %v361 = vpack.c.b16 %v351, %v349
      %v362 = vpack.c.b16 %v354, %v352
      %v363 = vpack.c.b16 %v355, %v353
      %v440 = vunpack.c.l.b16 %v242
      %v441 = vunpack.c.h.b16 %v242
      %v442 = vunpack.c.l.b16 %v243
      %v443 = vunpack.c.h.b16 %v243
      %v444 = vunpack.c.l.b16 %v244
      %v445 = vunpack.c.h.b16 %v244
      %v446 = vunpack.c.l.b16 %v245
      %v447 = vunpack.c.h.b16 %v245
      %v448 = vunpack.c.l.b16 %v246
      %v449 = vunpack.c.h.b16 %v246
      %v450 = vunpack.c.l.b16 %v247
      %v451 = vunpack.c.h.b16 %v247
      %v452 = vunpack.c.l.b16 %v248
      %v453 = vunpack.c.h.b16 %v248
      %v454 = vunpack.c.l.b16 %v249
      %v455 = vunpack.c.h.b16 %v249
      %v456 = vunpack.c.l.b16 %v250
      %v457 = vunpack.c.h.b16 %v250
      %v458 = vunpack.c.l.b16 %v251
      %v459 = vunpack.c.h.b16 %v251
      %v460 = vunpack.c.l.b16 %v252
      %v461 = vunpack.c.h.b16 %v252
      %v462 = vunpack.c.l.b16 %v253
      %v463 = vunpack.c.h.b16 %v253
      %v464 = vunpack.c.l.b16 %v254
      %v465 = vunpack.c.h.b16 %v254
      %v466 = vunpack.c.l.b16 %v255
      %v467 = vunpack.c.h.b16 %v255
      %v468 = vunpack.c.l.b16 %v256
      %v469 = vunpack.c.h.b16 %v256
      %v470 = vunpack.c.l.b16 %v257
      %v471 = vunpack.c.h.b16 %v257
      %v472 = vunpack.c.l.b16 %v258
      %v473 = vunpack.c.h.b16 %v258
      %v474 = vunpack.c.l.b16 %v259
      %v475 = vunpack.c.h.b16 %v259
      %v476 = vunpack.c.l.b16 %v260
      %v477 = vunpack.c.h.b16 %v260
      %v478 = vunpack.c.l.b16 %v261
      %v479 = vunpack.c.h.b16 %v261
      %v480 = vunpack.c.l.b16 %v262
      %v481 = vunpack.c.h.b16 %v262
      %v482 = vunpack.c.l.b16 %v263
      %v483 = vunpack.c.h.b16 %v263
      %v484 = vunpack.c.l.b16 %v264
      %v485 = vunpack.c.h.b16 %v264
      %v486 = vunpack.c.l.b16 %v265
      %v487 = vunpack.c.h.b16 %v265
      %v488 = vunpack.c.l.b16 %v266
      %v489 = vunpack.c.h.b16 %v266
      %v490 = vunpack.c.l.b16 %v267
      %v491 = vunpack.c.h.b16 %v267
      %v492 = vunpack.c.l.b16 %v268
      %v493 = vunpack.c.h.b16 %v268
      %v494 = vunpack.c.l.b16 %v269
      %v495 = vunpack.c.h.b16 %v269
      %v496 = vunpack.c.l.b16 %v270
      %v497 = vunpack.c.h.b16 %v270
      %v498 = vunpack.c.l.b16 %v271
      %v499 = vunpack.c.h.b16 %v271
      %v500 = vunpack.c.l.b16 %v272
      %v501 = vunpack.c.h.b16 %v272
      %v502 = vunpack.c.l.b16 %v273
      %v503 = vunpack.c.h.b16 %v273
      %v504 = vunpack.c.l.b16 %v274
      %v505 = vunpack.c.h.b16 %v274
      %v506 = vunpack.c.l.b16 %v275
      %v507 = vunpack.c.h.b16 %v275
      %v508 = vunpack.c.l.b16 %v276
      %v509 = vunpack.c.h.b16 %v276
      %v510 = vunpack.c.l.b16 %v277
      %v511 = vunpack.c.h.b16 %v277
      %v512 = vunpack.c.l.b16 %v278
      %v513 = vunpack.c.h.b16 %v278
      %v514 = vunpack.c.l.b16 %v279
      %v515 = vunpack.c.h.b16 %v279
      %v516 = vunpack.c.l.b16 %v280
      %v517 = vunpack.c.h.b16 %v280
      %v518 = vunpack.c.l.b16 %v281
      %v519 = vunpack.c.h.b16 %v281
      %v520 = vunpack.c.l.b16 %v282
      %v521 = vunpack.c.h.b16 %v282
      %v522 = vunpack.c.l.b16 %v283
      %v523 = vunpack.c.h.b16 %v283
      %v524 = vunpack.c.l.b16 %v284
      %v525 = vunpack.c.h.b16 %v284
      %v526 = vunpack.c.l.b16 %v285
      %v527 = vunpack.c.h.b16 %v285
      %v528 = vunpack.c.l.b16 %v286
      %v529 = vunpack.c.h.b16 %v286
      %v530 = vunpack.c.l.b16 %v287
      %v531 = vunpack.c.h.b16 %v287
      %v532 = vunpack.c.l.b16 %v288
      %v533 = vunpack.c.h.b16 %v288
      %v534 = vunpack.c.l.b16 %v289
      %v535 = vunpack.c.h.b16 %v289
      %v536 = vunpack.c.l.b16 %v290
      %v537 = vunpack.c.h.b16 %v290
      %v538 = vunpack.c.l.b16 %v291
      %v539 = vunpack.c.h.b16 %v291
      %v540 = vunpack.c.l.b16 %v292
      %v541 = vunpack.c.h.b16 %v292
      %v542 = vunpack.c.l.b16 %v293
      %v543 = vunpack.c.h.b16 %v293
      %v544 = vunpack.c.l.b16 %v294
      %v545 = vunpack.c.h.b16 %v294
      %v546 = vunpack.c.l.b16 %v295
      %v547 = vunpack.c.h.b16 %v295
      %v548 = vunpack.c.l.b16 %v296
      %v549 = vunpack.c.h.b16 %v296
      %v550 = vunpack.c.l.b16 %v297
      %v551 = vunpack.c.h.b16 %v297
      %v552 = vunpack.c.l.b16 %v298
      %v553 = vunpack.c.h.b16 %v298
      %v554 = vunpack.c.l.b16 %v299
      %v555 = vunpack.c.h.b16 %v299
      %v556 = vunpack.c.l.b16 %v300
      %v557 = vunpack.c.h.b16 %v300
      %v558 = vunpack.c.l.b16 %v301
      %v559 = vunpack.c.h.b16 %v301
      %v560 = vunpack.c.l.b16 %v302
      %v561 = vunpack.c.h.b16 %v302
      %v562 = vunpack.c.l.b16 %v303
      %v563 = vunpack.c.h.b16 %v303
      %v564 = vunpack.c.l.b16 %v304
      %v565 = vunpack.c.h.b16 %v304
      %v566 = vunpack.c.l.b16 %v305
      %v567 = vunpack.c.h.b16 %v305
      %v568 = vunpack.c.l.b16 %v306
      %v569 = vunpack.c.h.b16 %v306
      %v570 = vunpack.c.l.b16 %v307
      %v571 = vunpack.c.h.b16 %v307
      %v572 = vunpack.c.l.b16 %v308
      %v573 = vunpack.c.h.b16 %v308
      %v574 = vunpack.c.l.b16 %v309
      %v575 = vunpack.c.h.b16 %v309
      %v576 = vunpack.c.l.b16 %v310
      %v577 = vunpack.c.h.b16 %v310
      %v578 = vunpack.c.l.b16 %v311
      %v579 = vunpack.c.h.b16 %v311
      %v580 = vunpack.c.l.b16 %v312
      %v581 = vunpack.c.h.b16 %v312
      %v582 = vunpack.c.l.b16 %v313
      %v583 = vunpack.c.h.b16 %v313
      %v584 = vpack.c.b16 %v448, %v440
      %v585 = vpack.c.b16 %v449, %v441
      %v586 = vpack.c.b16 %v450, %v442
      %v587 = vpack.c.b16 %v451, %v443
      %v588 = vpack.c.b16 %v452, %v444
      %v589 = vpack.c.b16 %v453, %v445
      %v590 = vpack.c.b16 %v454, %v446
      %v591 = vpack.c.b16 %v455, %v447
      %v592 = vpack.c.b16 %v464, %v456
      %v593 = vpack.c.b16 %v465, %v457
      %v594 = vpack.c.b16 %v466, %v458
      %v595 = vpack.c.b16 %v467, %v459
      %v596 = vpack.c.b16 %v468, %v460
      %v597 = vpack.c.b16 %v469, %v461
      %v598 = vpack.c.b16 %v470, %v462
      %v599 = vpack.c.b16 %v471, %v463
      %v600 = vpack.c.b16 %v480, %v472
      %v601 = vpack.c.b16 %v481, %v473
      %v602 = vpack.c.b16 %v482, %v474
      %v603 = vpack.c.b16 %v483, %v475
      %v604 = vpack.c.b16 %v484, %v476
      %v605 = vpack.c.b16 %v485, %v477
      %v606 = vpack.c.b16 %v486, %v478
      %v607 = vpack.c.b16 %v487, %v479
      %v608 = vpack.c.b16 %v496, %v488
      %v609 = vpack.c.b16 %v497, %v489
      %v610 = vpack.c.b16 %v498, %v490
      %v611 = vpack.c.b16 %v499, %v491
      %v612 = vpack.c.b16 %v500, %v492
      %v613 = vpack.c.b16 %v501, %v493
      %v614 = vpack.c.b16 %v502, %v494
      %v615 = vpack.c.b16 %v503, %v495
      %v616 = vpack.c.b16 %v512, %v504
      %v617 = vpack.c.b16 %v513, %v505
      %v618 = vpack.c.b16 %v514, %v506
      %v619 = vpack.c.b16 %v515, %v507
      %v620 = vpack.c.b16 %v516, %v508
      %v621 = vpack.c.b16 %v517, %v509
      %v622 = vpack.c.b16 %v518, %v510
      %v623 = vpack.c.b16 %v519, %v511
      %v624 = vpack.c.b16 %v528, %v520
      %v625 = vpack.c.b16 %v529, %v521
      %v626 = vpack.c.b16 %v530, %v522
      %v627 = vpack.c.b16 %v531, %v523
      %v628 = vpack.c.b16 %v532, %v524
      %v629 = vpack.c.b16 %v533, %v525
      %v630 = vpack.c.b16 %v534, %v526
      %v631 = vpack.c.b16 %v535, %v527
      %v632 = vpack.c.b16 %v544, %v536
      %v633 = vpack.c.b16 %v545, %v537
      %v634 = vpack.c.b16 %v546, %v538
      %v635 = vpack.c.b16 %v547, %v539
      %v636 = vpack.c.b16 %v548, %v540
      %v637 = vpack.c.b16 %v549, %v541
      %v638 = vpack.c.b16 %v550, %v542
      %v639 = vpack.c.b16 %v551, %v543
      %v640 = vpack.c.b16 %v560, %v552
      %v641 = vpack.c.b16 %v561, %v553
      %v642 = vpack.c.b16 %v562, %v554
      %v643 = vpack.c.b16 %v563, %v555
      %v644 = vpack.c.b16 %v564, %v556
      %v645 = vpack.c.b16 %v565, %v557
      %v646 = vpack.c.b16 %v566, %v558
      %v647 = vpack.c.b16 %v567, %v559
      %v648 = vpack.c.b16 %v576, %v568
      %v649 = vpack.c.b16 %v577, %v569
      %v650 = vpack.c.b16 %v578, %v570
      %v651 = vpack.c.b16 %v579, %v571
      %v652 = vpack.c.b16 %v580, %v572
      %v653 = vpack.c.b16 %v581, %v573
      %v654 = vpack.c.b16 %v582, %v574
      %v655 = vpack.c.b16 %v583, %v575
      %vm728 = vcmask 130048
      %v730 = vsel %vm728, %v357, 0
      %v733 = vsel %vm728, %v359, 0
      %v736 = vsel %vm728, %v361, 0
      %v739 = vsel %vm728, %v363, 0
      %741 = vmatpush.bf16.msra.mxu0 %v640
      %742 = vmatpush.bf16.msra.mxu0 %v632
      %743 = vmatpush.bf16.msra.mxu0 %v624
      %744 = vmatpush.bf16.msra.mxu0 %v616
      %745 = vmatpush.bf16.msra.mxu0 %v608
      %746 = vmatpush.bf16.msra.mxu0 %v600
      %747 = vmatpush.bf16.msra.mxu0 %v592
      %748 = vmatpush.bf16.msra.mxu0 %v584
      %749 = vmatmul.bf16.gmra.mxu0 %v356
      %v750 = vpop.f32.mrf.mxu0
      %v751 = vadd.f32 %v316, %v750
      %v752 = vpop.f32.mrf.mxu0
      %v753 = vadd.f32 %v316, %v752
      %754 = vmatmul.bf16.gmra.mxu0 %v358
      %v755 = vpop.f32.mrf.mxu0
      %v756 = vadd.f32 %v316, %v755
      %v757 = vpop.f32.mrf.mxu0
      %v758 = vadd.f32 %v316, %v757
      %759 = vmatmul.bf16.gmra.mxu0 %v360
      %v760 = vpop.f32.mrf.mxu0
      %v761 = vadd.f32 %v316, %v760
      %v762 = vpop.f32.mrf.mxu0
      %v763 = vadd.f32 %v316, %v762
      %764 = vmatmul.bf16.gmra.mxu0 %v362
      %v765 = vpop.f32.mrf.mxu0
      %v766 = vadd.f32 %v316, %v765
      %v767 = vpop.f32.mrf.mxu0
      %v768 = vadd.f32 %v316, %v767
      %769 = vdwg.mxu0
      %770 = vmatpush.bf16.msra.mxu0 0
      %771 = vmatpush.bf16.msra.mxu0 0
      %772 = vmatpush.bf16.msra.mxu0 0
      %773 = vmatpush.bf16.msra.mxu0 0
      %774 = vmatpush.bf16.msra.mxu0 0
      %775 = vmatpush.bf16.msra.mxu0 0
      %776 = vmatpush.bf16.msra.mxu0 0
      %777 = vmatpush.bf16.msra.mxu0 %v648
      %778 = vmatmul.bf16.gmra.mxu0 %v730
      %v779 = vpop.f32.mrf.mxu0
      %v780 = vadd.f32 %v751, %v779
      %v781 = vpop.f32.mrf.mxu0
      %v782 = vadd.f32 %v753, %v781
      %783 = vmatmul.bf16.gmra.mxu0 %v733
      %v784 = vpop.f32.mrf.mxu0
      %v785 = vadd.f32 %v756, %v784
      %v786 = vpop.f32.mrf.mxu0
      %v787 = vadd.f32 %v758, %v786
      %788 = vmatmul.bf16.gmra.mxu0 %v736
      %v789 = vpop.f32.mrf.mxu0
      %v790 = vadd.f32 %v761, %v789
      %v791 = vpop.f32.mrf.mxu0
      %v792 = vadd.f32 %v763, %v791
      %793 = vmatmul.bf16.gmra.mxu0 %v739
      %v794 = vpop.f32.mrf.mxu0
      %v795 = vadd.f32 %v766, %v794
      %v796 = vpop.f32.mrf.mxu0
      %v797 = vadd.f32 %v768, %v796
      %798 = vdwg.mxu0
      %799 = vmatpush.bf16.msra.mxu0 %v641
      %800 = vmatpush.bf16.msra.mxu0 %v633
      %801 = vmatpush.bf16.msra.mxu0 %v625
      %802 = vmatpush.bf16.msra.mxu0 %v617
      %803 = vmatpush.bf16.msra.mxu0 %v609
      %804 = vmatpush.bf16.msra.mxu0 %v601
      %805 = vmatpush.bf16.msra.mxu0 %v593
      %806 = vmatpush.bf16.msra.mxu0 %v585
      %807 = vmatmul.bf16.gmra.mxu0 %v356
      %v808 = vpop.f32.mrf.mxu0
      %v809 = vadd.f32 %v317, %v808
      %v810 = vpop.f32.mrf.mxu0
      %v811 = vadd.f32 %v317, %v810
      %812 = vmatmul.bf16.gmra.mxu0 %v358
      %v813 = vpop.f32.mrf.mxu0
      %v814 = vadd.f32 %v317, %v813
      %v815 = vpop.f32.mrf.mxu0
      %v816 = vadd.f32 %v317, %v815
      %817 = vmatmul.bf16.gmra.mxu0 %v360
      %v818 = vpop.f32.mrf.mxu0
      %v819 = vadd.f32 %v317, %v818
      %v820 = vpop.f32.mrf.mxu0
      %v821 = vadd.f32 %v317, %v820
      %822 = vmatmul.bf16.gmra.mxu0 %v362
      %v823 = vpop.f32.mrf.mxu0
      %v824 = vadd.f32 %v317, %v823
      %v825 = vpop.f32.mrf.mxu0
      %v826 = vadd.f32 %v317, %v825
      %827 = vdwg.mxu0
      %828 = vmatpush.bf16.msra.mxu0 0
      %829 = vmatpush.bf16.msra.mxu0 0
      %830 = vmatpush.bf16.msra.mxu0 0
      %831 = vmatpush.bf16.msra.mxu0 0
      %832 = vmatpush.bf16.msra.mxu0 0
      %833 = vmatpush.bf16.msra.mxu0 0
      %834 = vmatpush.bf16.msra.mxu0 0
      %835 = vmatpush.bf16.msra.mxu0 %v649
      %836 = vmatmul.bf16.gmra.mxu0 %v730
      %v837 = vpop.f32.mrf.mxu0
      %v838 = vadd.f32 %v809, %v837
      %v839 = vpop.f32.mrf.mxu0
      %v840 = vadd.f32 %v811, %v839
      %841 = vmatmul.bf16.gmra.mxu0 %v733
      %v842 = vpop.f32.mrf.mxu0
      %v843 = vadd.f32 %v814, %v842
      %v844 = vpop.f32.mrf.mxu0
      %v845 = vadd.f32 %v816, %v844
      %846 = vmatmul.bf16.gmra.mxu0 %v736
      %v847 = vpop.f32.mrf.mxu0
      %v848 = vadd.f32 %v819, %v847
      %v849 = vpop.f32.mrf.mxu0
      %v850 = vadd.f32 %v821, %v849
      %851 = vmatmul.bf16.gmra.mxu0 %v739
      %v852 = vpop.f32.mrf.mxu0
      %v853 = vadd.f32 %v824, %v852
      %v854 = vpop.f32.mrf.mxu0
      %v855 = vadd.f32 %v826, %v854
      %856 = vdwg.mxu0
      %857 = vmatpush.bf16.msra.mxu0 %v642
      %858 = vmatpush.bf16.msra.mxu0 %v634
      %859 = vmatpush.bf16.msra.mxu0 %v626
      %860 = vmatpush.bf16.msra.mxu0 %v618
      %861 = vmatpush.bf16.msra.mxu0 %v610
      %862 = vmatpush.bf16.msra.mxu0 %v602
      %863 = vmatpush.bf16.msra.mxu0 %v594
      %864 = vmatpush.bf16.msra.mxu0 %v586
      %865 = vmatmul.bf16.gmra.mxu0 %v356
      %v866 = vpop.f32.mrf.mxu0
      %v867 = vadd.f32 %v318, %v866
      %v868 = vpop.f32.mrf.mxu0
      %v869 = vadd.f32 %v318, %v868
      %870 = vmatmul.bf16.gmra.mxu0 %v358
      %v871 = vpop.f32.mrf.mxu0
      %v872 = vadd.f32 %v318, %v871
      %v873 = vpop.f32.mrf.mxu0
      %v874 = vadd.f32 %v318, %v873
      %875 = vmatmul.bf16.gmra.mxu0 %v360
      %v876 = vpop.f32.mrf.mxu0
      %v877 = vadd.f32 %v318, %v876
      %v878 = vpop.f32.mrf.mxu0
      %v879 = vadd.f32 %v318, %v878
      %880 = vmatmul.bf16.gmra.mxu0 %v362
      %v881 = vpop.f32.mrf.mxu0
      %v882 = vadd.f32 %v318, %v881
      %v883 = vpop.f32.mrf.mxu0
      %v884 = vadd.f32 %v318, %v883
      %885 = vdwg.mxu0
      %886 = vmatpush.bf16.msra.mxu0 0
      %887 = vmatpush.bf16.msra.mxu0 0
      %888 = vmatpush.bf16.msra.mxu0 0
      %889 = vmatpush.bf16.msra.mxu0 0
      %890 = vmatpush.bf16.msra.mxu0 0
      %891 = vmatpush.bf16.msra.mxu0 0
      %892 = vmatpush.bf16.msra.mxu0 0
      %893 = vmatpush.bf16.msra.mxu0 %v650
      %894 = vmatmul.bf16.gmra.mxu0 %v730
      %v895 = vpop.f32.mrf.mxu0
      %v896 = vadd.f32 %v867, %v895
      %v897 = vpop.f32.mrf.mxu0
      %v898 = vadd.f32 %v869, %v897
      %899 = vmatmul.bf16.gmra.mxu0 %v733
      %v900 = vpop.f32.mrf.mxu0
      %v901 = vadd.f32 %v872, %v900
      %v902 = vpop.f32.mrf.mxu0
      %v903 = vadd.f32 %v874, %v902
      %904 = vmatmul.bf16.gmra.mxu0 %v736
      %v905 = vpop.f32.mrf.mxu0
      %v906 = vadd.f32 %v877, %v905
      %v907 = vpop.f32.mrf.mxu0
      %v908 = vadd.f32 %v879, %v907
      %909 = vmatmul.bf16.gmra.mxu0 %v739
      %v910 = vpop.f32.mrf.mxu0
      %v911 = vadd.f32 %v882, %v910
      %v912 = vpop.f32.mrf.mxu0
      %v913 = vadd.f32 %v884, %v912
      %914 = vdwg.mxu0
      %915 = vmatpush.bf16.msra.mxu0 %v643
      %916 = vmatpush.bf16.msra.mxu0 %v635
      %917 = vmatpush.bf16.msra.mxu0 %v627
      %918 = vmatpush.bf16.msra.mxu0 %v619
      %919 = vmatpush.bf16.msra.mxu0 %v611
      %920 = vmatpush.bf16.msra.mxu0 %v603
      %921 = vmatpush.bf16.msra.mxu0 %v595
      %922 = vmatpush.bf16.msra.mxu0 %v587
      %923 = vmatmul.bf16.gmra.mxu0 %v356
      %v924 = vpop.f32.mrf.mxu0
      %v925 = vadd.f32 %v319, %v924
      %v926 = vpop.f32.mrf.mxu0
      %v927 = vadd.f32 %v319, %v926
      %928 = vmatmul.bf16.gmra.mxu0 %v358
      %v929 = vpop.f32.mrf.mxu0
      %v930 = vadd.f32 %v319, %v929
      %v931 = vpop.f32.mrf.mxu0
      %v932 = vadd.f32 %v319, %v931
      %933 = vmatmul.bf16.gmra.mxu0 %v360
      %v934 = vpop.f32.mrf.mxu0
      %v935 = vadd.f32 %v319, %v934
      %v936 = vpop.f32.mrf.mxu0
      %v937 = vadd.f32 %v319, %v936
      %938 = vmatmul.bf16.gmra.mxu0 %v362
      %v939 = vpop.f32.mrf.mxu0
      %v940 = vadd.f32 %v319, %v939
      %v941 = vpop.f32.mrf.mxu0
      %v942 = vadd.f32 %v319, %v941
      %943 = vdwg.mxu0
      %944 = vmatpush.bf16.msra.mxu0 0
      %945 = vmatpush.bf16.msra.mxu0 0
      %946 = vmatpush.bf16.msra.mxu0 0
      %947 = vmatpush.bf16.msra.mxu0 0
      %948 = vmatpush.bf16.msra.mxu0 0
      %949 = vmatpush.bf16.msra.mxu0 0
      %950 = vmatpush.bf16.msra.mxu0 0
      %951 = vmatpush.bf16.msra.mxu0 %v651
      %952 = vmatmul.bf16.gmra.mxu0 %v730
      %v953 = vpop.f32.mrf.mxu0
      %v954 = vadd.f32 %v925, %v953
      %v955 = vpop.f32.mrf.mxu0
      %v956 = vadd.f32 %v927, %v955
      %957 = vmatmul.bf16.gmra.mxu0 %v733
      %v958 = vpop.f32.mrf.mxu0
      %v959 = vadd.f32 %v930, %v958
      %v960 = vpop.f32.mrf.mxu0
      %v961 = vadd.f32 %v932, %v960
      %962 = vmatmul.bf16.gmra.mxu0 %v736
      %v963 = vpop.f32.mrf.mxu0
      %v964 = vadd.f32 %v935, %v963
      %v965 = vpop.f32.mrf.mxu0
      %v966 = vadd.f32 %v937, %v965
      %967 = vmatmul.bf16.gmra.mxu0 %v739
      %v968 = vpop.f32.mrf.mxu0
      %v969 = vadd.f32 %v940, %v968
      %v970 = vpop.f32.mrf.mxu0
      %v971 = vadd.f32 %v942, %v970
      %972 = vdwg.mxu0
      %973 = vmatpush.bf16.msra.mxu0 %v644
      %974 = vmatpush.bf16.msra.mxu0 %v636
      %975 = vmatpush.bf16.msra.mxu0 %v628
      %976 = vmatpush.bf16.msra.mxu0 %v620
      %977 = vmatpush.bf16.msra.mxu0 %v612
      %978 = vmatpush.bf16.msra.mxu0 %v604
      %979 = vmatpush.bf16.msra.mxu0 %v596
      %980 = vmatpush.bf16.msra.mxu0 %v588
      %981 = vmatmul.bf16.gmra.mxu0 %v356
      %v982 = vpop.f32.mrf.mxu0
      %v983 = vadd.f32 %v320, %v982
      %v984 = vpop.f32.mrf.mxu0
      %v985 = vadd.f32 %v320, %v984
      %986 = vmatmul.bf16.gmra.mxu0 %v358
      %v987 = vpop.f32.mrf.mxu0
      %v988 = vadd.f32 %v320, %v987
      %v989 = vpop.f32.mrf.mxu0
      %v990 = vadd.f32 %v320, %v989
      %991 = vmatmul.bf16.gmra.mxu0 %v360
      %v992 = vpop.f32.mrf.mxu0
      %v993 = vadd.f32 %v320, %v992
      %v994 = vpop.f32.mrf.mxu0
      %v995 = vadd.f32 %v320, %v994
      %996 = vmatmul.bf16.gmra.mxu0 %v362
      %v997 = vpop.f32.mrf.mxu0
      %v998 = vadd.f32 %v320, %v997
      %v999 = vpop.f32.mrf.mxu0
      %v1000 = vadd.f32 %v320, %v999
      %1001 = vdwg.mxu0
      %1002 = vmatpush.bf16.msra.mxu0 0
      %1003 = vmatpush.bf16.msra.mxu0 0
      %1004 = vmatpush.bf16.msra.mxu0 0
      %1005 = vmatpush.bf16.msra.mxu0 0
      %1006 = vmatpush.bf16.msra.mxu0 0
      %1007 = vmatpush.bf16.msra.mxu0 0
      %1008 = vmatpush.bf16.msra.mxu0 0
      %1009 = vmatpush.bf16.msra.mxu0 %v652
      %1010 = vmatmul.bf16.gmra.mxu0 %v730
      %v1011 = vpop.f32.mrf.mxu0
      %v1012 = vadd.f32 %v983, %v1011
      %v1013 = vpop.f32.mrf.mxu0
      %v1014 = vadd.f32 %v985, %v1013
      %1015 = vmatmul.bf16.gmra.mxu0 %v733
      %v1016 = vpop.f32.mrf.mxu0
      %v1017 = vadd.f32 %v988, %v1016
      %v1018 = vpop.f32.mrf.mxu0
      %v1019 = vadd.f32 %v990, %v1018
      %1020 = vmatmul.bf16.gmra.mxu0 %v736
      %v1021 = vpop.f32.mrf.mxu0
      %v1022 = vadd.f32 %v993, %v1021
      %v1023 = vpop.f32.mrf.mxu0
      %v1024 = vadd.f32 %v995, %v1023
      %1025 = vmatmul.bf16.gmra.mxu0 %v739
      %v1026 = vpop.f32.mrf.mxu0
      %v1027 = vadd.f32 %v998, %v1026
      %v1028 = vpop.f32.mrf.mxu0
      %v1029 = vadd.f32 %v1000, %v1028
      %1030 = vdwg.mxu0
      %1031 = vmatpush.bf16.msra.mxu0 %v645
      %1032 = vmatpush.bf16.msra.mxu0 %v637
      %1033 = vmatpush.bf16.msra.mxu0 %v629
      %1034 = vmatpush.bf16.msra.mxu0 %v621
      %1035 = vmatpush.bf16.msra.mxu0 %v613
      %1036 = vmatpush.bf16.msra.mxu0 %v605
      %1037 = vmatpush.bf16.msra.mxu0 %v597
      %1038 = vmatpush.bf16.msra.mxu0 %v589
      %1039 = vmatmul.bf16.gmra.mxu0 %v356
      %v1040 = vpop.f32.mrf.mxu0
      %v1041 = vadd.f32 %v321, %v1040
      %v1042 = vpop.f32.mrf.mxu0
      %v1043 = vadd.f32 %v321, %v1042
      %1044 = vmatmul.bf16.gmra.mxu0 %v358
      %v1045 = vpop.f32.mrf.mxu0
      %v1046 = vadd.f32 %v321, %v1045
      %v1047 = vpop.f32.mrf.mxu0
      %v1048 = vadd.f32 %v321, %v1047
      %1049 = vmatmul.bf16.gmra.mxu0 %v360
      %v1050 = vpop.f32.mrf.mxu0
      %v1051 = vadd.f32 %v321, %v1050
      %v1052 = vpop.f32.mrf.mxu0
      %v1053 = vadd.f32 %v321, %v1052
      %1054 = vmatmul.bf16.gmra.mxu0 %v362
      %v1055 = vpop.f32.mrf.mxu0
      %v1056 = vadd.f32 %v321, %v1055
      %v1057 = vpop.f32.mrf.mxu0
      %v1058 = vadd.f32 %v321, %v1057
      %1059 = vdwg.mxu0
      %1060 = vmatpush.bf16.msra.mxu0 0
      %1061 = vmatpush.bf16.msra.mxu0 0
      %1062 = vmatpush.bf16.msra.mxu0 0
      %1063 = vmatpush.bf16.msra.mxu0 0
      %1064 = vmatpush.bf16.msra.mxu0 0
      %1065 = vmatpush.bf16.msra.mxu0 0
      %1066 = vmatpush.bf16.msra.mxu0 0
      %1067 = vmatpush.bf16.msra.mxu0 %v653
      %1068 = vmatmul.bf16.gmra.mxu0 %v730
      %v1069 = vpop.f32.mrf.mxu0
      %v1070 = vadd.f32 %v1041, %v1069
      %v1071 = vpop.f32.mrf.mxu0
      %v1072 = vadd.f32 %v1043, %v1071
      %1073 = vmatmul.bf16.gmra.mxu0 %v733
      %v1074 = vpop.f32.mrf.mxu0
      %v1075 = vadd.f32 %v1046, %v1074
      %v1076 = vpop.f32.mrf.mxu0
      %v1077 = vadd.f32 %v1048, %v1076
      %1078 = vmatmul.bf16.gmra.mxu0 %v736
      %v1079 = vpop.f32.mrf.mxu0
      %v1080 = vadd.f32 %v1051, %v1079
      %v1081 = vpop.f32.mrf.mxu0
      %v1082 = vadd.f32 %v1053, %v1081
      %1083 = vmatmul.bf16.gmra.mxu0 %v739
      %v1084 = vpop.f32.mrf.mxu0
      %v1085 = vadd.f32 %v1056, %v1084
      %v1086 = vpop.f32.mrf.mxu0
      %v1087 = vadd.f32 %v1058, %v1086
      %1088 = vdwg.mxu0
      %1089 = vmatpush.bf16.msra.mxu0 %v646
      %1090 = vmatpush.bf16.msra.mxu0 %v638
      %1091 = vmatpush.bf16.msra.mxu0 %v630
      %1092 = vmatpush.bf16.msra.mxu0 %v622
      %1093 = vmatpush.bf16.msra.mxu0 %v614
      %1094 = vmatpush.bf16.msra.mxu0 %v606
      %1095 = vmatpush.bf16.msra.mxu0 %v598
      %1096 = vmatpush.bf16.msra.mxu0 %v590
      %1097 = vmatmul.bf16.gmra.mxu0 %v356
      %v1098 = vpop.f32.mrf.mxu0
      %v1099 = vadd.f32 %v322, %v1098
      %v1100 = vpop.f32.mrf.mxu0
      %v1101 = vadd.f32 %v322, %v1100
      %1102 = vmatmul.bf16.gmra.mxu0 %v358
      %v1103 = vpop.f32.mrf.mxu0
      %v1104 = vadd.f32 %v322, %v1103
      %v1105 = vpop.f32.mrf.mxu0
      %v1106 = vadd.f32 %v322, %v1105
      %1107 = vmatmul.bf16.gmra.mxu0 %v360
      %v1108 = vpop.f32.mrf.mxu0
      %v1109 = vadd.f32 %v322, %v1108
      %v1110 = vpop.f32.mrf.mxu0
      %v1111 = vadd.f32 %v322, %v1110
      %1112 = vmatmul.bf16.gmra.mxu0 %v362
      %v1113 = vpop.f32.mrf.mxu0
      %v1114 = vadd.f32 %v322, %v1113
      %v1115 = vpop.f32.mrf.mxu0
      %v1116 = vadd.f32 %v322, %v1115
      %1117 = vdwg.mxu0
      %1118 = vmatpush.bf16.msra.mxu0 0
      %1119 = vmatpush.bf16.msra.mxu0 0
      %1120 = vmatpush.bf16.msra.mxu0 0
      %1121 = vmatpush.bf16.msra.mxu0 0
      %1122 = vmatpush.bf16.msra.mxu0 0
      %1123 = vmatpush.bf16.msra.mxu0 0
      %1124 = vmatpush.bf16.msra.mxu0 0
      %1125 = vmatpush.bf16.msra.mxu0 %v654
      %1126 = vmatmul.bf16.gmra.mxu0 %v730
      %v1127 = vpop.f32.mrf.mxu0
      %v1128 = vadd.f32 %v1099, %v1127
      %v1129 = vpop.f32.mrf.mxu0
      %v1130 = vadd.f32 %v1101, %v1129
      %1131 = vmatmul.bf16.gmra.mxu0 %v733
      %v1132 = vpop.f32.mrf.mxu0
      %v1133 = vadd.f32 %v1104, %v1132
      %v1134 = vpop.f32.mrf.mxu0
      %v1135 = vadd.f32 %v1106, %v1134
      %1136 = vmatmul.bf16.gmra.mxu0 %v736
      %v1137 = vpop.f32.mrf.mxu0
      %v1138 = vadd.f32 %v1109, %v1137
      %v1139 = vpop.f32.mrf.mxu0
      %v1140 = vadd.f32 %v1111, %v1139
      %1141 = vmatmul.bf16.gmra.mxu0 %v739
      %v1142 = vpop.f32.mrf.mxu0
      %v1143 = vadd.f32 %v1114, %v1142
      %v1144 = vpop.f32.mrf.mxu0
      %v1145 = vadd.f32 %v1116, %v1144
      %1146 = vdwg.mxu0
      %1147 = vmatpush.bf16.msra.mxu0 %v647
      %1148 = vmatpush.bf16.msra.mxu0 %v639
      %1149 = vmatpush.bf16.msra.mxu0 %v631
      %1150 = vmatpush.bf16.msra.mxu0 %v623
      %1151 = vmatpush.bf16.msra.mxu0 %v615
      %1152 = vmatpush.bf16.msra.mxu0 %v607
      %1153 = vmatpush.bf16.msra.mxu0 %v599
      %1154 = vmatpush.bf16.msra.mxu0 %v591
      %1155 = vmatmul.bf16.gmra.mxu0 %v356
      %v1156 = vpop.f32.mrf.mxu0
      %v1157 = vadd.f32 %v323, %v1156
      %v1158 = vpop.f32.mrf.mxu0
      %v1159 = vadd.f32 %v323, %v1158
      %1160 = vmatmul.bf16.gmra.mxu0 %v358
      %v1161 = vpop.f32.mrf.mxu0
      %v1162 = vadd.f32 %v323, %v1161
      %v1163 = vpop.f32.mrf.mxu0
      %v1164 = vadd.f32 %v323, %v1163
      %1165 = vmatmul.bf16.gmra.mxu0 %v360
      %v1166 = vpop.f32.mrf.mxu0
      %v1167 = vadd.f32 %v323, %v1166
      %v1168 = vpop.f32.mrf.mxu0
      %v1169 = vadd.f32 %v323, %v1168
      %1170 = vmatmul.bf16.gmra.mxu0 %v362
      %v1171 = vpop.f32.mrf.mxu0
      %v1172 = vadd.f32 %v323, %v1171
      %v1173 = vpop.f32.mrf.mxu0
      %v1174 = vadd.f32 %v323, %v1173
      %1175 = vdwg.mxu0
      %1176 = vmatpush.bf16.msra.mxu0 0
      %1177 = vmatpush.bf16.msra.mxu0 0
      %1178 = vmatpush.bf16.msra.mxu0 0
      %1179 = vmatpush.bf16.msra.mxu0 0
      %1180 = vmatpush.bf16.msra.mxu0 0
      %1181 = vmatpush.bf16.msra.mxu0 0
      %1182 = vmatpush.bf16.msra.mxu0 0
      %1183 = vmatpush.bf16.msra.mxu0 %v655
      %1184 = vmatmul.bf16.gmra.mxu0 %v730
      %v1185 = vpop.f32.mrf.mxu0
      %v1186 = vadd.f32 %v1157, %v1185
      %v1187 = vpop.f32.mrf.mxu0
      %v1188 = vadd.f32 %v1159, %v1187
      %1189 = vmatmul.bf16.gmra.mxu0 %v733
      %v1190 = vpop.f32.mrf.mxu0
      %v1191 = vadd.f32 %v1162, %v1190
      %v1192 = vpop.f32.mrf.mxu0
      %v1193 = vadd.f32 %v1164, %v1192
      %1194 = vmatmul.bf16.gmra.mxu0 %v736
      %v1195 = vpop.f32.mrf.mxu0
      %v1196 = vadd.f32 %v1167, %v1195
      %v1197 = vpop.f32.mrf.mxu0
      %v1198 = vadd.f32 %v1169, %v1197
      %1199 = vmatmul.bf16.gmra.mxu0 %v739
      %v1200 = vpop.f32.mrf.mxu0
      %v1201 = vadd.f32 %v1172, %v1200
      %v1202 = vpop.f32.mrf.mxu0
      %v1203 = vadd.f32 %v1174, %v1202
      %1204 = vdwg.mxu0
      %v1205 = vmax.f32 %v780, 0.0
      %v1206 = vmax.f32 %v838, 0.0
      %v1207 = vmax.f32 %v896, 0.0
      %v1208 = vmax.f32 %v954, 0.0
      %v1209 = vmax.f32 %v782, 0.0
      %v1210 = vmax.f32 %v840, 0.0
      %v1211 = vmax.f32 %v898, 0.0
      %v1212 = vmax.f32 %v956, 0.0
      %v1213 = vmax.f32 %v785, 0.0
      %v1214 = vmax.f32 %v843, 0.0
      %v1215 = vmax.f32 %v901, 0.0
      %v1216 = vmax.f32 %v959, 0.0
      %v1217 = vmax.f32 %v787, 0.0
      %v1218 = vmax.f32 %v845, 0.0
      %v1219 = vmax.f32 %v903, 0.0
      %v1220 = vmax.f32 %v961, 0.0
      %v1221 = vmax.f32 %v790, 0.0
      %v1222 = vmax.f32 %v848, 0.0
      %v1223 = vmax.f32 %v906, 0.0
      %v1224 = vmax.f32 %v964, 0.0
      %v1225 = vmax.f32 %v792, 0.0
      %v1226 = vmax.f32 %v850, 0.0
      %v1227 = vmax.f32 %v908, 0.0
      %v1228 = vmax.f32 %v966, 0.0
      %v1229 = vmax.f32 %v795, 0.0
      %v1230 = vmax.f32 %v853, 0.0
      %v1231 = vmax.f32 %v911, 0.0
      %v1232 = vmax.f32 %v969, 0.0
      %v1233 = vmax.f32 %v797, 0.0
      %v1234 = vmax.f32 %v855, 0.0
      %v1235 = vmax.f32 %v913, 0.0
      %v1236 = vmax.f32 %v971, 0.0
      %v1237 = vadd.f32 %v1012, %v1205
      %v1238 = vadd.f32 %v1070, %v1206
      %v1239 = vadd.f32 %v1128, %v1207
      %v1240 = vadd.f32 %v1186, %v1208
      %v1241 = vadd.f32 %v1014, %v1209
      %v1242 = vadd.f32 %v1072, %v1210
      %v1243 = vadd.f32 %v1130, %v1211
      %v1244 = vadd.f32 %v1188, %v1212
      %v1245 = vadd.f32 %v1017, %v1213
      %v1246 = vadd.f32 %v1075, %v1214
      %v1247 = vadd.f32 %v1133, %v1215
      %v1248 = vadd.f32 %v1191, %v1216
      %v1249 = vadd.f32 %v1019, %v1217
      %v1250 = vadd.f32 %v1077, %v1218
      %v1251 = vadd.f32 %v1135, %v1219
      %v1252 = vadd.f32 %v1193, %v1220
      %v1253 = vadd.f32 %v1022, %v1221
      %v1254 = vadd.f32 %v1080, %v1222
      %v1255 = vadd.f32 %v1138, %v1223
      %v1256 = vadd.f32 %v1196, %v1224
      %v1257 = vadd.f32 %v1024, %v1225
      %v1258 = vadd.f32 %v1082, %v1226
      %v1259 = vadd.f32 %v1140, %v1227
      %v1260 = vadd.f32 %v1198, %v1228
      %v1261 = vadd.f32 %v1027, %v1229
      %v1262 = vadd.f32 %v1085, %v1230
      %v1263 = vadd.f32 %v1143, %v1231
      %v1264 = vadd.f32 %v1201, %v1232
      %v1265 = vadd.f32 %v1029, %v1233
      %v1266 = vadd.f32 %v1087, %v1234
      %v1267 = vadd.f32 %v1145, %v1235
      %v1268 = vadd.f32 %v1203, %v1236
      %v1269 = vmax.f32 %v1237, 0.0
      %v1270 = vmax.f32 %v1238, 0.0
      %v1271 = vmax.f32 %v1239, 0.0
      %v1272 = vmax.f32 %v1240, 0.0
      %v1273 = vmax.f32 %v1241, 0.0
      %v1274 = vmax.f32 %v1242, 0.0
      %v1275 = vmax.f32 %v1243, 0.0
      %v1276 = vmax.f32 %v1244, 0.0
      %v1277 = vmax.f32 %v1245, 0.0
      %v1278 = vmax.f32 %v1246, 0.0
      %v1279 = vmax.f32 %v1247, 0.0
      %v1280 = vmax.f32 %v1248, 0.0
      %v1281 = vmax.f32 %v1249, 0.0
      %v1282 = vmax.f32 %v1250, 0.0
      %v1283 = vmax.f32 %v1251, 0.0
      %v1284 = vmax.f32 %v1252, 0.0
      %v1285 = vmax.f32 %v1253, 0.0
      %v1286 = vmax.f32 %v1254, 0.0
      %v1287 = vmax.f32 %v1255, 0.0
      %v1288 = vmax.f32 %v1256, 0.0
      %v1289 = vmax.f32 %v1257, 0.0
      %v1290 = vmax.f32 %v1258, 0.0
      %v1291 = vmax.f32 %v1259, 0.0
      %v1292 = vmax.f32 %v1260, 0.0
      %v1293 = vmax.f32 %v1261, 0.0
      %v1294 = vmax.f32 %v1262, 0.0
      %v1295 = vmax.f32 %v1263, 0.0
      %v1296 = vmax.f32 %v1264, 0.0
      %v1297 = vmax.f32 %v1265, 0.0
      %v1298 = vmax.f32 %v1266, 0.0
      %v1299 = vmax.f32 %v1267, 0.0
      %v1300 = vmax.f32 %v1268, 0.0
      %v1301 = vrsqrt.pop %v1269
      %v1302 = vmul.f32 %v1301, %v1269
      %v1303 = vmul.f32 %v1302, %v1301
      %v1304 = vmul.f32 0.5, %v1303
      %v1305 = vsub.f32 1.5, %v1304
      %v1306 = vmul.f32 %v1301, %v1305
      %v1307 = vmul.f32 %v1269, %v1306
      %vm1308 = vcmp.eq.f32.partialorder %v1269, inf
      %v1309 = vsel %vm1308, %v1269, %v1307
      %vm1310 = vcmp.eq.f32.partialorder %v1269, 0.0
      %v1311 = vand.u32 %v1269, 2147483648
      %v1312 = vsel %vm1310, %v1311, %v1309
      %v1313 = vrsqrt.pop %v1270
      %v1314 = vmul.f32 %v1313, %v1270
      %v1315 = vmul.f32 %v1314, %v1313
      %v1316 = vmul.f32 0.5, %v1315
      %v1317 = vsub.f32 1.5, %v1316
      %v1318 = vmul.f32 %v1313, %v1317
      %v1319 = vmul.f32 %v1270, %v1318
      %vm1320 = vcmp.eq.f32.partialorder %v1270, inf
      %v1321 = vsel %vm1320, %v1270, %v1319
      %vm1322 = vcmp.eq.f32.partialorder %v1270, 0.0
      %v1323 = vand.u32 %v1270, 2147483648
      %v1324 = vsel %vm1322, %v1323, %v1321
      %v1325 = vrsqrt.pop %v1271
      %v1326 = vmul.f32 %v1325, %v1271
      %v1327 = vmul.f32 %v1326, %v1325
      %v1328 = vmul.f32 0.5, %v1327
      %v1329 = vsub.f32 1.5, %v1328
      %v1330 = vmul.f32 %v1325, %v1329
      %v1331 = vmul.f32 %v1271, %v1330
      %vm1332 = vcmp.eq.f32.partialorder %v1271, inf
      %v1333 = vsel %vm1332, %v1271, %v1331
      %vm1334 = vcmp.eq.f32.partialorder %v1271, 0.0
      %v1335 = vand.u32 %v1271, 2147483648
      %v1336 = vsel %vm1334, %v1335, %v1333
      %v1337 = vrsqrt.pop %v1272
      %v1338 = vmul.f32 %v1337, %v1272
      %v1339 = vmul.f32 %v1338, %v1337
      %v1340 = vmul.f32 0.5, %v1339
      %v1341 = vsub.f32 1.5, %v1340
      %v1342 = vmul.f32 %v1337, %v1341
      %v1343 = vmul.f32 %v1272, %v1342
      %vm1344 = vcmp.eq.f32.partialorder %v1272, inf
      %v1345 = vsel %vm1344, %v1272, %v1343
      %vm1346 = vcmp.eq.f32.partialorder %v1272, 0.0
      %v1347 = vand.u32 %v1272, 2147483648
      %v1348 = vsel %vm1346, %v1347, %v1345
      %v1349 = vrsqrt.pop %v1273
      %v1350 = vmul.f32 %v1349, %v1273
      %v1351 = vmul.f32 %v1350, %v1349
      %v1352 = vmul.f32 0.5, %v1351
      %v1353 = vsub.f32 1.5, %v1352
      %v1354 = vmul.f32 %v1349, %v1353
      %v1355 = vmul.f32 %v1273, %v1354
      %vm1356 = vcmp.eq.f32.partialorder %v1273, inf
      %v1357 = vsel %vm1356, %v1273, %v1355
      %vm1358 = vcmp.eq.f32.partialorder %v1273, 0.0
      %v1359 = vand.u32 %v1273, 2147483648
      %v1360 = vsel %vm1358, %v1359, %v1357
      %v1361 = vrsqrt.pop %v1274
      %v1362 = vmul.f32 %v1361, %v1274
      %v1363 = vmul.f32 %v1362, %v1361
      %v1364 = vmul.f32 0.5, %v1363
      %v1365 = vsub.f32 1.5, %v1364
      %v1366 = vmul.f32 %v1361, %v1365
      %v1367 = vmul.f32 %v1274, %v1366
      %vm1368 = vcmp.eq.f32.partialorder %v1274, inf
      %v1369 = vsel %vm1368, %v1274, %v1367
      %vm1370 = vcmp.eq.f32.partialorder %v1274, 0.0
      %v1371 = vand.u32 %v1274, 2147483648
      %v1372 = vsel %vm1370, %v1371, %v1369
      %v1373 = vrsqrt.pop %v1275
      %v1374 = vmul.f32 %v1373, %v1275
      %v1375 = vmul.f32 %v1374, %v1373
      %v1376 = vmul.f32 0.5, %v1375
      %v1377 = vsub.f32 1.5, %v1376
      %v1378 = vmul.f32 %v1373, %v1377
      %v1379 = vmul.f32 %v1275, %v1378
      %vm1380 = vcmp.eq.f32.partialorder %v1275, inf
      %v1381 = vsel %vm1380, %v1275, %v1379
      %vm1382 = vcmp.eq.f32.partialorder %v1275, 0.0
      %v1383 = vand.u32 %v1275, 2147483648
      %v1384 = vsel %vm1382, %v1383, %v1381
      %v1385 = vrsqrt.pop %v1276
      %v1386 = vmul.f32 %v1385, %v1276
      %v1387 = vmul.f32 %v1386, %v1385
      %v1388 = vmul.f32 0.5, %v1387
      %v1389 = vsub.f32 1.5, %v1388
      %v1390 = vmul.f32 %v1385, %v1389
      %v1391 = vmul.f32 %v1276, %v1390
      %vm1392 = vcmp.eq.f32.partialorder %v1276, inf
      %v1393 = vsel %vm1392, %v1276, %v1391
      %vm1394 = vcmp.eq.f32.partialorder %v1276, 0.0
      %v1395 = vand.u32 %v1276, 2147483648
      %v1396 = vsel %vm1394, %v1395, %v1393
      %v1397 = vrsqrt.pop %v1277
      %v1398 = vmul.f32 %v1397, %v1277
      %v1399 = vmul.f32 %v1398, %v1397
      %v1400 = vmul.f32 0.5, %v1399
      %v1401 = vsub.f32 1.5, %v1400
      %v1402 = vmul.f32 %v1397, %v1401
      %v1403 = vmul.f32 %v1277, %v1402
      %vm1404 = vcmp.eq.f32.partialorder %v1277, inf
      %v1405 = vsel %vm1404, %v1277, %v1403
      %vm1406 = vcmp.eq.f32.partialorder %v1277, 0.0
      %v1407 = vand.u32 %v1277, 2147483648
      %v1408 = vsel %vm1406, %v1407, %v1405
      %v1409 = vrsqrt.pop %v1278
      %v1410 = vmul.f32 %v1409, %v1278
      %v1411 = vmul.f32 %v1410, %v1409
      %v1412 = vmul.f32 0.5, %v1411
      %v1413 = vsub.f32 1.5, %v1412
      %v1414 = vmul.f32 %v1409, %v1413
      %v1415 = vmul.f32 %v1278, %v1414
      %vm1416 = vcmp.eq.f32.partialorder %v1278, inf
      %v1417 = vsel %vm1416, %v1278, %v1415
      %vm1418 = vcmp.eq.f32.partialorder %v1278, 0.0
      %v1419 = vand.u32 %v1278, 2147483648
      %v1420 = vsel %vm1418, %v1419, %v1417
      %v1421 = vrsqrt.pop %v1279
      %v1422 = vmul.f32 %v1421, %v1279
      %v1423 = vmul.f32 %v1422, %v1421
      %v1424 = vmul.f32 0.5, %v1423
      %v1425 = vsub.f32 1.5, %v1424
      %v1426 = vmul.f32 %v1421, %v1425
      %v1427 = vmul.f32 %v1279, %v1426
      %vm1428 = vcmp.eq.f32.partialorder %v1279, inf
      %v1429 = vsel %vm1428, %v1279, %v1427
      %vm1430 = vcmp.eq.f32.partialorder %v1279, 0.0
      %v1431 = vand.u32 %v1279, 2147483648
      %v1432 = vsel %vm1430, %v1431, %v1429
      %v1433 = vrsqrt.pop %v1280
      %v1434 = vmul.f32 %v1433, %v1280
      %v1435 = vmul.f32 %v1434, %v1433
      %v1436 = vmul.f32 0.5, %v1435
      %v1437 = vsub.f32 1.5, %v1436
      %v1438 = vmul.f32 %v1433, %v1437
      %v1439 = vmul.f32 %v1280, %v1438
      %vm1440 = vcmp.eq.f32.partialorder %v1280, inf
      %v1441 = vsel %vm1440, %v1280, %v1439
      %vm1442 = vcmp.eq.f32.partialorder %v1280, 0.0
      %v1443 = vand.u32 %v1280, 2147483648
      %v1444 = vsel %vm1442, %v1443, %v1441
      %v1445 = vrsqrt.pop %v1281
      %v1446 = vmul.f32 %v1445, %v1281
      %v1447 = vmul.f32 %v1446, %v1445
      %v1448 = vmul.f32 0.5, %v1447
      %v1449 = vsub.f32 1.5, %v1448
      %v1450 = vmul.f32 %v1445, %v1449
      %v1451 = vmul.f32 %v1281, %v1450
      %vm1452 = vcmp.eq.f32.partialorder %v1281, inf
      %v1453 = vsel %vm1452, %v1281, %v1451
      %vm1454 = vcmp.eq.f32.partialorder %v1281, 0.0
      %v1455 = vand.u32 %v1281, 2147483648
      %v1456 = vsel %vm1454, %v1455, %v1453
      %v1457 = vrsqrt.pop %v1282
      %v1458 = vmul.f32 %v1457, %v1282
      %v1459 = vmul.f32 %v1458, %v1457
      %v1460 = vmul.f32 0.5, %v1459
      %v1461 = vsub.f32 1.5, %v1460
      %v1462 = vmul.f32 %v1457, %v1461
      %v1463 = vmul.f32 %v1282, %v1462
      %vm1464 = vcmp.eq.f32.partialorder %v1282, inf
      %v1465 = vsel %vm1464, %v1282, %v1463
      %vm1466 = vcmp.eq.f32.partialorder %v1282, 0.0
      %v1467 = vand.u32 %v1282, 2147483648
      %v1468 = vsel %vm1466, %v1467, %v1465
      %v1469 = vrsqrt.pop %v1283
      %v1470 = vmul.f32 %v1469, %v1283
      %v1471 = vmul.f32 %v1470, %v1469
      %v1472 = vmul.f32 0.5, %v1471
      %v1473 = vsub.f32 1.5, %v1472
      %v1474 = vmul.f32 %v1469, %v1473
      %v1475 = vmul.f32 %v1283, %v1474
      %vm1476 = vcmp.eq.f32.partialorder %v1283, inf
      %v1477 = vsel %vm1476, %v1283, %v1475
      %vm1478 = vcmp.eq.f32.partialorder %v1283, 0.0
      %v1479 = vand.u32 %v1283, 2147483648
      %v1480 = vsel %vm1478, %v1479, %v1477
      %v1481 = vrsqrt.pop %v1284
      %v1482 = vmul.f32 %v1481, %v1284
      %v1483 = vmul.f32 %v1482, %v1481
      %v1484 = vmul.f32 0.5, %v1483
      %v1485 = vsub.f32 1.5, %v1484
      %v1486 = vmul.f32 %v1481, %v1485
      %v1487 = vmul.f32 %v1284, %v1486
      %vm1488 = vcmp.eq.f32.partialorder %v1284, inf
      %v1489 = vsel %vm1488, %v1284, %v1487
      %vm1490 = vcmp.eq.f32.partialorder %v1284, 0.0
      %v1491 = vand.u32 %v1284, 2147483648
      %v1492 = vsel %vm1490, %v1491, %v1489
      %v1493 = vrsqrt.pop %v1285
      %v1494 = vmul.f32 %v1493, %v1285
      %v1495 = vmul.f32 %v1494, %v1493
      %v1496 = vmul.f32 0.5, %v1495
      %v1497 = vsub.f32 1.5, %v1496
      %v1498 = vmul.f32 %v1493, %v1497
      %v1499 = vmul.f32 %v1285, %v1498
      %vm1500 = vcmp.eq.f32.partialorder %v1285, inf
      %v1501 = vsel %vm1500, %v1285, %v1499
      %vm1502 = vcmp.eq.f32.partialorder %v1285, 0.0
      %v1503 = vand.u32 %v1285, 2147483648
      %v1504 = vsel %vm1502, %v1503, %v1501
      %v1505 = vrsqrt.pop %v1286
      %v1506 = vmul.f32 %v1505, %v1286
      %v1507 = vmul.f32 %v1506, %v1505
      %v1508 = vmul.f32 0.5, %v1507
      %v1509 = vsub.f32 1.5, %v1508
      %v1510 = vmul.f32 %v1505, %v1509
      %v1511 = vmul.f32 %v1286, %v1510
      %vm1512 = vcmp.eq.f32.partialorder %v1286, inf
      %v1513 = vsel %vm1512, %v1286, %v1511
      %vm1514 = vcmp.eq.f32.partialorder %v1286, 0.0
      %v1515 = vand.u32 %v1286, 2147483648
      %v1516 = vsel %vm1514, %v1515, %v1513
      %v1517 = vrsqrt.pop %v1287
      %v1518 = vmul.f32 %v1517, %v1287
      %v1519 = vmul.f32 %v1518, %v1517
      %v1520 = vmul.f32 0.5, %v1519
      %v1521 = vsub.f32 1.5, %v1520
      %v1522 = vmul.f32 %v1517, %v1521
      %v1523 = vmul.f32 %v1287, %v1522
      %vm1524 = vcmp.eq.f32.partialorder %v1287, inf
      %v1525 = vsel %vm1524, %v1287, %v1523
      %vm1526 = vcmp.eq.f32.partialorder %v1287, 0.0
      %v1527 = vand.u32 %v1287, 2147483648
      %v1528 = vsel %vm1526, %v1527, %v1525
      %v1529 = vrsqrt.pop %v1288
      %v1530 = vmul.f32 %v1529, %v1288
      %v1531 = vmul.f32 %v1530, %v1529
      %v1532 = vmul.f32 0.5, %v1531
      %v1533 = vsub.f32 1.5, %v1532
      %v1534 = vmul.f32 %v1529, %v1533
      %v1535 = vmul.f32 %v1288, %v1534
      %vm1536 = vcmp.eq.f32.partialorder %v1288, inf
      %v1537 = vsel %vm1536, %v1288, %v1535
      %vm1538 = vcmp.eq.f32.partialorder %v1288, 0.0
      %v1539 = vand.u32 %v1288, 2147483648
      %v1540 = vsel %vm1538, %v1539, %v1537
      %v1541 = vrsqrt.pop %v1289
      %v1542 = vmul.f32 %v1541, %v1289
      %v1543 = vmul.f32 %v1542, %v1541
      %v1544 = vmul.f32 0.5, %v1543
      %v1545 = vsub.f32 1.5, %v1544
      %v1546 = vmul.f32 %v1541, %v1545
      %v1547 = vmul.f32 %v1289, %v1546
      %vm1548 = vcmp.eq.f32.partialorder %v1289, inf
      %v1549 = vsel %vm1548, %v1289, %v1547
      %vm1550 = vcmp.eq.f32.partialorder %v1289, 0.0
      %v1551 = vand.u32 %v1289, 2147483648
      %v1552 = vsel %vm1550, %v1551, %v1549
      %v1553 = vrsqrt.pop %v1290
      %v1554 = vmul.f32 %v1553, %v1290
      %v1555 = vmul.f32 %v1554, %v1553
      %v1556 = vmul.f32 0.5, %v1555
      %v1557 = vsub.f32 1.5, %v1556
      %v1558 = vmul.f32 %v1553, %v1557
      %v1559 = vmul.f32 %v1290, %v1558
      %vm1560 = vcmp.eq.f32.partialorder %v1290, inf
      %v1561 = vsel %vm1560, %v1290, %v1559
      %vm1562 = vcmp.eq.f32.partialorder %v1290, 0.0
      %v1563 = vand.u32 %v1290, 2147483648
      %v1564 = vsel %vm1562, %v1563, %v1561
      %v1565 = vrsqrt.pop %v1291
      %v1566 = vmul.f32 %v1565, %v1291
      %v1567 = vmul.f32 %v1566, %v1565
      %v1568 = vmul.f32 0.5, %v1567
      %v1569 = vsub.f32 1.5, %v1568
      %v1570 = vmul.f32 %v1565, %v1569
      %v1571 = vmul.f32 %v1291, %v1570
      %vm1572 = vcmp.eq.f32.partialorder %v1291, inf
      %v1573 = vsel %vm1572, %v1291, %v1571
      %vm1574 = vcmp.eq.f32.partialorder %v1291, 0.0
      %v1575 = vand.u32 %v1291, 2147483648
      %v1576 = vsel %vm1574, %v1575, %v1573
      %v1577 = vrsqrt.pop %v1292
      %v1578 = vmul.f32 %v1577, %v1292
      %v1579 = vmul.f32 %v1578, %v1577
      %v1580 = vmul.f32 0.5, %v1579
      %v1581 = vsub.f32 1.5, %v1580
      %v1582 = vmul.f32 %v1577, %v1581
      %v1583 = vmul.f32 %v1292, %v1582
      %vm1584 = vcmp.eq.f32.partialorder %v1292, inf
      %v1585 = vsel %vm1584, %v1292, %v1583
      %vm1586 = vcmp.eq.f32.partialorder %v1292, 0.0
      %v1587 = vand.u32 %v1292, 2147483648
      %v1588 = vsel %vm1586, %v1587, %v1585
      %v1589 = vrsqrt.pop %v1293
      %v1590 = vmul.f32 %v1589, %v1293
      %v1591 = vmul.f32 %v1590, %v1589
      %v1592 = vmul.f32 0.5, %v1591
      %v1593 = vsub.f32 1.5, %v1592
      %v1594 = vmul.f32 %v1589, %v1593
      %v1595 = vmul.f32 %v1293, %v1594
      %vm1596 = vcmp.eq.f32.partialorder %v1293, inf
      %v1597 = vsel %vm1596, %v1293, %v1595
      %vm1598 = vcmp.eq.f32.partialorder %v1293, 0.0
      %v1599 = vand.u32 %v1293, 2147483648
      %v1600 = vsel %vm1598, %v1599, %v1597
      %v1601 = vrsqrt.pop %v1294
      %v1602 = vmul.f32 %v1601, %v1294
      %v1603 = vmul.f32 %v1602, %v1601
      %v1604 = vmul.f32 0.5, %v1603
      %v1605 = vsub.f32 1.5, %v1604
      %v1606 = vmul.f32 %v1601, %v1605
      %v1607 = vmul.f32 %v1294, %v1606
      %vm1608 = vcmp.eq.f32.partialorder %v1294, inf
      %v1609 = vsel %vm1608, %v1294, %v1607
      %vm1610 = vcmp.eq.f32.partialorder %v1294, 0.0
      %v1611 = vand.u32 %v1294, 2147483648
      %v1612 = vsel %vm1610, %v1611, %v1609
      %v1613 = vrsqrt.pop %v1295
      %v1614 = vmul.f32 %v1613, %v1295
      %v1615 = vmul.f32 %v1614, %v1613
      %v1616 = vmul.f32 0.5, %v1615
      %v1617 = vsub.f32 1.5, %v1616
      %v1618 = vmul.f32 %v1613, %v1617
      %v1619 = vmul.f32 %v1295, %v1618
      %vm1620 = vcmp.eq.f32.partialorder %v1295, inf
      %v1621 = vsel %vm1620, %v1295, %v1619
      %vm1622 = vcmp.eq.f32.partialorder %v1295, 0.0
      %v1623 = vand.u32 %v1295, 2147483648
      %v1624 = vsel %vm1622, %v1623, %v1621
      %v1625 = vrsqrt.pop %v1296
      %v1626 = vmul.f32 %v1625, %v1296
      %v1627 = vmul.f32 %v1626, %v1625
      %v1628 = vmul.f32 0.5, %v1627
      %v1629 = vsub.f32 1.5, %v1628
      %v1630 = vmul.f32 %v1625, %v1629
      %v1631 = vmul.f32 %v1296, %v1630
      %vm1632 = vcmp.eq.f32.partialorder %v1296, inf
      %v1633 = vsel %vm1632, %v1296, %v1631
      %vm1634 = vcmp.eq.f32.partialorder %v1296, 0.0
      %v1635 = vand.u32 %v1296, 2147483648
      %v1636 = vsel %vm1634, %v1635, %v1633
      %v1637 = vrsqrt.pop %v1297
      %v1638 = vmul.f32 %v1637, %v1297
      %v1639 = vmul.f32 %v1638, %v1637
      %v1640 = vmul.f32 0.5, %v1639
      %v1641 = vsub.f32 1.5, %v1640
      %v1642 = vmul.f32 %v1637, %v1641
      %v1643 = vmul.f32 %v1297, %v1642
      %vm1644 = vcmp.eq.f32.partialorder %v1297, inf
      %v1645 = vsel %vm1644, %v1297, %v1643
      %vm1646 = vcmp.eq.f32.partialorder %v1297, 0.0
      %v1647 = vand.u32 %v1297, 2147483648
      %v1648 = vsel %vm1646, %v1647, %v1645
      %v1649 = vrsqrt.pop %v1298
      %v1650 = vmul.f32 %v1649, %v1298
      %v1651 = vmul.f32 %v1650, %v1649
      %v1652 = vmul.f32 0.5, %v1651
      %v1653 = vsub.f32 1.5, %v1652
      %v1654 = vmul.f32 %v1649, %v1653
      %v1655 = vmul.f32 %v1298, %v1654
      %vm1656 = vcmp.eq.f32.partialorder %v1298, inf
      %v1657 = vsel %vm1656, %v1298, %v1655
      %vm1658 = vcmp.eq.f32.partialorder %v1298, 0.0
      %v1659 = vand.u32 %v1298, 2147483648
      %v1660 = vsel %vm1658, %v1659, %v1657
      %v1661 = vrsqrt.pop %v1299
      %v1662 = vmul.f32 %v1661, %v1299
      %v1663 = vmul.f32 %v1662, %v1661
      %v1664 = vmul.f32 0.5, %v1663
      %v1665 = vsub.f32 1.5, %v1664
      %v1666 = vmul.f32 %v1661, %v1665
      %v1667 = vmul.f32 %v1299, %v1666
      %vm1668 = vcmp.eq.f32.partialorder %v1299, inf
      %v1669 = vsel %vm1668, %v1299, %v1667
      %vm1670 = vcmp.eq.f32.partialorder %v1299, 0.0
      %v1671 = vand.u32 %v1299, 2147483648
      %v1672 = vsel %vm1670, %v1671, %v1669
      %v1673 = vrsqrt.pop %v1300
      %v1674 = vmul.f32 %v1673, %v1300
      %v1675 = vmul.f32 %v1674, %v1673
      %v1676 = vmul.f32 0.5, %v1675
      %v1677 = vsub.f32 1.5, %v1676
      %v1678 = vmul.f32 %v1673, %v1677
      %v1679 = vmul.f32 %v1300, %v1678
      %vm1680 = vcmp.eq.f32.partialorder %v1300, inf
      %v1681 = vsel %vm1680, %v1300, %v1679
      %vm1682 = vcmp.eq.f32.partialorder %v1300, 0.0
      %v1683 = vand.u32 %v1300, 2147483648
      %v1684 = vsel %vm1682, %v1683, %v1681
      %v1685 = vpack.c.bf16 %v1324, %v1312
      %v1686 = vpack.c.bf16 %v1348, %v1336
      %v1687 = vpack.c.bf16 %v1372, %v1360
      %v1688 = vpack.c.bf16 %v1396, %v1384
      %v1689 = vpack.c.bf16 %v1420, %v1408
      %v1690 = vpack.c.bf16 %v1444, %v1432
      %v1691 = vpack.c.bf16 %v1468, %v1456
      %v1692 = vpack.c.bf16 %v1492, %v1480
      %v1693 = vpack.c.bf16 %v1516, %v1504
      %v1694 = vpack.c.bf16 %v1540, %v1528
      %v1695 = vpack.c.bf16 %v1564, %v1552
      %v1696 = vpack.c.bf16 %v1588, %v1576
      %v1697 = vpack.c.bf16 %v1612, %v1600
      %v1698 = vpack.c.bf16 %v1636, %v1624
      %v1699 = vpack.c.bf16 %v1660, %v1648
      %v1700 = vpack.c.bf16 %v1684, %v1672
      %v1717 = vunpack.c.l.b16 %v1685
      %v1718 = vunpack.c.h.b16 %v1685
      %v1719 = vunpack.c.l.b16 %v1686
      %v1720 = vunpack.c.h.b16 %v1686
      %v1721 = vunpack.c.l.b16 %v1687
      %v1722 = vunpack.c.h.b16 %v1687
      %v1723 = vunpack.c.l.b16 %v1688
      %v1724 = vunpack.c.h.b16 %v1688
      %v1725 = vunpack.c.l.b16 %v1689
      %v1726 = vunpack.c.h.b16 %v1689
      %v1727 = vunpack.c.l.b16 %v1690
      %v1728 = vunpack.c.h.b16 %v1690
      %v1729 = vunpack.c.l.b16 %v1691
      %v1730 = vunpack.c.h.b16 %v1691
      %v1731 = vunpack.c.l.b16 %v1692
      %v1732 = vunpack.c.h.b16 %v1692
      %v1733 = vunpack.c.l.b16 %v1693
      %v1734 = vunpack.c.h.b16 %v1693
      %v1735 = vunpack.c.l.b16 %v1694
      %v1736 = vunpack.c.h.b16 %v1694
      %v1737 = vunpack.c.l.b16 %v1695
      %v1738 = vunpack.c.h.b16 %v1695
      %v1739 = vunpack.c.l.b16 %v1696
      %v1740 = vunpack.c.h.b16 %v1696
      %v1741 = vunpack.c.l.b16 %v1697
      %v1742 = vunpack.c.h.b16 %v1697
      %v1743 = vunpack.c.l.b16 %v1698
      %v1744 = vunpack.c.h.b16 %v1698
      %v1745 = vunpack.c.l.b16 %v1699
      %v1746 = vunpack.c.h.b16 %v1699
      %v1747 = vunpack.c.l.b16 %v1700
      %v1748 = vunpack.c.h.b16 %v1700
      %v1749 = vpack.c.b16 %v1721, %v1717
      %v1750 = vpack.c.b16 %v1722, %v1718
      %v1751 = vpack.c.b16 %v1723, %v1719
      %v1752 = vpack.c.b16 %v1724, %v1720
      %v1753 = vpack.c.b16 %v1729, %v1725
      %v1754 = vpack.c.b16 %v1730, %v1726
      %v1755 = vpack.c.b16 %v1731, %v1727
      %v1756 = vpack.c.b16 %v1732, %v1728
      %v1757 = vpack.c.b16 %v1737, %v1733
      %v1758 = vpack.c.b16 %v1738, %v1734
      %v1759 = vpack.c.b16 %v1739, %v1735
      %v1760 = vpack.c.b16 %v1740, %v1736
      %v1761 = vpack.c.b16 %v1745, %v1741
      %v1762 = vpack.c.b16 %v1746, %v1742
      %v1763 = vpack.c.b16 %v1747, %v1743
      %v1764 = vpack.c.b16 %v1748, %v1744
      %v1781 = vld [vmem:[%s4] sm:$0x3f]
      %v1783 = vperm.slane %v1781, 0
      %v1784 = vperm.slane %v1781, 1
      %v1785 = vperm.slane %v1781, 2
      %v1786 = vperm.slane %v1781, 3
      %v1787 = vperm.slane %v1781, 4
      %v1788 = vperm.slane %v1781, 5
      %v1795 = vadd.f32 %v1783, 0.0
      %v1796 = vadd.f32 %v1784, 0.0
      %v1797 = vadd.f32 %v1785, 0.0
      %v1798 = vadd.f32 %v1786, 0.0
      %v1799 = vadd.f32 %v1787, 0.0
      %v1800 = vadd.f32 %v1788, 0.0
      %v1801 = vld [vmem:[%s3] sm:$0xff]
      %v1802 = vld [vmem:[%s3 + $0x8] sm:$0xff]
      %v1803 = vld [vmem:[%s3 + $0x10] sm:$0xff]
      %v1804 = vld [vmem:[%s3 + $0x18] sm:$0xff]
      %v1805 = vld [vmem:[%s3 + $0x20] sm:$0xff]
      %v1806 = vld [vmem:[%s3 + $0x28] sm:$0xff]
      %v1807 = vld [vmem:[%s3 + $0x30] sm:$0xff]
      %v1808 = vld [vmem:[%s3 + $0x38] sm:$0xff]
      %v1809 = vld [vmem:[%s3 + $0x40] sm:$0xff]
      %v1810 = vld [vmem:[%s3 + $0x48] sm:$0xff]
      %v1811 = vld [vmem:[%s3 + $0x50] sm:$0xff]
      %v1812 = vld [vmem:[%s3 + $0x58] sm:$0xff]
      %v1813 = vld [vmem:[%s3 + $0x60] sm:$0xff]
      %v1814 = vld [vmem:[%s3 + $0x68] sm:$0xff]
      %v1815 = vld [vmem:[%s3 + $0x70] sm:$0xff]
      %v1816 = vld [vmem:[%s3 + $0x78] sm:$0xff]
      %v1817 = vld [vmem:[%s3 + $0x80] sm:$0xff]
      %v1818 = vld [vmem:[%s3 + $0x88] sm:$0xff]
      %v1819 = vld [vmem:[%s3 + $0x90] sm:$0xff]
      %v1820 = vld [vmem:[%s3 + $0x98] sm:$0xff]
      %v1821 = vld [vmem:[%s3 + $0xa0] sm:$0xff]
      %v1822 = vld [vmem:[%s3 + $0xa8] sm:$0xff]
      %v1823 = vld [vmem:[%s3 + $0xb0] sm:$0xff]
      %v1824 = vld [vmem:[%s3 + $0xb8] sm:$0xff]
      %v1825 = vld [vmem:[%s3 + $0xc0] sm:$0xff]
      %v1826 = vld [vmem:[%s3 + $0xc8] sm:$0xff]
      %v1827 = vld [vmem:[%s3 + $0xd0] sm:$0xff]
      %v1828 = vld [vmem:[%s3 + $0xd8] sm:$0xff]
      %v1829 = vld [vmem:[%s3 + $0xe0] sm:$0xff]
      %v1830 = vld [vmem:[%s3 + $0xe8] sm:$0xff]
      %v1831 = vld [vmem:[%s3 + $0xf0] sm:$0xff]
      %v1832 = vld [vmem:[%s3 + $0xf8] sm:$0xff]
      %v1833 = vld [vmem:[%s3 + $0x100] sm:$0xff]
      %v1834 = vld [vmem:[%s3 + $0x108] sm:$0xff]
      %v1835 = vld [vmem:[%s3 + $0x110] sm:$0xff]
      %v1836 = vld [vmem:[%s3 + $0x118] sm:$0xff]
      %v1837 = vld [vmem:[%s3 + $0x120] sm:$0xff]
      %v1838 = vld [vmem:[%s3 + $0x128] sm:$0xff]
      %v1839 = vld [vmem:[%s3 + $0x130] sm:$0xff]
      %v1840 = vld [vmem:[%s3 + $0x138] sm:$0xff]
      %v1841 = vld [vmem:[%s3 + $0x140] sm:$0xff]
      %v1842 = vld [vmem:[%s3 + $0x148] sm:$0xff]
      %v1843 = vld [vmem:[%s3 + $0x150] sm:$0xff]
      %v1844 = vld [vmem:[%s3 + $0x158] sm:$0xff]
      %v1845 = vld [vmem:[%s3 + $0x160] sm:$0xff]
      %v1846 = vld [vmem:[%s3 + $0x168] sm:$0xff]
      %v1847 = vld [vmem:[%s3 + $0x170] sm:$0xff]
      %v1848 = vld [vmem:[%s3 + $0x178] sm:$0xff]
      %v1849 = vld [vmem:[%s3 + $0x180] sm:$0xff]
      %v1850 = vld [vmem:[%s3 + $0x188] sm:$0xff]
      %v1851 = vld [vmem:[%s3 + $0x190] sm:$0xff]
      %v1852 = vld [vmem:[%s3 + $0x198] sm:$0xff]
      %v1853 = vld [vmem:[%s3 + $0x1a0] sm:$0xff]
      %v1854 = vld [vmem:[%s3 + $0x1a8] sm:$0xff]
      %v1855 = vld [vmem:[%s3 + $0x1b0] sm:$0xff]
      %v1856 = vld [vmem:[%s3 + $0x1b8] sm:$0xff]
      %v1857 = vld [vmem:[%s3 + $0x1c0] sm:$0xff]
      %v1858 = vld [vmem:[%s3 + $0x1c8] sm:$0xff]
      %v1859 = vld [vmem:[%s3 + $0x1d0] sm:$0xff]
      %v1860 = vld [vmem:[%s3 + $0x1d8] sm:$0xff]
      %v1861 = vld [vmem:[%s3 + $0x1e0] sm:$0xff]
      %v1862 = vld [vmem:[%s3 + $0x1e8] sm:$0xff]
      %v1863 = vld [vmem:[%s3 + $0x1f0] sm:$0xff]
      %v1864 = vld [vmem:[%s3 + $0x1f8] sm:$0xff]
      %v1865 = vld [vmem:[%s3 + $0x200] sm:$0xff]
      %v1866 = vld [vmem:[%s3 + $0x208] sm:$0xff]
      %v1867 = vld [vmem:[%s3 + $0x210] sm:$0xff]
      %v1868 = vld [vmem:[%s3 + $0x218] sm:$0xff]
      %v1869 = vld [vmem:[%s3 + $0x220] sm:$0xff]
      %v1870 = vld [vmem:[%s3 + $0x228] sm:$0xff]
      %v1871 = vld [vmem:[%s3 + $0x230] sm:$0xff]
      %v1872 = vld [vmem:[%s3 + $0x238] sm:$0xff]
      %v1873 = vld [vmem:[%s3 + $0x240] sm:$0xff]
      %v1874 = vld [vmem:[%s3 + $0x248] sm:$0xff]
      %v1875 = vld [vmem:[%s3 + $0x250] sm:$0xff]
      %v1876 = vld [vmem:[%s3 + $0x258] sm:$0xff]
      %v1877 = vld [vmem:[%s3 + $0x260] sm:$0xff]
      %v1878 = vld [vmem:[%s3 + $0x268] sm:$0xff]
      %v1879 = vld [vmem:[%s3 + $0x270] sm:$0xff]
      %v1880 = vld [vmem:[%s3 + $0x278] sm:$0xff]
      %v1881 = vld [vmem:[%s3 + $0x280] sm:$0xff]
      %v1882 = vld [vmem:[%s3 + $0x288] sm:$0xff]
      %v1883 = vld [vmem:[%s3 + $0x290] sm:$0xff]
      %v1884 = vld [vmem:[%s3 + $0x298] sm:$0xff]
      %v1885 = vld [vmem:[%s3 + $0x2a0] sm:$0xff]
      %v1886 = vld [vmem:[%s3 + $0x2a8] sm:$0xff]
      %v1887 = vld [vmem:[%s3 + $0x2b0] sm:$0xff]
      %v1888 = vld [vmem:[%s3 + $0x2b8] sm:$0xff]
      %v1889 = vld [vmem:[%s3 + $0x2c0] sm:$0xff]
      %v1890 = vld [vmem:[%s3 + $0x2c8] sm:$0xff]
      %v1891 = vld [vmem:[%s3 + $0x2d0] sm:$0xff]
      %v1892 = vld [vmem:[%s3 + $0x2d8] sm:$0xff]
      %v1893 = vld [vmem:[%s3 + $0x2e0] sm:$0xff]
      %v1894 = vld [vmem:[%s3 + $0x2e8] sm:$0xff]
      %v1895 = vld [vmem:[%s3 + $0x2f0] sm:$0xff]
      %v1896 = vld [vmem:[%s3 + $0x2f8] sm:$0xff]
      %v1897 = vld [vmem:[%s3 + $0x300] sm:$0xff]
      %v1898 = vld [vmem:[%s3 + $0x308] sm:$0xff]
      %v1899 = vld [vmem:[%s3 + $0x310] sm:$0xff]
      %v1900 = vld [vmem:[%s3 + $0x318] sm:$0xff]
      %v1901 = vld [vmem:[%s3 + $0x320] sm:$0xff]
      %v1902 = vld [vmem:[%s3 + $0x328] sm:$0xff]
      %v1903 = vld [vmem:[%s3 + $0x330] sm:$0xff]
      %v1904 = vld [vmem:[%s3 + $0x338] sm:$0xff]
      %v1905 = vld [vmem:[%s3 + $0x340] sm:$0xff]
      %v1906 = vld [vmem:[%s3 + $0x348] sm:$0xff]
      %v1907 = vld [vmem:[%s3 + $0x350] sm:$0xff]
      %v1908 = vld [vmem:[%s3 + $0x358] sm:$0xff]
      %v1909 = vld [vmem:[%s3 + $0x360] sm:$0xff]
      %v1910 = vld [vmem:[%s3 + $0x368] sm:$0xff]
      %v1911 = vld [vmem:[%s3 + $0x370] sm:$0xff]
      %v1912 = vld [vmem:[%s3 + $0x378] sm:$0xff]
      %v1913 = vld [vmem:[%s3 + $0x380] sm:$0xff]
      %v1914 = vld [vmem:[%s3 + $0x388] sm:$0xff]
      %v1915 = vld [vmem:[%s3 + $0x390] sm:$0xff]
      %v1916 = vld [vmem:[%s3 + $0x398] sm:$0xff]
      %v1917 = vld [vmem:[%s3 + $0x3a0] sm:$0xff]
      %v1918 = vld [vmem:[%s3 + $0x3a8] sm:$0xff]
      %v1919 = vld [vmem:[%s3 + $0x3b0] sm:$0xff]
      %v1920 = vld [vmem:[%s3 + $0x3b8] sm:$0xff]
      %v1921 = vld [vmem:[%s3 + $0x3c0] sm:$0xff]
      %v1922 = vld [vmem:[%s3 + $0x3c8] sm:$0xff]
      %v1923 = vld [vmem:[%s3 + $0x3d0] sm:$0xff]
      %v1924 = vld [vmem:[%s3 + $0x3d8] sm:$0xff]
      %v1925 = vld [vmem:[%s3 + $0x3e0] sm:$0xff]
      %v1926 = vld [vmem:[%s3 + $0x3e8] sm:$0xff]
      %v1927 = vld [vmem:[%s3 + $0x3f0] sm:$0xff]
      %v1928 = vld [vmem:[%s3 + $0x3f8] sm:$0xff]
      %v1929 = vld [vmem:[%s3 + $0x400] sm:$0xff]
      %v1930 = vld [vmem:[%s3 + $0x408] sm:$0xff]
      %v1931 = vld [vmem:[%s3 + $0x410] sm:$0xff]
      %v1932 = vld [vmem:[%s3 + $0x418] sm:$0xff]
      %v1933 = vld [vmem:[%s3 + $0x420] sm:$0xff]
      %v1934 = vld [vmem:[%s3 + $0x428] sm:$0xff]
      %v1935 = vld [vmem:[%s3 + $0x430] sm:$0xff]
      %v1936 = vld [vmem:[%s3 + $0x438] sm:$0xff]
      %v1937 = vld [vmem:[%s3 + $0x440] sm:$0xff]
      %v1938 = vld [vmem:[%s3 + $0x448] sm:$0xff]
      %v1939 = vld [vmem:[%s3 + $0x450] sm:$0xff]
      %v1940 = vld [vmem:[%s3 + $0x458] sm:$0xff]
      %v1941 = vld [vmem:[%s3 + $0x460] sm:$0xff]
      %v1942 = vld [vmem:[%s3 + $0x468] sm:$0xff]
      %v1943 = vld [vmem:[%s3 + $0x470] sm:$0xff]
      %v1944 = vld [vmem:[%s3 + $0x478] sm:$0xff]
      %v1945 = vld [vmem:[%s3 + $0x480] sm:$0xff]
      %v1946 = vld [vmem:[%s3 + $0x488] sm:$0xff]
      %v1947 = vld [vmem:[%s3 + $0x490] sm:$0xff]
      %v1948 = vld [vmem:[%s3 + $0x498] sm:$0xff]
      %v1949 = vld [vmem:[%s3 + $0x4a0] sm:$0xff]
      %v1950 = vld [vmem:[%s3 + $0x4a8] sm:$0xff]
      %v1951 = vld [vmem:[%s3 + $0x4b0] sm:$0xff]
      %v1952 = vld [vmem:[%s3 + $0x4b8] sm:$0xff]
      %v1953 = vld [vmem:[%s3 + $0x4c0] sm:$0xff]
      %v1954 = vld [vmem:[%s3 + $0x4c8] sm:$0xff]
      %v1955 = vld [vmem:[%s3 + $0x4d0] sm:$0xff]
      %v1956 = vld [vmem:[%s3 + $0x4d8] sm:$0xff]
      %v1957 = vld [vmem:[%s3 + $0x4e0] sm:$0xff]
      %v1958 = vld [vmem:[%s3 + $0x4e8] sm:$0xff]
      %v1959 = vld [vmem:[%s3 + $0x4f0] sm:$0xff]
      %v1960 = vld [vmem:[%s3 + $0x4f8] sm:$0xff]
      %v1961 = vld [vmem:[%s3 + $0x500] sm:$0xff]
      %v1962 = vld [vmem:[%s3 + $0x508] sm:$0xff]
      %v1963 = vld [vmem:[%s3 + $0x510] sm:$0xff]
      %v1964 = vld [vmem:[%s3 + $0x518] sm:$0xff]
      %v1965 = vld [vmem:[%s3 + $0x520] sm:$0xff]
      %v1966 = vld [vmem:[%s3 + $0x528] sm:$0xff]
      %v1967 = vld [vmem:[%s3 + $0x530] sm:$0xff]
      %v1968 = vld [vmem:[%s3 + $0x538] sm:$0xff]
      %v1969 = vld [vmem:[%s3 + $0x540] sm:$0xff]
      %v1970 = vld [vmem:[%s3 + $0x548] sm:$0xff]
      %v1971 = vld [vmem:[%s3 + $0x550] sm:$0xff]
      %v1972 = vld [vmem:[%s3 + $0x558] sm:$0xff]
      %v1973 = vld [vmem:[%s3 + $0x560] sm:$0xff]
      %v1974 = vld [vmem:[%s3 + $0x568] sm:$0xff]
      %v1975 = vld [vmem:[%s3 + $0x570] sm:$0xff]
      %v1976 = vld [vmem:[%s3 + $0x578] sm:$0xff]
      %v1977 = vld [vmem:[%s3 + $0x580] sm:$0xff]
      %v1978 = vld [vmem:[%s3 + $0x588] sm:$0xff]
      %v1979 = vld [vmem:[%s3 + $0x590] sm:$0xff]
      %v1980 = vld [vmem:[%s3 + $0x598] sm:$0xff]
      %v1981 = vld [vmem:[%s3 + $0x5a0] sm:$0xff]
      %v1982 = vld [vmem:[%s3 + $0x5a8] sm:$0xff]
      %v1983 = vld [vmem:[%s3 + $0x5b0] sm:$0xff]
      %v1984 = vld [vmem:[%s3 + $0x5b8] sm:$0xff]
      %v1985 = vld [vmem:[%s3 + $0x5c0] sm:$0xff]
      %v1986 = vld [vmem:[%s3 + $0x5c8] sm:$0xff]
      %v1987 = vld [vmem:[%s3 + $0x5d0] sm:$0xff]
      %v1988 = vld [vmem:[%s3 + $0x5d8] sm:$0xff]
      %v1989 = vld [vmem:[%s3 + $0x5e0] sm:$0xff]
      %v1990 = vld [vmem:[%s3 + $0x5e8] sm:$0xff]
      %v1991 = vld [vmem:[%s3 + $0x5f0] sm:$0xff]
      %v1992 = vld [vmem:[%s3 + $0x5f8] sm:$0xff]
      %v2185 = vunpack.c.l.b16 %v1801
      %v2186 = vunpack.c.h.b16 %v1801
      %v2187 = vunpack.c.l.b16 %v1802
      %v2188 = vunpack.c.h.b16 %v1802
      %v2189 = vunpack.c.l.b16 %v1803
      %v2190 = vunpack.c.h.b16 %v1803
      %v2191 = vunpack.c.l.b16 %v1804
      %v2192 = vunpack.c.h.b16 %v1804
      %v2193 = vunpack.c.l.b16 %v1805
      %v2194 = vunpack.c.h.b16 %v1805
      %v2195 = vunpack.c.l.b16 %v1806
      %v2196 = vunpack.c.h.b16 %v1806
      %v2197 = vunpack.c.l.b16 %v1807
      %v2198 = vunpack.c.h.b16 %v1807
      %v2199 = vunpack.c.l.b16 %v1808
      %v2200 = vunpack.c.h.b16 %v1808
      %v2201 = vunpack.c.l.b16 %v1809
      %v2202 = vunpack.c.h.b16 %v1809
      %v2203 = vunpack.c.l.b16 %v1810
      %v2204 = vunpack.c.h.b16 %v1810
      %v2205 = vunpack.c.l.b16 %v1811
      %v2206 = vunpack.c.h.b16 %v1811
      %v2207 = vunpack.c.l.b16 %v1812
      %v2208 = vunpack.c.h.b16 %v1812
      %v2209 = vunpack.c.l.b16 %v1813
      %v2210 = vunpack.c.h.b16 %v1813
      %v2211 = vunpack.c.l.b16 %v1814
      %v2212 = vunpack.c.h.b16 %v1814
      %v2213 = vunpack.c.l.b16 %v1815
      %v2214 = vunpack.c.h.b16 %v1815
      %v2215 = vunpack.c.l.b16 %v1816
      %v2216 = vunpack.c.h.b16 %v1816
      %v2217 = vunpack.c.l.b16 %v1817
      %v2218 = vunpack.c.h.b16 %v1817
      %v2219 = vunpack.c.l.b16 %v1818
      %v2220 = vunpack.c.h.b16 %v1818
      %v2221 = vunpack.c.l.b16 %v1819
      %v2222 = vunpack.c.h.b16 %v1819
      %v2223 = vunpack.c.l.b16 %v1820
      %v2224 = vunpack.c.h.b16 %v1820
      %v2225 = vunpack.c.l.b16 %v1821
      %v2226 = vunpack.c.h.b16 %v1821
      %v2227 = vunpack.c.l.b16 %v1822
      %v2228 = vunpack.c.h.b16 %v1822
      %v2229 = vunpack.c.l.b16 %v1823
      %v2230 = vunpack.c.h.b16 %v1823
      %v2231 = vunpack.c.l.b16 %v1824
      %v2232 = vunpack.c.h.b16 %v1824
      %v2233 = vunpack.c.l.b16 %v1825
      %v2234 = vunpack.c.h.b16 %v1825
      %v2235 = vunpack.c.l.b16 %v1826
      %v2236 = vunpack.c.h.b16 %v1826
      %v2237 = vunpack.c.l.b16 %v1827
      %v2238 = vunpack.c.h.b16 %v1827
      %v2239 = vunpack.c.l.b16 %v1828
      %v2240 = vunpack.c.h.b16 %v1828
      %v2241 = vunpack.c.l.b16 %v1829
      %v2242 = vunpack.c.h.b16 %v1829
      %v2243 = vunpack.c.l.b16 %v1830
      %v2244 = vunpack.c.h.b16 %v1830
      %v2245 = vunpack.c.l.b16 %v1831
      %v2246 = vunpack.c.h.b16 %v1831
      %v2247 = vunpack.c.l.b16 %v1832
      %v2248 = vunpack.c.h.b16 %v1832
      %v2249 = vunpack.c.l.b16 %v1833
      %v2250 = vunpack.c.h.b16 %v1833
      %v2251 = vunpack.c.l.b16 %v1834
      %v2252 = vunpack.c.h.b16 %v1834
      %v2253 = vunpack.c.l.b16 %v1835
      %v2254 = vunpack.c.h.b16 %v1835
      %v2255 = vunpack.c.l.b16 %v1836
      %v2256 = vunpack.c.h.b16 %v1836
      %v2257 = vunpack.c.l.b16 %v1837
      %v2258 = vunpack.c.h.b16 %v1837
      %v2259 = vunpack.c.l.b16 %v1838
      %v2260 = vunpack.c.h.b16 %v1838
      %v2261 = vunpack.c.l.b16 %v1839
      %v2262 = vunpack.c.h.b16 %v1839
      %v2263 = vunpack.c.l.b16 %v1840
      %v2264 = vunpack.c.h.b16 %v1840
      %v2265 = vunpack.c.l.b16 %v1841
      %v2266 = vunpack.c.h.b16 %v1841
      %v2267 = vunpack.c.l.b16 %v1842
      %v2268 = vunpack.c.h.b16 %v1842
      %v2269 = vunpack.c.l.b16 %v1843
      %v2270 = vunpack.c.h.b16 %v1843
      %v2271 = vunpack.c.l.b16 %v1844
      %v2272 = vunpack.c.h.b16 %v1844
      %v2273 = vunpack.c.l.b16 %v1845
      %v2274 = vunpack.c.h.b16 %v1845
      %v2275 = vunpack.c.l.b16 %v1846
      %v2276 = vunpack.c.h.b16 %v1846
      %v2277 = vunpack.c.l.b16 %v1847
      %v2278 = vunpack.c.h.b16 %v1847
      %v2279 = vunpack.c.l.b16 %v1848
      %v2280 = vunpack.c.h.b16 %v1848
      %v2281 = vunpack.c.l.b16 %v1849
      %v2282 = vunpack.c.h.b16 %v1849
      %v2283 = vunpack.c.l.b16 %v1850
      %v2284 = vunpack.c.h.b16 %v1850
      %v2285 = vunpack.c.l.b16 %v1851
      %v2286 = vunpack.c.h.b16 %v1851
      %v2287 = vunpack.c.l.b16 %v1852
      %v2288 = vunpack.c.h.b16 %v1852
      %v2289 = vunpack.c.l.b16 %v1853
      %v2290 = vunpack.c.h.b16 %v1853
      %v2291 = vunpack.c.l.b16 %v1854
      %v2292 = vunpack.c.h.b16 %v1854
      %v2293 = vunpack.c.l.b16 %v1855
      %v2294 = vunpack.c.h.b16 %v1855
      %v2295 = vunpack.c.l.b16 %v1856
      %v2296 = vunpack.c.h.b16 %v1856
      %v2297 = vunpack.c.l.b16 %v1857
      %v2298 = vunpack.c.h.b16 %v1857
      %v2299 = vunpack.c.l.b16 %v1858
      %v2300 = vunpack.c.h.b16 %v1858
      %v2301 = vunpack.c.l.b16 %v1859
      %v2302 = vunpack.c.h.b16 %v1859
      %v2303 = vunpack.c.l.b16 %v1860
      %v2304 = vunpack.c.h.b16 %v1860
      %v2305 = vunpack.c.l.b16 %v1861
      %v2306 = vunpack.c.h.b16 %v1861
      %v2307 = vunpack.c.l.b16 %v1862
      %v2308 = vunpack.c.h.b16 %v1862
      %v2309 = vunpack.c.l.b16 %v1863
      %v2310 = vunpack.c.h.b16 %v1863
      %v2311 = vunpack.c.l.b16 %v1864
      %v2312 = vunpack.c.h.b16 %v1864
      %v2313 = vunpack.c.l.b16 %v1865
      %v2314 = vunpack.c.h.b16 %v1865
      %v2315 = vunpack.c.l.b16 %v1866
      %v2316 = vunpack.c.h.b16 %v1866
      %v2317 = vunpack.c.l.b16 %v1867
      %v2318 = vunpack.c.h.b16 %v1867
      %v2319 = vunpack.c.l.b16 %v1868
      %v2320 = vunpack.c.h.b16 %v1868
      %v2321 = vunpack.c.l.b16 %v1869
      %v2322 = vunpack.c.h.b16 %v1869
      %v2323 = vunpack.c.l.b16 %v1870
      %v2324 = vunpack.c.h.b16 %v1870
      %v2325 = vunpack.c.l.b16 %v1871
      %v2326 = vunpack.c.h.b16 %v1871
      %v2327 = vunpack.c.l.b16 %v1872
      %v2328 = vunpack.c.h.b16 %v1872
      %v2329 = vunpack.c.l.b16 %v1873
      %v2330 = vunpack.c.h.b16 %v1873
      %v2331 = vunpack.c.l.b16 %v1874
      %v2332 = vunpack.c.h.b16 %v1874
      %v2333 = vunpack.c.l.b16 %v1875
      %v2334 = vunpack.c.h.b16 %v1875
      %v2335 = vunpack.c.l.b16 %v1876
      %v2336 = vunpack.c.h.b16 %v1876
      %v2337 = vunpack.c.l.b16 %v1877
      %v2338 = vunpack.c.h.b16 %v1877
      %v2339 = vunpack.c.l.b16 %v1878
      %v2340 = vunpack.c.h.b16 %v1878
      %v2341 = vunpack.c.l.b16 %v1879
      %v2342 = vunpack.c.h.b16 %v1879
      %v2343 = vunpack.c.l.b16 %v1880
      %v2344 = vunpack.c.h.b16 %v1880
      %v2345 = vunpack.c.l.b16 %v1881
      %v2346 = vunpack.c.h.b16 %v1881
      %v2347 = vunpack.c.l.b16 %v1882
      %v2348 = vunpack.c.h.b16 %v1882
      %v2349 = vunpack.c.l.b16 %v1883
      %v2350 = vunpack.c.h.b16 %v1883
      %v2351 = vunpack.c.l.b16 %v1884
      %v2352 = vunpack.c.h.b16 %v1884
      %v2353 = vunpack.c.l.b16 %v1885
      %v2354 = vunpack.c.h.b16 %v1885
      %v2355 = vunpack.c.l.b16 %v1886
      %v2356 = vunpack.c.h.b16 %v1886
      %v2357 = vunpack.c.l.b16 %v1887
      %v2358 = vunpack.c.h.b16 %v1887
      %v2359 = vunpack.c.l.b16 %v1888
      %v2360 = vunpack.c.h.b16 %v1888
      %v2361 = vunpack.c.l.b16 %v1889
      %v2362 = vunpack.c.h.b16 %v1889
      %v2363 = vunpack.c.l.b16 %v1890
      %v2364 = vunpack.c.h.b16 %v1890
      %v2365 = vunpack.c.l.b16 %v1891
      %v2366 = vunpack.c.h.b16 %v1891
      %v2367 = vunpack.c.l.b16 %v1892
      %v2368 = vunpack.c.h.b16 %v1892
      %v2369 = vunpack.c.l.b16 %v1893
      %v2370 = vunpack.c.h.b16 %v1893
      %v2371 = vunpack.c.l.b16 %v1894
      %v2372 = vunpack.c.h.b16 %v1894
      %v2373 = vunpack.c.l.b16 %v1895
      %v2374 = vunpack.c.h.b16 %v1895
      %v2375 = vunpack.c.l.b16 %v1896
      %v2376 = vunpack.c.h.b16 %v1896
      %v2377 = vunpack.c.l.b16 %v1897
      %v2378 = vunpack.c.h.b16 %v1897
      %v2379 = vunpack.c.l.b16 %v1898
      %v2380 = vunpack.c.h.b16 %v1898
      %v2381 = vunpack.c.l.b16 %v1899
      %v2382 = vunpack.c.h.b16 %v1899
      %v2383 = vunpack.c.l.b16 %v1900
      %v2384 = vunpack.c.h.b16 %v1900
      %v2385 = vunpack.c.l.b16 %v1901
      %v2386 = vunpack.c.h.b16 %v1901
      %v2387 = vunpack.c.l.b16 %v1902
      %v2388 = vunpack.c.h.b16 %v1902
      %v2389 = vunpack.c.l.b16 %v1903
      %v2390 = vunpack.c.h.b16 %v1903
      %v2391 = vunpack.c.l.b16 %v1904
      %v2392 = vunpack.c.h.b16 %v1904
      %v2393 = vunpack.c.l.b16 %v1905
      %v2394 = vunpack.c.h.b16 %v1905
      %v2395 = vunpack.c.l.b16 %v1906
      %v2396 = vunpack.c.h.b16 %v1906
      %v2397 = vunpack.c.l.b16 %v1907
      %v2398 = vunpack.c.h.b16 %v1907
      %v2399 = vunpack.c.l.b16 %v1908
      %v2400 = vunpack.c.h.b16 %v1908
      %v2401 = vunpack.c.l.b16 %v1909
      %v2402 = vunpack.c.h.b16 %v1909
      %v2403 = vunpack.c.l.b16 %v1910
      %v2404 = vunpack.c.h.b16 %v1910
      %v2405 = vunpack.c.l.b16 %v1911
      %v2406 = vunpack.c.h.b16 %v1911
      %v2407 = vunpack.c.l.b16 %v1912
      %v2408 = vunpack.c.h.b16 %v1912
      %v2409 = vunpack.c.l.b16 %v1913
      %v2410 = vunpack.c.h.b16 %v1913
      %v2411 = vunpack.c.l.b16 %v1914
      %v2412 = vunpack.c.h.b16 %v1914
      %v2413 = vunpack.c.l.b16 %v1915
      %v2414 = vunpack.c.h.b16 %v1915
      %v2415 = vunpack.c.l.b16 %v1916
      %v2416 = vunpack.c.h.b16 %v1916
      %v2417 = vunpack.c.l.b16 %v1917
      %v2418 = vunpack.c.h.b16 %v1917
      %v2419 = vunpack.c.l.b16 %v1918
      %v2420 = vunpack.c.h.b16 %v1918
      %v2421 = vunpack.c.l.b16 %v1919
      %v2422 = vunpack.c.h.b16 %v1919
      %v2423 = vunpack.c.l.b16 %v1920
      %v2424 = vunpack.c.h.b16 %v1920
      %v2425 = vunpack.c.l.b16 %v1921
      %v2426 = vunpack.c.h.b16 %v1921
      %v2427 = vunpack.c.l.b16 %v1922
      %v2428 = vunpack.c.h.b16 %v1922
      %v2429 = vunpack.c.l.b16 %v1923
      %v2430 = vunpack.c.h.b16 %v1923
      %v2431 = vunpack.c.l.b16 %v1924
      %v2432 = vunpack.c.h.b16 %v1924
      %v2433 = vunpack.c.l.b16 %v1925
      %v2434 = vunpack.c.h.b16 %v1925
      %v2435 = vunpack.c.l.b16 %v1926
      %v2436 = vunpack.c.h.b16 %v1926
      %v2437 = vunpack.c.l.b16 %v1927
      %v2438 = vunpack.c.h.b16 %v1927
      %v2439 = vunpack.c.l.b16 %v1928
      %v2440 = vunpack.c.h.b16 %v1928
      %v2441 = vunpack.c.l.b16 %v1929
      %v2442 = vunpack.c.h.b16 %v1929
      %v2443 = vunpack.c.l.b16 %v1930
      %v2444 = vunpack.c.h.b16 %v1930
      %v2445 = vunpack.c.l.b16 %v1931
      %v2446 = vunpack.c.h.b16 %v1931
      %v2447 = vunpack.c.l.b16 %v1932
      %v2448 = vunpack.c.h.b16 %v1932
      %v2449 = vunpack.c.l.b16 %v1933
      %v2450 = vunpack.c.h.b16 %v1933
      %v2451 = vunpack.c.l.b16 %v1934
      %v2452 = vunpack.c.h.b16 %v1934
      %v2453 = vunpack.c.l.b16 %v1935
      %v2454 = vunpack.c.h.b16 %v1935
      %v2455 = vunpack.c.l.b16 %v1936
      %v2456 = vunpack.c.h.b16 %v1936
      %v2457 = vunpack.c.l.b16 %v1937
      %v2458 = vunpack.c.h.b16 %v1937
      %v2459 = vunpack.c.l.b16 %v1938
      %v2460 = vunpack.c.h.b16 %v1938
      %v2461 = vunpack.c.l.b16 %v1939
      %v2462 = vunpack.c.h.b16 %v1939
      %v2463 = vunpack.c.l.b16 %v1940
      %v2464 = vunpack.c.h.b16 %v1940
      %v2465 = vunpack.c.l.b16 %v1941
      %v2466 = vunpack.c.h.b16 %v1941
      %v2467 = vunpack.c.l.b16 %v1942
      %v2468 = vunpack.c.h.b16 %v1942
      %v2469 = vunpack.c.l.b16 %v1943
      %v2470 = vunpack.c.h.b16 %v1943
      %v2471 = vunpack.c.l.b16 %v1944
      %v2472 = vunpack.c.h.b16 %v1944
      %v2473 = vunpack.c.l.b16 %v1945
      %v2474 = vunpack.c.h.b16 %v1945
      %v2475 = vunpack.c.l.b16 %v1946
      %v2476 = vunpack.c.h.b16 %v1946
      %v2477 = vunpack.c.l.b16 %v1947
      %v2478 = vunpack.c.h.b16 %v1947
      %v2479 = vunpack.c.l.b16 %v1948
      %v2480 = vunpack.c.h.b16 %v1948
      %v2481 = vunpack.c.l.b16 %v1949
      %v2482 = vunpack.c.h.b16 %v1949
      %v2483 = vunpack.c.l.b16 %v1950
      %v2484 = vunpack.c.h.b16 %v1950
      %v2485 = vunpack.c.l.b16 %v1951
      %v2486 = vunpack.c.h.b16 %v1951
      %v2487 = vunpack.c.l.b16 %v1952
      %v2488 = vunpack.c.h.b16 %v1952
      %v2489 = vunpack.c.l.b16 %v1953
      %v2490 = vunpack.c.h.b16 %v1953
      %v2491 = vunpack.c.l.b16 %v1954
      %v2492 = vunpack.c.h.b16 %v1954
      %v2493 = vunpack.c.l.b16 %v1955
      %v2494 = vunpack.c.h.b16 %v1955
      %v2495 = vunpack.c.l.b16 %v1956
      %v2496 = vunpack.c.h.b16 %v1956
      %v2497 = vunpack.c.l.b16 %v1957
      %v2498 = vunpack.c.h.b16 %v1957
      %v2499 = vunpack.c.l.b16 %v1958
      %v2500 = vunpack.c.h.b16 %v1958
      %v2501 = vunpack.c.l.b16 %v1959
      %v2502 = vunpack.c.h.b16 %v1959
      %v2503 = vunpack.c.l.b16 %v1960
      %v2504 = vunpack.c.h.b16 %v1960
      %v2505 = vunpack.c.l.b16 %v1961
      %v2506 = vunpack.c.h.b16 %v1961
      %v2507 = vunpack.c.l.b16 %v1962
      %v2508 = vunpack.c.h.b16 %v1962
      %v2509 = vunpack.c.l.b16 %v1963
      %v2510 = vunpack.c.h.b16 %v1963
      %v2511 = vunpack.c.l.b16 %v1964
      %v2512 = vunpack.c.h.b16 %v1964
      %v2513 = vunpack.c.l.b16 %v1965
      %v2514 = vunpack.c.h.b16 %v1965
      %v2515 = vunpack.c.l.b16 %v1966
      %v2516 = vunpack.c.h.b16 %v1966
      %v2517 = vunpack.c.l.b16 %v1967
      %v2518 = vunpack.c.h.b16 %v1967
      %v2519 = vunpack.c.l.b16 %v1968
      %v2520 = vunpack.c.h.b16 %v1968
      %v2521 = vunpack.c.l.b16 %v1969
      %v2522 = vunpack.c.h.b16 %v1969
      %v2523 = vunpack.c.l.b16 %v1970
      %v2524 = vunpack.c.h.b16 %v1970
      %v2525 = vunpack.c.l.b16 %v1971
      %v2526 = vunpack.c.h.b16 %v1971
      %v2527 = vunpack.c.l.b16 %v1972
      %v2528 = vunpack.c.h.b16 %v1972
      %v2529 = vunpack.c.l.b16 %v1973
      %v2530 = vunpack.c.h.b16 %v1973
      %v2531 = vunpack.c.l.b16 %v1974
      %v2532 = vunpack.c.h.b16 %v1974
      %v2533 = vunpack.c.l.b16 %v1975
      %v2534 = vunpack.c.h.b16 %v1975
      %v2535 = vunpack.c.l.b16 %v1976
      %v2536 = vunpack.c.h.b16 %v1976
      %v2537 = vunpack.c.l.b16 %v1977
      %v2538 = vunpack.c.h.b16 %v1977
      %v2539 = vunpack.c.l.b16 %v1978
      %v2540 = vunpack.c.h.b16 %v1978
      %v2541 = vunpack.c.l.b16 %v1979
      %v2542 = vunpack.c.h.b16 %v1979
      %v2543 = vunpack.c.l.b16 %v1980
      %v2544 = vunpack.c.h.b16 %v1980
      %v2545 = vunpack.c.l.b16 %v1981
      %v2546 = vunpack.c.h.b16 %v1981
      %v2547 = vunpack.c.l.b16 %v1982
      %v2548 = vunpack.c.h.b16 %v1982
      %v2549 = vunpack.c.l.b16 %v1983
      %v2550 = vunpack.c.h.b16 %v1983
      %v2551 = vunpack.c.l.b16 %v1984
      %v2552 = vunpack.c.h.b16 %v1984
      %v2553 = vunpack.c.l.b16 %v1985
      %v2554 = vunpack.c.h.b16 %v1985
      %v2555 = vunpack.c.l.b16 %v1986
      %v2556 = vunpack.c.h.b16 %v1986
      %v2557 = vunpack.c.l.b16 %v1987
      %v2558 = vunpack.c.h.b16 %v1987
      %v2559 = vunpack.c.l.b16 %v1988
      %v2560 = vunpack.c.h.b16 %v1988
      %v2561 = vunpack.c.l.b16 %v1989
      %v2562 = vunpack.c.h.b16 %v1989
      %v2563 = vunpack.c.l.b16 %v1990
      %v2564 = vunpack.c.h.b16 %v1990
      %v2565 = vunpack.c.l.b16 %v1991
      %v2566 = vunpack.c.h.b16 %v1991
      %v2567 = vunpack.c.l.b16 %v1992
      %v2568 = vunpack.c.h.b16 %v1992
      %v2569 = vpack.c.b16 %v2191, %v2185
      %v2570 = vpack.c.b16 %v2192, %v2186
      %v2571 = vpack.c.b16 %v2193, %v2187
      %v2572 = vpack.c.b16 %v2194, %v2188
      %v2573 = vpack.c.b16 %v2195, %v2189
      %v2574 = vpack.c.b16 %v2196, %v2190
      %v2575 = vpack.c.b16 %v2203, %v2197
      %v2576 = vpack.c.b16 %v2204, %v2198
      %v2577 = vpack.c.b16 %v2205, %v2199
      %v2578 = vpack.c.b16 %v2206, %v2200
      %v2579 = vpack.c.b16 %v2207, %v2201
      %v2580 = vpack.c.b16 %v2208, %v2202
      %v2581 = vpack.c.b16 %v2215, %v2209
      %v2582 = vpack.c.b16 %v2216, %v2210
      %v2583 = vpack.c.b16 %v2217, %v2211
      %v2584 = vpack.c.b16 %v2218, %v2212
      %v2585 = vpack.c.b16 %v2219, %v2213
      %v2586 = vpack.c.b16 %v2220, %v2214
      %v2587 = vpack.c.b16 %v2227, %v2221
      %v2588 = vpack.c.b16 %v2228, %v2222
      %v2589 = vpack.c.b16 %v2229, %v2223
      %v2590 = vpack.c.b16 %v2230, %v2224
      %v2591 = vpack.c.b16 %v2231, %v2225
      %v2592 = vpack.c.b16 %v2232, %v2226
      %v2593 = vpack.c.b16 %v2239, %v2233
      %v2594 = vpack.c.b16 %v2240, %v2234
      %v2595 = vpack.c.b16 %v2241, %v2235
      %v2596 = vpack.c.b16 %v2242, %v2236
      %v2597 = vpack.c.b16 %v2243, %v2237
      %v2598 = vpack.c.b16 %v2244, %v2238
      %v2599 = vpack.c.b16 %v2251, %v2245
      %v2600 = vpack.c.b16 %v2252, %v2246
      %v2601 = vpack.c.b16 %v2253, %v2247
      %v2602 = vpack.c.b16 %v2254, %v2248
      %v2603 = vpack.c.b16 %v2255, %v2249
      %v2604 = vpack.c.b16 %v2256, %v2250
      %v2605 = vpack.c.b16 %v2263, %v2257
      %v2606 = vpack.c.b16 %v2264, %v2258
      %v2607 = vpack.c.b16 %v2265, %v2259
      %v2608 = vpack.c.b16 %v2266, %v2260
      %v2609 = vpack.c.b16 %v2267, %v2261
      %v2610 = vpack.c.b16 %v2268, %v2262
      %v2611 = vpack.c.b16 %v2275, %v2269
      %v2612 = vpack.c.b16 %v2276, %v2270
      %v2613 = vpack.c.b16 %v2277, %v2271
      %v2614 = vpack.c.b16 %v2278, %v2272
      %v2615 = vpack.c.b16 %v2279, %v2273
      %v2616 = vpack.c.b16 %v2280, %v2274
      %v2617 = vpack.c.b16 %v2287, %v2281
      %v2618 = vpack.c.b16 %v2288, %v2282
      %v2619 = vpack.c.b16 %v2289, %v2283
      %v2620 = vpack.c.b16 %v2290, %v2284
      %v2621 = vpack.c.b16 %v2291, %v2285
      %v2622 = vpack.c.b16 %v2292, %v2286
      %v2623 = vpack.c.b16 %v2299, %v2293
      %v2624 = vpack.c.b16 %v2300, %v2294
      %v2625 = vpack.c.b16 %v2301, %v2295
      %v2626 = vpack.c.b16 %v2302, %v2296
      %v2627 = vpack.c.b16 %v2303, %v2297
      %v2628 = vpack.c.b16 %v2304, %v2298
      %v2629 = vpack.c.b16 %v2311, %v2305
      %v2630 = vpack.c.b16 %v2312, %v2306
      %v2631 = vpack.c.b16 %v2313, %v2307
      %v2632 = vpack.c.b16 %v2314, %v2308
      %v2633 = vpack.c.b16 %v2315, %v2309
      %v2634 = vpack.c.b16 %v2316, %v2310
      %v2635 = vpack.c.b16 %v2323, %v2317
      %v2636 = vpack.c.b16 %v2324, %v2318
      %v2637 = vpack.c.b16 %v2325, %v2319
      %v2638 = vpack.c.b16 %v2326, %v2320
      %v2639 = vpack.c.b16 %v2327, %v2321
      %v2640 = vpack.c.b16 %v2328, %v2322
      %v2641 = vpack.c.b16 %v2335, %v2329
      %v2642 = vpack.c.b16 %v2336, %v2330
      %v2643 = vpack.c.b16 %v2337, %v2331
      %v2644 = vpack.c.b16 %v2338, %v2332
      %v2645 = vpack.c.b16 %v2339, %v2333
      %v2646 = vpack.c.b16 %v2340, %v2334
      %v2647 = vpack.c.b16 %v2347, %v2341
      %v2648 = vpack.c.b16 %v2348, %v2342
      %v2649 = vpack.c.b16 %v2349, %v2343
      %v2650 = vpack.c.b16 %v2350, %v2344
      %v2651 = vpack.c.b16 %v2351, %v2345
      %v2652 = vpack.c.b16 %v2352, %v2346
      %v2653 = vpack.c.b16 %v2359, %v2353
      %v2654 = vpack.c.b16 %v2360, %v2354
      %v2655 = vpack.c.b16 %v2361, %v2355
      %v2656 = vpack.c.b16 %v2362, %v2356
      %v2657 = vpack.c.b16 %v2363, %v2357
      %v2658 = vpack.c.b16 %v2364, %v2358
      %v2659 = vpack.c.b16 %v2371, %v2365
      %v2660 = vpack.c.b16 %v2372, %v2366
      %v2661 = vpack.c.b16 %v2373, %v2367
      %v2662 = vpack.c.b16 %v2374, %v2368
      %v2663 = vpack.c.b16 %v2375, %v2369
      %v2664 = vpack.c.b16 %v2376, %v2370
      %v2665 = vpack.c.b16 %v2383, %v2377
      %v2666 = vpack.c.b16 %v2384, %v2378
      %v2667 = vpack.c.b16 %v2385, %v2379
      %v2668 = vpack.c.b16 %v2386, %v2380
      %v2669 = vpack.c.b16 %v2387, %v2381
      %v2670 = vpack.c.b16 %v2388, %v2382
      %v2671 = vpack.c.b16 %v2395, %v2389
      %v2672 = vpack.c.b16 %v2396, %v2390
      %v2673 = vpack.c.b16 %v2397, %v2391
      %v2674 = vpack.c.b16 %v2398, %v2392
      %v2675 = vpack.c.b16 %v2399, %v2393
      %v2676 = vpack.c.b16 %v2400, %v2394
      %v2677 = vpack.c.b16 %v2407, %v2401
      %v2678 = vpack.c.b16 %v2408, %v2402
      %v2679 = vpack.c.b16 %v2409, %v2403
      %v2680 = vpack.c.b16 %v2410, %v2404
      %v2681 = vpack.c.b16 %v2411, %v2405
      %v2682 = vpack.c.b16 %v2412, %v2406
      %v2683 = vpack.c.b16 %v2419, %v2413
      %v2684 = vpack.c.b16 %v2420, %v2414
      %v2685 = vpack.c.b16 %v2421, %v2415
      %v2686 = vpack.c.b16 %v2422, %v2416
      %v2687 = vpack.c.b16 %v2423, %v2417
      %v2688 = vpack.c.b16 %v2424, %v2418
      %v2689 = vpack.c.b16 %v2431, %v2425
      %v2690 = vpack.c.b16 %v2432, %v2426
      %v2691 = vpack.c.b16 %v2433, %v2427
      %v2692 = vpack.c.b16 %v2434, %v2428
      %v2693 = vpack.c.b16 %v2435, %v2429
      %v2694 = vpack.c.b16 %v2436, %v2430
      %v2695 = vpack.c.b16 %v2443, %v2437
      %v2696 = vpack.c.b16 %v2444, %v2438
      %v2697 = vpack.c.b16 %v2445, %v2439
      %v2698 = vpack.c.b16 %v2446, %v2440
      %v2699 = vpack.c.b16 %v2447, %v2441
      %v2700 = vpack.c.b16 %v2448, %v2442
      %v2701 = vpack.c.b16 %v2455, %v2449
      %v2702 = vpack.c.b16 %v2456, %v2450
      %v2703 = vpack.c.b16 %v2457, %v2451
      %v2704 = vpack.c.b16 %v2458, %v2452
      %v2705 = vpack.c.b16 %v2459, %v2453
      %v2706 = vpack.c.b16 %v2460, %v2454
      %v2707 = vpack.c.b16 %v2467, %v2461
      %v2708 = vpack.c.b16 %v2468, %v2462
      %v2709 = vpack.c.b16 %v2469, %v2463
      %v2710 = vpack.c.b16 %v2470, %v2464
      %v2711 = vpack.c.b16 %v2471, %v2465
      %v2712 = vpack.c.b16 %v2472, %v2466
      %v2713 = vpack.c.b16 %v2479, %v2473
      %v2714 = vpack.c.b16 %v2480, %v2474
      %v2715 = vpack.c.b16 %v2481, %v2475
      %v2716 = vpack.c.b16 %v2482, %v2476
      %v2717 = vpack.c.b16 %v2483, %v2477
      %v2718 = vpack.c.b16 %v2484, %v2478
      %v2719 = vpack.c.b16 %v2491, %v2485
      %v2720 = vpack.c.b16 %v2492, %v2486
      %v2721 = vpack.c.b16 %v2493, %v2487
      %v2722 = vpack.c.b16 %v2494, %v2488
      %v2723 = vpack.c.b16 %v2495, %v2489
      %v2724 = vpack.c.b16 %v2496, %v2490
      %v2725 = vpack.c.b16 %v2503, %v2497
      %v2726 = vpack.c.b16 %v2504, %v2498
      %v2727 = vpack.c.b16 %v2505, %v2499
      %v2728 = vpack.c.b16 %v2506, %v2500
      %v2729 = vpack.c.b16 %v2507, %v2501
      %v2730 = vpack.c.b16 %v2508, %v2502
      %v2731 = vpack.c.b16 %v2515, %v2509
      %v2732 = vpack.c.b16 %v2516, %v2510
      %v2733 = vpack.c.b16 %v2517, %v2511
      %v2734 = vpack.c.b16 %v2518, %v2512
      %v2735 = vpack.c.b16 %v2519, %v2513
      %v2736 = vpack.c.b16 %v2520, %v2514
      %v2737 = vpack.c.b16 %v2527, %v2521
      %v2738 = vpack.c.b16 %v2528, %v2522
      %v2739 = vpack.c.b16 %v2529, %v2523
      %v2740 = vpack.c.b16 %v2530, %v2524
      %v2741 = vpack.c.b16 %v2531, %v2525
      %v2742 = vpack.c.b16 %v2532, %v2526
      %v2743 = vpack.c.b16 %v2539, %v2533
      %v2744 = vpack.c.b16 %v2540, %v2534
      %v2745 = vpack.c.b16 %v2541, %v2535
      %v2746 = vpack.c.b16 %v2542, %v2536
      %v2747 = vpack.c.b16 %v2543, %v2537
      %v2748 = vpack.c.b16 %v2544, %v2538
      %v2749 = vpack.c.b16 %v2551, %v2545
      %v2750 = vpack.c.b16 %v2552, %v2546
      %v2751 = vpack.c.b16 %v2553, %v2547
      %v2752 = vpack.c.b16 %v2554, %v2548
      %v2753 = vpack.c.b16 %v2555, %v2549
      %v2754 = vpack.c.b16 %v2556, %v2550
      %v2755 = vpack.c.b16 %v2563, %v2557
      %v2756 = vpack.c.b16 %v2564, %v2558
      %v2757 = vpack.c.b16 %v2565, %v2559
      %v2758 = vpack.c.b16 %v2566, %v2560
      %v2759 = vpack.c.b16 %v2567, %v2561
      %v2760 = vpack.c.b16 %v2568, %v2562
      %2953 = vmatpush.bf16.msra.mxu0 %v2611
      %2954 = vmatpush.bf16.msra.mxu0 %v2605
      %2955 = vmatpush.bf16.msra.mxu0 %v2599
      %2956 = vmatpush.bf16.msra.mxu0 %v2593
      %2957 = vmatpush.bf16.msra.mxu0 %v2587
      %2958 = vmatpush.bf16.msra.mxu0 %v2581
      %2959 = vmatpush.bf16.msra.mxu0 %v2575
      %2960 = vmatpush.bf16.msra.mxu0 %v2569
      %2961 = vmatmul.bf16.gmra.mxu0 %v1749
      %v2962 = vpop.f32.mrf.mxu0
      %v2963 = vadd.f32 0.0, %v2962
      %v2964 = vpop.f32.mrf.mxu0
      %v2965 = vadd.f32 0.0, %v2964
      %2966 = vmatmul.bf16.gmra.mxu0 %v1753
      %v2967 = vpop.f32.mrf.mxu0
      %v2968 = vadd.f32 0.0, %v2967
      %v2969 = vpop.f32.mrf.mxu0
      %v2970 = vadd.f32 0.0, %v2969
      %2971 = vmatmul.bf16.gmra.mxu0 %v1757
      %v2972 = vpop.f32.mrf.mxu0
      %v2973 = vadd.f32 0.0, %v2972
      %v2974 = vpop.f32.mrf.mxu0
      %v2975 = vadd.f32 0.0, %v2974
      %2976 = vmatmul.bf16.gmra.mxu0 %v1761
      %v2977 = vpop.f32.mrf.mxu0
      %v2978 = vadd.f32 0.0, %v2977
      %v2979 = vpop.f32.mrf.mxu0
      %v2980 = vadd.f32 0.0, %v2979
      %2981 = vdwg.mxu0
      %2982 = vmatpush.bf16.msra.mxu0 %v2659
      %2983 = vmatpush.bf16.msra.mxu0 %v2653
      %2984 = vmatpush.bf16.msra.mxu0 %v2647
      %2985 = vmatpush.bf16.msra.mxu0 %v2641
      %2986 = vmatpush.bf16.msra.mxu0 %v2635
      %2987 = vmatpush.bf16.msra.mxu0 %v2629
      %2988 = vmatpush.bf16.msra.mxu0 %v2623
      %2989 = vmatpush.bf16.msra.mxu0 %v2617
      %2990 = vmatmul.bf16.gmra.mxu0 %v1750
      %v2991 = vpop.f32.mrf.mxu0
      %v2992 = vadd.f32 %v2963, %v2991
      %v2993 = vpop.f32.mrf.mxu0
      %v2994 = vadd.f32 %v2965, %v2993
      %2995 = vmatmul.bf16.gmra.mxu0 %v1754
      %v2996 = vpop.f32.mrf.mxu0
      %v2997 = vadd.f32 %v2968, %v2996
      %v2998 = vpop.f32.mrf.mxu0
      %v2999 = vadd.f32 %v2970, %v2998
      %3000 = vmatmul.bf16.gmra.mxu0 %v1758
      %v3001 = vpop.f32.mrf.mxu0
      %v3002 = vadd.f32 %v2973, %v3001
      %v3003 = vpop.f32.mrf.mxu0
      %v3004 = vadd.f32 %v2975, %v3003
      %3005 = vmatmul.bf16.gmra.mxu0 %v1762
      %v3006 = vpop.f32.mrf.mxu0
      %v3007 = vadd.f32 %v2978, %v3006
      %v3008 = vpop.f32.mrf.mxu0
      %v3009 = vadd.f32 %v2980, %v3008
      %3010 = vdwg.mxu0
      %3011 = vmatpush.bf16.msra.mxu0 %v2707
      %3012 = vmatpush.bf16.msra.mxu0 %v2701
      %3013 = vmatpush.bf16.msra.mxu0 %v2695
      %3014 = vmatpush.bf16.msra.mxu0 %v2689
      %3015 = vmatpush.bf16.msra.mxu0 %v2683
      %3016 = vmatpush.bf16.msra.mxu0 %v2677
      %3017 = vmatpush.bf16.msra.mxu0 %v2671
      %3018 = vmatpush.bf16.msra.mxu0 %v2665
      %3019 = vmatmul.bf16.gmra.mxu0 %v1751
      %v3020 = vpop.f32.mrf.mxu0
      %v3021 = vadd.f32 %v2992, %v3020
      %v3022 = vpop.f32.mrf.mxu0
      %v3023 = vadd.f32 %v2994, %v3022
      %3024 = vmatmul.bf16.gmra.mxu0 %v1755
      %v3025 = vpop.f32.mrf.mxu0
      %v3026 = vadd.f32 %v2997, %v3025
      %v3027 = vpop.f32.mrf.mxu0
      %v3028 = vadd.f32 %v2999, %v3027
      %3029 = vmatmul.bf16.gmra.mxu0 %v1759
      %v3030 = vpop.f32.mrf.mxu0
      %v3031 = vadd.f32 %v3002, %v3030
      %v3032 = vpop.f32.mrf.mxu0
      %v3033 = vadd.f32 %v3004, %v3032
      %3034 = vmatmul.bf16.gmra.mxu0 %v1763
      %v3035 = vpop.f32.mrf.mxu0
      %v3036 = vadd.f32 %v3007, %v3035
      %v3037 = vpop.f32.mrf.mxu0
      %v3038 = vadd.f32 %v3009, %v3037
      %3039 = vdwg.mxu0
      %3040 = vmatpush.bf16.msra.mxu0 %v2755
      %3041 = vmatpush.bf16.msra.mxu0 %v2749
      %3042 = vmatpush.bf16.msra.mxu0 %v2743
      %3043 = vmatpush.bf16.msra.mxu0 %v2737
      %3044 = vmatpush.bf16.msra.mxu0 %v2731
      %3045 = vmatpush.bf16.msra.mxu0 %v2725
      %3046 = vmatpush.bf16.msra.mxu0 %v2719
      %3047 = vmatpush.bf16.msra.mxu0 %v2713
      %3048 = vmatmul.bf16.gmra.mxu0 %v1752
      %v3049 = vpop.f32.mrf.mxu0
      %v3050 = vadd.f32 %v3021, %v3049
      %v3051 = vpop.f32.mrf.mxu0
      %v3052 = vadd.f32 %v3023, %v3051
      %3053 = vmatmul.bf16.gmra.mxu0 %v1756
      %v3054 = vpop.f32.mrf.mxu0
      %v3055 = vadd.f32 %v3026, %v3054
      %v3056 = vpop.f32.mrf.mxu0
      %v3057 = vadd.f32 %v3028, %v3056
      %3058 = vmatmul.bf16.gmra.mxu0 %v1760
      %v3059 = vpop.f32.mrf.mxu0
      %v3060 = vadd.f32 %v3031, %v3059
      %v3061 = vpop.f32.mrf.mxu0
      %v3062 = vadd.f32 %v3033, %v3061
      %3063 = vmatmul.bf16.gmra.mxu0 %v1764
      %v3064 = vpop.f32.mrf.mxu0
      %v3065 = vadd.f32 %v3036, %v3064
      %v3066 = vpop.f32.mrf.mxu0
      %v3067 = vadd.f32 %v3038, %v3066
      %3068 = vdwg.mxu0
      %3069 = vmatpush.bf16.msra.mxu0 %v2612
      %3070 = vmatpush.bf16.msra.mxu0 %v2606
      %3071 = vmatpush.bf16.msra.mxu0 %v2600
      %3072 = vmatpush.bf16.msra.mxu0 %v2594
      %3073 = vmatpush.bf16.msra.mxu0 %v2588
      %3074 = vmatpush.bf16.msra.mxu0 %v2582
      %3075 = vmatpush.bf16.msra.mxu0 %v2576
      %3076 = vmatpush.bf16.msra.mxu0 %v2570
      %3077 = vmatmul.bf16.gmra.mxu0 %v1749
      %v3078 = vpop.f32.mrf.mxu0
      %v3079 = vadd.f32 0.0, %v3078
      %v3080 = vpop.f32.mrf.mxu0
      %v3081 = vadd.f32 0.0, %v3080
      %3082 = vmatmul.bf16.gmra.mxu0 %v1753
      %v3083 = vpop.f32.mrf.mxu0
      %v3084 = vadd.f32 0.0, %v3083
      %v3085 = vpop.f32.mrf.mxu0
      %v3086 = vadd.f32 0.0, %v3085
      %3087 = vmatmul.bf16.gmra.mxu0 %v1757
      %v3088 = vpop.f32.mrf.mxu0
      %v3089 = vadd.f32 0.0, %v3088
      %v3090 = vpop.f32.mrf.mxu0
      %v3091 = vadd.f32 0.0, %v3090
      %3092 = vmatmul.bf16.gmra.mxu0 %v1761
      %v3093 = vpop.f32.mrf.mxu0
      %v3094 = vadd.f32 0.0, %v3093
      %v3095 = vpop.f32.mrf.mxu0
      %v3096 = vadd.f32 0.0, %v3095
      %3097 = vdwg.mxu0
      %3098 = vmatpush.bf16.msra.mxu0 %v2660
      %3099 = vmatpush.bf16.msra.mxu0 %v2654
      %3100 = vmatpush.bf16.msra.mxu0 %v2648
      %3101 = vmatpush.bf16.msra.mxu0 %v2642
      %3102 = vmatpush.bf16.msra.mxu0 %v2636
      %3103 = vmatpush.bf16.msra.mxu0 %v2630
      %3104 = vmatpush.bf16.msra.mxu0 %v2624
      %3105 = vmatpush.bf16.msra.mxu0 %v2618
      %3106 = vmatmul.bf16.gmra.mxu0 %v1750
      %v3107 = vpop.f32.mrf.mxu0
      %v3108 = vadd.f32 %v3079, %v3107
      %v3109 = vpop.f32.mrf.mxu0
      %v3110 = vadd.f32 %v3081, %v3109
      %3111 = vmatmul.bf16.gmra.mxu0 %v1754
      %v3112 = vpop.f32.mrf.mxu0
      %v3113 = vadd.f32 %v3084, %v3112
      %v3114 = vpop.f32.mrf.mxu0
      %v3115 = vadd.f32 %v3086, %v3114
      %3116 = vmatmul.bf16.gmra.mxu0 %v1758
      %v3117 = vpop.f32.mrf.mxu0
      %v3118 = vadd.f32 %v3089, %v3117
      %v3119 = vpop.f32.mrf.mxu0
      %v3120 = vadd.f32 %v3091, %v3119
      %3121 = vmatmul.bf16.gmra.mxu0 %v1762
      %v3122 = vpop.f32.mrf.mxu0
      %v3123 = vadd.f32 %v3094, %v3122
      %v3124 = vpop.f32.mrf.mxu0
      %v3125 = vadd.f32 %v3096, %v3124
      %3126 = vdwg.mxu0
      %3127 = vmatpush.bf16.msra.mxu0 %v2708
      %3128 = vmatpush.bf16.msra.mxu0 %v2702
      %3129 = vmatpush.bf16.msra.mxu0 %v2696
      %3130 = vmatpush.bf16.msra.mxu0 %v2690
      %3131 = vmatpush.bf16.msra.mxu0 %v2684
      %3132 = vmatpush.bf16.msra.mxu0 %v2678
      %3133 = vmatpush.bf16.msra.mxu0 %v2672
      %3134 = vmatpush.bf16.msra.mxu0 %v2666
      %3135 = vmatmul.bf16.gmra.mxu0 %v1751
      %v3136 = vpop.f32.mrf.mxu0
      %v3137 = vadd.f32 %v3108, %v3136
      %v3138 = vpop.f32.mrf.mxu0
      %v3139 = vadd.f32 %v3110, %v3138
      %3140 = vmatmul.bf16.gmra.mxu0 %v1755
      %v3141 = vpop.f32.mrf.mxu0
      %v3142 = vadd.f32 %v3113, %v3141
      %v3143 = vpop.f32.mrf.mxu0
      %v3144 = vadd.f32 %v3115, %v3143
      %3145 = vmatmul.bf16.gmra.mxu0 %v1759
      %v3146 = vpop.f32.mrf.mxu0
      %v3147 = vadd.f32 %v3118, %v3146
      %v3148 = vpop.f32.mrf.mxu0
      %v3149 = vadd.f32 %v3120, %v3148
      %3150 = vmatmul.bf16.gmra.mxu0 %v1763
      %v3151 = vpop.f32.mrf.mxu0
      %v3152 = vadd.f32 %v3123, %v3151
      %v3153 = vpop.f32.mrf.mxu0
      %v3154 = vadd.f32 %v3125, %v3153
      %3155 = vdwg.mxu0
      %3156 = vmatpush.bf16.msra.mxu0 %v2756
      %3157 = vmatpush.bf16.msra.mxu0 %v2750
      %3158 = vmatpush.bf16.msra.mxu0 %v2744
      %3159 = vmatpush.bf16.msra.mxu0 %v2738
      %3160 = vmatpush.bf16.msra.mxu0 %v2732
      %3161 = vmatpush.bf16.msra.mxu0 %v2726
      %3162 = vmatpush.bf16.msra.mxu0 %v2720
      %3163 = vmatpush.bf16.msra.mxu0 %v2714
      %3164 = vmatmul.bf16.gmra.mxu0 %v1752
      %v3165 = vpop.f32.mrf.mxu0
      %v3166 = vadd.f32 %v3137, %v3165
      %v3167 = vpop.f32.mrf.mxu0
      %v3168 = vadd.f32 %v3139, %v3167
      %3169 = vmatmul.bf16.gmra.mxu0 %v1756
      %v3170 = vpop.f32.mrf.mxu0
      %v3171 = vadd.f32 %v3142, %v3170
      %v3172 = vpop.f32.mrf.mxu0
      %v3173 = vadd.f32 %v3144, %v3172
      %3174 = vmatmul.bf16.gmra.mxu0 %v1760
      %v3175 = vpop.f32.mrf.mxu0
      %v3176 = vadd.f32 %v3147, %v3175
      %v3177 = vpop.f32.mrf.mxu0
      %v3178 = vadd.f32 %v3149, %v3177
      %3179 = vmatmul.bf16.gmra.mxu0 %v1764
      %v3180 = vpop.f32.mrf.mxu0
      %v3181 = vadd.f32 %v3152, %v3180
      %v3182 = vpop.f32.mrf.mxu0
      %v3183 = vadd.f32 %v3154, %v3182
      %3184 = vdwg.mxu0
      %3185 = vmatpush.bf16.msra.mxu0 %v2613
      %3186 = vmatpush.bf16.msra.mxu0 %v2607
      %3187 = vmatpush.bf16.msra.mxu0 %v2601
      %3188 = vmatpush.bf16.msra.mxu0 %v2595
      %3189 = vmatpush.bf16.msra.mxu0 %v2589
      %3190 = vmatpush.bf16.msra.mxu0 %v2583
      %3191 = vmatpush.bf16.msra.mxu0 %v2577
      %3192 = vmatpush.bf16.msra.mxu0 %v2571
      %3193 = vmatmul.bf16.gmra.mxu0 %v1749
      %v3194 = vpop.f32.mrf.mxu0
      %v3195 = vadd.f32 0.0, %v3194
      %v3196 = vpop.f32.mrf.mxu0
      %v3197 = vadd.f32 0.0, %v3196
      %3198 = vmatmul.bf16.gmra.mxu0 %v1753
      %v3199 = vpop.f32.mrf.mxu0
      %v3200 = vadd.f32 0.0, %v3199
      %v3201 = vpop.f32.mrf.mxu0
      %v3202 = vadd.f32 0.0, %v3201
      %3203 = vmatmul.bf16.gmra.mxu0 %v1757
      %v3204 = vpop.f32.mrf.mxu0
      %v3205 = vadd.f32 0.0, %v3204
      %v3206 = vpop.f32.mrf.mxu0
      %v3207 = vadd.f32 0.0, %v3206
      %3208 = vmatmul.bf16.gmra.mxu0 %v1761
      %v3209 = vpop.f32.mrf.mxu0
      %v3210 = vadd.f32 0.0, %v3209
      %v3211 = vpop.f32.mrf.mxu0
      %v3212 = vadd.f32 0.0, %v3211
      %3213 = vdwg.mxu0
      %3214 = vmatpush.bf16.msra.mxu0 %v2661
      %3215 = vmatpush.bf16.msra.mxu0 %v2655
      %3216 = vmatpush.bf16.msra.mxu0 %v2649
      %3217 = vmatpush.bf16.msra.mxu0 %v2643
      %3218 = vmatpush.bf16.msra.mxu0 %v2637
      %3219 = vmatpush.bf16.msra.mxu0 %v2631
      %3220 = vmatpush.bf16.msra.mxu0 %v2625
      %3221 = vmatpush.bf16.msra.mxu0 %v2619
      %3222 = vmatmul.bf16.gmra.mxu0 %v1750
      %v3223 = vpop.f32.mrf.mxu0
      %v3224 = vadd.f32 %v3195, %v3223
      %v3225 = vpop.f32.mrf.mxu0
      %v3226 = vadd.f32 %v3197, %v3225
      %3227 = vmatmul.bf16.gmra.mxu0 %v1754
      %v3228 = vpop.f32.mrf.mxu0
      %v3229 = vadd.f32 %v3200, %v3228
      %v3230 = vpop.f32.mrf.mxu0
      %v3231 = vadd.f32 %v3202, %v3230
      %3232 = vmatmul.bf16.gmra.mxu0 %v1758
      %v3233 = vpop.f32.mrf.mxu0
      %v3234 = vadd.f32 %v3205, %v3233
      %v3235 = vpop.f32.mrf.mxu0
      %v3236 = vadd.f32 %v3207, %v3235
      %3237 = vmatmul.bf16.gmra.mxu0 %v1762
      %v3238 = vpop.f32.mrf.mxu0
      %v3239 = vadd.f32 %v3210, %v3238
      %v3240 = vpop.f32.mrf.mxu0
      %v3241 = vadd.f32 %v3212, %v3240
      %3242 = vdwg.mxu0
      %3243 = vmatpush.bf16.msra.mxu0 %v2709
      %3244 = vmatpush.bf16.msra.mxu0 %v2703
      %3245 = vmatpush.bf16.msra.mxu0 %v2697
      %3246 = vmatpush.bf16.msra.mxu0 %v2691
      %3247 = vmatpush.bf16.msra.mxu0 %v2685
      %3248 = vmatpush.bf16.msra.mxu0 %v2679
      %3249 = vmatpush.bf16.msra.mxu0 %v2673
      %3250 = vmatpush.bf16.msra.mxu0 %v2667
      %3251 = vmatmul.bf16.gmra.mxu0 %v1751
      %v3252 = vpop.f32.mrf.mxu0
      %v3253 = vadd.f32 %v3224, %v3252
      %v3254 = vpop.f32.mrf.mxu0
      %v3255 = vadd.f32 %v3226, %v3254
      %3256 = vmatmul.bf16.gmra.mxu0 %v1755
      %v3257 = vpop.f32.mrf.mxu0
      %v3258 = vadd.f32 %v3229, %v3257
      %v3259 = vpop.f32.mrf.mxu0
      %v3260 = vadd.f32 %v3231, %v3259
      %3261 = vmatmul.bf16.gmra.mxu0 %v1759
      %v3262 = vpop.f32.mrf.mxu0
      %v3263 = vadd.f32 %v3234, %v3262
      %v3264 = vpop.f32.mrf.mxu0
      %v3265 = vadd.f32 %v3236, %v3264
      %3266 = vmatmul.bf16.gmra.mxu0 %v1763
      %v3267 = vpop.f32.mrf.mxu0
      %v3268 = vadd.f32 %v3239, %v3267
      %v3269 = vpop.f32.mrf.mxu0
      %v3270 = vadd.f32 %v3241, %v3269
      %3271 = vdwg.mxu0
      %3272 = vmatpush.bf16.msra.mxu0 %v2757
      %3273 = vmatpush.bf16.msra.mxu0 %v2751
      %3274 = vmatpush.bf16.msra.mxu0 %v2745
      %3275 = vmatpush.bf16.msra.mxu0 %v2739
      %3276 = vmatpush.bf16.msra.mxu0 %v2733
      %3277 = vmatpush.bf16.msra.mxu0 %v2727
      %3278 = vmatpush.bf16.msra.mxu0 %v2721
      %3279 = vmatpush.bf16.msra.mxu0 %v2715
      %3280 = vmatmul.bf16.gmra.mxu0 %v1752
      %v3281 = vpop.f32.mrf.mxu0
      %v3282 = vadd.f32 %v3253, %v3281
      %v3283 = vpop.f32.mrf.mxu0
      %v3284 = vadd.f32 %v3255, %v3283
      %3285 = vmatmul.bf16.gmra.mxu0 %v1756
      %v3286 = vpop.f32.mrf.mxu0
      %v3287 = vadd.f32 %v3258, %v3286
      %v3288 = vpop.f32.mrf.mxu0
      %v3289 = vadd.f32 %v3260, %v3288
      %3290 = vmatmul.bf16.gmra.mxu0 %v1760
      %v3291 = vpop.f32.mrf.mxu0
      %v3292 = vadd.f32 %v3263, %v3291
      %v3293 = vpop.f32.mrf.mxu0
      %v3294 = vadd.f32 %v3265, %v3293
      %3295 = vmatmul.bf16.gmra.mxu0 %v1764
      %v3296 = vpop.f32.mrf.mxu0
      %v3297 = vadd.f32 %v3268, %v3296
      %v3298 = vpop.f32.mrf.mxu0
      %v3299 = vadd.f32 %v3270, %v3298
      %3300 = vdwg.mxu0
      %3301 = vmatpush.bf16.msra.mxu0 %v2614
      %3302 = vmatpush.bf16.msra.mxu0 %v2608
      %3303 = vmatpush.bf16.msra.mxu0 %v2602
      %3304 = vmatpush.bf16.msra.mxu0 %v2596
      %3305 = vmatpush.bf16.msra.mxu0 %v2590
      %3306 = vmatpush.bf16.msra.mxu0 %v2584
      %3307 = vmatpush.bf16.msra.mxu0 %v2578
      %3308 = vmatpush.bf16.msra.mxu0 %v2572
      %3309 = vmatmul.bf16.gmra.mxu0 %v1749
      %v3310 = vpop.f32.mrf.mxu0
      %v3311 = vadd.f32 0.0, %v3310
      %v3312 = vpop.f32.mrf.mxu0
      %v3313 = vadd.f32 0.0, %v3312
      %3314 = vmatmul.bf16.gmra.mxu0 %v1753
      %v3315 = vpop.f32.mrf.mxu0
      %v3316 = vadd.f32 0.0, %v3315
      %v3317 = vpop.f32.mrf.mxu0
      %v3318 = vadd.f32 0.0, %v3317
      %3319 = vmatmul.bf16.gmra.mxu0 %v1757
      %v3320 = vpop.f32.mrf.mxu0
      %v3321 = vadd.f32 0.0, %v3320
      %v3322 = vpop.f32.mrf.mxu0
      %v3323 = vadd.f32 0.0, %v3322
      %3324 = vmatmul.bf16.gmra.mxu0 %v1761
      %v3325 = vpop.f32.mrf.mxu0
      %v3326 = vadd.f32 0.0, %v3325
      %v3327 = vpop.f32.mrf.mxu0
      %v3328 = vadd.f32 0.0, %v3327
      %3329 = vdwg.mxu0
      %3330 = vmatpush.bf16.msra.mxu0 %v2662
      %3331 = vmatpush.bf16.msra.mxu0 %v2656
      %3332 = vmatpush.bf16.msra.mxu0 %v2650
      %3333 = vmatpush.bf16.msra.mxu0 %v2644
      %3334 = vmatpush.bf16.msra.mxu0 %v2638
      %3335 = vmatpush.bf16.msra.mxu0 %v2632
      %3336 = vmatpush.bf16.msra.mxu0 %v2626
      %3337 = vmatpush.bf16.msra.mxu0 %v2620
      %3338 = vmatmul.bf16.gmra.mxu0 %v1750
      %v3339 = vpop.f32.mrf.mxu0
      %v3340 = vadd.f32 %v3311, %v3339
      %v3341 = vpop.f32.mrf.mxu0
      %v3342 = vadd.f32 %v3313, %v3341
      %3343 = vmatmul.bf16.gmra.mxu0 %v1754
      %v3344 = vpop.f32.mrf.mxu0
      %v3345 = vadd.f32 %v3316, %v3344
      %v3346 = vpop.f32.mrf.mxu0
      %v3347 = vadd.f32 %v3318, %v3346
      %3348 = vmatmul.bf16.gmra.mxu0 %v1758
      %v3349 = vpop.f32.mrf.mxu0
      %v3350 = vadd.f32 %v3321, %v3349
      %v3351 = vpop.f32.mrf.mxu0
      %v3352 = vadd.f32 %v3323, %v3351
      %3353 = vmatmul.bf16.gmra.mxu0 %v1762
      %v3354 = vpop.f32.mrf.mxu0
      %v3355 = vadd.f32 %v3326, %v3354
      %v3356 = vpop.f32.mrf.mxu0
      %v3357 = vadd.f32 %v3328, %v3356
      %3358 = vdwg.mxu0
      %3359 = vmatpush.bf16.msra.mxu0 %v2710
      %3360 = vmatpush.bf16.msra.mxu0 %v2704
      %3361 = vmatpush.bf16.msra.mxu0 %v2698
      %3362 = vmatpush.bf16.msra.mxu0 %v2692
      %3363 = vmatpush.bf16.msra.mxu0 %v2686
      %3364 = vmatpush.bf16.msra.mxu0 %v2680
      %3365 = vmatpush.bf16.msra.mxu0 %v2674
      %3366 = vmatpush.bf16.msra.mxu0 %v2668
      %3367 = vmatmul.bf16.gmra.mxu0 %v1751
      %v3368 = vpop.f32.mrf.mxu0
      %v3369 = vadd.f32 %v3340, %v3368
      %v3370 = vpop.f32.mrf.mxu0
      %v3371 = vadd.f32 %v3342, %v3370
      %3372 = vmatmul.bf16.gmra.mxu0 %v1755
      %v3373 = vpop.f32.mrf.mxu0
      %v3374 = vadd.f32 %v3345, %v3373
      %v3375 = vpop.f32.mrf.mxu0
      %v3376 = vadd.f32 %v3347, %v3375
      %3377 = vmatmul.bf16.gmra.mxu0 %v1759
      %v3378 = vpop.f32.mrf.mxu0
      %v3379 = vadd.f32 %v3350, %v3378
      %v3380 = vpop.f32.mrf.mxu0
      %v3381 = vadd.f32 %v3352, %v3380
      %3382 = vmatmul.bf16.gmra.mxu0 %v1763
      %v3383 = vpop.f32.mrf.mxu0
      %v3384 = vadd.f32 %v3355, %v3383
      %v3385 = vpop.f32.mrf.mxu0
      %v3386 = vadd.f32 %v3357, %v3385
      %3387 = vdwg.mxu0
      %3388 = vmatpush.bf16.msra.mxu0 %v2758
      %3389 = vmatpush.bf16.msra.mxu0 %v2752
      %3390 = vmatpush.bf16.msra.mxu0 %v2746
      %3391 = vmatpush.bf16.msra.mxu0 %v2740
      %3392 = vmatpush.bf16.msra.mxu0 %v2734
      %3393 = vmatpush.bf16.msra.mxu0 %v2728
      %3394 = vmatpush.bf16.msra.mxu0 %v2722
      %3395 = vmatpush.bf16.msra.mxu0 %v2716
      %3396 = vmatmul.bf16.gmra.mxu0 %v1752
      %v3397 = vpop.f32.mrf.mxu0
      %v3398 = vadd.f32 %v3369, %v3397
      %v3399 = vpop.f32.mrf.mxu0
      %v3400 = vadd.f32 %v3371, %v3399
      %3401 = vmatmul.bf16.gmra.mxu0 %v1756
      %v3402 = vpop.f32.mrf.mxu0
      %v3403 = vadd.f32 %v3374, %v3402
      %v3404 = vpop.f32.mrf.mxu0
      %v3405 = vadd.f32 %v3376, %v3404
      %3406 = vmatmul.bf16.gmra.mxu0 %v1760
      %v3407 = vpop.f32.mrf.mxu0
      %v3408 = vadd.f32 %v3379, %v3407
      %v3409 = vpop.f32.mrf.mxu0
      %v3410 = vadd.f32 %v3381, %v3409
      %3411 = vmatmul.bf16.gmra.mxu0 %v1764
      %v3412 = vpop.f32.mrf.mxu0
      %v3413 = vadd.f32 %v3384, %v3412
      %v3414 = vpop.f32.mrf.mxu0
      %v3415 = vadd.f32 %v3386, %v3414
      %3416 = vdwg.mxu0
      %3417 = vmatpush.bf16.msra.mxu0 %v2615
      %3418 = vmatpush.bf16.msra.mxu0 %v2609
      %3419 = vmatpush.bf16.msra.mxu0 %v2603
      %3420 = vmatpush.bf16.msra.mxu0 %v2597
      %3421 = vmatpush.bf16.msra.mxu0 %v2591
      %3422 = vmatpush.bf16.msra.mxu0 %v2585
      %3423 = vmatpush.bf16.msra.mxu0 %v2579
      %3424 = vmatpush.bf16.msra.mxu0 %v2573
      %3425 = vmatmul.bf16.gmra.mxu0 %v1749
      %v3426 = vpop.f32.mrf.mxu0
      %v3427 = vadd.f32 0.0, %v3426
      %v3428 = vpop.f32.mrf.mxu0
      %v3429 = vadd.f32 0.0, %v3428
      %3430 = vmatmul.bf16.gmra.mxu0 %v1753
      %v3431 = vpop.f32.mrf.mxu0
      %v3432 = vadd.f32 0.0, %v3431
      %v3433 = vpop.f32.mrf.mxu0
      %v3434 = vadd.f32 0.0, %v3433
      %3435 = vmatmul.bf16.gmra.mxu0 %v1757
      %v3436 = vpop.f32.mrf.mxu0
      %v3437 = vadd.f32 0.0, %v3436
      %v3438 = vpop.f32.mrf.mxu0
      %v3439 = vadd.f32 0.0, %v3438
      %3440 = vmatmul.bf16.gmra.mxu0 %v1761
      %v3441 = vpop.f32.mrf.mxu0
      %v3442 = vadd.f32 0.0, %v3441
      %v3443 = vpop.f32.mrf.mxu0
      %v3444 = vadd.f32 0.0, %v3443
      %3445 = vdwg.mxu0
      %3446 = vmatpush.bf16.msra.mxu0 %v2663
      %3447 = vmatpush.bf16.msra.mxu0 %v2657
      %3448 = vmatpush.bf16.msra.mxu0 %v2651
      %3449 = vmatpush.bf16.msra.mxu0 %v2645
      %3450 = vmatpush.bf16.msra.mxu0 %v2639
      %3451 = vmatpush.bf16.msra.mxu0 %v2633
      %3452 = vmatpush.bf16.msra.mxu0 %v2627
      %3453 = vmatpush.bf16.msra.mxu0 %v2621
      %3454 = vmatmul.bf16.gmra.mxu0 %v1750
      %v3455 = vpop.f32.mrf.mxu0
      %v3456 = vadd.f32 %v3427, %v3455
      %v3457 = vpop.f32.mrf.mxu0
      %v3458 = vadd.f32 %v3429, %v3457
      %3459 = vmatmul.bf16.gmra.mxu0 %v1754
      %v3460 = vpop.f32.mrf.mxu0
      %v3461 = vadd.f32 %v3432, %v3460
      %v3462 = vpop.f32.mrf.mxu0
      %v3463 = vadd.f32 %v3434, %v3462
      %3464 = vmatmul.bf16.gmra.mxu0 %v1758
      %v3465 = vpop.f32.mrf.mxu0
      %v3466 = vadd.f32 %v3437, %v3465
      %v3467 = vpop.f32.mrf.mxu0
      %v3468 = vadd.f32 %v3439, %v3467
      %3469 = vmatmul.bf16.gmra.mxu0 %v1762
      %v3470 = vpop.f32.mrf.mxu0
      %v3471 = vadd.f32 %v3442, %v3470
      %v3472 = vpop.f32.mrf.mxu0
      %v3473 = vadd.f32 %v3444, %v3472
      %3474 = vdwg.mxu0
      %3475 = vmatpush.bf16.msra.mxu0 %v2711
      %3476 = vmatpush.bf16.msra.mxu0 %v2705
      %3477 = vmatpush.bf16.msra.mxu0 %v2699
      %3478 = vmatpush.bf16.msra.mxu0 %v2693
      %3479 = vmatpush.bf16.msra.mxu0 %v2687
      %3480 = vmatpush.bf16.msra.mxu0 %v2681
      %3481 = vmatpush.bf16.msra.mxu0 %v2675
      %3482 = vmatpush.bf16.msra.mxu0 %v2669
      %3483 = vmatmul.bf16.gmra.mxu0 %v1751
      %v3484 = vpop.f32.mrf.mxu0
      %v3485 = vadd.f32 %v3456, %v3484
      %v3486 = vpop.f32.mrf.mxu0
      %v3487 = vadd.f32 %v3458, %v3486
      %3488 = vmatmul.bf16.gmra.mxu0 %v1755
      %v3489 = vpop.f32.mrf.mxu0
      %v3490 = vadd.f32 %v3461, %v3489
      %v3491 = vpop.f32.mrf.mxu0
      %v3492 = vadd.f32 %v3463, %v3491
      %3493 = vmatmul.bf16.gmra.mxu0 %v1759
      %v3494 = vpop.f32.mrf.mxu0
      %v3495 = vadd.f32 %v3466, %v3494
      %v3496 = vpop.f32.mrf.mxu0
      %v3497 = vadd.f32 %v3468, %v3496
      %3498 = vmatmul.bf16.gmra.mxu0 %v1763
      %v3499 = vpop.f32.mrf.mxu0
      %v3500 = vadd.f32 %v3471, %v3499
      %v3501 = vpop.f32.mrf.mxu0
      %v3502 = vadd.f32 %v3473, %v3501
      %3503 = vdwg.mxu0
      %3504 = vmatpush.bf16.msra.mxu0 %v2759
      %3505 = vmatpush.bf16.msra.mxu0 %v2753
      %3506 = vmatpush.bf16.msra.mxu0 %v2747
      %3507 = vmatpush.bf16.msra.mxu0 %v2741
      %3508 = vmatpush.bf16.msra.mxu0 %v2735
      %3509 = vmatpush.bf16.msra.mxu0 %v2729
      %3510 = vmatpush.bf16.msra.mxu0 %v2723
      %3511 = vmatpush.bf16.msra.mxu0 %v2717
      %3512 = vmatmul.bf16.gmra.mxu0 %v1752
      %v3513 = vpop.f32.mrf.mxu0
      %v3514 = vadd.f32 %v3485, %v3513
      %v3515 = vpop.f32.mrf.mxu0
      %v3516 = vadd.f32 %v3487, %v3515
      %3517 = vmatmul.bf16.gmra.mxu0 %v1756
      %v3518 = vpop.f32.mrf.mxu0
      %v3519 = vadd.f32 %v3490, %v3518
      %v3520 = vpop.f32.mrf.mxu0
      %v3521 = vadd.f32 %v3492, %v3520
      %3522 = vmatmul.bf16.gmra.mxu0 %v1760
      %v3523 = vpop.f32.mrf.mxu0
      %v3524 = vadd.f32 %v3495, %v3523
      %v3525 = vpop.f32.mrf.mxu0
      %v3526 = vadd.f32 %v3497, %v3525
      %3527 = vmatmul.bf16.gmra.mxu0 %v1764
      %v3528 = vpop.f32.mrf.mxu0
      %v3529 = vadd.f32 %v3500, %v3528
      %v3530 = vpop.f32.mrf.mxu0
      %v3531 = vadd.f32 %v3502, %v3530
      %3532 = vdwg.mxu0
      %3533 = vmatpush.bf16.msra.mxu0 %v2616
      %3534 = vmatpush.bf16.msra.mxu0 %v2610
      %3535 = vmatpush.bf16.msra.mxu0 %v2604
      %3536 = vmatpush.bf16.msra.mxu0 %v2598
      %3537 = vmatpush.bf16.msra.mxu0 %v2592
      %3538 = vmatpush.bf16.msra.mxu0 %v2586
      %3539 = vmatpush.bf16.msra.mxu0 %v2580
      %3540 = vmatpush.bf16.msra.mxu0 %v2574
      %3541 = vmatmul.bf16.gmra.mxu0 %v1749
      %v3542 = vpop.f32.mrf.mxu0
      %v3543 = vadd.f32 0.0, %v3542
      %v3544 = vpop.f32.mrf.mxu0
      %v3545 = vadd.f32 0.0, %v3544
      %3546 = vmatmul.bf16.gmra.mxu0 %v1753
      %v3547 = vpop.f32.mrf.mxu0
      %v3548 = vadd.f32 0.0, %v3547
      %v3549 = vpop.f32.mrf.mxu0
      %v3550 = vadd.f32 0.0, %v3549
      %3551 = vmatmul.bf16.gmra.mxu0 %v1757
      %v3552 = vpop.f32.mrf.mxu0
      %v3553 = vadd.f32 0.0, %v3552
      %v3554 = vpop.f32.mrf.mxu0
      %v3555 = vadd.f32 0.0, %v3554
      %3556 = vmatmul.bf16.gmra.mxu0 %v1761
      %v3557 = vpop.f32.mrf.mxu0
      %v3558 = vadd.f32 0.0, %v3557
      %v3559 = vpop.f32.mrf.mxu0
      %v3560 = vadd.f32 0.0, %v3559
      %3561 = vdwg.mxu0
      %3562 = vmatpush.bf16.msra.mxu0 %v2664
      %3563 = vmatpush.bf16.msra.mxu0 %v2658
      %3564 = vmatpush.bf16.msra.mxu0 %v2652
      %3565 = vmatpush.bf16.msra.mxu0 %v2646
      %3566 = vmatpush.bf16.msra.mxu0 %v2640
      %3567 = vmatpush.bf16.msra.mxu0 %v2634
      %3568 = vmatpush.bf16.msra.mxu0 %v2628
      %3569 = vmatpush.bf16.msra.mxu0 %v2622
      %3570 = vmatmul.bf16.gmra.mxu0 %v1750
      %v3571 = vpop.f32.mrf.mxu0
      %v3572 = vadd.f32 %v3543, %v3571
      %v3573 = vpop.f32.mrf.mxu0
      %v3574 = vadd.f32 %v3545, %v3573
      %3575 = vmatmul.bf16.gmra.mxu0 %v1754
      %v3576 = vpop.f32.mrf.mxu0
      %v3577 = vadd.f32 %v3548, %v3576
      %v3578 = vpop.f32.mrf.mxu0
      %v3579 = vadd.f32 %v3550, %v3578
      %3580 = vmatmul.bf16.gmra.mxu0 %v1758
      %v3581 = vpop.f32.mrf.mxu0
      %v3582 = vadd.f32 %v3553, %v3581
      %v3583 = vpop.f32.mrf.mxu0
      %v3584 = vadd.f32 %v3555, %v3583
      %3585 = vmatmul.bf16.gmra.mxu0 %v1762
      %v3586 = vpop.f32.mrf.mxu0
      %v3587 = vadd.f32 %v3558, %v3586
      %v3588 = vpop.f32.mrf.mxu0
      %v3589 = vadd.f32 %v3560, %v3588
      %3590 = vdwg.mxu0
      %3591 = vmatpush.bf16.msra.mxu0 %v2712
      %3592 = vmatpush.bf16.msra.mxu0 %v2706
      %3593 = vmatpush.bf16.msra.mxu0 %v2700
      %3594 = vmatpush.bf16.msra.mxu0 %v2694
      %3595 = vmatpush.bf16.msra.mxu0 %v2688
      %3596 = vmatpush.bf16.msra.mxu0 %v2682
      %3597 = vmatpush.bf16.msra.mxu0 %v2676
      %3598 = vmatpush.bf16.msra.mxu0 %v2670
      %3599 = vmatmul.bf16.gmra.mxu0 %v1751
      %v3600 = vpop.f32.mrf.mxu0
      %v3601 = vadd.f32 %v3572, %v3600
      %v3602 = vpop.f32.mrf.mxu0
      %v3603 = vadd.f32 %v3574, %v3602
      %3604 = vmatmul.bf16.gmra.mxu0 %v1755
      %v3605 = vpop.f32.mrf.mxu0
      %v3606 = vadd.f32 %v3577, %v3605
      %v3607 = vpop.f32.mrf.mxu0
      %v3608 = vadd.f32 %v3579, %v3607
      %3609 = vmatmul.bf16.gmra.mxu0 %v1759
      %v3610 = vpop.f32.mrf.mxu0
      %v3611 = vadd.f32 %v3582, %v3610
      %v3612 = vpop.f32.mrf.mxu0
      %v3613 = vadd.f32 %v3584, %v3612
      %3614 = vmatmul.bf16.gmra.mxu0 %v1763
      %v3615 = vpop.f32.mrf.mxu0
      %v3616 = vadd.f32 %v3587, %v3615
      %v3617 = vpop.f32.mrf.mxu0
      %v3618 = vadd.f32 %v3589, %v3617
      %3619 = vdwg.mxu0
      %3620 = vmatpush.bf16.msra.mxu0 %v2760
      %3621 = vmatpush.bf16.msra.mxu0 %v2754
      %3622 = vmatpush.bf16.msra.mxu0 %v2748
      %3623 = vmatpush.bf16.msra.mxu0 %v2742
      %3624 = vmatpush.bf16.msra.mxu0 %v2736
      %3625 = vmatpush.bf16.msra.mxu0 %v2730
      %3626 = vmatpush.bf16.msra.mxu0 %v2724
      %3627 = vmatpush.bf16.msra.mxu0 %v2718
      %3628 = vmatmul.bf16.gmra.mxu0 %v1752
      %v3629 = vpop.f32.mrf.mxu0
      %v3630 = vadd.f32 %v3601, %v3629
      %v3631 = vpop.f32.mrf.mxu0
      %v3632 = vadd.f32 %v3603, %v3631
      %3633 = vmatmul.bf16.gmra.mxu0 %v1756
      %v3634 = vpop.f32.mrf.mxu0
      %v3635 = vadd.f32 %v3606, %v3634
      %v3636 = vpop.f32.mrf.mxu0
      %v3637 = vadd.f32 %v3608, %v3636
      %3638 = vmatmul.bf16.gmra.mxu0 %v1760
      %v3639 = vpop.f32.mrf.mxu0
      %v3640 = vadd.f32 %v3611, %v3639
      %v3641 = vpop.f32.mrf.mxu0
      %v3642 = vadd.f32 %v3613, %v3641
      %3643 = vmatmul.bf16.gmra.mxu0 %v1764
      %v3644 = vpop.f32.mrf.mxu0
      %v3645 = vadd.f32 %v3616, %v3644
      %v3646 = vpop.f32.mrf.mxu0
      %v3647 = vadd.f32 %v3618, %v3646
      %3648 = vdwg.mxu0
      %v3649 = vadd.f32 %v1795, %v3050
      %v3650 = vadd.f32 %v1796, %v3166
      %v3651 = vadd.f32 %v1797, %v3282
      %v3652 = vadd.f32 %v1798, %v3398
      %v3653 = vadd.f32 %v1799, %v3514
      %v3654 = vadd.f32 %v1800, %v3630
      %v3655 = vadd.f32 %v1795, %v3052
      %v3656 = vadd.f32 %v1796, %v3168
      %v3657 = vadd.f32 %v1797, %v3284
      %v3658 = vadd.f32 %v1798, %v3400
      %v3659 = vadd.f32 %v1799, %v3516
      %v3660 = vadd.f32 %v1800, %v3632
      %v3661 = vadd.f32 %v1795, %v3055
      %v3662 = vadd.f32 %v1796, %v3171
      %v3663 = vadd.f32 %v1797, %v3287
      %v3664 = vadd.f32 %v1798, %v3403
      %v3665 = vadd.f32 %v1799, %v3519
      %v3666 = vadd.f32 %v1800, %v3635
      %v3667 = vadd.f32 %v1795, %v3057
      %v3668 = vadd.f32 %v1796, %v3173
      %v3669 = vadd.f32 %v1797, %v3289
      %v3670 = vadd.f32 %v1798, %v3405
      %v3671 = vadd.f32 %v1799, %v3521
      %v3672 = vadd.f32 %v1800, %v3637
      %v3673 = vadd.f32 %v1795, %v3060
      %v3674 = vadd.f32 %v1796, %v3176
      %v3675 = vadd.f32 %v1797, %v3292
      %v3676 = vadd.f32 %v1798, %v3408
      %v3677 = vadd.f32 %v1799, %v3524
      %v3678 = vadd.f32 %v1800, %v3640
      %v3679 = vadd.f32 %v1795, %v3062
      %v3680 = vadd.f32 %v1796, %v3178
      %v3681 = vadd.f32 %v1797, %v3294
      %v3682 = vadd.f32 %v1798, %v3410
      %v3683 = vadd.f32 %v1799, %v3526
      %v3684 = vadd.f32 %v1800, %v3642
      %v3685 = vadd.f32 %v1795, %v3065
      %v3686 = vadd.f32 %v1796, %v3181
      %v3687 = vadd.f32 %v1797, %v3297
      %v3688 = vadd.f32 %v1798, %v3413
      %v3689 = vadd.f32 %v1799, %v3529
      %v3690 = vadd.f32 %v1800, %v3645
      %v3691 = vadd.f32 %v1795, %v3067
      %v3692 = vadd.f32 %v1796, %v3183
      %v3693 = vadd.f32 %v1797, %v3299
      %v3694 = vadd.f32 %v1798, %v3415
      %v3695 = vadd.f32 %v1799, %v3531
      %v3696 = vadd.f32 %v1800, %v3647
      %s3697 = scalar_lea.vmem %s3, 1536
      %v3698 = vld [vmem:[%s3697] sm:$0xff]
      %v3699 = vld [vmem:[%s3697 + $0x8] sm:$0xff]
      %v3700 = vld [vmem:[%s3697 + $0x10] sm:$0xff]
      %v3701 = vld [vmem:[%s3697 + $0x18] sm:$0xff]
      %v3702 = vld [vmem:[%s3697 + $0x20] sm:$0xff]
      %v3703 = vld [vmem:[%s3697 + $0x28] sm:$0xff]
      %v3704 = vld [vmem:[%s3697 + $0x30] sm:$0xff]
      %v3705 = vld [vmem:[%s3697 + $0x38] sm:$0xff]
      %v3706 = vld [vmem:[%s3697 + $0x40] sm:$0xff]
      %v3707 = vld [vmem:[%s3697 + $0x48] sm:$0xff]
      %v3708 = vld [vmem:[%s3697 + $0x50] sm:$0xff]
      %v3709 = vld [vmem:[%s3697 + $0x58] sm:$0xff]
      %v3710 = vld [vmem:[%s3697 + $0x60] sm:$0xff]
      %v3711 = vld [vmem:[%s3697 + $0x68] sm:$0xff]
      %v3712 = vld [vmem:[%s3697 + $0x70] sm:$0xff]
      %v3713 = vld [vmem:[%s3697 + $0x78] sm:$0xff]
      %v3714 = vld [vmem:[%s3697 + $0x80] sm:$0xff]
      %v3715 = vld [vmem:[%s3697 + $0x88] sm:$0xff]
      %v3716 = vld [vmem:[%s3697 + $0x90] sm:$0xff]
      %v3717 = vld [vmem:[%s3697 + $0x98] sm:$0xff]
      %v3718 = vld [vmem:[%s3697 + $0xa0] sm:$0xff]
      %v3719 = vld [vmem:[%s3697 + $0xa8] sm:$0xff]
      %v3720 = vld [vmem:[%s3697 + $0xb0] sm:$0xff]
      %v3721 = vld [vmem:[%s3697 + $0xb8] sm:$0xff]
      %v3722 = vld [vmem:[%s3697 + $0xc0] sm:$0xff]
      %v3723 = vld [vmem:[%s3697 + $0xc8] sm:$0xff]
      %v3724 = vld [vmem:[%s3697 + $0xd0] sm:$0xff]
      %v3725 = vld [vmem:[%s3697 + $0xd8] sm:$0xff]
      %v3726 = vld [vmem:[%s3697 + $0xe0] sm:$0xff]
      %v3727 = vld [vmem:[%s3697 + $0xe8] sm:$0xff]
      %v3728 = vld [vmem:[%s3697 + $0xf0] sm:$0xff]
      %v3729 = vld [vmem:[%s3697 + $0xf8] sm:$0xff]
      %v3730 = vld [vmem:[%s3697 + $0x100] sm:$0xff]
      %v3731 = vld [vmem:[%s3697 + $0x108] sm:$0xff]
      %v3732 = vld [vmem:[%s3697 + $0x110] sm:$0xff]
      %v3733 = vld [vmem:[%s3697 + $0x118] sm:$0xff]
      %v3734 = vld [vmem:[%s3697 + $0x120] sm:$0xff]
      %v3735 = vld [vmem:[%s3697 + $0x128] sm:$0xff]
      %v3736 = vld [vmem:[%s3697 + $0x130] sm:$0xff]
      %v3737 = vld [vmem:[%s3697 + $0x138] sm:$0xff]
      %v3738 = vld [vmem:[%s3697 + $0x140] sm:$0xff]
      %v3739 = vld [vmem:[%s3697 + $0x148] sm:$0xff]
      %v3740 = vld [vmem:[%s3697 + $0x150] sm:$0xff]
      %v3741 = vld [vmem:[%s3697 + $0x158] sm:$0xff]
      %v3742 = vld [vmem:[%s3697 + $0x160] sm:$0xff]
      %v3743 = vld [vmem:[%s3697 + $0x168] sm:$0xff]
      %v3744 = vld [vmem:[%s3697 + $0x170] sm:$0xff]
      %v3745 = vld [vmem:[%s3697 + $0x178] sm:$0xff]
      %v3746 = vld [vmem:[%s3697 + $0x180] sm:$0xff]
      %v3747 = vld [vmem:[%s3697 + $0x188] sm:$0xff]
      %v3748 = vld [vmem:[%s3697 + $0x190] sm:$0xff]
      %v3749 = vld [vmem:[%s3697 + $0x198] sm:$0xff]
      %v3750 = vld [vmem:[%s3697 + $0x1a0] sm:$0xff]
      %v3751 = vld [vmem:[%s3697 + $0x1a8] sm:$0xff]
      %v3752 = vld [vmem:[%s3697 + $0x1b0] sm:$0xff]
      %v3753 = vld [vmem:[%s3697 + $0x1b8] sm:$0xff]
      %v3754 = vld [vmem:[%s3697 + $0x1c0] sm:$0xff]
      %v3755 = vld [vmem:[%s3697 + $0x1c8] sm:$0xff]
      %v3756 = vld [vmem:[%s3697 + $0x1d0] sm:$0xff]
      %v3757 = vld [vmem:[%s3697 + $0x1d8] sm:$0xff]
      %v3758 = vld [vmem:[%s3697 + $0x1e0] sm:$0xff]
      %v3759 = vld [vmem:[%s3697 + $0x1e8] sm:$0xff]
      %v3760 = vld [vmem:[%s3697 + $0x1f0] sm:$0xff]
      %v3761 = vld [vmem:[%s3697 + $0x1f8] sm:$0xff]
      %v3762 = vld [vmem:[%s3697 + $0x200] sm:$0xff]
      %v3763 = vld [vmem:[%s3697 + $0x208] sm:$0xff]
      %v3764 = vld [vmem:[%s3697 + $0x210] sm:$0xff]
      %v3765 = vld [vmem:[%s3697 + $0x218] sm:$0xff]
      %v3766 = vld [vmem:[%s3697 + $0x220] sm:$0xff]
      %v3767 = vld [vmem:[%s3697 + $0x228] sm:$0xff]
      %v3768 = vld [vmem:[%s3697 + $0x230] sm:$0xff]
      %v3769 = vld [vmem:[%s3697 + $0x238] sm:$0xff]
      %v3770 = vld [vmem:[%s3697 + $0x240] sm:$0xff]
      %v3771 = vld [vmem:[%s3697 + $0x248] sm:$0xff]
      %v3772 = vld [vmem:[%s3697 + $0x250] sm:$0xff]
      %v3773 = vld [vmem:[%s3697 + $0x258] sm:$0xff]
      %v3774 = vld [vmem:[%s3697 + $0x260] sm:$0xff]
      %v3775 = vld [vmem:[%s3697 + $0x268] sm:$0xff]
      %v3776 = vld [vmem:[%s3697 + $0x270] sm:$0xff]
      %v3777 = vld [vmem:[%s3697 + $0x278] sm:$0xff]
      %v3778 = vld [vmem:[%s3697 + $0x280] sm:$0xff]
      %v3779 = vld [vmem:[%s3697 + $0x288] sm:$0xff]
      %v3780 = vld [vmem:[%s3697 + $0x290] sm:$0xff]
      %v3781 = vld [vmem:[%s3697 + $0x298] sm:$0xff]
      %v3782 = vld [vmem:[%s3697 + $0x2a0] sm:$0xff]
      %v3783 = vld [vmem:[%s3697 + $0x2a8] sm:$0xff]
      %v3784 = vld [vmem:[%s3697 + $0x2b0] sm:$0xff]
      %v3785 = vld [vmem:[%s3697 + $0x2b8] sm:$0xff]
      %v3786 = vld [vmem:[%s3697 + $0x2c0] sm:$0xff]
      %v3787 = vld [vmem:[%s3697 + $0x2c8] sm:$0xff]
      %v3788 = vld [vmem:[%s3697 + $0x2d0] sm:$0xff]
      %v3789 = vld [vmem:[%s3697 + $0x2d8] sm:$0xff]
      %v3790 = vld [vmem:[%s3697 + $0x2e0] sm:$0xff]
      %v3791 = vld [vmem:[%s3697 + $0x2e8] sm:$0xff]
      %v3792 = vld [vmem:[%s3697 + $0x2f0] sm:$0xff]
      %v3793 = vld [vmem:[%s3697 + $0x2f8] sm:$0xff]
      %v3794 = vld [vmem:[%s3697 + $0x300] sm:$0xff]
      %v3795 = vld [vmem:[%s3697 + $0x308] sm:$0xff]
      %v3796 = vld [vmem:[%s3697 + $0x310] sm:$0xff]
      %v3797 = vld [vmem:[%s3697 + $0x318] sm:$0xff]
      %v3798 = vld [vmem:[%s3697 + $0x320] sm:$0xff]
      %v3799 = vld [vmem:[%s3697 + $0x328] sm:$0xff]
      %v3800 = vld [vmem:[%s3697 + $0x330] sm:$0xff]
      %v3801 = vld [vmem:[%s3697 + $0x338] sm:$0xff]
      %v3802 = vld [vmem:[%s3697 + $0x340] sm:$0xff]
      %v3803 = vld [vmem:[%s3697 + $0x348] sm:$0xff]
      %v3804 = vld [vmem:[%s3697 + $0x350] sm:$0xff]
      %v3805 = vld [vmem:[%s3697 + $0x358] sm:$0xff]
      %v3806 = vld [vmem:[%s3697 + $0x360] sm:$0xff]
      %v3807 = vld [vmem:[%s3697 + $0x368] sm:$0xff]
      %v3808 = vld [vmem:[%s3697 + $0x370] sm:$0xff]
      %v3809 = vld [vmem:[%s3697 + $0x378] sm:$0xff]
      %v3810 = vld [vmem:[%s3697 + $0x380] sm:$0xff]
      %v3811 = vld [vmem:[%s3697 + $0x388] sm:$0xff]
      %v3812 = vld [vmem:[%s3697 + $0x390] sm:$0xff]
      %v3813 = vld [vmem:[%s3697 + $0x398] sm:$0xff]
      %v3814 = vld [vmem:[%s3697 + $0x3a0] sm:$0xff]
      %v3815 = vld [vmem:[%s3697 + $0x3a8] sm:$0xff]
      %v3816 = vld [vmem:[%s3697 + $0x3b0] sm:$0xff]
      %v3817 = vld [vmem:[%s3697 + $0x3b8] sm:$0xff]
      %v3818 = vld [vmem:[%s3697 + $0x3c0] sm:$0xff]
      %v3819 = vld [vmem:[%s3697 + $0x3c8] sm:$0xff]
      %v3820 = vld [vmem:[%s3697 + $0x3d0] sm:$0xff]
      %v3821 = vld [vmem:[%s3697 + $0x3d8] sm:$0xff]
      %v3822 = vld [vmem:[%s3697 + $0x3e0] sm:$0xff]
      %v3823 = vld [vmem:[%s3697 + $0x3e8] sm:$0xff]
      %v3824 = vld [vmem:[%s3697 + $0x3f0] sm:$0xff]
      %v3825 = vld [vmem:[%s3697 + $0x3f8] sm:$0xff]
      %v3826 = vld [vmem:[%s3697 + $0x400] sm:$0xff]
      %v3827 = vld [vmem:[%s3697 + $0x408] sm:$0xff]
      %v3828 = vld [vmem:[%s3697 + $0x410] sm:$0xff]
      %v3829 = vld [vmem:[%s3697 + $0x418] sm:$0xff]
      %v3830 = vld [vmem:[%s3697 + $0x420] sm:$0xff]
      %v3831 = vld [vmem:[%s3697 + $0x428] sm:$0xff]
      %v3832 = vld [vmem:[%s3697 + $0x430] sm:$0xff]
      %v3833 = vld [vmem:[%s3697 + $0x438] sm:$0xff]
      %v3834 = vld [vmem:[%s3697 + $0x440] sm:$0xff]
      %v3835 = vld [vmem:[%s3697 + $0x448] sm:$0xff]
      %v3836 = vld [vmem:[%s3697 + $0x450] sm:$0xff]
      %v3837 = vld [vmem:[%s3697 + $0x458] sm:$0xff]
      %v3838 = vld [vmem:[%s3697 + $0x460] sm:$0xff]
      %v3839 = vld [vmem:[%s3697 + $0x468] sm:$0xff]
      %v3840 = vld [vmem:[%s3697 + $0x470] sm:$0xff]
      %v3841 = vld [vmem:[%s3697 + $0x478] sm:$0xff]
      %v3842 = vld [vmem:[%s3697 + $0x480] sm:$0xff]
      %v3843 = vld [vmem:[%s3697 + $0x488] sm:$0xff]
      %v3844 = vld [vmem:[%s3697 + $0x490] sm:$0xff]
      %v3845 = vld [vmem:[%s3697 + $0x498] sm:$0xff]
      %v3846 = vld [vmem:[%s3697 + $0x4a0] sm:$0xff]
      %v3847 = vld [vmem:[%s3697 + $0x4a8] sm:$0xff]
      %v3848 = vld [vmem:[%s3697 + $0x4b0] sm:$0xff]
      %v3849 = vld [vmem:[%s3697 + $0x4b8] sm:$0xff]
      %v3850 = vld [vmem:[%s3697 + $0x4c0] sm:$0xff]
      %v3851 = vld [vmem:[%s3697 + $0x4c8] sm:$0xff]
      %v3852 = vld [vmem:[%s3697 + $0x4d0] sm:$0xff]
      %v3853 = vld [vmem:[%s3697 + $0x4d8] sm:$0xff]
      %v3854 = vld [vmem:[%s3697 + $0x4e0] sm:$0xff]
      %v3855 = vld [vmem:[%s3697 + $0x4e8] sm:$0xff]
      %v3856 = vld [vmem:[%s3697 + $0x4f0] sm:$0xff]
      %v3857 = vld [vmem:[%s3697 + $0x4f8] sm:$0xff]
      %v3858 = vld [vmem:[%s3697 + $0x500] sm:$0xff]
      %v3859 = vld [vmem:[%s3697 + $0x508] sm:$0xff]
      %v3860 = vld [vmem:[%s3697 + $0x510] sm:$0xff]
      %v3861 = vld [vmem:[%s3697 + $0x518] sm:$0xff]
      %v3862 = vld [vmem:[%s3697 + $0x520] sm:$0xff]
      %v3863 = vld [vmem:[%s3697 + $0x528] sm:$0xff]
      %v3864 = vld [vmem:[%s3697 + $0x530] sm:$0xff]
      %v3865 = vld [vmem:[%s3697 + $0x538] sm:$0xff]
      %v3866 = vld [vmem:[%s3697 + $0x540] sm:$0xff]
      %v3867 = vld [vmem:[%s3697 + $0x548] sm:$0xff]
      %v3868 = vld [vmem:[%s3697 + $0x550] sm:$0xff]
      %v3869 = vld [vmem:[%s3697 + $0x558] sm:$0xff]
      %v3870 = vld [vmem:[%s3697 + $0x560] sm:$0xff]
      %v3871 = vld [vmem:[%s3697 + $0x568] sm:$0xff]
      %v3872 = vld [vmem:[%s3697 + $0x570] sm:$0xff]
      %v3873 = vld [vmem:[%s3697 + $0x578] sm:$0xff]
      %v3874 = vld [vmem:[%s3697 + $0x580] sm:$0xff]
      %v3875 = vld [vmem:[%s3697 + $0x588] sm:$0xff]
      %v3876 = vld [vmem:[%s3697 + $0x590] sm:$0xff]
      %v3877 = vld [vmem:[%s3697 + $0x598] sm:$0xff]
      %v3878 = vld [vmem:[%s3697 + $0x5a0] sm:$0xff]
      %v3879 = vld [vmem:[%s3697 + $0x5a8] sm:$0xff]
      %v3880 = vld [vmem:[%s3697 + $0x5b0] sm:$0xff]
      %v3881 = vld [vmem:[%s3697 + $0x5b8] sm:$0xff]
      %v3882 = vld [vmem:[%s3697 + $0x5c0] sm:$0xff]
      %v3883 = vld [vmem:[%s3697 + $0x5c8] sm:$0xff]
      %v3884 = vld [vmem:[%s3697 + $0x5d0] sm:$0xff]
      %v3885 = vld [vmem:[%s3697 + $0x5d8] sm:$0xff]
      %v3886 = vld [vmem:[%s3697 + $0x5e0] sm:$0xff]
      %v3887 = vld [vmem:[%s3697 + $0x5e8] sm:$0xff]
      %v3888 = vld [vmem:[%s3697 + $0x5f0] sm:$0xff]
      %v3889 = vld [vmem:[%s3697 + $0x5f8] sm:$0xff]
      %vm3890 = vsmask.f32 7424
      %v3892 = vshrl.u32 %v1749, 16
      %v3894 = vshll.u32 %v1749, 16
      %v3896 = vrot.slane %v3894, 1
      %v3897 = vor.u32 %v3892, %v3896
      %v3899 = vshll.u32 %v1753, 16
      %v3901 = vrot.slane %v3899, 1
      %v3902 = vsel %vm3890, %v3897, %v3901
      %v3904 = vshrl.u32 %v1750, 16
      %v3906 = vshll.u32 %v1750, 16
      %v3908 = vrot.slane %v3906, 1
      %v3909 = vor.u32 %v3904, %v3908
      %v3911 = vshll.u32 %v1754, 16
      %v3913 = vrot.slane %v3911, 1
      %v3914 = vsel %vm3890, %v3909, %v3913
      %v3916 = vshrl.u32 %v1751, 16
      %v3918 = vshll.u32 %v1751, 16
      %v3920 = vrot.slane %v3918, 1
      %v3921 = vor.u32 %v3916, %v3920
      %v3923 = vshll.u32 %v1755, 16
      %v3925 = vrot.slane %v3923, 1
      %v3926 = vsel %vm3890, %v3921, %v3925
      %v3928 = vshrl.u32 %v1752, 16
      %v3930 = vshll.u32 %v1752, 16
      %v3932 = vrot.slane %v3930, 1
      %v3933 = vor.u32 %v3928, %v3932
      %v3935 = vshll.u32 %v1756, 16
      %v3937 = vrot.slane %v3935, 1
      %v3938 = vsel %vm3890, %v3933, %v3937
      %v3939 = vshrl.u32 %v1753, 16
      %v3941 = vor.u32 %v3939, %v3901
      %v3943 = vshll.u32 %v1757, 16
      %v3945 = vrot.slane %v3943, 1
      %v3946 = vsel %vm3890, %v3941, %v3945
      %v3947 = vshrl.u32 %v1754, 16
      %v3949 = vor.u32 %v3947, %v3913
      %v3951 = vshll.u32 %v1758, 16
      %v3953 = vrot.slane %v3951, 1
      %v3954 = vsel %vm3890, %v3949, %v3953
      %v3955 = vshrl.u32 %v1755, 16
      %v3957 = vor.u32 %v3955, %v3925
      %v3959 = vshll.u32 %v1759, 16
      %v3961 = vrot.slane %v3959, 1
      %v3962 = vsel %vm3890, %v3957, %v3961
      %v3963 = vshrl.u32 %v1756, 16
      %v3965 = vor.u32 %v3963, %v3937
      %v3967 = vshll.u32 %v1760, 16
      %v3969 = vrot.slane %v3967, 1
      %v3970 = vsel %vm3890, %v3965, %v3969
      %v3971 = vshrl.u32 %v1757, 16
      %v3973 = vor.u32 %v3971, %v3945
      %v3975 = vshll.u32 %v1761, 16
      %v3977 = vrot.slane %v3975, 1
      %v3978 = vsel %vm3890, %v3973, %v3977
      %v3979 = vshrl.u32 %v1758, 16
      %v3981 = vor.u32 %v3979, %v3953
      %v3983 = vshll.u32 %v1762, 16
      %v3985 = vrot.slane %v3983, 1
      %v3986 = vsel %vm3890, %v3981, %v3985
      %v3987 = vshrl.u32 %v1759, 16
      %v3989 = vor.u32 %v3987, %v3961
      %v3991 = vshll.u32 %v1763, 16
      %v3993 = vrot.slane %v3991, 1
      %v3994 = vsel %vm3890, %v3989, %v3993
      %v3995 = vshrl.u32 %v1760, 16
      %v3997 = vor.u32 %v3995, %v3969
      %v3999 = vshll.u32 %v1764, 16
      %v4001 = vrot.slane %v3999, 1
      %v4002 = vsel %vm3890, %v3997, %v4001
      %v4003 = vshrl.u32 %v1761, 16
      %v4005 = vor.u32 %v4003, %v3977
      %v4007 = vshll.u32 0, 16
      %v4009 = vrot.slane %v4007, 1
      %v4010 = vsel %vm3890, %v4005, %v4009
      %v4011 = vshrl.u32 %v1762, 16
      %v4013 = vor.u32 %v4011, %v3985
      %v4014 = vsel %vm3890, %v4013, %v4009
      %v4015 = vshrl.u32 %v1763, 16
      %v4017 = vor.u32 %v4015, %v3993
      %v4018 = vsel %vm3890, %v4017, %v4009
      %v4019 = vshrl.u32 %v1764, 16
      %v4021 = vor.u32 %v4019, %v4001
      %v4022 = vsel %vm3890, %v4021, %v4009
      %v4231 = vunpack.c.l.b16 %v3698
      %v4232 = vunpack.c.h.b16 %v3698
      %v4233 = vunpack.c.l.b16 %v3699
      %v4234 = vunpack.c.h.b16 %v3699
      %v4235 = vunpack.c.l.b16 %v3700
      %v4236 = vunpack.c.h.b16 %v3700
      %v4237 = vunpack.c.l.b16 %v3701
      %v4238 = vunpack.c.h.b16 %v3701
      %v4239 = vunpack.c.l.b16 %v3702
      %v4240 = vunpack.c.h.b16 %v3702
      %v4241 = vunpack.c.l.b16 %v3703
      %v4242 = vunpack.c.h.b16 %v3703
      %v4243 = vunpack.c.l.b16 %v3704
      %v4244 = vunpack.c.h.b16 %v3704
      %v4245 = vunpack.c.l.b16 %v3705
      %v4246 = vunpack.c.h.b16 %v3705
      %v4247 = vunpack.c.l.b16 %v3706
      %v4248 = vunpack.c.h.b16 %v3706
      %v4249 = vunpack.c.l.b16 %v3707
      %v4250 = vunpack.c.h.b16 %v3707
      %v4251 = vunpack.c.l.b16 %v3708
      %v4252 = vunpack.c.h.b16 %v3708
      %v4253 = vunpack.c.l.b16 %v3709
      %v4254 = vunpack.c.h.b16 %v3709
      %v4255 = vunpack.c.l.b16 %v3710
      %v4256 = vunpack.c.h.b16 %v3710
      %v4257 = vunpack.c.l.b16 %v3711
      %v4258 = vunpack.c.h.b16 %v3711
      %v4259 = vunpack.c.l.b16 %v3712
      %v4260 = vunpack.c.h.b16 %v3712
      %v4261 = vunpack.c.l.b16 %v3713
      %v4262 = vunpack.c.h.b16 %v3713
      %v4263 = vunpack.c.l.b16 %v3714
      %v4264 = vunpack.c.h.b16 %v3714
      %v4265 = vunpack.c.l.b16 %v3715
      %v4266 = vunpack.c.h.b16 %v3715
      %v4267 = vunpack.c.l.b16 %v3716
      %v4268 = vunpack.c.h.b16 %v3716
      %v4269 = vunpack.c.l.b16 %v3717
      %v4270 = vunpack.c.h.b16 %v3717
      %v4271 = vunpack.c.l.b16 %v3718
      %v4272 = vunpack.c.h.b16 %v3718
      %v4273 = vunpack.c.l.b16 %v3719
      %v4274 = vunpack.c.h.b16 %v3719
      %v4275 = vunpack.c.l.b16 %v3720
      %v4276 = vunpack.c.h.b16 %v3720
      %v4277 = vunpack.c.l.b16 %v3721
      %v4278 = vunpack.c.h.b16 %v3721
      %v4279 = vunpack.c.l.b16 %v3722
      %v4280 = vunpack.c.h.b16 %v3722
      %v4281 = vunpack.c.l.b16 %v3723
      %v4282 = vunpack.c.h.b16 %v3723
      %v4283 = vunpack.c.l.b16 %v3724
      %v4284 = vunpack.c.h.b16 %v3724
      %v4285 = vunpack.c.l.b16 %v3725
      %v4286 = vunpack.c.h.b16 %v3725
      %v4287 = vunpack.c.l.b16 %v3726
      %v4288 = vunpack.c.h.b16 %v3726
      %v4289 = vunpack.c.l.b16 %v3727
      %v4290 = vunpack.c.h.b16 %v3727
      %v4291 = vunpack.c.l.b16 %v3728
      %v4292 = vunpack.c.h.b16 %v3728
      %v4293 = vunpack.c.l.b16 %v3729
      %v4294 = vunpack.c.h.b16 %v3729
      %v4295 = vunpack.c.l.b16 %v3730
      %v4296 = vunpack.c.h.b16 %v3730
      %v4297 = vunpack.c.l.b16 %v3731
      %v4298 = vunpack.c.h.b16 %v3731
      %v4299 = vunpack.c.l.b16 %v3732
      %v4300 = vunpack.c.h.b16 %v3732
      %v4301 = vunpack.c.l.b16 %v3733
      %v4302 = vunpack.c.h.b16 %v3733
      %v4303 = vunpack.c.l.b16 %v3734
      %v4304 = vunpack.c.h.b16 %v3734
      %v4305 = vunpack.c.l.b16 %v3735
      %v4306 = vunpack.c.h.b16 %v3735
      %v4307 = vunpack.c.l.b16 %v3736
      %v4308 = vunpack.c.h.b16 %v3736
      %v4309 = vunpack.c.l.b16 %v3737
      %v4310 = vunpack.c.h.b16 %v3737
      %v4311 = vunpack.c.l.b16 %v3738
      %v4312 = vunpack.c.h.b16 %v3738
      %v4313 = vunpack.c.l.b16 %v3739
      %v4314 = vunpack.c.h.b16 %v3739
      %v4315 = vunpack.c.l.b16 %v3740
      %v4316 = vunpack.c.h.b16 %v3740
      %v4317 = vunpack.c.l.b16 %v3741
      %v4318 = vunpack.c.h.b16 %v3741
      %v4319 = vunpack.c.l.b16 %v3742
      %v4320 = vunpack.c.h.b16 %v3742
      %v4321 = vunpack.c.l.b16 %v3743
      %v4322 = vunpack.c.h.b16 %v3743
      %v4323 = vunpack.c.l.b16 %v3744
      %v4324 = vunpack.c.h.b16 %v3744
      %v4325 = vunpack.c.l.b16 %v3745
      %v4326 = vunpack.c.h.b16 %v3745
      %v4327 = vunpack.c.l.b16 %v3746
      %v4328 = vunpack.c.h.b16 %v3746
      %v4329 = vunpack.c.l.b16 %v3747
      %v4330 = vunpack.c.h.b16 %v3747
      %v4331 = vunpack.c.l.b16 %v3748
      %v4332 = vunpack.c.h.b16 %v3748
      %v4333 = vunpack.c.l.b16 %v3749
      %v4334 = vunpack.c.h.b16 %v3749
      %v4335 = vunpack.c.l.b16 %v3750
      %v4336 = vunpack.c.h.b16 %v3750
      %v4337 = vunpack.c.l.b16 %v3751
      %v4338 = vunpack.c.h.b16 %v3751
      %v4339 = vunpack.c.l.b16 %v3752
      %v4340 = vunpack.c.h.b16 %v3752
      %v4341 = vunpack.c.l.b16 %v3753
      %v4342 = vunpack.c.h.b16 %v3753
      %v4343 = vunpack.c.l.b16 %v3754
      %v4344 = vunpack.c.h.b16 %v3754
      %v4345 = vunpack.c.l.b16 %v3755
      %v4346 = vunpack.c.h.b16 %v3755
      %v4347 = vunpack.c.l.b16 %v3756
      %v4348 = vunpack.c.h.b16 %v3756
      %v4349 = vunpack.c.l.b16 %v3757
      %v4350 = vunpack.c.h.b16 %v3757
      %v4351 = vunpack.c.l.b16 %v3758
      %v4352 = vunpack.c.h.b16 %v3758
      %v4353 = vunpack.c.l.b16 %v3759
      %v4354 = vunpack.c.h.b16 %v3759
      %v4355 = vunpack.c.l.b16 %v3760
      %v4356 = vunpack.c.h.b16 %v3760
      %v4357 = vunpack.c.l.b16 %v3761
      %v4358 = vunpack.c.h.b16 %v3761
      %v4359 = vunpack.c.l.b16 %v3762
      %v4360 = vunpack.c.h.b16 %v3762
      %v4361 = vunpack.c.l.b16 %v3763
      %v4362 = vunpack.c.h.b16 %v3763
      %v4363 = vunpack.c.l.b16 %v3764
      %v4364 = vunpack.c.h.b16 %v3764
      %v4365 = vunpack.c.l.b16 %v3765
      %v4366 = vunpack.c.h.b16 %v3765
      %v4367 = vunpack.c.l.b16 %v3766
      %v4368 = vunpack.c.h.b16 %v3766
      %v4369 = vunpack.c.l.b16 %v3767
      %v4370 = vunpack.c.h.b16 %v3767
      %v4371 = vunpack.c.l.b16 %v3768
      %v4372 = vunpack.c.h.b16 %v3768
      %v4373 = vunpack.c.l.b16 %v3769
      %v4374 = vunpack.c.h.b16 %v3769
      %v4375 = vunpack.c.l.b16 %v3770
      %v4376 = vunpack.c.h.b16 %v3770
      %v4377 = vunpack.c.l.b16 %v3771
      %v4378 = vunpack.c.h.b16 %v3771
      %v4379 = vunpack.c.l.b16 %v3772
      %v4380 = vunpack.c.h.b16 %v3772
      %v4381 = vunpack.c.l.b16 %v3773
      %v4382 = vunpack.c.h.b16 %v3773
      %v4383 = vunpack.c.l.b16 %v3774
      %v4384 = vunpack.c.h.b16 %v3774
      %v4385 = vunpack.c.l.b16 %v3775
      %v4386 = vunpack.c.h.b16 %v3775
      %v4387 = vunpack.c.l.b16 %v3776
      %v4388 = vunpack.c.h.b16 %v3776
      %v4389 = vunpack.c.l.b16 %v3777
      %v4390 = vunpack.c.h.b16 %v3777
      %v4391 = vunpack.c.l.b16 %v3778
      %v4392 = vunpack.c.h.b16 %v3778
      %v4393 = vunpack.c.l.b16 %v3779
      %v4394 = vunpack.c.h.b16 %v3779
      %v4395 = vunpack.c.l.b16 %v3780
      %v4396 = vunpack.c.h.b16 %v3780
      %v4397 = vunpack.c.l.b16 %v3781
      %v4398 = vunpack.c.h.b16 %v3781
      %v4399 = vunpack.c.l.b16 %v3782
      %v4400 = vunpack.c.h.b16 %v3782
      %v4401 = vunpack.c.l.b16 %v3783
      %v4402 = vunpack.c.h.b16 %v3783
      %v4403 = vunpack.c.l.b16 %v3784
      %v4404 = vunpack.c.h.b16 %v3784
      %v4405 = vunpack.c.l.b16 %v3785
      %v4406 = vunpack.c.h.b16 %v3785
      %v4407 = vunpack.c.l.b16 %v3786
      %v4408 = vunpack.c.h.b16 %v3786
      %v4409 = vunpack.c.l.b16 %v3787
      %v4410 = vunpack.c.h.b16 %v3787
      %v4411 = vunpack.c.l.b16 %v3788
      %v4412 = vunpack.c.h.b16 %v3788
      %v4413 = vunpack.c.l.b16 %v3789
      %v4414 = vunpack.c.h.b16 %v3789
      %v4415 = vunpack.c.l.b16 %v3790
      %v4416 = vunpack.c.h.b16 %v3790
      %v4417 = vunpack.c.l.b16 %v3791
      %v4418 = vunpack.c.h.b16 %v3791
      %v4419 = vunpack.c.l.b16 %v3792
      %v4420 = vunpack.c.h.b16 %v3792
      %v4421 = vunpack.c.l.b16 %v3793
      %v4422 = vunpack.c.h.b16 %v3793
      %v4423 = vunpack.c.l.b16 %v3794
      %v4424 = vunpack.c.h.b16 %v3794
      %v4425 = vunpack.c.l.b16 %v3795
      %v4426 = vunpack.c.h.b16 %v3795
      %v4427 = vunpack.c.l.b16 %v3796
      %v4428 = vunpack.c.h.b16 %v3796
      %v4429 = vunpack.c.l.b16 %v3797
      %v4430 = vunpack.c.h.b16 %v3797
      %v4431 = vunpack.c.l.b16 %v3798
      %v4432 = vunpack.c.h.b16 %v3798
      %v4433 = vunpack.c.l.b16 %v3799
      %v4434 = vunpack.c.h.b16 %v3799
      %v4435 = vunpack.c.l.b16 %v3800
      %v4436 = vunpack.c.h.b16 %v3800
      %v4437 = vunpack.c.l.b16 %v3801
      %v4438 = vunpack.c.h.b16 %v3801
      %v4439 = vunpack.c.l.b16 %v3802
      %v4440 = vunpack.c.h.b16 %v3802
      %v4441 = vunpack.c.l.b16 %v3803
      %v4442 = vunpack.c.h.b16 %v3803
      %v4443 = vunpack.c.l.b16 %v3804
      %v4444 = vunpack.c.h.b16 %v3804
      %v4445 = vunpack.c.l.b16 %v3805
      %v4446 = vunpack.c.h.b16 %v3805
      %v4447 = vunpack.c.l.b16 %v3806
      %v4448 = vunpack.c.h.b16 %v3806
      %v4449 = vunpack.c.l.b16 %v3807
      %v4450 = vunpack.c.h.b16 %v3807
      %v4451 = vunpack.c.l.b16 %v3808
      %v4452 = vunpack.c.h.b16 %v3808
      %v4453 = vunpack.c.l.b16 %v3809
      %v4454 = vunpack.c.h.b16 %v3809
      %v4455 = vunpack.c.l.b16 %v3810
      %v4456 = vunpack.c.h.b16 %v3810
      %v4457 = vunpack.c.l.b16 %v3811
      %v4458 = vunpack.c.h.b16 %v3811
      %v4459 = vunpack.c.l.b16 %v3812
      %v4460 = vunpack.c.h.b16 %v3812
      %v4461 = vunpack.c.l.b16 %v3813
      %v4462 = vunpack.c.h.b16 %v3813
      %v4463 = vunpack.c.l.b16 %v3814
      %v4464 = vunpack.c.h.b16 %v3814
      %v4465 = vunpack.c.l.b16 %v3815
      %v4466 = vunpack.c.h.b16 %v3815
      %v4467 = vunpack.c.l.b16 %v3816
      %v4468 = vunpack.c.h.b16 %v3816
      %v4469 = vunpack.c.l.b16 %v3817
      %v4470 = vunpack.c.h.b16 %v3817
      %v4471 = vunpack.c.l.b16 %v3818
      %v4472 = vunpack.c.h.b16 %v3818
      %v4473 = vunpack.c.l.b16 %v3819
      %v4474 = vunpack.c.h.b16 %v3819
      %v4475 = vunpack.c.l.b16 %v3820
      %v4476 = vunpack.c.h.b16 %v3820
      %v4477 = vunpack.c.l.b16 %v3821
      %v4478 = vunpack.c.h.b16 %v3821
      %v4479 = vunpack.c.l.b16 %v3822
      %v4480 = vunpack.c.h.b16 %v3822
      %v4481 = vunpack.c.l.b16 %v3823
      %v4482 = vunpack.c.h.b16 %v3823
      %v4483 = vunpack.c.l.b16 %v3824
      %v4484 = vunpack.c.h.b16 %v3824
      %v4485 = vunpack.c.l.b16 %v3825
      %v4486 = vunpack.c.h.b16 %v3825
      %v4487 = vunpack.c.l.b16 %v3826
      %v4488 = vunpack.c.h.b16 %v3826
      %v4489 = vunpack.c.l.b16 %v3827
      %v4490 = vunpack.c.h.b16 %v3827
      %v4491 = vunpack.c.l.b16 %v3828
      %v4492 = vunpack.c.h.b16 %v3828
      %v4493 = vunpack.c.l.b16 %v3829
      %v4494 = vunpack.c.h.b16 %v3829
      %v4495 = vunpack.c.l.b16 %v3830
      %v4496 = vunpack.c.h.b16 %v3830
      %v4497 = vunpack.c.l.b16 %v3831
      %v4498 = vunpack.c.h.b16 %v3831
      %v4499 = vunpack.c.l.b16 %v3832
      %v4500 = vunpack.c.h.b16 %v3832
      %v4501 = vunpack.c.l.b16 %v3833
      %v4502 = vunpack.c.h.b16 %v3833
      %v4503 = vunpack.c.l.b16 %v3834
      %v4504 = vunpack.c.h.b16 %v3834
      %v4505 = vunpack.c.l.b16 %v3835
      %v4506 = vunpack.c.h.b16 %v3835
      %v4507 = vunpack.c.l.b16 %v3836
      %v4508 = vunpack.c.h.b16 %v3836
      %v4509 = vunpack.c.l.b16 %v3837
      %v4510 = vunpack.c.h.b16 %v3837
      %v4511 = vunpack.c.l.b16 %v3838
      %v4512 = vunpack.c.h.b16 %v3838
      %v4513 = vunpack.c.l.b16 %v3839
      %v4514 = vunpack.c.h.b16 %v3839
      %v4515 = vunpack.c.l.b16 %v3840
      %v4516 = vunpack.c.h.b16 %v3840
      %v4517 = vunpack.c.l.b16 %v3841
      %v4518 = vunpack.c.h.b16 %v3841
      %v4519 = vunpack.c.l.b16 %v3842
      %v4520 = vunpack.c.h.b16 %v3842
      %v4521 = vunpack.c.l.b16 %v3843
      %v4522 = vunpack.c.h.b16 %v3843
      %v4523 = vunpack.c.l.b16 %v3844
      %v4524 = vunpack.c.h.b16 %v3844
      %v4525 = vunpack.c.l.b16 %v3845
      %v4526 = vunpack.c.h.b16 %v3845
      %v4527 = vunpack.c.l.b16 %v3846
      %v4528 = vunpack.c.h.b16 %v3846
      %v4529 = vunpack.c.l.b16 %v3847
      %v4530 = vunpack.c.h.b16 %v3847
      %v4531 = vunpack.c.l.b16 %v3848
      %v4532 = vunpack.c.h.b16 %v3848
      %v4533 = vunpack.c.l.b16 %v3849
      %v4534 = vunpack.c.h.b16 %v3849
      %v4535 = vunpack.c.l.b16 %v3850
      %v4536 = vunpack.c.h.b16 %v3850
      %v4537 = vunpack.c.l.b16 %v3851
      %v4538 = vunpack.c.h.b16 %v3851
      %v4539 = vunpack.c.l.b16 %v3852
      %v4540 = vunpack.c.h.b16 %v3852
      %v4541 = vunpack.c.l.b16 %v3853
      %v4542 = vunpack.c.h.b16 %v3853
      %v4543 = vunpack.c.l.b16 %v3854
      %v4544 = vunpack.c.h.b16 %v3854
      %v4545 = vunpack.c.l.b16 %v3855
      %v4546 = vunpack.c.h.b16 %v3855
      %v4547 = vunpack.c.l.b16 %v3856
      %v4548 = vunpack.c.h.b16 %v3856
      %v4549 = vunpack.c.l.b16 %v3857
      %v4550 = vunpack.c.h.b16 %v3857
      %v4551 = vunpack.c.l.b16 %v3858
      %v4552 = vunpack.c.h.b16 %v3858
      %v4553 = vunpack.c.l.b16 %v3859
      %v4554 = vunpack.c.h.b16 %v3859
      %v4555 = vunpack.c.l.b16 %v3860
      %v4556 = vunpack.c.h.b16 %v3860
      %v4557 = vunpack.c.l.b16 %v3861
      %v4558 = vunpack.c.h.b16 %v3861
      %v4559 = vunpack.c.l.b16 %v3862
      %v4560 = vunpack.c.h.b16 %v3862
      %v4561 = vunpack.c.l.b16 %v3863
      %v4562 = vunpack.c.h.b16 %v3863
      %v4563 = vunpack.c.l.b16 %v3864
      %v4564 = vunpack.c.h.b16 %v3864
      %v4565 = vunpack.c.l.b16 %v3865
      %v4566 = vunpack.c.h.b16 %v3865
      %v4567 = vunpack.c.l.b16 %v3866
      %v4568 = vunpack.c.h.b16 %v3866
      %v4569 = vunpack.c.l.b16 %v3867
      %v4570 = vunpack.c.h.b16 %v3867
      %v4571 = vunpack.c.l.b16 %v3868
      %v4572 = vunpack.c.h.b16 %v3868
      %v4573 = vunpack.c.l.b16 %v3869
      %v4574 = vunpack.c.h.b16 %v3869
      %v4575 = vunpack.c.l.b16 %v3870
      %v4576 = vunpack.c.h.b16 %v3870
      %v4577 = vunpack.c.l.b16 %v3871
      %v4578 = vunpack.c.h.b16 %v3871
      %v4579 = vunpack.c.l.b16 %v3872
      %v4580 = vunpack.c.h.b16 %v3872
      %v4581 = vunpack.c.l.b16 %v3873
      %v4582 = vunpack.c.h.b16 %v3873
      %v4583 = vunpack.c.l.b16 %v3874
      %v4584 = vunpack.c.h.b16 %v3874
      %v4585 = vunpack.c.l.b16 %v3875
      %v4586 = vunpack.c.h.b16 %v3875
      %v4587 = vunpack.c.l.b16 %v3876
      %v4588 = vunpack.c.h.b16 %v3876
      %v4589 = vunpack.c.l.b16 %v3877
      %v4590 = vunpack.c.h.b16 %v3877
      %v4591 = vunpack.c.l.b16 %v3878
      %v4592 = vunpack.c.h.b16 %v3878
      %v4593 = vunpack.c.l.b16 %v3879
      %v4594 = vunpack.c.h.b16 %v3879
      %v4595 = vunpack.c.l.b16 %v3880
      %v4596 = vunpack.c.h.b16 %v3880
      %v4597 = vunpack.c.l.b16 %v3881
      %v4598 = vunpack.c.h.b16 %v3881
      %v4599 = vunpack.c.l.b16 %v3882
      %v4600 = vunpack.c.h.b16 %v3882
      %v4601 = vunpack.c.l.b16 %v3883
      %v4602 = vunpack.c.h.b16 %v3883
      %v4603 = vunpack.c.l.b16 %v3884
      %v4604 = vunpack.c.h.b16 %v3884
      %v4605 = vunpack.c.l.b16 %v3885
      %v4606 = vunpack.c.h.b16 %v3885
      %v4607 = vunpack.c.l.b16 %v3886
      %v4608 = vunpack.c.h.b16 %v3886
      %v4609 = vunpack.c.l.b16 %v3887
      %v4610 = vunpack.c.h.b16 %v3887
      %v4611 = vunpack.c.l.b16 %v3888
      %v4612 = vunpack.c.h.b16 %v3888
      %v4613 = vunpack.c.l.b16 %v3889
      %v4614 = vunpack.c.h.b16 %v3889
      %v4615 = vpack.c.b16 %v4237, %v4231
      %v4616 = vpack.c.b16 %v4238, %v4232
      %v4617 = vpack.c.b16 %v4239, %v4233
      %v4618 = vpack.c.b16 %v4240, %v4234
      %v4619 = vpack.c.b16 %v4241, %v4235
      %v4620 = vpack.c.b16 %v4242, %v4236
      %v4621 = vpack.c.b16 %v4249, %v4243
      %v4622 = vpack.c.b16 %v4250, %v4244
      %v4623 = vpack.c.b16 %v4251, %v4245
      %v4624 = vpack.c.b16 %v4252, %v4246
      %v4625 = vpack.c.b16 %v4253, %v4247
      %v4626 = vpack.c.b16 %v4254, %v4248
      %v4627 = vpack.c.b16 %v4261, %v4255
      %v4628 = vpack.c.b16 %v4262, %v4256
      %v4629 = vpack.c.b16 %v4263, %v4257
      %v4630 = vpack.c.b16 %v4264, %v4258
      %v4631 = vpack.c.b16 %v4265, %v4259
      %v4632 = vpack.c.b16 %v4266, %v4260
      %v4633 = vpack.c.b16 %v4273, %v4267
      %v4634 = vpack.c.b16 %v4274, %v4268
      %v4635 = vpack.c.b16 %v4275, %v4269
      %v4636 = vpack.c.b16 %v4276, %v4270
      %v4637 = vpack.c.b16 %v4277, %v4271
      %v4638 = vpack.c.b16 %v4278, %v4272
      %v4639 = vpack.c.b16 %v4285, %v4279
      %v4640 = vpack.c.b16 %v4286, %v4280
      %v4641 = vpack.c.b16 %v4287, %v4281
      %v4642 = vpack.c.b16 %v4288, %v4282
      %v4643 = vpack.c.b16 %v4289, %v4283
      %v4644 = vpack.c.b16 %v4290, %v4284
      %v4645 = vpack.c.b16 %v4297, %v4291
      %v4646 = vpack.c.b16 %v4298, %v4292
      %v4647 = vpack.c.b16 %v4299, %v4293
      %v4648 = vpack.c.b16 %v4300, %v4294
      %v4649 = vpack.c.b16 %v4301, %v4295
      %v4650 = vpack.c.b16 %v4302, %v4296
      %v4651 = vpack.c.b16 %v4309, %v4303
      %v4652 = vpack.c.b16 %v4310, %v4304
      %v4653 = vpack.c.b16 %v4311, %v4305
      %v4654 = vpack.c.b16 %v4312, %v4306
      %v4655 = vpack.c.b16 %v4313, %v4307
      %v4656 = vpack.c.b16 %v4314, %v4308
      %v4657 = vpack.c.b16 %v4321, %v4315
      %v4658 = vpack.c.b16 %v4322, %v4316
      %v4659 = vpack.c.b16 %v4323, %v4317
      %v4660 = vpack.c.b16 %v4324, %v4318
      %v4661 = vpack.c.b16 %v4325, %v4319
      %v4662 = vpack.c.b16 %v4326, %v4320
      %v4663 = vpack.c.b16 %v4333, %v4327
      %v4664 = vpack.c.b16 %v4334, %v4328
      %v4665 = vpack.c.b16 %v4335, %v4329
      %v4666 = vpack.c.b16 %v4336, %v4330
      %v4667 = vpack.c.b16 %v4337, %v4331
      %v4668 = vpack.c.b16 %v4338, %v4332
      %v4669 = vpack.c.b16 %v4345, %v4339
      %v4670 = vpack.c.b16 %v4346, %v4340
      %v4671 = vpack.c.b16 %v4347, %v4341
      %v4672 = vpack.c.b16 %v4348, %v4342
      %v4673 = vpack.c.b16 %v4349, %v4343
      %v4674 = vpack.c.b16 %v4350, %v4344
      %v4675 = vpack.c.b16 %v4357, %v4351
      %v4676 = vpack.c.b16 %v4358, %v4352
      %v4677 = vpack.c.b16 %v4359, %v4353
      %v4678 = vpack.c.b16 %v4360, %v4354
      %v4679 = vpack.c.b16 %v4361, %v4355
      %v4680 = vpack.c.b16 %v4362, %v4356
      %v4681 = vpack.c.b16 %v4369, %v4363
      %v4682 = vpack.c.b16 %v4370, %v4364
      %v4683 = vpack.c.b16 %v4371, %v4365
      %v4684 = vpack.c.b16 %v4372, %v4366
      %v4685 = vpack.c.b16 %v4373, %v4367
      %v4686 = vpack.c.b16 %v4374, %v4368
      %v4687 = vpack.c.b16 %v4381, %v4375
      %v4688 = vpack.c.b16 %v4382, %v4376
      %v4689 = vpack.c.b16 %v4383, %v4377
      %v4690 = vpack.c.b16 %v4384, %v4378
      %v4691 = vpack.c.b16 %v4385, %v4379
      %v4692 = vpack.c.b16 %v4386, %v4380
      %v4693 = vpack.c.b16 %v4393, %v4387
      %v4694 = vpack.c.b16 %v4394, %v4388
      %v4695 = vpack.c.b16 %v4395, %v4389
      %v4696 = vpack.c.b16 %v4396, %v4390
      %v4697 = vpack.c.b16 %v4397, %v4391
      %v4698 = vpack.c.b16 %v4398, %v4392
      %v4699 = vpack.c.b16 %v4405, %v4399
      %v4700 = vpack.c.b16 %v4406, %v4400
      %v4701 = vpack.c.b16 %v4407, %v4401
      %v4702 = vpack.c.b16 %v4408, %v4402
      %v4703 = vpack.c.b16 %v4409, %v4403
      %v4704 = vpack.c.b16 %v4410, %v4404
      %v4705 = vpack.c.b16 %v4417, %v4411
      %v4706 = vpack.c.b16 %v4418, %v4412
      %v4707 = vpack.c.b16 %v4419, %v4413
      %v4708 = vpack.c.b16 %v4420, %v4414
      %v4709 = vpack.c.b16 %v4421, %v4415
      %v4710 = vpack.c.b16 %v4422, %v4416
      %v4711 = vpack.c.b16 %v4429, %v4423
      %v4712 = vpack.c.b16 %v4430, %v4424
      %v4713 = vpack.c.b16 %v4431, %v4425
      %v4714 = vpack.c.b16 %v4432, %v4426
      %v4715 = vpack.c.b16 %v4433, %v4427
      %v4716 = vpack.c.b16 %v4434, %v4428
      %v4717 = vpack.c.b16 %v4441, %v4435
      %v4718 = vpack.c.b16 %v4442, %v4436
      %v4719 = vpack.c.b16 %v4443, %v4437
      %v4720 = vpack.c.b16 %v4444, %v4438
      %v4721 = vpack.c.b16 %v4445, %v4439
      %v4722 = vpack.c.b16 %v4446, %v4440
      %v4723 = vpack.c.b16 %v4453, %v4447
      %v4724 = vpack.c.b16 %v4454, %v4448
      %v4725 = vpack.c.b16 %v4455, %v4449
      %v4726 = vpack.c.b16 %v4456, %v4450
      %v4727 = vpack.c.b16 %v4457, %v4451
      %v4728 = vpack.c.b16 %v4458, %v4452
      %v4729 = vpack.c.b16 %v4465, %v4459
      %v4730 = vpack.c.b16 %v4466, %v4460
      %v4731 = vpack.c.b16 %v4467, %v4461
      %v4732 = vpack.c.b16 %v4468, %v4462
      %v4733 = vpack.c.b16 %v4469, %v4463
      %v4734 = vpack.c.b16 %v4470, %v4464
      %v4735 = vpack.c.b16 %v4477, %v4471
      %v4736 = vpack.c.b16 %v4478, %v4472
      %v4737 = vpack.c.b16 %v4479, %v4473
      %v4738 = vpack.c.b16 %v4480, %v4474
      %v4739 = vpack.c.b16 %v4481, %v4475
      %v4740 = vpack.c.b16 %v4482, %v4476
      %v4741 = vpack.c.b16 %v4489, %v4483
      %v4742 = vpack.c.b16 %v4490, %v4484
      %v4743 = vpack.c.b16 %v4491, %v4485
      %v4744 = vpack.c.b16 %v4492, %v4486
      %v4745 = vpack.c.b16 %v4493, %v4487
      %v4746 = vpack.c.b16 %v4494, %v4488
      %v4747 = vpack.c.b16 %v4501, %v4495
      %v4748 = vpack.c.b16 %v4502, %v4496
      %v4749 = vpack.c.b16 %v4503, %v4497
      %v4750 = vpack.c.b16 %v4504, %v4498
      %v4751 = vpack.c.b16 %v4505, %v4499
      %v4752 = vpack.c.b16 %v4506, %v4500
      %v4753 = vpack.c.b16 %v4513, %v4507
      %v4754 = vpack.c.b16 %v4514, %v4508
      %v4755 = vpack.c.b16 %v4515, %v4509
      %v4756 = vpack.c.b16 %v4516, %v4510
      %v4757 = vpack.c.b16 %v4517, %v4511
      %v4758 = vpack.c.b16 %v4518, %v4512
      %v4759 = vpack.c.b16 %v4525, %v4519
      %v4760 = vpack.c.b16 %v4526, %v4520
      %v4761 = vpack.c.b16 %v4527, %v4521
      %v4762 = vpack.c.b16 %v4528, %v4522
      %v4763 = vpack.c.b16 %v4529, %v4523
      %v4764 = vpack.c.b16 %v4530, %v4524
      %v4765 = vpack.c.b16 %v4537, %v4531
      %v4766 = vpack.c.b16 %v4538, %v4532
      %v4767 = vpack.c.b16 %v4539, %v4533
      %v4768 = vpack.c.b16 %v4540, %v4534
      %v4769 = vpack.c.b16 %v4541, %v4535
      %v4770 = vpack.c.b16 %v4542, %v4536
      %v4771 = vpack.c.b16 %v4549, %v4543
      %v4772 = vpack.c.b16 %v4550, %v4544
      %v4773 = vpack.c.b16 %v4551, %v4545
      %v4774 = vpack.c.b16 %v4552, %v4546
      %v4775 = vpack.c.b16 %v4553, %v4547
      %v4776 = vpack.c.b16 %v4554, %v4548
      %v4777 = vpack.c.b16 %v4561, %v4555
      %v4778 = vpack.c.b16 %v4562, %v4556
      %v4779 = vpack.c.b16 %v4563, %v4557
      %v4780 = vpack.c.b16 %v4564, %v4558
      %v4781 = vpack.c.b16 %v4565, %v4559
      %v4782 = vpack.c.b16 %v4566, %v4560
      %v4783 = vpack.c.b16 %v4573, %v4567
      %v4784 = vpack.c.b16 %v4574, %v4568
      %v4785 = vpack.c.b16 %v4575, %v4569
      %v4786 = vpack.c.b16 %v4576, %v4570
      %v4787 = vpack.c.b16 %v4577, %v4571
      %v4788 = vpack.c.b16 %v4578, %v4572
      %v4789 = vpack.c.b16 %v4585, %v4579
      %v4790 = vpack.c.b16 %v4586, %v4580
      %v4791 = vpack.c.b16 %v4587, %v4581
      %v4792 = vpack.c.b16 %v4588, %v4582
      %v4793 = vpack.c.b16 %v4589, %v4583
      %v4794 = vpack.c.b16 %v4590, %v4584
      %v4795 = vpack.c.b16 %v4597, %v4591
      %v4796 = vpack.c.b16 %v4598, %v4592
      %v4797 = vpack.c.b16 %v4599, %v4593
      %v4798 = vpack.c.b16 %v4600, %v4594
      %v4799 = vpack.c.b16 %v4601, %v4595
      %v4800 = vpack.c.b16 %v4602, %v4596
      %v4801 = vpack.c.b16 %v4609, %v4603
      %v4802 = vpack.c.b16 %v4610, %v4604
      %v4803 = vpack.c.b16 %v4611, %v4605
      %v4804 = vpack.c.b16 %v4612, %v4606
      %v4805 = vpack.c.b16 %v4613, %v4607
      %v4806 = vpack.c.b16 %v4614, %v4608
      %4999 = vmatpush.bf16.msra.mxu0 %v4657
      %5000 = vmatpush.bf16.msra.mxu0 %v4651
      %5001 = vmatpush.bf16.msra.mxu0 %v4645
      %5002 = vmatpush.bf16.msra.mxu0 %v4639
      %5003 = vmatpush.bf16.msra.mxu0 %v4633
      %5004 = vmatpush.bf16.msra.mxu0 %v4627
      %5005 = vmatpush.bf16.msra.mxu0 %v4621
      %5006 = vmatpush.bf16.msra.mxu0 %v4615
      %5007 = vmatmul.bf16.gmra.mxu0 %v3902
      %v5008 = vpop.f32.mrf.mxu0
      %v5009 = vadd.f32 0.0, %v5008
      %v5010 = vpop.f32.mrf.mxu0
      %v5011 = vadd.f32 0.0, %v5010
      %5012 = vmatmul.bf16.gmra.mxu0 %v3946
      %v5013 = vpop.f32.mrf.mxu0
      %v5014 = vadd.f32 0.0, %v5013
      %v5015 = vpop.f32.mrf.mxu0
      %v5016 = vadd.f32 0.0, %v5015
      %5017 = vmatmul.bf16.gmra.mxu0 %v3978
      %v5018 = vpop.f32.mrf.mxu0
      %v5019 = vadd.f32 0.0, %v5018
      %v5020 = vpop.f32.mrf.mxu0
      %v5021 = vadd.f32 0.0, %v5020
      %5022 = vmatmul.bf16.gmra.mxu0 %v4010
      %v5023 = vpop.f32.mrf.mxu0
      %v5024 = vadd.f32 0.0, %v5023
      %v5025 = vpop.f32.mrf.mxu0
      %v5026 = vadd.f32 0.0, %v5025
      %5027 = vdwg.mxu0
      %5028 = vmatpush.bf16.msra.mxu0 %v4705
      %5029 = vmatpush.bf16.msra.mxu0 %v4699
      %5030 = vmatpush.bf16.msra.mxu0 %v4693
      %5031 = vmatpush.bf16.msra.mxu0 %v4687
      %5032 = vmatpush.bf16.msra.mxu0 %v4681
      %5033 = vmatpush.bf16.msra.mxu0 %v4675
      %5034 = vmatpush.bf16.msra.mxu0 %v4669
      %5035 = vmatpush.bf16.msra.mxu0 %v4663
      %5036 = vmatmul.bf16.gmra.mxu0 %v3914
      %v5037 = vpop.f32.mrf.mxu0
      %v5038 = vadd.f32 %v5009, %v5037
      %v5039 = vpop.f32.mrf.mxu0
      %v5040 = vadd.f32 %v5011, %v5039
      %5041 = vmatmul.bf16.gmra.mxu0 %v3954
      %v5042 = vpop.f32.mrf.mxu0
      %v5043 = vadd.f32 %v5014, %v5042
      %v5044 = vpop.f32.mrf.mxu0
      %v5045 = vadd.f32 %v5016, %v5044
      %5046 = vmatmul.bf16.gmra.mxu0 %v3986
      %v5047 = vpop.f32.mrf.mxu0
      %v5048 = vadd.f32 %v5019, %v5047
      %v5049 = vpop.f32.mrf.mxu0
      %v5050 = vadd.f32 %v5021, %v5049
      %5051 = vmatmul.bf16.gmra.mxu0 %v4014
      %v5052 = vpop.f32.mrf.mxu0
      %v5053 = vadd.f32 %v5024, %v5052
      %v5054 = vpop.f32.mrf.mxu0
      %v5055 = vadd.f32 %v5026, %v5054
      %5056 = vdwg.mxu0
      %5057 = vmatpush.bf16.msra.mxu0 %v4753
      %5058 = vmatpush.bf16.msra.mxu0 %v4747
      %5059 = vmatpush.bf16.msra.mxu0 %v4741
      %5060 = vmatpush.bf16.msra.mxu0 %v4735
      %5061 = vmatpush.bf16.msra.mxu0 %v4729
      %5062 = vmatpush.bf16.msra.mxu0 %v4723
      %5063 = vmatpush.bf16.msra.mxu0 %v4717
      %5064 = vmatpush.bf16.msra.mxu0 %v4711
      %5065 = vmatmul.bf16.gmra.mxu0 %v3926
      %v5066 = vpop.f32.mrf.mxu0
      %v5067 = vadd.f32 %v5038, %v5066
      %v5068 = vpop.f32.mrf.mxu0
      %v5069 = vadd.f32 %v5040, %v5068
      %5070 = vmatmul.bf16.gmra.mxu0 %v3962
      %v5071 = vpop.f32.mrf.mxu0
      %v5072 = vadd.f32 %v5043, %v5071
      %v5073 = vpop.f32.mrf.mxu0
      %v5074 = vadd.f32 %v5045, %v5073
      %5075 = vmatmul.bf16.gmra.mxu0 %v3994
      %v5076 = vpop.f32.mrf.mxu0
      %v5077 = vadd.f32 %v5048, %v5076
      %v5078 = vpop.f32.mrf.mxu0
      %v5079 = vadd.f32 %v5050, %v5078
      %5080 = vmatmul.bf16.gmra.mxu0 %v4018
      %v5081 = vpop.f32.mrf.mxu0
      %v5082 = vadd.f32 %v5053, %v5081
      %v5083 = vpop.f32.mrf.mxu0
      %v5084 = vadd.f32 %v5055, %v5083
      %5085 = vdwg.mxu0
      %5086 = vmatpush.bf16.msra.mxu0 %v4801
      %5087 = vmatpush.bf16.msra.mxu0 %v4795
      %5088 = vmatpush.bf16.msra.mxu0 %v4789
      %5089 = vmatpush.bf16.msra.mxu0 %v4783
      %5090 = vmatpush.bf16.msra.mxu0 %v4777
      %5091 = vmatpush.bf16.msra.mxu0 %v4771
      %5092 = vmatpush.bf16.msra.mxu0 %v4765
      %5093 = vmatpush.bf16.msra.mxu0 %v4759
      %5094 = vmatmul.bf16.gmra.mxu0 %v3938
      %v5095 = vpop.f32.mrf.mxu0
      %v5096 = vadd.f32 %v5067, %v5095
      %v5097 = vpop.f32.mrf.mxu0
      %v5098 = vadd.f32 %v5069, %v5097
      %5099 = vmatmul.bf16.gmra.mxu0 %v3970
      %v5100 = vpop.f32.mrf.mxu0
      %v5101 = vadd.f32 %v5072, %v5100
      %v5102 = vpop.f32.mrf.mxu0
      %v5103 = vadd.f32 %v5074, %v5102
      %5104 = vmatmul.bf16.gmra.mxu0 %v4002
      %v5105 = vpop.f32.mrf.mxu0
      %v5106 = vadd.f32 %v5077, %v5105
      %v5107 = vpop.f32.mrf.mxu0
      %v5108 = vadd.f32 %v5079, %v5107
      %5109 = vmatmul.bf16.gmra.mxu0 %v4022
      %v5110 = vpop.f32.mrf.mxu0
      %v5111 = vadd.f32 %v5082, %v5110
      %v5112 = vpop.f32.mrf.mxu0
      %v5113 = vadd.f32 %v5084, %v5112
      %5114 = vdwg.mxu0
      %5115 = vmatpush.bf16.msra.mxu0 %v4658
      %5116 = vmatpush.bf16.msra.mxu0 %v4652
      %5117 = vmatpush.bf16.msra.mxu0 %v4646
      %5118 = vmatpush.bf16.msra.mxu0 %v4640
      %5119 = vmatpush.bf16.msra.mxu0 %v4634
      %5120 = vmatpush.bf16.msra.mxu0 %v4628
      %5121 = vmatpush.bf16.msra.mxu0 %v4622
      %5122 = vmatpush.bf16.msra.mxu0 %v4616
      %5123 = vmatmul.bf16.gmra.mxu0 %v3902
      %v5124 = vpop.f32.mrf.mxu0
      %v5125 = vadd.f32 0.0, %v5124
      %v5126 = vpop.f32.mrf.mxu0
      %v5127 = vadd.f32 0.0, %v5126
      %5128 = vmatmul.bf16.gmra.mxu0 %v3946
      %v5129 = vpop.f32.mrf.mxu0
      %v5130 = vadd.f32 0.0, %v5129
      %v5131 = vpop.f32.mrf.mxu0
      %v5132 = vadd.f32 0.0, %v5131
      %5133 = vmatmul.bf16.gmra.mxu0 %v3978
      %v5134 = vpop.f32.mrf.mxu0
      %v5135 = vadd.f32 0.0, %v5134
      %v5136 = vpop.f32.mrf.mxu0
      %v5137 = vadd.f32 0.0, %v5136
      %5138 = vmatmul.bf16.gmra.mxu0 %v4010
      %v5139 = vpop.f32.mrf.mxu0
      %v5140 = vadd.f32 0.0, %v5139
      %v5141 = vpop.f32.mrf.mxu0
      %v5142 = vadd.f32 0.0, %v5141
      %5143 = vdwg.mxu0
      %5144 = vmatpush.bf16.msra.mxu0 %v4706
      %5145 = vmatpush.bf16.msra.mxu0 %v4700
      %5146 = vmatpush.bf16.msra.mxu0 %v4694
      %5147 = vmatpush.bf16.msra.mxu0 %v4688
      %5148 = vmatpush.bf16.msra.mxu0 %v4682
      %5149 = vmatpush.bf16.msra.mxu0 %v4676
      %5150 = vmatpush.bf16.msra.mxu0 %v4670
      %5151 = vmatpush.bf16.msra.mxu0 %v4664
      %5152 = vmatmul.bf16.gmra.mxu0 %v3914
      %v5153 = vpop.f32.mrf.mxu0
      %v5154 = vadd.f32 %v5125, %v5153
      %v5155 = vpop.f32.mrf.mxu0
      %v5156 = vadd.f32 %v5127, %v5155
      %5157 = vmatmul.bf16.gmra.mxu0 %v3954
      %v5158 = vpop.f32.mrf.mxu0
      %v5159 = vadd.f32 %v5130, %v5158
      %v5160 = vpop.f32.mrf.mxu0
      %v5161 = vadd.f32 %v5132, %v5160
      %5162 = vmatmul.bf16.gmra.mxu0 %v3986
      %v5163 = vpop.f32.mrf.mxu0
      %v5164 = vadd.f32 %v5135, %v5163
      %v5165 = vpop.f32.mrf.mxu0
      %v5166 = vadd.f32 %v5137, %v5165
      %5167 = vmatmul.bf16.gmra.mxu0 %v4014
      %v5168 = vpop.f32.mrf.mxu0
      %v5169 = vadd.f32 %v5140, %v5168
      %v5170 = vpop.f32.mrf.mxu0
      %v5171 = vadd.f32 %v5142, %v5170
      %5172 = vdwg.mxu0
      %5173 = vmatpush.bf16.msra.mxu0 %v4754
      %5174 = vmatpush.bf16.msra.mxu0 %v4748
      %5175 = vmatpush.bf16.msra.mxu0 %v4742
      %5176 = vmatpush.bf16.msra.mxu0 %v4736
      %5177 = vmatpush.bf16.msra.mxu0 %v4730
      %5178 = vmatpush.bf16.msra.mxu0 %v4724
      %5179 = vmatpush.bf16.msra.mxu0 %v4718
      %5180 = vmatpush.bf16.msra.mxu0 %v4712
      %5181 = vmatmul.bf16.gmra.mxu0 %v3926
      %v5182 = vpop.f32.mrf.mxu0
      %v5183 = vadd.f32 %v5154, %v5182
      %v5184 = vpop.f32.mrf.mxu0
      %v5185 = vadd.f32 %v5156, %v5184
      %5186 = vmatmul.bf16.gmra.mxu0 %v3962
      %v5187 = vpop.f32.mrf.mxu0
      %v5188 = vadd.f32 %v5159, %v5187
      %v5189 = vpop.f32.mrf.mxu0
      %v5190 = vadd.f32 %v5161, %v5189
      %5191 = vmatmul.bf16.gmra.mxu0 %v3994
      %v5192 = vpop.f32.mrf.mxu0
      %v5193 = vadd.f32 %v5164, %v5192
      %v5194 = vpop.f32.mrf.mxu0
      %v5195 = vadd.f32 %v5166, %v5194
      %5196 = vmatmul.bf16.gmra.mxu0 %v4018
      %v5197 = vpop.f32.mrf.mxu0
      %v5198 = vadd.f32 %v5169, %v5197
      %v5199 = vpop.f32.mrf.mxu0
      %v5200 = vadd.f32 %v5171, %v5199
      %5201 = vdwg.mxu0
      %5202 = vmatpush.bf16.msra.mxu0 %v4802
      %5203 = vmatpush.bf16.msra.mxu0 %v4796
      %5204 = vmatpush.bf16.msra.mxu0 %v4790
      %5205 = vmatpush.bf16.msra.mxu0 %v4784
      %5206 = vmatpush.bf16.msra.mxu0 %v4778
      %5207 = vmatpush.bf16.msra.mxu0 %v4772
      %5208 = vmatpush.bf16.msra.mxu0 %v4766
      %5209 = vmatpush.bf16.msra.mxu0 %v4760
      %5210 = vmatmul.bf16.gmra.mxu0 %v3938
      %v5211 = vpop.f32.mrf.mxu0
      %v5212 = vadd.f32 %v5183, %v5211
      %v5213 = vpop.f32.mrf.mxu0
      %v5214 = vadd.f32 %v5185, %v5213
      %5215 = vmatmul.bf16.gmra.mxu0 %v3970
      %v5216 = vpop.f32.mrf.mxu0
      %v5217 = vadd.f32 %v5188, %v5216
      %v5218 = vpop.f32.mrf.mxu0
      %v5219 = vadd.f32 %v5190, %v5218
      %5220 = vmatmul.bf16.gmra.mxu0 %v4002
      %v5221 = vpop.f32.mrf.mxu0
      %v5222 = vadd.f32 %v5193, %v5221
      %v5223 = vpop.f32.mrf.mxu0
      %v5224 = vadd.f32 %v5195, %v5223
      %5225 = vmatmul.bf16.gmra.mxu0 %v4022
      %v5226 = vpop.f32.mrf.mxu0
      %v5227 = vadd.f32 %v5198, %v5226
      %v5228 = vpop.f32.mrf.mxu0
      %v5229 = vadd.f32 %v5200, %v5228
      %5230 = vdwg.mxu0
      %5231 = vmatpush.bf16.msra.mxu0 %v4659
      %5232 = vmatpush.bf16.msra.mxu0 %v4653
      %5233 = vmatpush.bf16.msra.mxu0 %v4647
      %5234 = vmatpush.bf16.msra.mxu0 %v4641
      %5235 = vmatpush.bf16.msra.mxu0 %v4635
      %5236 = vmatpush.bf16.msra.mxu0 %v4629
      %5237 = vmatpush.bf16.msra.mxu0 %v4623
      %5238 = vmatpush.bf16.msra.mxu0 %v4617
      %5239 = vmatmul.bf16.gmra.mxu0 %v3902
      %v5240 = vpop.f32.mrf.mxu0
      %v5241 = vadd.f32 0.0, %v5240
      %v5242 = vpop.f32.mrf.mxu0
      %v5243 = vadd.f32 0.0, %v5242
      %5244 = vmatmul.bf16.gmra.mxu0 %v3946
      %v5245 = vpop.f32.mrf.mxu0
      %v5246 = vadd.f32 0.0, %v5245
      %v5247 = vpop.f32.mrf.mxu0
      %v5248 = vadd.f32 0.0, %v5247
      %5249 = vmatmul.bf16.gmra.mxu0 %v3978
      %v5250 = vpop.f32.mrf.mxu0
      %v5251 = vadd.f32 0.0, %v5250
      %v5252 = vpop.f32.mrf.mxu0
      %v5253 = vadd.f32 0.0, %v5252
      %5254 = vmatmul.bf16.gmra.mxu0 %v4010
      %v5255 = vpop.f32.mrf.mxu0
      %v5256 = vadd.f32 0.0, %v5255
      %v5257 = vpop.f32.mrf.mxu0
      %v5258 = vadd.f32 0.0, %v5257
      %5259 = vdwg.mxu0
      %5260 = vmatpush.bf16.msra.mxu0 %v4707
      %5261 = vmatpush.bf16.msra.mxu0 %v4701
      %5262 = vmatpush.bf16.msra.mxu0 %v4695
      %5263 = vmatpush.bf16.msra.mxu0 %v4689
      %5264 = vmatpush.bf16.msra.mxu0 %v4683
      %5265 = vmatpush.bf16.msra.mxu0 %v4677
      %5266 = vmatpush.bf16.msra.mxu0 %v4671
      %5267 = vmatpush.bf16.msra.mxu0 %v4665
      %5268 = vmatmul.bf16.gmra.mxu0 %v3914
      %v5269 = vpop.f32.mrf.mxu0
      %v5270 = vadd.f32 %v5241, %v5269
      %v5271 = vpop.f32.mrf.mxu0
      %v5272 = vadd.f32 %v5243, %v5271
      %5273 = vmatmul.bf16.gmra.mxu0 %v3954
      %v5274 = vpop.f32.mrf.mxu0
      %v5275 = vadd.f32 %v5246, %v5274
      %v5276 = vpop.f32.mrf.mxu0
      %v5277 = vadd.f32 %v5248, %v5276
      %5278 = vmatmul.bf16.gmra.mxu0 %v3986
      %v5279 = vpop.f32.mrf.mxu0
      %v5280 = vadd.f32 %v5251, %v5279
      %v5281 = vpop.f32.mrf.mxu0
      %v5282 = vadd.f32 %v5253, %v5281
      %5283 = vmatmul.bf16.gmra.mxu0 %v4014
      %v5284 = vpop.f32.mrf.mxu0
      %v5285 = vadd.f32 %v5256, %v5284
      %v5286 = vpop.f32.mrf.mxu0
      %v5287 = vadd.f32 %v5258, %v5286
      %5288 = vdwg.mxu0
      %5289 = vmatpush.bf16.msra.mxu0 %v4755
      %5290 = vmatpush.bf16.msra.mxu0 %v4749
      %5291 = vmatpush.bf16.msra.mxu0 %v4743
      %5292 = vmatpush.bf16.msra.mxu0 %v4737
      %5293 = vmatpush.bf16.msra.mxu0 %v4731
      %5294 = vmatpush.bf16.msra.mxu0 %v4725
      %5295 = vmatpush.bf16.msra.mxu0 %v4719
      %5296 = vmatpush.bf16.msra.mxu0 %v4713
      %5297 = vmatmul.bf16.gmra.mxu0 %v3926
      %v5298 = vpop.f32.mrf.mxu0
      %v5299 = vadd.f32 %v5270, %v5298
      %v5300 = vpop.f32.mrf.mxu0
      %v5301 = vadd.f32 %v5272, %v5300
      %5302 = vmatmul.bf16.gmra.mxu0 %v3962
      %v5303 = vpop.f32.mrf.mxu0
      %v5304 = vadd.f32 %v5275, %v5303
      %v5305 = vpop.f32.mrf.mxu0
      %v5306 = vadd.f32 %v5277, %v5305
      %5307 = vmatmul.bf16.gmra.mxu0 %v3994
      %v5308 = vpop.f32.mrf.mxu0
      %v5309 = vadd.f32 %v5280, %v5308
      %v5310 = vpop.f32.mrf.mxu0
      %v5311 = vadd.f32 %v5282, %v5310
      %5312 = vmatmul.bf16.gmra.mxu0 %v4018
      %v5313 = vpop.f32.mrf.mxu0
      %v5314 = vadd.f32 %v5285, %v5313
      %v5315 = vpop.f32.mrf.mxu0
      %v5316 = vadd.f32 %v5287, %v5315
      %5317 = vdwg.mxu0
      %5318 = vmatpush.bf16.msra.mxu0 %v4803
      %5319 = vmatpush.bf16.msra.mxu0 %v4797
      %5320 = vmatpush.bf16.msra.mxu0 %v4791
      %5321 = vmatpush.bf16.msra.mxu0 %v4785
      %5322 = vmatpush.bf16.msra.mxu0 %v4779
      %5323 = vmatpush.bf16.msra.mxu0 %v4773
      %5324 = vmatpush.bf16.msra.mxu0 %v4767
      %5325 = vmatpush.bf16.msra.mxu0 %v4761
      %5326 = vmatmul.bf16.gmra.mxu0 %v3938
      %v5327 = vpop.f32.mrf.mxu0
      %v5328 = vadd.f32 %v5299, %v5327
      %v5329 = vpop.f32.mrf.mxu0
      %v5330 = vadd.f32 %v5301, %v5329
      %5331 = vmatmul.bf16.gmra.mxu0 %v3970
      %v5332 = vpop.f32.mrf.mxu0
      %v5333 = vadd.f32 %v5304, %v5332
      %v5334 = vpop.f32.mrf.mxu0
      %v5335 = vadd.f32 %v5306, %v5334
      %5336 = vmatmul.bf16.gmra.mxu0 %v4002
      %v5337 = vpop.f32.mrf.mxu0
      %v5338 = vadd.f32 %v5309, %v5337
      %v5339 = vpop.f32.mrf.mxu0
      %v5340 = vadd.f32 %v5311, %v5339
      %5341 = vmatmul.bf16.gmra.mxu0 %v4022
      %v5342 = vpop.f32.mrf.mxu0
      %v5343 = vadd.f32 %v5314, %v5342
      %v5344 = vpop.f32.mrf.mxu0
      %v5345 = vadd.f32 %v5316, %v5344
      %5346 = vdwg.mxu0
      %5347 = vmatpush.bf16.msra.mxu0 %v4660
      %5348 = vmatpush.bf16.msra.mxu0 %v4654
      %5349 = vmatpush.bf16.msra.mxu0 %v4648
      %5350 = vmatpush.bf16.msra.mxu0 %v4642
      %5351 = vmatpush.bf16.msra.mxu0 %v4636
      %5352 = vmatpush.bf16.msra.mxu0 %v4630
      %5353 = vmatpush.bf16.msra.mxu0 %v4624
      %5354 = vmatpush.bf16.msra.mxu0 %v4618
      %5355 = vmatmul.bf16.gmra.mxu0 %v3902
      %v5356 = vpop.f32.mrf.mxu0
      %v5357 = vadd.f32 0.0, %v5356
      %v5358 = vpop.f32.mrf.mxu0
      %v5359 = vadd.f32 0.0, %v5358
      %5360 = vmatmul.bf16.gmra.mxu0 %v3946
      %v5361 = vpop.f32.mrf.mxu0
      %v5362 = vadd.f32 0.0, %v5361
      %v5363 = vpop.f32.mrf.mxu0
      %v5364 = vadd.f32 0.0, %v5363
      %5365 = vmatmul.bf16.gmra.mxu0 %v3978
      %v5366 = vpop.f32.mrf.mxu0
      %v5367 = vadd.f32 0.0, %v5366
      %v5368 = vpop.f32.mrf.mxu0
      %v5369 = vadd.f32 0.0, %v5368
      %5370 = vmatmul.bf16.gmra.mxu0 %v4010
      %v5371 = vpop.f32.mrf.mxu0
      %v5372 = vadd.f32 0.0, %v5371
      %v5373 = vpop.f32.mrf.mxu0
      %v5374 = vadd.f32 0.0, %v5373
      %5375 = vdwg.mxu0
      %5376 = vmatpush.bf16.msra.mxu0 %v4708
      %5377 = vmatpush.bf16.msra.mxu0 %v4702
      %5378 = vmatpush.bf16.msra.mxu0 %v4696
      %5379 = vmatpush.bf16.msra.mxu0 %v4690
      %5380 = vmatpush.bf16.msra.mxu0 %v4684
      %5381 = vmatpush.bf16.msra.mxu0 %v4678
      %5382 = vmatpush.bf16.msra.mxu0 %v4672
      %5383 = vmatpush.bf16.msra.mxu0 %v4666
      %5384 = vmatmul.bf16.gmra.mxu0 %v3914
      %v5385 = vpop.f32.mrf.mxu0
      %v5386 = vadd.f32 %v5357, %v5385
      %v5387 = vpop.f32.mrf.mxu0
      %v5388 = vadd.f32 %v5359, %v5387
      %5389 = vmatmul.bf16.gmra.mxu0 %v3954
      %v5390 = vpop.f32.mrf.mxu0
      %v5391 = vadd.f32 %v5362, %v5390
      %v5392 = vpop.f32.mrf.mxu0
      %v5393 = vadd.f32 %v5364, %v5392
      %5394 = vmatmul.bf16.gmra.mxu0 %v3986
      %v5395 = vpop.f32.mrf.mxu0
      %v5396 = vadd.f32 %v5367, %v5395
      %v5397 = vpop.f32.mrf.mxu0
      %v5398 = vadd.f32 %v5369, %v5397
      %5399 = vmatmul.bf16.gmra.mxu0 %v4014
      %v5400 = vpop.f32.mrf.mxu0
      %v5401 = vadd.f32 %v5372, %v5400
      %v5402 = vpop.f32.mrf.mxu0
      %v5403 = vadd.f32 %v5374, %v5402
      %5404 = vdwg.mxu0
      %5405 = vmatpush.bf16.msra.mxu0 %v4756
      %5406 = vmatpush.bf16.msra.mxu0 %v4750
      %5407 = vmatpush.bf16.msra.mxu0 %v4744
      %5408 = vmatpush.bf16.msra.mxu0 %v4738
      %5409 = vmatpush.bf16.msra.mxu0 %v4732
      %5410 = vmatpush.bf16.msra.mxu0 %v4726
      %5411 = vmatpush.bf16.msra.mxu0 %v4720
      %5412 = vmatpush.bf16.msra.mxu0 %v4714
      %5413 = vmatmul.bf16.gmra.mxu0 %v3926
      %v5414 = vpop.f32.mrf.mxu0
      %v5415 = vadd.f32 %v5386, %v5414
      %v5416 = vpop.f32.mrf.mxu0
      %v5417 = vadd.f32 %v5388, %v5416
      %5418 = vmatmul.bf16.gmra.mxu0 %v3962
      %v5419 = vpop.f32.mrf.mxu0
      %v5420 = vadd.f32 %v5391, %v5419
      %v5421 = vpop.f32.mrf.mxu0
      %v5422 = vadd.f32 %v5393, %v5421
      %5423 = vmatmul.bf16.gmra.mxu0 %v3994
      %v5424 = vpop.f32.mrf.mxu0
      %v5425 = vadd.f32 %v5396, %v5424
      %v5426 = vpop.f32.mrf.mxu0
      %v5427 = vadd.f32 %v5398, %v5426
      %5428 = vmatmul.bf16.gmra.mxu0 %v4018
      %v5429 = vpop.f32.mrf.mxu0
      %v5430 = vadd.f32 %v5401, %v5429
      %v5431 = vpop.f32.mrf.mxu0
      %v5432 = vadd.f32 %v5403, %v5431
      %5433 = vdwg.mxu0
      %5434 = vmatpush.bf16.msra.mxu0 %v4804
      %5435 = vmatpush.bf16.msra.mxu0 %v4798
      %5436 = vmatpush.bf16.msra.mxu0 %v4792
      %5437 = vmatpush.bf16.msra.mxu0 %v4786
      %5438 = vmatpush.bf16.msra.mxu0 %v4780
      %5439 = vmatpush.bf16.msra.mxu0 %v4774
      %5440 = vmatpush.bf16.msra.mxu0 %v4768
      %5441 = vmatpush.bf16.msra.mxu0 %v4762
      %5442 = vmatmul.bf16.gmra.mxu0 %v3938
      %v5443 = vpop.f32.mrf.mxu0
      %v5444 = vadd.f32 %v5415, %v5443
      %v5445 = vpop.f32.mrf.mxu0
      %v5446 = vadd.f32 %v5417, %v5445
      %5447 = vmatmul.bf16.gmra.mxu0 %v3970
      %v5448 = vpop.f32.mrf.mxu0
      %v5449 = vadd.f32 %v5420, %v5448
      %v5450 = vpop.f32.mrf.mxu0
      %v5451 = vadd.f32 %v5422, %v5450
      %5452 = vmatmul.bf16.gmra.mxu0 %v4002
      %v5453 = vpop.f32.mrf.mxu0
      %v5454 = vadd.f32 %v5425, %v5453
      %v5455 = vpop.f32.mrf.mxu0
      %v5456 = vadd.f32 %v5427, %v5455
      %5457 = vmatmul.bf16.gmra.mxu0 %v4022
      %v5458 = vpop.f32.mrf.mxu0
      %v5459 = vadd.f32 %v5430, %v5458
      %v5460 = vpop.f32.mrf.mxu0
      %v5461 = vadd.f32 %v5432, %v5460
      %5462 = vdwg.mxu0
      %5463 = vmatpush.bf16.msra.mxu0 %v4661
      %5464 = vmatpush.bf16.msra.mxu0 %v4655
      %5465 = vmatpush.bf16.msra.mxu0 %v4649
      %5466 = vmatpush.bf16.msra.mxu0 %v4643
      %5467 = vmatpush.bf16.msra.mxu0 %v4637
      %5468 = vmatpush.bf16.msra.mxu0 %v4631
      %5469 = vmatpush.bf16.msra.mxu0 %v4625
      %5470 = vmatpush.bf16.msra.mxu0 %v4619
      %5471 = vmatmul.bf16.gmra.mxu0 %v3902
      %v5472 = vpop.f32.mrf.mxu0
      %v5473 = vadd.f32 0.0, %v5472
      %v5474 = vpop.f32.mrf.mxu0
      %v5475 = vadd.f32 0.0, %v5474
      %5476 = vmatmul.bf16.gmra.mxu0 %v3946
      %v5477 = vpop.f32.mrf.mxu0
      %v5478 = vadd.f32 0.0, %v5477
      %v5479 = vpop.f32.mrf.mxu0
      %v5480 = vadd.f32 0.0, %v5479
      %5481 = vmatmul.bf16.gmra.mxu0 %v3978
      %v5482 = vpop.f32.mrf.mxu0
      %v5483 = vadd.f32 0.0, %v5482
      %v5484 = vpop.f32.mrf.mxu0
      %v5485 = vadd.f32 0.0, %v5484
      %5486 = vmatmul.bf16.gmra.mxu0 %v4010
      %v5487 = vpop.f32.mrf.mxu0
      %v5488 = vadd.f32 0.0, %v5487
      %v5489 = vpop.f32.mrf.mxu0
      %v5490 = vadd.f32 0.0, %v5489
      %5491 = vdwg.mxu0
      %5492 = vmatpush.bf16.msra.mxu0 %v4709
      %5493 = vmatpush.bf16.msra.mxu0 %v4703
      %5494 = vmatpush.bf16.msra.mxu0 %v4697
      %5495 = vmatpush.bf16.msra.mxu0 %v4691
      %5496 = vmatpush.bf16.msra.mxu0 %v4685
      %5497 = vmatpush.bf16.msra.mxu0 %v4679
      %5498 = vmatpush.bf16.msra.mxu0 %v4673
      %5499 = vmatpush.bf16.msra.mxu0 %v4667
      %5500 = vmatmul.bf16.gmra.mxu0 %v3914
      %v5501 = vpop.f32.mrf.mxu0
      %v5502 = vadd.f32 %v5473, %v5501
      %v5503 = vpop.f32.mrf.mxu0
      %v5504 = vadd.f32 %v5475, %v5503
      %5505 = vmatmul.bf16.gmra.mxu0 %v3954
      %v5506 = vpop.f32.mrf.mxu0
      %v5507 = vadd.f32 %v5478, %v5506
      %v5508 = vpop.f32.mrf.mxu0
      %v5509 = vadd.f32 %v5480, %v5508
      %5510 = vmatmul.bf16.gmra.mxu0 %v3986
      %v5511 = vpop.f32.mrf.mxu0
      %v5512 = vadd.f32 %v5483, %v5511
      %v5513 = vpop.f32.mrf.mxu0
      %v5514 = vadd.f32 %v5485, %v5513
      %5515 = vmatmul.bf16.gmra.mxu0 %v4014
      %v5516 = vpop.f32.mrf.mxu0
      %v5517 = vadd.f32 %v5488, %v5516
      %v5518 = vpop.f32.mrf.mxu0
      %v5519 = vadd.f32 %v5490, %v5518
      %5520 = vdwg.mxu0
      %5521 = vmatpush.bf16.msra.mxu0 %v4757
      %5522 = vmatpush.bf16.msra.mxu0 %v4751
      %5523 = vmatpush.bf16.msra.mxu0 %v4745
      %5524 = vmatpush.bf16.msra.mxu0 %v4739
      %5525 = vmatpush.bf16.msra.mxu0 %v4733
      %5526 = vmatpush.bf16.msra.mxu0 %v4727
      %5527 = vmatpush.bf16.msra.mxu0 %v4721
      %5528 = vmatpush.bf16.msra.mxu0 %v4715
      %5529 = vmatmul.bf16.gmra.mxu0 %v3926
      %v5530 = vpop.f32.mrf.mxu0
      %v5531 = vadd.f32 %v5502, %v5530
      %v5532 = vpop.f32.mrf.mxu0
      %v5533 = vadd.f32 %v5504, %v5532
      %5534 = vmatmul.bf16.gmra.mxu0 %v3962
      %v5535 = vpop.f32.mrf.mxu0
      %v5536 = vadd.f32 %v5507, %v5535
      %v5537 = vpop.f32.mrf.mxu0
      %v5538 = vadd.f32 %v5509, %v5537
      %5539 = vmatmul.bf16.gmra.mxu0 %v3994
      %v5540 = vpop.f32.mrf.mxu0
      %v5541 = vadd.f32 %v5512, %v5540
      %v5542 = vpop.f32.mrf.mxu0
      %v5543 = vadd.f32 %v5514, %v5542
      %5544 = vmatmul.bf16.gmra.mxu0 %v4018
      %v5545 = vpop.f32.mrf.mxu0
      %v5546 = vadd.f32 %v5517, %v5545
      %v5547 = vpop.f32.mrf.mxu0
      %v5548 = vadd.f32 %v5519, %v5547
      %5549 = vdwg.mxu0
      %5550 = vmatpush.bf16.msra.mxu0 %v4805
      %5551 = vmatpush.bf16.msra.mxu0 %v4799
      %5552 = vmatpush.bf16.msra.mxu0 %v4793
      %5553 = vmatpush.bf16.msra.mxu0 %v4787
      %5554 = vmatpush.bf16.msra.mxu0 %v4781
      %5555 = vmatpush.bf16.msra.mxu0 %v4775
      %5556 = vmatpush.bf16.msra.mxu0 %v4769
      %5557 = vmatpush.bf16.msra.mxu0 %v4763
      %5558 = vmatmul.bf16.gmra.mxu0 %v3938
      %v5559 = vpop.f32.mrf.mxu0
      %v5560 = vadd.f32 %v5531, %v5559
      %v5561 = vpop.f32.mrf.mxu0
      %v5562 = vadd.f32 %v5533, %v5561
      %5563 = vmatmul.bf16.gmra.mxu0 %v3970
      %v5564 = vpop.f32.mrf.mxu0
      %v5565 = vadd.f32 %v5536, %v5564
      %v5566 = vpop.f32.mrf.mxu0
      %v5567 = vadd.f32 %v5538, %v5566
      %5568 = vmatmul.bf16.gmra.mxu0 %v4002
      %v5569 = vpop.f32.mrf.mxu0
      %v5570 = vadd.f32 %v5541, %v5569
      %v5571 = vpop.f32.mrf.mxu0
      %v5572 = vadd.f32 %v5543, %v5571
      %5573 = vmatmul.bf16.gmra.mxu0 %v4022
      %v5574 = vpop.f32.mrf.mxu0
      %v5575 = vadd.f32 %v5546, %v5574
      %v5576 = vpop.f32.mrf.mxu0
      %v5577 = vadd.f32 %v5548, %v5576
      %5578 = vdwg.mxu0
      %5579 = vmatpush.bf16.msra.mxu0 %v4662
      %5580 = vmatpush.bf16.msra.mxu0 %v4656
      %5581 = vmatpush.bf16.msra.mxu0 %v4650
      %5582 = vmatpush.bf16.msra.mxu0 %v4644
      %5583 = vmatpush.bf16.msra.mxu0 %v4638
      %5584 = vmatpush.bf16.msra.mxu0 %v4632
      %5585 = vmatpush.bf16.msra.mxu0 %v4626
      %5586 = vmatpush.bf16.msra.mxu0 %v4620
      %5587 = vmatmul.bf16.gmra.mxu0 %v3902
      %v5588 = vpop.f32.mrf.mxu0
      %v5589 = vadd.f32 0.0, %v5588
      %v5590 = vpop.f32.mrf.mxu0
      %v5591 = vadd.f32 0.0, %v5590
      %5592 = vmatmul.bf16.gmra.mxu0 %v3946
      %v5593 = vpop.f32.mrf.mxu0
      %v5594 = vadd.f32 0.0, %v5593
      %v5595 = vpop.f32.mrf.mxu0
      %v5596 = vadd.f32 0.0, %v5595
      %5597 = vmatmul.bf16.gmra.mxu0 %v3978
      %v5598 = vpop.f32.mrf.mxu0
      %v5599 = vadd.f32 0.0, %v5598
      %v5600 = vpop.f32.mrf.mxu0
      %v5601 = vadd.f32 0.0, %v5600
      %5602 = vmatmul.bf16.gmra.mxu0 %v4010
      %v5603 = vpop.f32.mrf.mxu0
      %v5604 = vadd.f32 0.0, %v5603
      %v5605 = vpop.f32.mrf.mxu0
      %v5606 = vadd.f32 0.0, %v5605
      %5607 = vdwg.mxu0
      %5608 = vmatpush.bf16.msra.mxu0 %v4710
      %5609 = vmatpush.bf16.msra.mxu0 %v4704
      %5610 = vmatpush.bf16.msra.mxu0 %v4698
      %5611 = vmatpush.bf16.msra.mxu0 %v4692
      %5612 = vmatpush.bf16.msra.mxu0 %v4686
      %5613 = vmatpush.bf16.msra.mxu0 %v4680
      %5614 = vmatpush.bf16.msra.mxu0 %v4674
      %5615 = vmatpush.bf16.msra.mxu0 %v4668
      %5616 = vmatmul.bf16.gmra.mxu0 %v3914
      %v5617 = vpop.f32.mrf.mxu0
      %v5618 = vadd.f32 %v5589, %v5617
      %v5619 = vpop.f32.mrf.mxu0
      %v5620 = vadd.f32 %v5591, %v5619
      %5621 = vmatmul.bf16.gmra.mxu0 %v3954
      %v5622 = vpop.f32.mrf.mxu0
      %v5623 = vadd.f32 %v5594, %v5622
      %v5624 = vpop.f32.mrf.mxu0
      %v5625 = vadd.f32 %v5596, %v5624
      %5626 = vmatmul.bf16.gmra.mxu0 %v3986
      %v5627 = vpop.f32.mrf.mxu0
      %v5628 = vadd.f32 %v5599, %v5627
      %v5629 = vpop.f32.mrf.mxu0
      %v5630 = vadd.f32 %v5601, %v5629
      %5631 = vmatmul.bf16.gmra.mxu0 %v4014
      %v5632 = vpop.f32.mrf.mxu0
      %v5633 = vadd.f32 %v5604, %v5632
      %v5634 = vpop.f32.mrf.mxu0
      %v5635 = vadd.f32 %v5606, %v5634
      %5636 = vdwg.mxu0
      %5637 = vmatpush.bf16.msra.mxu0 %v4758
      %5638 = vmatpush.bf16.msra.mxu0 %v4752
      %5639 = vmatpush.bf16.msra.mxu0 %v4746
      %5640 = vmatpush.bf16.msra.mxu0 %v4740
      %5641 = vmatpush.bf16.msra.mxu0 %v4734
      %5642 = vmatpush.bf16.msra.mxu0 %v4728
      %5643 = vmatpush.bf16.msra.mxu0 %v4722
      %5644 = vmatpush.bf16.msra.mxu0 %v4716
      %5645 = vmatmul.bf16.gmra.mxu0 %v3926
      %v5646 = vpop.f32.mrf.mxu0
      %v5647 = vadd.f32 %v5618, %v5646
      %v5648 = vpop.f32.mrf.mxu0
      %v5649 = vadd.f32 %v5620, %v5648
      %5650 = vmatmul.bf16.gmra.mxu0 %v3962
      %v5651 = vpop.f32.mrf.mxu0
      %v5652 = vadd.f32 %v5623, %v5651
      %v5653 = vpop.f32.mrf.mxu0
      %v5654 = vadd.f32 %v5625, %v5653
      %5655 = vmatmul.bf16.gmra.mxu0 %v3994
      %v5656 = vpop.f32.mrf.mxu0
      %v5657 = vadd.f32 %v5628, %v5656
      %v5658 = vpop.f32.mrf.mxu0
      %v5659 = vadd.f32 %v5630, %v5658
      %5660 = vmatmul.bf16.gmra.mxu0 %v4018
      %v5661 = vpop.f32.mrf.mxu0
      %v5662 = vadd.f32 %v5633, %v5661
      %v5663 = vpop.f32.mrf.mxu0
      %v5664 = vadd.f32 %v5635, %v5663
      %5665 = vdwg.mxu0
      %5666 = vmatpush.bf16.msra.mxu0 %v4806
      %5667 = vmatpush.bf16.msra.mxu0 %v4800
      %5668 = vmatpush.bf16.msra.mxu0 %v4794
      %5669 = vmatpush.bf16.msra.mxu0 %v4788
      %5670 = vmatpush.bf16.msra.mxu0 %v4782
      %5671 = vmatpush.bf16.msra.mxu0 %v4776
      %5672 = vmatpush.bf16.msra.mxu0 %v4770
      %5673 = vmatpush.bf16.msra.mxu0 %v4764
      %5674 = vmatmul.bf16.gmra.mxu0 %v3938
      %v5675 = vpop.f32.mrf.mxu0
      %v5676 = vadd.f32 %v5647, %v5675
      %v5677 = vpop.f32.mrf.mxu0
      %v5678 = vadd.f32 %v5649, %v5677
      %5679 = vmatmul.bf16.gmra.mxu0 %v3970
      %v5680 = vpop.f32.mrf.mxu0
      %v5681 = vadd.f32 %v5652, %v5680
      %v5682 = vpop.f32.mrf.mxu0
      %v5683 = vadd.f32 %v5654, %v5682
      %5684 = vmatmul.bf16.gmra.mxu0 %v4002
      %v5685 = vpop.f32.mrf.mxu0
      %v5686 = vadd.f32 %v5657, %v5685
      %v5687 = vpop.f32.mrf.mxu0
      %v5688 = vadd.f32 %v5659, %v5687
      %5689 = vmatmul.bf16.gmra.mxu0 %v4022
      %v5690 = vpop.f32.mrf.mxu0
      %v5691 = vadd.f32 %v5662, %v5690
      %v5692 = vpop.f32.mrf.mxu0
      %v5693 = vadd.f32 %v5664, %v5692
      %5694 = vdwg.mxu0
      %v5695 = vadd.f32 %v3649, %v5096
      %v5696 = vadd.f32 %v3650, %v5212
      %v5697 = vadd.f32 %v3651, %v5328
      %v5698 = vadd.f32 %v3652, %v5444
      %v5699 = vadd.f32 %v3653, %v5560
      %v5700 = vadd.f32 %v3654, %v5676
      %v5701 = vadd.f32 %v3655, %v5098
      %v5702 = vadd.f32 %v3656, %v5214
      %v5703 = vadd.f32 %v3657, %v5330
      %v5704 = vadd.f32 %v3658, %v5446
      %v5705 = vadd.f32 %v3659, %v5562
      %v5706 = vadd.f32 %v3660, %v5678
      %v5707 = vadd.f32 %v3661, %v5101
      %v5708 = vadd.f32 %v3662, %v5217
      %v5709 = vadd.f32 %v3663, %v5333
      %v5710 = vadd.f32 %v3664, %v5449
      %v5711 = vadd.f32 %v3665, %v5565
      %v5712 = vadd.f32 %v3666, %v5681
      %v5713 = vadd.f32 %v3667, %v5103
      %v5714 = vadd.f32 %v3668, %v5219
      %v5715 = vadd.f32 %v3669, %v5335
      %v5716 = vadd.f32 %v3670, %v5451
      %v5717 = vadd.f32 %v3671, %v5567
      %v5718 = vadd.f32 %v3672, %v5683
      %v5719 = vadd.f32 %v3673, %v5106
      %v5720 = vadd.f32 %v3674, %v5222
      %v5721 = vadd.f32 %v3675, %v5338
      %v5722 = vadd.f32 %v3676, %v5454
      %v5723 = vadd.f32 %v3677, %v5570
      %v5724 = vadd.f32 %v3678, %v5686
      %v5725 = vadd.f32 %v3679, %v5108
      %v5726 = vadd.f32 %v3680, %v5224
      %v5727 = vadd.f32 %v3681, %v5340
      %v5728 = vadd.f32 %v3682, %v5456
      %v5729 = vadd.f32 %v3683, %v5572
      %v5730 = vadd.f32 %v3684, %v5688
      %v5731 = vadd.f32 %v3685, %v5111
      %v5732 = vadd.f32 %v3686, %v5227
      %v5733 = vadd.f32 %v3687, %v5343
      %v5734 = vadd.f32 %v3688, %v5459
      %v5735 = vadd.f32 %v3689, %v5575
      %v5736 = vadd.f32 %v3690, %v5691
      %v5737 = vadd.f32 %v3691, %v5113
      %v5738 = vadd.f32 %v3692, %v5229
      %v5739 = vadd.f32 %v3693, %v5345
      %v5740 = vadd.f32 %v3694, %v5461
      %v5741 = vadd.f32 %v3695, %v5577
      %v5742 = vadd.f32 %v3696, %v5693
      %s5743 = scalar_lea.vmem %s3, 3072
      %v5744 = vld [vmem:[%s5743] sm:$0xff]
      %v5745 = vld [vmem:[%s5743 + $0x8] sm:$0xff]
      %v5746 = vld [vmem:[%s5743 + $0x10] sm:$0xff]
      %v5747 = vld [vmem:[%s5743 + $0x18] sm:$0xff]
      %v5748 = vld [vmem:[%s5743 + $0x20] sm:$0xff]
      %v5749 = vld [vmem:[%s5743 + $0x28] sm:$0xff]
      %v5750 = vld [vmem:[%s5743 + $0x30] sm:$0xff]
      %v5751 = vld [vmem:[%s5743 + $0x38] sm:$0xff]
      %v5752 = vld [vmem:[%s5743 + $0x40] sm:$0xff]
      %v5753 = vld [vmem:[%s5743 + $0x48] sm:$0xff]
      %v5754 = vld [vmem:[%s5743 + $0x50] sm:$0xff]
      %v5755 = vld [vmem:[%s5743 + $0x58] sm:$0xff]
      %v5756 = vld [vmem:[%s5743 + $0x60] sm:$0xff]
      %v5757 = vld [vmem:[%s5743 + $0x68] sm:$0xff]
      %v5758 = vld [vmem:[%s5743 + $0x70] sm:$0xff]
      %v5759 = vld [vmem:[%s5743 + $0x78] sm:$0xff]
      %v5760 = vld [vmem:[%s5743 + $0x80] sm:$0xff]
      %v5761 = vld [vmem:[%s5743 + $0x88] sm:$0xff]
      %v5762 = vld [vmem:[%s5743 + $0x90] sm:$0xff]
      %v5763 = vld [vmem:[%s5743 + $0x98] sm:$0xff]
      %v5764 = vld [vmem:[%s5743 + $0xa0] sm:$0xff]
      %v5765 = vld [vmem:[%s5743 + $0xa8] sm:$0xff]
      %v5766 = vld [vmem:[%s5743 + $0xb0] sm:$0xff]
      %v5767 = vld [vmem:[%s5743 + $0xb8] sm:$0xff]
      %v5768 = vld [vmem:[%s5743 + $0xc0] sm:$0xff]
      %v5769 = vld [vmem:[%s5743 + $0xc8] sm:$0xff]
      %v5770 = vld [vmem:[%s5743 + $0xd0] sm:$0xff]
      %v5771 = vld [vmem:[%s5743 + $0xd8] sm:$0xff]
      %v5772 = vld [vmem:[%s5743 + $0xe0] sm:$0xff]
      %v5773 = vld [vmem:[%s5743 + $0xe8] sm:$0xff]
      %v5774 = vld [vmem:[%s5743 + $0xf0] sm:$0xff]
      %v5775 = vld [vmem:[%s5743 + $0xf8] sm:$0xff]
      %v5776 = vld [vmem:[%s5743 + $0x100] sm:$0xff]
      %v5777 = vld [vmem:[%s5743 + $0x108] sm:$0xff]
      %v5778 = vld [vmem:[%s5743 + $0x110] sm:$0xff]
      %v5779 = vld [vmem:[%s5743 + $0x118] sm:$0xff]
      %v5780 = vld [vmem:[%s5743 + $0x120] sm:$0xff]
      %v5781 = vld [vmem:[%s5743 + $0x128] sm:$0xff]
      %v5782 = vld [vmem:[%s5743 + $0x130] sm:$0xff]
      %v5783 = vld [vmem:[%s5743 + $0x138] sm:$0xff]
      %v5784 = vld [vmem:[%s5743 + $0x140] sm:$0xff]
      %v5785 = vld [vmem:[%s5743 + $0x148] sm:$0xff]
      %v5786 = vld [vmem:[%s5743 + $0x150] sm:$0xff]
      %v5787 = vld [vmem:[%s5743 + $0x158] sm:$0xff]
      %v5788 = vld [vmem:[%s5743 + $0x160] sm:$0xff]
      %v5789 = vld [vmem:[%s5743 + $0x168] sm:$0xff]
      %v5790 = vld [vmem:[%s5743 + $0x170] sm:$0xff]
      %v5791 = vld [vmem:[%s5743 + $0x178] sm:$0xff]
      %v5792 = vld [vmem:[%s5743 + $0x180] sm:$0xff]
      %v5793 = vld [vmem:[%s5743 + $0x188] sm:$0xff]
      %v5794 = vld [vmem:[%s5743 + $0x190] sm:$0xff]
      %v5795 = vld [vmem:[%s5743 + $0x198] sm:$0xff]
      %v5796 = vld [vmem:[%s5743 + $0x1a0] sm:$0xff]
      %v5797 = vld [vmem:[%s5743 + $0x1a8] sm:$0xff]
      %v5798 = vld [vmem:[%s5743 + $0x1b0] sm:$0xff]
      %v5799 = vld [vmem:[%s5743 + $0x1b8] sm:$0xff]
      %v5800 = vld [vmem:[%s5743 + $0x1c0] sm:$0xff]
      %v5801 = vld [vmem:[%s5743 + $0x1c8] sm:$0xff]
      %v5802 = vld [vmem:[%s5743 + $0x1d0] sm:$0xff]
      %v5803 = vld [vmem:[%s5743 + $0x1d8] sm:$0xff]
      %v5804 = vld [vmem:[%s5743 + $0x1e0] sm:$0xff]
      %v5805 = vld [vmem:[%s5743 + $0x1e8] sm:$0xff]
      %v5806 = vld [vmem:[%s5743 + $0x1f0] sm:$0xff]
      %v5807 = vld [vmem:[%s5743 + $0x1f8] sm:$0xff]
      %v5808 = vld [vmem:[%s5743 + $0x200] sm:$0xff]
      %v5809 = vld [vmem:[%s5743 + $0x208] sm:$0xff]
      %v5810 = vld [vmem:[%s5743 + $0x210] sm:$0xff]
      %v5811 = vld [vmem:[%s5743 + $0x218] sm:$0xff]
      %v5812 = vld [vmem:[%s5743 + $0x220] sm:$0xff]
      %v5813 = vld [vmem:[%s5743 + $0x228] sm:$0xff]
      %v5814 = vld [vmem:[%s5743 + $0x230] sm:$0xff]
      %v5815 = vld [vmem:[%s5743 + $0x238] sm:$0xff]
      %v5816 = vld [vmem:[%s5743 + $0x240] sm:$0xff]
      %v5817 = vld [vmem:[%s5743 + $0x248] sm:$0xff]
      %v5818 = vld [vmem:[%s5743 + $0x250] sm:$0xff]
      %v5819 = vld [vmem:[%s5743 + $0x258] sm:$0xff]
      %v5820 = vld [vmem:[%s5743 + $0x260] sm:$0xff]
      %v5821 = vld [vmem:[%s5743 + $0x268] sm:$0xff]
      %v5822 = vld [vmem:[%s5743 + $0x270] sm:$0xff]
      %v5823 = vld [vmem:[%s5743 + $0x278] sm:$0xff]
      %v5824 = vld [vmem:[%s5743 + $0x280] sm:$0xff]
      %v5825 = vld [vmem:[%s5743 + $0x288] sm:$0xff]
      %v5826 = vld [vmem:[%s5743 + $0x290] sm:$0xff]
      %v5827 = vld [vmem:[%s5743 + $0x298] sm:$0xff]
      %v5828 = vld [vmem:[%s5743 + $0x2a0] sm:$0xff]
      %v5829 = vld [vmem:[%s5743 + $0x2a8] sm:$0xff]
      %v5830 = vld [vmem:[%s5743 + $0x2b0] sm:$0xff]
      %v5831 = vld [vmem:[%s5743 + $0x2b8] sm:$0xff]
      %v5832 = vld [vmem:[%s5743 + $0x2c0] sm:$0xff]
      %v5833 = vld [vmem:[%s5743 + $0x2c8] sm:$0xff]
      %v5834 = vld [vmem:[%s5743 + $0x2d0] sm:$0xff]
      %v5835 = vld [vmem:[%s5743 + $0x2d8] sm:$0xff]
      %v5836 = vld [vmem:[%s5743 + $0x2e0] sm:$0xff]
      %v5837 = vld [vmem:[%s5743 + $0x2e8] sm:$0xff]
      %v5838 = vld [vmem:[%s5743 + $0x2f0] sm:$0xff]
      %v5839 = vld [vmem:[%s5743 + $0x2f8] sm:$0xff]
      %v5840 = vld [vmem:[%s5743 + $0x300] sm:$0xff]
      %v5841 = vld [vmem:[%s5743 + $0x308] sm:$0xff]
      %v5842 = vld [vmem:[%s5743 + $0x310] sm:$0xff]
      %v5843 = vld [vmem:[%s5743 + $0x318] sm:$0xff]
      %v5844 = vld [vmem:[%s5743 + $0x320] sm:$0xff]
      %v5845 = vld [vmem:[%s5743 + $0x328] sm:$0xff]
      %v5846 = vld [vmem:[%s5743 + $0x330] sm:$0xff]
      %v5847 = vld [vmem:[%s5743 + $0x338] sm:$0xff]
      %v5848 = vld [vmem:[%s5743 + $0x340] sm:$0xff]
      %v5849 = vld [vmem:[%s5743 + $0x348] sm:$0xff]
      %v5850 = vld [vmem:[%s5743 + $0x350] sm:$0xff]
      %v5851 = vld [vmem:[%s5743 + $0x358] sm:$0xff]
      %v5852 = vld [vmem:[%s5743 + $0x360] sm:$0xff]
      %v5853 = vld [vmem:[%s5743 + $0x368] sm:$0xff]
      %v5854 = vld [vmem:[%s5743 + $0x370] sm:$0xff]
      %v5855 = vld [vmem:[%s5743 + $0x378] sm:$0xff]
      %v5856 = vld [vmem:[%s5743 + $0x380] sm:$0xff]
      %v5857 = vld [vmem:[%s5743 + $0x388] sm:$0xff]
      %v5858 = vld [vmem:[%s5743 + $0x390] sm:$0xff]
      %v5859 = vld [vmem:[%s5743 + $0x398] sm:$0xff]
      %v5860 = vld [vmem:[%s5743 + $0x3a0] sm:$0xff]
      %v5861 = vld [vmem:[%s5743 + $0x3a8] sm:$0xff]
      %v5862 = vld [vmem:[%s5743 + $0x3b0] sm:$0xff]
      %v5863 = vld [vmem:[%s5743 + $0x3b8] sm:$0xff]
      %v5864 = vld [vmem:[%s5743 + $0x3c0] sm:$0xff]
      %v5865 = vld [vmem:[%s5743 + $0x3c8] sm:$0xff]
      %v5866 = vld [vmem:[%s5743 + $0x3d0] sm:$0xff]
      %v5867 = vld [vmem:[%s5743 + $0x3d8] sm:$0xff]
      %v5868 = vld [vmem:[%s5743 + $0x3e0] sm:$0xff]
      %v5869 = vld [vmem:[%s5743 + $0x3e8] sm:$0xff]
      %v5870 = vld [vmem:[%s5743 + $0x3f0] sm:$0xff]
      %v5871 = vld [vmem:[%s5743 + $0x3f8] sm:$0xff]
      %v5872 = vld [vmem:[%s5743 + $0x400] sm:$0xff]
      %v5873 = vld [vmem:[%s5743 + $0x408] sm:$0xff]
      %v5874 = vld [vmem:[%s5743 + $0x410] sm:$0xff]
      %v5875 = vld [vmem:[%s5743 + $0x418] sm:$0xff]
      %v5876 = vld [vmem:[%s5743 + $0x420] sm:$0xff]
      %v5877 = vld [vmem:[%s5743 + $0x428] sm:$0xff]
      %v5878 = vld [vmem:[%s5743 + $0x430] sm:$0xff]
      %v5879 = vld [vmem:[%s5743 + $0x438] sm:$0xff]
      %v5880 = vld [vmem:[%s5743 + $0x440] sm:$0xff]
      %v5881 = vld [vmem:[%s5743 + $0x448] sm:$0xff]
      %v5882 = vld [vmem:[%s5743 + $0x450] sm:$0xff]
      %v5883 = vld [vmem:[%s5743 + $0x458] sm:$0xff]
      %v5884 = vld [vmem:[%s5743 + $0x460] sm:$0xff]
      %v5885 = vld [vmem:[%s5743 + $0x468] sm:$0xff]
      %v5886 = vld [vmem:[%s5743 + $0x470] sm:$0xff]
      %v5887 = vld [vmem:[%s5743 + $0x478] sm:$0xff]
      %v5888 = vld [vmem:[%s5743 + $0x480] sm:$0xff]
      %v5889 = vld [vmem:[%s5743 + $0x488] sm:$0xff]
      %v5890 = vld [vmem:[%s5743 + $0x490] sm:$0xff]
      %v5891 = vld [vmem:[%s5743 + $0x498] sm:$0xff]
      %v5892 = vld [vmem:[%s5743 + $0x4a0] sm:$0xff]
      %v5893 = vld [vmem:[%s5743 + $0x4a8] sm:$0xff]
      %v5894 = vld [vmem:[%s5743 + $0x4b0] sm:$0xff]
      %v5895 = vld [vmem:[%s5743 + $0x4b8] sm:$0xff]
      %v5896 = vld [vmem:[%s5743 + $0x4c0] sm:$0xff]
      %v5897 = vld [vmem:[%s5743 + $0x4c8] sm:$0xff]
      %v5898 = vld [vmem:[%s5743 + $0x4d0] sm:$0xff]
      %v5899 = vld [vmem:[%s5743 + $0x4d8] sm:$0xff]
      %v5900 = vld [vmem:[%s5743 + $0x4e0] sm:$0xff]
      %v5901 = vld [vmem:[%s5743 + $0x4e8] sm:$0xff]
      %v5902 = vld [vmem:[%s5743 + $0x4f0] sm:$0xff]
      %v5903 = vld [vmem:[%s5743 + $0x4f8] sm:$0xff]
      %v5904 = vld [vmem:[%s5743 + $0x500] sm:$0xff]
      %v5905 = vld [vmem:[%s5743 + $0x508] sm:$0xff]
      %v5906 = vld [vmem:[%s5743 + $0x510] sm:$0xff]
      %v5907 = vld [vmem:[%s5743 + $0x518] sm:$0xff]
      %v5908 = vld [vmem:[%s5743 + $0x520] sm:$0xff]
      %v5909 = vld [vmem:[%s5743 + $0x528] sm:$0xff]
      %v5910 = vld [vmem:[%s5743 + $0x530] sm:$0xff]
      %v5911 = vld [vmem:[%s5743 + $0x538] sm:$0xff]
      %v5912 = vld [vmem:[%s5743 + $0x540] sm:$0xff]
      %v5913 = vld [vmem:[%s5743 + $0x548] sm:$0xff]
      %v5914 = vld [vmem:[%s5743 + $0x550] sm:$0xff]
      %v5915 = vld [vmem:[%s5743 + $0x558] sm:$0xff]
      %v5916 = vld [vmem:[%s5743 + $0x560] sm:$0xff]
      %v5917 = vld [vmem:[%s5743 + $0x568] sm:$0xff]
      %v5918 = vld [vmem:[%s5743 + $0x570] sm:$0xff]
      %v5919 = vld [vmem:[%s5743 + $0x578] sm:$0xff]
      %v5920 = vld [vmem:[%s5743 + $0x580] sm:$0xff]
      %v5921 = vld [vmem:[%s5743 + $0x588] sm:$0xff]
      %v5922 = vld [vmem:[%s5743 + $0x590] sm:$0xff]
      %v5923 = vld [vmem:[%s5743 + $0x598] sm:$0xff]
      %v5924 = vld [vmem:[%s5743 + $0x5a0] sm:$0xff]
      %v5925 = vld [vmem:[%s5743 + $0x5a8] sm:$0xff]
      %v5926 = vld [vmem:[%s5743 + $0x5b0] sm:$0xff]
      %v5927 = vld [vmem:[%s5743 + $0x5b8] sm:$0xff]
      %v5928 = vld [vmem:[%s5743 + $0x5c0] sm:$0xff]
      %v5929 = vld [vmem:[%s5743 + $0x5c8] sm:$0xff]
      %v5930 = vld [vmem:[%s5743 + $0x5d0] sm:$0xff]
      %v5931 = vld [vmem:[%s5743 + $0x5d8] sm:$0xff]
      %v5932 = vld [vmem:[%s5743 + $0x5e0] sm:$0xff]
      %v5933 = vld [vmem:[%s5743 + $0x5e8] sm:$0xff]
      %v5934 = vld [vmem:[%s5743 + $0x5f0] sm:$0xff]
      %v5935 = vld [vmem:[%s5743 + $0x5f8] sm:$0xff]
      %vm5937 = vcmask 1046528
      %v5938 = vrot.slane %v1749, 1
      %v5939 = vrot.slane %v1753, 1
      %v5940 = vsel %vm5937, %v5938, %v5939
      %v5941 = vrot.slane %v1750, 1
      %v5942 = vrot.slane %v1754, 1
      %v5943 = vsel %vm5937, %v5941, %v5942
      %v5944 = vrot.slane %v1751, 1
      %v5945 = vrot.slane %v1755, 1
      %v5946 = vsel %vm5937, %v5944, %v5945
      %v5947 = vrot.slane %v1752, 1
      %v5948 = vrot.slane %v1756, 1
      %v5949 = vsel %vm5937, %v5947, %v5948
      %v5950 = vrot.slane %v1757, 1
      %v5951 = vsel %vm5937, %v5939, %v5950
      %v5952 = vrot.slane %v1758, 1
      %v5953 = vsel %vm5937, %v5942, %v5952
      %v5954 = vrot.slane %v1759, 1
      %v5955 = vsel %vm5937, %v5945, %v5954
      %v5956 = vrot.slane %v1760, 1
      %v5957 = vsel %vm5937, %v5948, %v5956
      %v5958 = vrot.slane %v1761, 1
      %v5959 = vsel %vm5937, %v5950, %v5958
      %v5960 = vrot.slane %v1762, 1
      %v5961 = vsel %vm5937, %v5952, %v5960
      %v5962 = vrot.slane %v1763, 1
      %v5963 = vsel %vm5937, %v5954, %v5962
      %v5964 = vrot.slane %v1764, 1
      %v5965 = vsel %vm5937, %v5956, %v5964
      %v5966 = vrot.slane 0, 1
      %v5967 = vsel %vm5937, %v5958, %v5966
      %v5968 = vsel %vm5937, %v5960, %v5966
      %v5969 = vsel %vm5937, %v5962, %v5966
      %v5970 = vsel %vm5937, %v5964, %v5966
      %v6179 = vunpack.c.l.b16 %v5744
      %v6180 = vunpack.c.h.b16 %v5744
      %v6181 = vunpack.c.l.b16 %v5745
      %v6182 = vunpack.c.h.b16 %v5745
      %v6183 = vunpack.c.l.b16 %v5746
      %v6184 = vunpack.c.h.b16 %v5746
      %v6185 = vunpack.c.l.b16 %v5747
      %v6186 = vunpack.c.h.b16 %v5747
      %v6187 = vunpack.c.l.b16 %v5748
      %v6188 = vunpack.c.h.b16 %v5748
      %v6189 = vunpack.c.l.b16 %v5749
      %v6190 = vunpack.c.h.b16 %v5749
      %v6191 = vunpack.c.l.b16 %v5750
      %v6192 = vunpack.c.h.b16 %v5750
      %v6193 = vunpack.c.l.b16 %v5751
      %v6194 = vunpack.c.h.b16 %v5751
      %v6195 = vunpack.c.l.b16 %v5752
      %v6196 = vunpack.c.h.b16 %v5752
      %v6197 = vunpack.c.l.b16 %v5753
      %v6198 = vunpack.c.h.b16 %v5753
      %v6199 = vunpack.c.l.b16 %v5754
      %v6200 = vunpack.c.h.b16 %v5754
      %v6201 = vunpack.c.l.b16 %v5755
      %v6202 = vunpack.c.h.b16 %v5755
      %v6203 = vunpack.c.l.b16 %v5756
      %v6204 = vunpack.c.h.b16 %v5756
      %v6205 = vunpack.c.l.b16 %v5757
      %v6206 = vunpack.c.h.b16 %v5757
      %v6207 = vunpack.c.l.b16 %v5758
      %v6208 = vunpack.c.h.b16 %v5758
      %v6209 = vunpack.c.l.b16 %v5759
      %v6210 = vunpack.c.h.b16 %v5759
      %v6211 = vunpack.c.l.b16 %v5760
      %v6212 = vunpack.c.h.b16 %v5760
      %v6213 = vunpack.c.l.b16 %v5761
      %v6214 = vunpack.c.h.b16 %v5761
      %v6215 = vunpack.c.l.b16 %v5762
      %v6216 = vunpack.c.h.b16 %v5762
      %v6217 = vunpack.c.l.b16 %v5763
      %v6218 = vunpack.c.h.b16 %v5763
      %v6219 = vunpack.c.l.b16 %v5764
      %v6220 = vunpack.c.h.b16 %v5764
      %v6221 = vunpack.c.l.b16 %v5765
      %v6222 = vunpack.c.h.b16 %v5765
      %v6223 = vunpack.c.l.b16 %v5766
      %v6224 = vunpack.c.h.b16 %v5766
      %v6225 = vunpack.c.l.b16 %v5767
      %v6226 = vunpack.c.h.b16 %v5767
      %v6227 = vunpack.c.l.b16 %v5768
      %v6228 = vunpack.c.h.b16 %v5768
      %v6229 = vunpack.c.l.b16 %v5769
      %v6230 = vunpack.c.h.b16 %v5769
      %v6231 = vunpack.c.l.b16 %v5770
      %v6232 = vunpack.c.h.b16 %v5770
      %v6233 = vunpack.c.l.b16 %v5771
      %v6234 = vunpack.c.h.b16 %v5771
      %v6235 = vunpack.c.l.b16 %v5772
      %v6236 = vunpack.c.h.b16 %v5772
      %v6237 = vunpack.c.l.b16 %v5773
      %v6238 = vunpack.c.h.b16 %v5773
      %v6239 = vunpack.c.l.b16 %v5774
      %v6240 = vunpack.c.h.b16 %v5774
      %v6241 = vunpack.c.l.b16 %v5775
      %v6242 = vunpack.c.h.b16 %v5775
      %v6243 = vunpack.c.l.b16 %v5776
      %v6244 = vunpack.c.h.b16 %v5776
      %v6245 = vunpack.c.l.b16 %v5777
      %v6246 = vunpack.c.h.b16 %v5777
      %v6247 = vunpack.c.l.b16 %v5778
      %v6248 = vunpack.c.h.b16 %v5778
      %v6249 = vunpack.c.l.b16 %v5779
      %v6250 = vunpack.c.h.b16 %v5779
      %v6251 = vunpack.c.l.b16 %v5780
      %v6252 = vunpack.c.h.b16 %v5780
      %v6253 = vunpack.c.l.b16 %v5781
      %v6254 = vunpack.c.h.b16 %v5781
      %v6255 = vunpack.c.l.b16 %v5782
      %v6256 = vunpack.c.h.b16 %v5782
      %v6257 = vunpack.c.l.b16 %v5783
      %v6258 = vunpack.c.h.b16 %v5783
      %v6259 = vunpack.c.l.b16 %v5784
      %v6260 = vunpack.c.h.b16 %v5784
      %v6261 = vunpack.c.l.b16 %v5785
      %v6262 = vunpack.c.h.b16 %v5785
      %v6263 = vunpack.c.l.b16 %v5786
      %v6264 = vunpack.c.h.b16 %v5786
      %v6265 = vunpack.c.l.b16 %v5787
      %v6266 = vunpack.c.h.b16 %v5787
      %v6267 = vunpack.c.l.b16 %v5788
      %v6268 = vunpack.c.h.b16 %v5788
      %v6269 = vunpack.c.l.b16 %v5789
      %v6270 = vunpack.c.h.b16 %v5789
      %v6271 = vunpack.c.l.b16 %v5790
      %v6272 = vunpack.c.h.b16 %v5790
      %v6273 = vunpack.c.l.b16 %v5791
      %v6274 = vunpack.c.h.b16 %v5791
      %v6275 = vunpack.c.l.b16 %v5792
      %v6276 = vunpack.c.h.b16 %v5792
      %v6277 = vunpack.c.l.b16 %v5793
      %v6278 = vunpack.c.h.b16 %v5793
      %v6279 = vunpack.c.l.b16 %v5794
      %v6280 = vunpack.c.h.b16 %v5794
      %v6281 = vunpack.c.l.b16 %v5795
      %v6282 = vunpack.c.h.b16 %v5795
      %v6283 = vunpack.c.l.b16 %v5796
      %v6284 = vunpack.c.h.b16 %v5796
      %v6285 = vunpack.c.l.b16 %v5797
      %v6286 = vunpack.c.h.b16 %v5797
      %v6287 = vunpack.c.l.b16 %v5798
      %v6288 = vunpack.c.h.b16 %v5798
      %v6289 = vunpack.c.l.b16 %v5799
      %v6290 = vunpack.c.h.b16 %v5799
      %v6291 = vunpack.c.l.b16 %v5800
      %v6292 = vunpack.c.h.b16 %v5800
      %v6293 = vunpack.c.l.b16 %v5801
      %v6294 = vunpack.c.h.b16 %v5801
      %v6295 = vunpack.c.l.b16 %v5802
      %v6296 = vunpack.c.h.b16 %v5802
      %v6297 = vunpack.c.l.b16 %v5803
      %v6298 = vunpack.c.h.b16 %v5803
      %v6299 = vunpack.c.l.b16 %v5804
      %v6300 = vunpack.c.h.b16 %v5804
      %v6301 = vunpack.c.l.b16 %v5805
      %v6302 = vunpack.c.h.b16 %v5805
      %v6303 = vunpack.c.l.b16 %v5806
      %v6304 = vunpack.c.h.b16 %v5806
      %v6305 = vunpack.c.l.b16 %v5807
      %v6306 = vunpack.c.h.b16 %v5807
      %v6307 = vunpack.c.l.b16 %v5808
      %v6308 = vunpack.c.h.b16 %v5808
      %v6309 = vunpack.c.l.b16 %v5809
      %v6310 = vunpack.c.h.b16 %v5809
      %v6311 = vunpack.c.l.b16 %v5810
      %v6312 = vunpack.c.h.b16 %v5810
      %v6313 = vunpack.c.l.b16 %v5811
      %v6314 = vunpack.c.h.b16 %v5811
      %v6315 = vunpack.c.l.b16 %v5812
      %v6316 = vunpack.c.h.b16 %v5812
      %v6317 = vunpack.c.l.b16 %v5813
      %v6318 = vunpack.c.h.b16 %v5813
      %v6319 = vunpack.c.l.b16 %v5814
      %v6320 = vunpack.c.h.b16 %v5814
      %v6321 = vunpack.c.l.b16 %v5815
      %v6322 = vunpack.c.h.b16 %v5815
      %v6323 = vunpack.c.l.b16 %v5816
      %v6324 = vunpack.c.h.b16 %v5816
      %v6325 = vunpack.c.l.b16 %v5817
      %v6326 = vunpack.c.h.b16 %v5817
      %v6327 = vunpack.c.l.b16 %v5818
      %v6328 = vunpack.c.h.b16 %v5818
      %v6329 = vunpack.c.l.b16 %v5819
      %v6330 = vunpack.c.h.b16 %v5819
      %v6331 = vunpack.c.l.b16 %v5820
      %v6332 = vunpack.c.h.b16 %v5820
      %v6333 = vunpack.c.l.b16 %v5821
      %v6334 = vunpack.c.h.b16 %v5821
      %v6335 = vunpack.c.l.b16 %v5822
      %v6336 = vunpack.c.h.b16 %v5822
      %v6337 = vunpack.c.l.b16 %v5823
      %v6338 = vunpack.c.h.b16 %v5823
      %v6339 = vunpack.c.l.b16 %v5824
      %v6340 = vunpack.c.h.b16 %v5824
      %v6341 = vunpack.c.l.b16 %v5825
      %v6342 = vunpack.c.h.b16 %v5825
      %v6343 = vunpack.c.l.b16 %v5826
      %v6344 = vunpack.c.h.b16 %v5826
      %v6345 = vunpack.c.l.b16 %v5827
      %v6346 = vunpack.c.h.b16 %v5827
      %v6347 = vunpack.c.l.b16 %v5828
      %v6348 = vunpack.c.h.b16 %v5828
      %v6349 = vunpack.c.l.b16 %v5829
      %v6350 = vunpack.c.h.b16 %v5829
      %v6351 = vunpack.c.l.b16 %v5830
      %v6352 = vunpack.c.h.b16 %v5830
      %v6353 = vunpack.c.l.b16 %v5831
      %v6354 = vunpack.c.h.b16 %v5831
      %v6355 = vunpack.c.l.b16 %v5832
      %v6356 = vunpack.c.h.b16 %v5832
      %v6357 = vunpack.c.l.b16 %v5833
      %v6358 = vunpack.c.h.b16 %v5833
      %v6359 = vunpack.c.l.b16 %v5834
      %v6360 = vunpack.c.h.b16 %v5834
      %v6361 = vunpack.c.l.b16 %v5835
      %v6362 = vunpack.c.h.b16 %v5835
      %v6363 = vunpack.c.l.b16 %v5836
      %v6364 = vunpack.c.h.b16 %v5836
      %v6365 = vunpack.c.l.b16 %v5837
      %v6366 = vunpack.c.h.b16 %v5837
      %v6367 = vunpack.c.l.b16 %v5838
      %v6368 = vunpack.c.h.b16 %v5838
      %v6369 = vunpack.c.l.b16 %v5839
      %v6370 = vunpack.c.h.b16 %v5839
      %v6371 = vunpack.c.l.b16 %v5840
      %v6372 = vunpack.c.h.b16 %v5840
      %v6373 = vunpack.c.l.b16 %v5841
      %v6374 = vunpack.c.h.b16 %v5841
      %v6375 = vunpack.c.l.b16 %v5842
      %v6376 = vunpack.c.h.b16 %v5842
      %v6377 = vunpack.c.l.b16 %v5843
      %v6378 = vunpack.c.h.b16 %v5843
      %v6379 = vunpack.c.l.b16 %v5844
      %v6380 = vunpack.c.h.b16 %v5844
      %v6381 = vunpack.c.l.b16 %v5845
      %v6382 = vunpack.c.h.b16 %v5845
      %v6383 = vunpack.c.l.b16 %v5846
      %v6384 = vunpack.c.h.b16 %v5846
      %v6385 = vunpack.c.l.b16 %v5847
      %v6386 = vunpack.c.h.b16 %v5847
      %v6387 = vunpack.c.l.b16 %v5848
      %v6388 = vunpack.c.h.b16 %v5848
      %v6389 = vunpack.c.l.b16 %v5849
      %v6390 = vunpack.c.h.b16 %v5849
      %v6391 = vunpack.c.l.b16 %v5850
      %v6392 = vunpack.c.h.b16 %v5850
      %v6393 = vunpack.c.l.b16 %v5851
      %v6394 = vunpack.c.h.b16 %v5851
      %v6395 = vunpack.c.l.b16 %v5852
      %v6396 = vunpack.c.h.b16 %v5852
      %v6397 = vunpack.c.l.b16 %v5853
      %v6398 = vunpack.c.h.b16 %v5853
      %v6399 = vunpack.c.l.b16 %v5854
      %v6400 = vunpack.c.h.b16 %v5854
      %v6401 = vunpack.c.l.b16 %v5855
      %v6402 = vunpack.c.h.b16 %v5855
      %v6403 = vunpack.c.l.b16 %v5856
      %v6404 = vunpack.c.h.b16 %v5856
      %v6405 = vunpack.c.l.b16 %v5857
      %v6406 = vunpack.c.h.b16 %v5857
      %v6407 = vunpack.c.l.b16 %v5858
      %v6408 = vunpack.c.h.b16 %v5858
      %v6409 = vunpack.c.l.b16 %v5859
      %v6410 = vunpack.c.h.b16 %v5859
      %v6411 = vunpack.c.l.b16 %v5860
      %v6412 = vunpack.c.h.b16 %v5860
      %v6413 = vunpack.c.l.b16 %v5861
      %v6414 = vunpack.c.h.b16 %v5861
      %v6415 = vunpack.c.l.b16 %v5862
      %v6416 = vunpack.c.h.b16 %v5862
      %v6417 = vunpack.c.l.b16 %v5863
      %v6418 = vunpack.c.h.b16 %v5863
      %v6419 = vunpack.c.l.b16 %v5864
      %v6420 = vunpack.c.h.b16 %v5864
      %v6421 = vunpack.c.l.b16 %v5865
      %v6422 = vunpack.c.h.b16 %v5865
      %v6423 = vunpack.c.l.b16 %v5866
      %v6424 = vunpack.c.h.b16 %v5866
      %v6425 = vunpack.c.l.b16 %v5867
      %v6426 = vunpack.c.h.b16 %v5867
      %v6427 = vunpack.c.l.b16 %v5868
      %v6428 = vunpack.c.h.b16 %v5868
      %v6429 = vunpack.c.l.b16 %v5869
      %v6430 = vunpack.c.h.b16 %v5869
      %v6431 = vunpack.c.l.b16 %v5870
      %v6432 = vunpack.c.h.b16 %v5870
      %v6433 = vunpack.c.l.b16 %v5871
      %v6434 = vunpack.c.h.b16 %v5871
      %v6435 = vunpack.c.l.b16 %v5872
      %v6436 = vunpack.c.h.b16 %v5872
      %v6437 = vunpack.c.l.b16 %v5873
      %v6438 = vunpack.c.h.b16 %v5873
      %v6439 = vunpack.c.l.b16 %v5874
      %v6440 = vunpack.c.h.b16 %v5874
      %v6441 = vunpack.c.l.b16 %v5875
      %v6442 = vunpack.c.h.b16 %v5875
      %v6443 = vunpack.c.l.b16 %v5876
      %v6444 = vunpack.c.h.b16 %v5876
      %v6445 = vunpack.c.l.b16 %v5877
      %v6446 = vunpack.c.h.b16 %v5877
      %v6447 = vunpack.c.l.b16 %v5878
      %v6448 = vunpack.c.h.b16 %v5878
      %v6449 = vunpack.c.l.b16 %v5879
      %v6450 = vunpack.c.h.b16 %v5879
      %v6451 = vunpack.c.l.b16 %v5880
      %v6452 = vunpack.c.h.b16 %v5880
      %v6453 = vunpack.c.l.b16 %v5881
      %v6454 = vunpack.c.h.b16 %v5881
      %v6455 = vunpack.c.l.b16 %v5882
      %v6456 = vunpack.c.h.b16 %v5882
      %v6457 = vunpack.c.l.b16 %v5883
      %v6458 = vunpack.c.h.b16 %v5883
      %v6459 = vunpack.c.l.b16 %v5884
      %v6460 = vunpack.c.h.b16 %v5884
      %v6461 = vunpack.c.l.b16 %v5885
      %v6462 = vunpack.c.h.b16 %v5885
      %v6463 = vunpack.c.l.b16 %v5886
      %v6464 = vunpack.c.h.b16 %v5886
      %v6465 = vunpack.c.l.b16 %v5887
      %v6466 = vunpack.c.h.b16 %v5887
      %v6467 = vunpack.c.l.b16 %v5888
      %v6468 = vunpack.c.h.b16 %v5888
      %v6469 = vunpack.c.l.b16 %v5889
      %v6470 = vunpack.c.h.b16 %v5889
      %v6471 = vunpack.c.l.b16 %v5890
      %v6472 = vunpack.c.h.b16 %v5890
      %v6473 = vunpack.c.l.b16 %v5891
      %v6474 = vunpack.c.h.b16 %v5891
      %v6475 = vunpack.c.l.b16 %v5892
      %v6476 = vunpack.c.h.b16 %v5892
      %v6477 = vunpack.c.l.b16 %v5893
      %v6478 = vunpack.c.h.b16 %v5893
      %v6479 = vunpack.c.l.b16 %v5894
      %v6480 = vunpack.c.h.b16 %v5894
      %v6481 = vunpack.c.l.b16 %v5895
      %v6482 = vunpack.c.h.b16 %v5895
      %v6483 = vunpack.c.l.b16 %v5896
      %v6484 = vunpack.c.h.b16 %v5896
      %v6485 = vunpack.c.l.b16 %v5897
      %v6486 = vunpack.c.h.b16 %v5897
      %v6487 = vunpack.c.l.b16 %v5898
      %v6488 = vunpack.c.h.b16 %v5898
      %v6489 = vunpack.c.l.b16 %v5899
      %v6490 = vunpack.c.h.b16 %v5899
      %v6491 = vunpack.c.l.b16 %v5900
      %v6492 = vunpack.c.h.b16 %v5900
      %v6493 = vunpack.c.l.b16 %v5901
      %v6494 = vunpack.c.h.b16 %v5901
      %v6495 = vunpack.c.l.b16 %v5902
      %v6496 = vunpack.c.h.b16 %v5902
      %v6497 = vunpack.c.l.b16 %v5903
      %v6498 = vunpack.c.h.b16 %v5903
      %v6499 = vunpack.c.l.b16 %v5904
      %v6500 = vunpack.c.h.b16 %v5904
      %v6501 = vunpack.c.l.b16 %v5905
      %v6502 = vunpack.c.h.b16 %v5905
      %v6503 = vunpack.c.l.b16 %v5906
      %v6504 = vunpack.c.h.b16 %v5906
      %v6505 = vunpack.c.l.b16 %v5907
      %v6506 = vunpack.c.h.b16 %v5907
      %v6507 = vunpack.c.l.b16 %v5908
      %v6508 = vunpack.c.h.b16 %v5908
      %v6509 = vunpack.c.l.b16 %v5909
      %v6510 = vunpack.c.h.b16 %v5909
      %v6511 = vunpack.c.l.b16 %v5910
      %v6512 = vunpack.c.h.b16 %v5910
      %v6513 = vunpack.c.l.b16 %v5911
      %v6514 = vunpack.c.h.b16 %v5911
      %v6515 = vunpack.c.l.b16 %v5912
      %v6516 = vunpack.c.h.b16 %v5912
      %v6517 = vunpack.c.l.b16 %v5913
      %v6518 = vunpack.c.h.b16 %v5913
      %v6519 = vunpack.c.l.b16 %v5914
      %v6520 = vunpack.c.h.b16 %v5914
      %v6521 = vunpack.c.l.b16 %v5915
      %v6522 = vunpack.c.h.b16 %v5915
      %v6523 = vunpack.c.l.b16 %v5916
      %v6524 = vunpack.c.h.b16 %v5916
      %v6525 = vunpack.c.l.b16 %v5917
      %v6526 = vunpack.c.h.b16 %v5917
      %v6527 = vunpack.c.l.b16 %v5918
      %v6528 = vunpack.c.h.b16 %v5918
      %v6529 = vunpack.c.l.b16 %v5919
      %v6530 = vunpack.c.h.b16 %v5919
      %v6531 = vunpack.c.l.b16 %v5920
      %v6532 = vunpack.c.h.b16 %v5920
      %v6533 = vunpack.c.l.b16 %v5921
      %v6534 = vunpack.c.h.b16 %v5921
      %v6535 = vunpack.c.l.b16 %v5922
      %v6536 = vunpack.c.h.b16 %v5922
      %v6537 = vunpack.c.l.b16 %v5923
      %v6538 = vunpack.c.h.b16 %v5923
      %v6539 = vunpack.c.l.b16 %v5924
      %v6540 = vunpack.c.h.b16 %v5924
      %v6541 = vunpack.c.l.b16 %v5925
      %v6542 = vunpack.c.h.b16 %v5925
      %v6543 = vunpack.c.l.b16 %v5926
      %v6544 = vunpack.c.h.b16 %v5926
      %v6545 = vunpack.c.l.b16 %v5927
      %v6546 = vunpack.c.h.b16 %v5927
      %v6547 = vunpack.c.l.b16 %v5928
      %v6548 = vunpack.c.h.b16 %v5928
      %v6549 = vunpack.c.l.b16 %v5929
      %v6550 = vunpack.c.h.b16 %v5929
      %v6551 = vunpack.c.l.b16 %v5930
      %v6552 = vunpack.c.h.b16 %v5930
      %v6553 = vunpack.c.l.b16 %v5931
      %v6554 = vunpack.c.h.b16 %v5931
      %v6555 = vunpack.c.l.b16 %v5932
      %v6556 = vunpack.c.h.b16 %v5932
      %v6557 = vunpack.c.l.b16 %v5933
      %v6558 = vunpack.c.h.b16 %v5933
      %v6559 = vunpack.c.l.b16 %v5934
      %v6560 = vunpack.c.h.b16 %v5934
      %v6561 = vunpack.c.l.b16 %v5935
      %v6562 = vunpack.c.h.b16 %v5935
      %v6563 = vpack.c.b16 %v6185, %v6179
      %v6564 = vpack.c.b16 %v6186, %v6180
      %v6565 = vpack.c.b16 %v6187, %v6181
      %v6566 = vpack.c.b16 %v6188, %v6182
      %v6567 = vpack.c.b16 %v6189, %v6183
      %v6568 = vpack.c.b16 %v6190, %v6184
      %v6569 = vpack.c.b16 %v6197, %v6191
      %v6570 = vpack.c.b16 %v6198, %v6192
      %v6571 = vpack.c.b16 %v6199, %v6193
      %v6572 = vpack.c.b16 %v6200, %v6194
      %v6573 = vpack.c.b16 %v6201, %v6195
      %v6574 = vpack.c.b16 %v6202, %v6196
      %v6575 = vpack.c.b16 %v6209, %v6203
      %v6576 = vpack.c.b16 %v6210, %v6204
      %v6577 = vpack.c.b16 %v6211, %v6205
      %v6578 = vpack.c.b16 %v6212, %v6206
      %v6579 = vpack.c.b16 %v6213, %v6207
      %v6580 = vpack.c.b16 %v6214, %v6208
      %v6581 = vpack.c.b16 %v6221, %v6215
      %v6582 = vpack.c.b16 %v6222, %v6216
      %v6583 = vpack.c.b16 %v6223, %v6217
      %v6584 = vpack.c.b16 %v6224, %v6218
      %v6585 = vpack.c.b16 %v6225, %v6219
      %v6586 = vpack.c.b16 %v6226, %v6220
      %v6587 = vpack.c.b16 %v6233, %v6227
      %v6588 = vpack.c.b16 %v6234, %v6228
      %v6589 = vpack.c.b16 %v6235, %v6229
      %v6590 = vpack.c.b16 %v6236, %v6230
      %v6591 = vpack.c.b16 %v6237, %v6231
      %v6592 = vpack.c.b16 %v6238, %v6232
      %v6593 = vpack.c.b16 %v6245, %v6239
      %v6594 = vpack.c.b16 %v6246, %v6240
      %v6595 = vpack.c.b16 %v6247, %v6241
      %v6596 = vpack.c.b16 %v6248, %v6242
      %v6597 = vpack.c.b16 %v6249, %v6243
      %v6598 = vpack.c.b16 %v6250, %v6244
      %v6599 = vpack.c.b16 %v6257, %v6251
      %v6600 = vpack.c.b16 %v6258, %v6252
      %v6601 = vpack.c.b16 %v6259, %v6253
      %v6602 = vpack.c.b16 %v6260, %v6254
      %v6603 = vpack.c.b16 %v6261, %v6255
      %v6604 = vpack.c.b16 %v6262, %v6256
      %v6605 = vpack.c.b16 %v6269, %v6263
      %v6606 = vpack.c.b16 %v6270, %v6264
      %v6607 = vpack.c.b16 %v6271, %v6265
      %v6608 = vpack.c.b16 %v6272, %v6266
      %v6609 = vpack.c.b16 %v6273, %v6267
      %v6610 = vpack.c.b16 %v6274, %v6268
      %v6611 = vpack.c.b16 %v6281, %v6275
      %v6612 = vpack.c.b16 %v6282, %v6276
      %v6613 = vpack.c.b16 %v6283, %v6277
      %v6614 = vpack.c.b16 %v6284, %v6278
      %v6615 = vpack.c.b16 %v6285, %v6279
      %v6616 = vpack.c.b16 %v6286, %v6280
      %v6617 = vpack.c.b16 %v6293, %v6287
      %v6618 = vpack.c.b16 %v6294, %v6288
      %v6619 = vpack.c.b16 %v6295, %v6289
      %v6620 = vpack.c.b16 %v6296, %v6290
      %v6621 = vpack.c.b16 %v6297, %v6291
      %v6622 = vpack.c.b16 %v6298, %v6292
      %v6623 = vpack.c.b16 %v6305, %v6299
      %v6624 = vpack.c.b16 %v6306, %v6300
      %v6625 = vpack.c.b16 %v6307, %v6301
      %v6626 = vpack.c.b16 %v6308, %v6302
      %v6627 = vpack.c.b16 %v6309, %v6303
      %v6628 = vpack.c.b16 %v6310, %v6304
      %v6629 = vpack.c.b16 %v6317, %v6311
      %v6630 = vpack.c.b16 %v6318, %v6312
      %v6631 = vpack.c.b16 %v6319, %v6313
      %v6632 = vpack.c.b16 %v6320, %v6314
      %v6633 = vpack.c.b16 %v6321, %v6315
      %v6634 = vpack.c.b16 %v6322, %v6316
      %v6635 = vpack.c.b16 %v6329, %v6323
      %v6636 = vpack.c.b16 %v6330, %v6324
      %v6637 = vpack.c.b16 %v6331, %v6325
      %v6638 = vpack.c.b16 %v6332, %v6326
      %v6639 = vpack.c.b16 %v6333, %v6327
      %v6640 = vpack.c.b16 %v6334, %v6328
      %v6641 = vpack.c.b16 %v6341, %v6335
      %v6642 = vpack.c.b16 %v6342, %v6336
      %v6643 = vpack.c.b16 %v6343, %v6337
      %v6644 = vpack.c.b16 %v6344, %v6338
      %v6645 = vpack.c.b16 %v6345, %v6339
      %v6646 = vpack.c.b16 %v6346, %v6340
      %v6647 = vpack.c.b16 %v6353, %v6347
      %v6648 = vpack.c.b16 %v6354, %v6348
      %v6649 = vpack.c.b16 %v6355, %v6349
      %v6650 = vpack.c.b16 %v6356, %v6350
      %v6651 = vpack.c.b16 %v6357, %v6351
      %v6652 = vpack.c.b16 %v6358, %v6352
      %v6653 = vpack.c.b16 %v6365, %v6359
      %v6654 = vpack.c.b16 %v6366, %v6360
      %v6655 = vpack.c.b16 %v6367, %v6361
      %v6656 = vpack.c.b16 %v6368, %v6362
      %v6657 = vpack.c.b16 %v6369, %v6363
      %v6658 = vpack.c.b16 %v6370, %v6364
      %v6659 = vpack.c.b16 %v6377, %v6371
      %v6660 = vpack.c.b16 %v6378, %v6372
      %v6661 = vpack.c.b16 %v6379, %v6373
      %v6662 = vpack.c.b16 %v6380, %v6374
      %v6663 = vpack.c.b16 %v6381, %v6375
      %v6664 = vpack.c.b16 %v6382, %v6376
      %v6665 = vpack.c.b16 %v6389, %v6383
      %v6666 = vpack.c.b16 %v6390, %v6384
      %v6667 = vpack.c.b16 %v6391, %v6385
      %v6668 = vpack.c.b16 %v6392, %v6386
      %v6669 = vpack.c.b16 %v6393, %v6387
      %v6670 = vpack.c.b16 %v6394, %v6388
      %v6671 = vpack.c.b16 %v6401, %v6395
      %v6672 = vpack.c.b16 %v6402, %v6396
      %v6673 = vpack.c.b16 %v6403, %v6397
      %v6674 = vpack.c.b16 %v6404, %v6398
      %v6675 = vpack.c.b16 %v6405, %v6399
      %v6676 = vpack.c.b16 %v6406, %v6400
      %v6677 = vpack.c.b16 %v6413, %v6407
      %v6678 = vpack.c.b16 %v6414, %v6408
      %v6679 = vpack.c.b16 %v6415, %v6409
      %v6680 = vpack.c.b16 %v6416, %v6410
      %v6681 = vpack.c.b16 %v6417, %v6411
      %v6682 = vpack.c.b16 %v6418, %v6412
      %v6683 = vpack.c.b16 %v6425, %v6419
      %v6684 = vpack.c.b16 %v6426, %v6420
      %v6685 = vpack.c.b16 %v6427, %v6421
      %v6686 = vpack.c.b16 %v6428, %v6422
      %v6687 = vpack.c.b16 %v6429, %v6423
      %v6688 = vpack.c.b16 %v6430, %v6424
      %v6689 = vpack.c.b16 %v6437, %v6431
      %v6690 = vpack.c.b16 %v6438, %v6432
      %v6691 = vpack.c.b16 %v6439, %v6433
      %v6692 = vpack.c.b16 %v6440, %v6434
      %v6693 = vpack.c.b16 %v6441, %v6435
      %v6694 = vpack.c.b16 %v6442, %v6436
      %v6695 = vpack.c.b16 %v6449, %v6443
      %v6696 = vpack.c.b16 %v6450, %v6444
      %v6697 = vpack.c.b16 %v6451, %v6445
      %v6698 = vpack.c.b16 %v6452, %v6446
      %v6699 = vpack.c.b16 %v6453, %v6447
      %v6700 = vpack.c.b16 %v6454, %v6448
      %v6701 = vpack.c.b16 %v6461, %v6455
      %v6702 = vpack.c.b16 %v6462, %v6456
      %v6703 = vpack.c.b16 %v6463, %v6457
      %v6704 = vpack.c.b16 %v6464, %v6458
      %v6705 = vpack.c.b16 %v6465, %v6459
      %v6706 = vpack.c.b16 %v6466, %v6460
      %v6707 = vpack.c.b16 %v6473, %v6467
      %v6708 = vpack.c.b16 %v6474, %v6468
      %v6709 = vpack.c.b16 %v6475, %v6469
      %v6710 = vpack.c.b16 %v6476, %v6470
      %v6711 = vpack.c.b16 %v6477, %v6471
      %v6712 = vpack.c.b16 %v6478, %v6472
      %v6713 = vpack.c.b16 %v6485, %v6479
      %v6714 = vpack.c.b16 %v6486, %v6480
      %v6715 = vpack.c.b16 %v6487, %v6481
      %v6716 = vpack.c.b16 %v6488, %v6482
      %v6717 = vpack.c.b16 %v6489, %v6483
      %v6718 = vpack.c.b16 %v6490, %v6484
      %v6719 = vpack.c.b16 %v6497, %v6491
      %v6720 = vpack.c.b16 %v6498, %v6492
      %v6721 = vpack.c.b16 %v6499, %v6493
      %v6722 = vpack.c.b16 %v6500, %v6494
      %v6723 = vpack.c.b16 %v6501, %v6495
      %v6724 = vpack.c.b16 %v6502, %v6496
      %v6725 = vpack.c.b16 %v6509, %v6503
      %v6726 = vpack.c.b16 %v6510, %v6504
      %v6727 = vpack.c.b16 %v6511, %v6505
      %v6728 = vpack.c.b16 %v6512, %v6506
      %v6729 = vpack.c.b16 %v6513, %v6507
      %v6730 = vpack.c.b16 %v6514, %v6508
      %v6731 = vpack.c.b16 %v6521, %v6515
      %v6732 = vpack.c.b16 %v6522, %v6516
      %v6733 = vpack.c.b16 %v6523, %v6517
      %v6734 = vpack.c.b16 %v6524, %v6518
      %v6735 = vpack.c.b16 %v6525, %v6519
      %v6736 = vpack.c.b16 %v6526, %v6520
      %v6737 = vpack.c.b16 %v6533, %v6527
      %v6738 = vpack.c.b16 %v6534, %v6528
      %v6739 = vpack.c.b16 %v6535, %v6529
      %v6740 = vpack.c.b16 %v6536, %v6530
      %v6741 = vpack.c.b16 %v6537, %v6531
      %v6742 = vpack.c.b16 %v6538, %v6532
      %v6743 = vpack.c.b16 %v6545, %v6539
      %v6744 = vpack.c.b16 %v6546, %v6540
      %v6745 = vpack.c.b16 %v6547, %v6541
      %v6746 = vpack.c.b16 %v6548, %v6542
      %v6747 = vpack.c.b16 %v6549, %v6543
      %v6748 = vpack.c.b16 %v6550, %v6544
      %v6749 = vpack.c.b16 %v6557, %v6551
      %v6750 = vpack.c.b16 %v6558, %v6552
      %v6751 = vpack.c.b16 %v6559, %v6553
      %v6752 = vpack.c.b16 %v6560, %v6554
      %v6753 = vpack.c.b16 %v6561, %v6555
      %v6754 = vpack.c.b16 %v6562, %v6556
      %6947 = vmatpush.bf16.msra.mxu0 %v6605
      %6948 = vmatpush.bf16.msra.mxu0 %v6599
      %6949 = vmatpush.bf16.msra.mxu0 %v6593
      %6950 = vmatpush.bf16.msra.mxu0 %v6587
      %6951 = vmatpush.bf16.msra.mxu0 %v6581
      %6952 = vmatpush.bf16.msra.mxu0 %v6575
      %6953 = vmatpush.bf16.msra.mxu0 %v6569
      %6954 = vmatpush.bf16.msra.mxu0 %v6563
      %6955 = vmatmul.bf16.gmra.mxu0 %v5940
      %v6956 = vpop.f32.mrf.mxu0
      %v6957 = vadd.f32 0.0, %v6956
      %v6958 = vpop.f32.mrf.mxu0
      %v6959 = vadd.f32 0.0, %v6958
      %6960 = vmatmul.bf16.gmra.mxu0 %v5951
      %v6961 = vpop.f32.mrf.mxu0
      %v6962 = vadd.f32 0.0, %v6961
      %v6963 = vpop.f32.mrf.mxu0
      %v6964 = vadd.f32 0.0, %v6963
      %6965 = vmatmul.bf16.gmra.mxu0 %v5959
      %v6966 = vpop.f32.mrf.mxu0
      %v6967 = vadd.f32 0.0, %v6966
      %v6968 = vpop.f32.mrf.mxu0
      %v6969 = vadd.f32 0.0, %v6968
      %6970 = vmatmul.bf16.gmra.mxu0 %v5967
      %v6971 = vpop.f32.mrf.mxu0
      %v6972 = vadd.f32 0.0, %v6971
      %v6973 = vpop.f32.mrf.mxu0
      %v6974 = vadd.f32 0.0, %v6973
      %6975 = vdwg.mxu0
      %6976 = vmatpush.bf16.msra.mxu0 %v6653
      %6977 = vmatpush.bf16.msra.mxu0 %v6647
      %6978 = vmatpush.bf16.msra.mxu0 %v6641
      %6979 = vmatpush.bf16.msra.mxu0 %v6635
      %6980 = vmatpush.bf16.msra.mxu0 %v6629
      %6981 = vmatpush.bf16.msra.mxu0 %v6623
      %6982 = vmatpush.bf16.msra.mxu0 %v6617
      %6983 = vmatpush.bf16.msra.mxu0 %v6611
      %6984 = vmatmul.bf16.gmra.mxu0 %v5943
      %v6985 = vpop.f32.mrf.mxu0
      %v6986 = vadd.f32 %v6957, %v6985
      %v6987 = vpop.f32.mrf.mxu0
      %v6988 = vadd.f32 %v6959, %v6987
      %6989 = vmatmul.bf16.gmra.mxu0 %v5953
      %v6990 = vpop.f32.mrf.mxu0
      %v6991 = vadd.f32 %v6962, %v6990
      %v6992 = vpop.f32.mrf.mxu0
      %v6993 = vadd.f32 %v6964, %v6992
      %6994 = vmatmul.bf16.gmra.mxu0 %v5961
      %v6995 = vpop.f32.mrf.mxu0
      %v6996 = vadd.f32 %v6967, %v6995
      %v6997 = vpop.f32.mrf.mxu0
      %v6998 = vadd.f32 %v6969, %v6997
      %6999 = vmatmul.bf16.gmra.mxu0 %v5968
      %v7000 = vpop.f32.mrf.mxu0
      %v7001 = vadd.f32 %v6972, %v7000
      %v7002 = vpop.f32.mrf.mxu0
      %v7003 = vadd.f32 %v6974, %v7002
      %7004 = vdwg.mxu0
      %7005 = vmatpush.bf16.msra.mxu0 %v6701
      %7006 = vmatpush.bf16.msra.mxu0 %v6695
      %7007 = vmatpush.bf16.msra.mxu0 %v6689
      %7008 = vmatpush.bf16.msra.mxu0 %v6683
      %7009 = vmatpush.bf16.msra.mxu0 %v6677
      %7010 = vmatpush.bf16.msra.mxu0 %v6671
      %7011 = vmatpush.bf16.msra.mxu0 %v6665
      %7012 = vmatpush.bf16.msra.mxu0 %v6659
      %7013 = vmatmul.bf16.gmra.mxu0 %v5946
      %v7014 = vpop.f32.mrf.mxu0
      %v7015 = vadd.f32 %v6986, %v7014
      %v7016 = vpop.f32.mrf.mxu0
      %v7017 = vadd.f32 %v6988, %v7016
      %7018 = vmatmul.bf16.gmra.mxu0 %v5955
      %v7019 = vpop.f32.mrf.mxu0
      %v7020 = vadd.f32 %v6991, %v7019
      %v7021 = vpop.f32.mrf.mxu0
      %v7022 = vadd.f32 %v6993, %v7021
      %7023 = vmatmul.bf16.gmra.mxu0 %v5963
      %v7024 = vpop.f32.mrf.mxu0
      %v7025 = vadd.f32 %v6996, %v7024
      %v7026 = vpop.f32.mrf.mxu0
      %v7027 = vadd.f32 %v6998, %v7026
      %7028 = vmatmul.bf16.gmra.mxu0 %v5969
      %v7029 = vpop.f32.mrf.mxu0
      %v7030 = vadd.f32 %v7001, %v7029
      %v7031 = vpop.f32.mrf.mxu0
      %v7032 = vadd.f32 %v7003, %v7031
      %7033 = vdwg.mxu0
      %7034 = vmatpush.bf16.msra.mxu0 %v6749
      %7035 = vmatpush.bf16.msra.mxu0 %v6743
      %7036 = vmatpush.bf16.msra.mxu0 %v6737
      %7037 = vmatpush.bf16.msra.mxu0 %v6731
      %7038 = vmatpush.bf16.msra.mxu0 %v6725
      %7039 = vmatpush.bf16.msra.mxu0 %v6719
      %7040 = vmatpush.bf16.msra.mxu0 %v6713
      %7041 = vmatpush.bf16.msra.mxu0 %v6707
      %7042 = vmatmul.bf16.gmra.mxu0 %v5949
      %v7043 = vpop.f32.mrf.mxu0
      %v7044 = vadd.f32 %v7015, %v7043
      %v7045 = vpop.f32.mrf.mxu0
      %v7046 = vadd.f32 %v7017, %v7045
      %7047 = vmatmul.bf16.gmra.mxu0 %v5957
      %v7048 = vpop.f32.mrf.mxu0
      %v7049 = vadd.f32 %v7020, %v7048
      %v7050 = vpop.f32.mrf.mxu0
      %v7051 = vadd.f32 %v7022, %v7050
      %7052 = vmatmul.bf16.gmra.mxu0 %v5965
      %v7053 = vpop.f32.mrf.mxu0
      %v7054 = vadd.f32 %v7025, %v7053
      %v7055 = vpop.f32.mrf.mxu0
      %v7056 = vadd.f32 %v7027, %v7055
      %7057 = vmatmul.bf16.gmra.mxu0 %v5970
      %v7058 = vpop.f32.mrf.mxu0
      %v7059 = vadd.f32 %v7030, %v7058
      %v7060 = vpop.f32.mrf.mxu0
      %v7061 = vadd.f32 %v7032, %v7060
      %7062 = vdwg.mxu0
      %7063 = vmatpush.bf16.msra.mxu0 %v6606
      %7064 = vmatpush.bf16.msra.mxu0 %v6600
      %7065 = vmatpush.bf16.msra.mxu0 %v6594
      %7066 = vmatpush.bf16.msra.mxu0 %v6588
      %7067 = vmatpush.bf16.msra.mxu0 %v6582
      %7068 = vmatpush.bf16.msra.mxu0 %v6576
      %7069 = vmatpush.bf16.msra.mxu0 %v6570
      %7070 = vmatpush.bf16.msra.mxu0 %v6564
      %7071 = vmatmul.bf16.gmra.mxu0 %v5940
      %v7072 = vpop.f32.mrf.mxu0
      %v7073 = vadd.f32 0.0, %v7072
      %v7074 = vpop.f32.mrf.mxu0
      %v7075 = vadd.f32 0.0, %v7074
      %7076 = vmatmul.bf16.gmra.mxu0 %v5951
      %v7077 = vpop.f32.mrf.mxu0
      %v7078 = vadd.f32 0.0, %v7077
      %v7079 = vpop.f32.mrf.mxu0
      %v7080 = vadd.f32 0.0, %v7079
      %7081 = vmatmul.bf16.gmra.mxu0 %v5959
      %v7082 = vpop.f32.mrf.mxu0
      %v7083 = vadd.f32 0.0, %v7082
      %v7084 = vpop.f32.mrf.mxu0
      %v7085 = vadd.f32 0.0, %v7084
      %7086 = vmatmul.bf16.gmra.mxu0 %v5967
      %v7087 = vpop.f32.mrf.mxu0
      %v7088 = vadd.f32 0.0, %v7087
      %v7089 = vpop.f32.mrf.mxu0
      %v7090 = vadd.f32 0.0, %v7089
      %7091 = vdwg.mxu0
      %7092 = vmatpush.bf16.msra.mxu0 %v6654
      %7093 = vmatpush.bf16.msra.mxu0 %v6648
      %7094 = vmatpush.bf16.msra.mxu0 %v6642
      %7095 = vmatpush.bf16.msra.mxu0 %v6636
      %7096 = vmatpush.bf16.msra.mxu0 %v6630
      %7097 = vmatpush.bf16.msra.mxu0 %v6624
      %7098 = vmatpush.bf16.msra.mxu0 %v6618
      %7099 = vmatpush.bf16.msra.mxu0 %v6612
      %7100 = vmatmul.bf16.gmra.mxu0 %v5943
      %v7101 = vpop.f32.mrf.mxu0
      %v7102 = vadd.f32 %v7073, %v7101
      %v7103 = vpop.f32.mrf.mxu0
      %v7104 = vadd.f32 %v7075, %v7103
      %7105 = vmatmul.bf16.gmra.mxu0 %v5953
      %v7106 = vpop.f32.mrf.mxu0
      %v7107 = vadd.f32 %v7078, %v7106
      %v7108 = vpop.f32.mrf.mxu0
      %v7109 = vadd.f32 %v7080, %v7108
      %7110 = vmatmul.bf16.gmra.mxu0 %v5961
      %v7111 = vpop.f32.mrf.mxu0
      %v7112 = vadd.f32 %v7083, %v7111
      %v7113 = vpop.f32.mrf.mxu0
      %v7114 = vadd.f32 %v7085, %v7113
      %7115 = vmatmul.bf16.gmra.mxu0 %v5968
      %v7116 = vpop.f32.mrf.mxu0
      %v7117 = vadd.f32 %v7088, %v7116
      %v7118 = vpop.f32.mrf.mxu0
      %v7119 = vadd.f32 %v7090, %v7118
      %7120 = vdwg.mxu0
      %7121 = vmatpush.bf16.msra.mxu0 %v6702
      %7122 = vmatpush.bf16.msra.mxu0 %v6696
      %7123 = vmatpush.bf16.msra.mxu0 %v6690
      %7124 = vmatpush.bf16.msra.mxu0 %v6684
      %7125 = vmatpush.bf16.msra.mxu0 %v6678
      %7126 = vmatpush.bf16.msra.mxu0 %v6672
      %7127 = vmatpush.bf16.msra.mxu0 %v6666
      %7128 = vmatpush.bf16.msra.mxu0 %v6660
      %7129 = vmatmul.bf16.gmra.mxu0 %v5946
      %v7130 = vpop.f32.mrf.mxu0
      %v7131 = vadd.f32 %v7102, %v7130
      %v7132 = vpop.f32.mrf.mxu0
      %v7133 = vadd.f32 %v7104, %v7132
      %7134 = vmatmul.bf16.gmra.mxu0 %v5955
      %v7135 = vpop.f32.mrf.mxu0
      %v7136 = vadd.f32 %v7107, %v7135
      %v7137 = vpop.f32.mrf.mxu0
      %v7138 = vadd.f32 %v7109, %v7137
      %7139 = vmatmul.bf16.gmra.mxu0 %v5963
      %v7140 = vpop.f32.mrf.mxu0
      %v7141 = vadd.f32 %v7112, %v7140
      %v7142 = vpop.f32.mrf.mxu0
      %v7143 = vadd.f32 %v7114, %v7142
      %7144 = vmatmul.bf16.gmra.mxu0 %v5969
      %v7145 = vpop.f32.mrf.mxu0
      %v7146 = vadd.f32 %v7117, %v7145
      %v7147 = vpop.f32.mrf.mxu0
      %v7148 = vadd.f32 %v7119, %v7147
      %7149 = vdwg.mxu0
      %7150 = vmatpush.bf16.msra.mxu0 %v6750
      %7151 = vmatpush.bf16.msra.mxu0 %v6744
      %7152 = vmatpush.bf16.msra.mxu0 %v6738
      %7153 = vmatpush.bf16.msra.mxu0 %v6732
      %7154 = vmatpush.bf16.msra.mxu0 %v6726
      %7155 = vmatpush.bf16.msra.mxu0 %v6720
      %7156 = vmatpush.bf16.msra.mxu0 %v6714
      %7157 = vmatpush.bf16.msra.mxu0 %v6708
      %7158 = vmatmul.bf16.gmra.mxu0 %v5949
      %v7159 = vpop.f32.mrf.mxu0
      %v7160 = vadd.f32 %v7131, %v7159
      %v7161 = vpop.f32.mrf.mxu0
      %v7162 = vadd.f32 %v7133, %v7161
      %7163 = vmatmul.bf16.gmra.mxu0 %v5957
      %v7164 = vpop.f32.mrf.mxu0
      %v7165 = vadd.f32 %v7136, %v7164
      %v7166 = vpop.f32.mrf.mxu0
      %v7167 = vadd.f32 %v7138, %v7166
      %7168 = vmatmul.bf16.gmra.mxu0 %v5965
      %v7169 = vpop.f32.mrf.mxu0
      %v7170 = vadd.f32 %v7141, %v7169
      %v7171 = vpop.f32.mrf.mxu0
      %v7172 = vadd.f32 %v7143, %v7171
      %7173 = vmatmul.bf16.gmra.mxu0 %v5970
      %v7174 = vpop.f32.mrf.mxu0
      %v7175 = vadd.f32 %v7146, %v7174
      %v7176 = vpop.f32.mrf.mxu0
      %v7177 = vadd.f32 %v7148, %v7176
      %7178 = vdwg.mxu0
      %7179 = vmatpush.bf16.msra.mxu0 %v6607
      %7180 = vmatpush.bf16.msra.mxu0 %v6601
      %7181 = vmatpush.bf16.msra.mxu0 %v6595
      %7182 = vmatpush.bf16.msra.mxu0 %v6589
      %7183 = vmatpush.bf16.msra.mxu0 %v6583
      %7184 = vmatpush.bf16.msra.mxu0 %v6577
      %7185 = vmatpush.bf16.msra.mxu0 %v6571
      %7186 = vmatpush.bf16.msra.mxu0 %v6565
      %7187 = vmatmul.bf16.gmra.mxu0 %v5940
      %v7188 = vpop.f32.mrf.mxu0
      %v7189 = vadd.f32 0.0, %v7188
      %v7190 = vpop.f32.mrf.mxu0
      %v7191 = vadd.f32 0.0, %v7190
      %7192 = vmatmul.bf16.gmra.mxu0 %v5951
      %v7193 = vpop.f32.mrf.mxu0
      %v7194 = vadd.f32 0.0, %v7193
      %v7195 = vpop.f32.mrf.mxu0
      %v7196 = vadd.f32 0.0, %v7195
      %7197 = vmatmul.bf16.gmra.mxu0 %v5959
      %v7198 = vpop.f32.mrf.mxu0
      %v7199 = vadd.f32 0.0, %v7198
      %v7200 = vpop.f32.mrf.mxu0
      %v7201 = vadd.f32 0.0, %v7200
      %7202 = vmatmul.bf16.gmra.mxu0 %v5967
      %v7203 = vpop.f32.mrf.mxu0
      %v7204 = vadd.f32 0.0, %v7203
      %v7205 = vpop.f32.mrf.mxu0
      %v7206 = vadd.f32 0.0, %v7205
      %7207 = vdwg.mxu0
      %7208 = vmatpush.bf16.msra.mxu0 %v6655
      %7209 = vmatpush.bf16.msra.mxu0 %v6649
      %7210 = vmatpush.bf16.msra.mxu0 %v6643
      %7211 = vmatpush.bf16.msra.mxu0 %v6637
      %7212 = vmatpush.bf16.msra.mxu0 %v6631
      %7213 = vmatpush.bf16.msra.mxu0 %v6625
      %7214 = vmatpush.bf16.msra.mxu0 %v6619
      %7215 = vmatpush.bf16.msra.mxu0 %v6613
      %7216 = vmatmul.bf16.gmra.mxu0 %v5943
      %v7217 = vpop.f32.mrf.mxu0
      %v7218 = vadd.f32 %v7189, %v7217
      %v7219 = vpop.f32.mrf.mxu0
      %v7220 = vadd.f32 %v7191, %v7219
      %7221 = vmatmul.bf16.gmra.mxu0 %v5953
      %v7222 = vpop.f32.mrf.mxu0
      %v7223 = vadd.f32 %v7194, %v7222
      %v7224 = vpop.f32.mrf.mxu0
      %v7225 = vadd.f32 %v7196, %v7224
      %7226 = vmatmul.bf16.gmra.mxu0 %v5961
      %v7227 = vpop.f32.mrf.mxu0
      %v7228 = vadd.f32 %v7199, %v7227
      %v7229 = vpop.f32.mrf.mxu0
      %v7230 = vadd.f32 %v7201, %v7229
      %7231 = vmatmul.bf16.gmra.mxu0 %v5968
      %v7232 = vpop.f32.mrf.mxu0
      %v7233 = vadd.f32 %v7204, %v7232
      %v7234 = vpop.f32.mrf.mxu0
      %v7235 = vadd.f32 %v7206, %v7234
      %7236 = vdwg.mxu0
      %7237 = vmatpush.bf16.msra.mxu0 %v6703
      %7238 = vmatpush.bf16.msra.mxu0 %v6697
      %7239 = vmatpush.bf16.msra.mxu0 %v6691
      %7240 = vmatpush.bf16.msra.mxu0 %v6685
      %7241 = vmatpush.bf16.msra.mxu0 %v6679
      %7242 = vmatpush.bf16.msra.mxu0 %v6673
      %7243 = vmatpush.bf16.msra.mxu0 %v6667
      %7244 = vmatpush.bf16.msra.mxu0 %v6661
      %7245 = vmatmul.bf16.gmra.mxu0 %v5946
      %v7246 = vpop.f32.mrf.mxu0
      %v7247 = vadd.f32 %v7218, %v7246
      %v7248 = vpop.f32.mrf.mxu0
      %v7249 = vadd.f32 %v7220, %v7248
      %7250 = vmatmul.bf16.gmra.mxu0 %v5955
      %v7251 = vpop.f32.mrf.mxu0
      %v7252 = vadd.f32 %v7223, %v7251
      %v7253 = vpop.f32.mrf.mxu0
      %v7254 = vadd.f32 %v7225, %v7253
      %7255 = vmatmul.bf16.gmra.mxu0 %v5963
      %v7256 = vpop.f32.mrf.mxu0
      %v7257 = vadd.f32 %v7228, %v7256
      %v7258 = vpop.f32.mrf.mxu0
      %v7259 = vadd.f32 %v7230, %v7258
      %7260 = vmatmul.bf16.gmra.mxu0 %v5969
      %v7261 = vpop.f32.mrf.mxu0
      %v7262 = vadd.f32 %v7233, %v7261
      %v7263 = vpop.f32.mrf.mxu0
      %v7264 = vadd.f32 %v7235, %v7263
      %7265 = vdwg.mxu0
      %7266 = vmatpush.bf16.msra.mxu0 %v6751
      %7267 = vmatpush.bf16.msra.mxu0 %v6745
      %7268 = vmatpush.bf16.msra.mxu0 %v6739
      %7269 = vmatpush.bf16.msra.mxu0 %v6733
      %7270 = vmatpush.bf16.msra.mxu0 %v6727
      %7271 = vmatpush.bf16.msra.mxu0 %v6721
      %7272 = vmatpush.bf16.msra.mxu0 %v6715
      %7273 = vmatpush.bf16.msra.mxu0 %v6709
      %7274 = vmatmul.bf16.gmra.mxu0 %v5949
      %v7275 = vpop.f32.mrf.mxu0
      %v7276 = vadd.f32 %v7247, %v7275
      %v7277 = vpop.f32.mrf.mxu0
      %v7278 = vadd.f32 %v7249, %v7277
      %7279 = vmatmul.bf16.gmra.mxu0 %v5957
      %v7280 = vpop.f32.mrf.mxu0
      %v7281 = vadd.f32 %v7252, %v7280
      %v7282 = vpop.f32.mrf.mxu0
      %v7283 = vadd.f32 %v7254, %v7282
      %7284 = vmatmul.bf16.gmra.mxu0 %v5965
      %v7285 = vpop.f32.mrf.mxu0
      %v7286 = vadd.f32 %v7257, %v7285
      %v7287 = vpop.f32.mrf.mxu0
      %v7288 = vadd.f32 %v7259, %v7287
      %7289 = vmatmul.bf16.gmra.mxu0 %v5970
      %v7290 = vpop.f32.mrf.mxu0
      %v7291 = vadd.f32 %v7262, %v7290
      %v7292 = vpop.f32.mrf.mxu0
      %v7293 = vadd.f32 %v7264, %v7292
      %7294 = vdwg.mxu0
      %7295 = vmatpush.bf16.msra.mxu0 %v6608
      %7296 = vmatpush.bf16.msra.mxu0 %v6602
      %7297 = vmatpush.bf16.msra.mxu0 %v6596
      %7298 = vmatpush.bf16.msra.mxu0 %v6590
      %7299 = vmatpush.bf16.msra.mxu0 %v6584
      %7300 = vmatpush.bf16.msra.mxu0 %v6578
      %7301 = vmatpush.bf16.msra.mxu0 %v6572
      %7302 = vmatpush.bf16.msra.mxu0 %v6566
      %7303 = vmatmul.bf16.gmra.mxu0 %v5940
      %v7304 = vpop.f32.mrf.mxu0
      %v7305 = vadd.f32 0.0, %v7304
      %v7306 = vpop.f32.mrf.mxu0
      %v7307 = vadd.f32 0.0, %v7306
      %7308 = vmatmul.bf16.gmra.mxu0 %v5951
      %v7309 = vpop.f32.mrf.mxu0
      %v7310 = vadd.f32 0.0, %v7309
      %v7311 = vpop.f32.mrf.mxu0
      %v7312 = vadd.f32 0.0, %v7311
      %7313 = vmatmul.bf16.gmra.mxu0 %v5959
      %v7314 = vpop.f32.mrf.mxu0
      %v7315 = vadd.f32 0.0, %v7314
      %v7316 = vpop.f32.mrf.mxu0
      %v7317 = vadd.f32 0.0, %v7316
      %7318 = vmatmul.bf16.gmra.mxu0 %v5967
      %v7319 = vpop.f32.mrf.mxu0
      %v7320 = vadd.f32 0.0, %v7319
      %v7321 = vpop.f32.mrf.mxu0
      %v7322 = vadd.f32 0.0, %v7321
      %7323 = vdwg.mxu0
      %7324 = vmatpush.bf16.msra.mxu0 %v6656
      %7325 = vmatpush.bf16.msra.mxu0 %v6650
      %7326 = vmatpush.bf16.msra.mxu0 %v6644
      %7327 = vmatpush.bf16.msra.mxu0 %v6638
      %7328 = vmatpush.bf16.msra.mxu0 %v6632
      %7329 = vmatpush.bf16.msra.mxu0 %v6626
      %7330 = vmatpush.bf16.msra.mxu0 %v6620
      %7331 = vmatpush.bf16.msra.mxu0 %v6614
      %7332 = vmatmul.bf16.gmra.mxu0 %v5943
      %v7333 = vpop.f32.mrf.mxu0
      %v7334 = vadd.f32 %v7305, %v7333
      %v7335 = vpop.f32.mrf.mxu0
      %v7336 = vadd.f32 %v7307, %v7335
      %7337 = vmatmul.bf16.gmra.mxu0 %v5953
      %v7338 = vpop.f32.mrf.mxu0
      %v7339 = vadd.f32 %v7310, %v7338
      %v7340 = vpop.f32.mrf.mxu0
      %v7341 = vadd.f32 %v7312, %v7340
      %7342 = vmatmul.bf16.gmra.mxu0 %v5961
      %v7343 = vpop.f32.mrf.mxu0
      %v7344 = vadd.f32 %v7315, %v7343
      %v7345 = vpop.f32.mrf.mxu0
      %v7346 = vadd.f32 %v7317, %v7345
      %7347 = vmatmul.bf16.gmra.mxu0 %v5968
      %v7348 = vpop.f32.mrf.mxu0
      %v7349 = vadd.f32 %v7320, %v7348
      %v7350 = vpop.f32.mrf.mxu0
      %v7351 = vadd.f32 %v7322, %v7350
      %7352 = vdwg.mxu0
      %7353 = vmatpush.bf16.msra.mxu0 %v6704
      %7354 = vmatpush.bf16.msra.mxu0 %v6698
      %7355 = vmatpush.bf16.msra.mxu0 %v6692
      %7356 = vmatpush.bf16.msra.mxu0 %v6686
      %7357 = vmatpush.bf16.msra.mxu0 %v6680
      %7358 = vmatpush.bf16.msra.mxu0 %v6674
      %7359 = vmatpush.bf16.msra.mxu0 %v6668
      %7360 = vmatpush.bf16.msra.mxu0 %v6662
      %7361 = vmatmul.bf16.gmra.mxu0 %v5946
      %v7362 = vpop.f32.mrf.mxu0
      %v7363 = vadd.f32 %v7334, %v7362
      %v7364 = vpop.f32.mrf.mxu0
      %v7365 = vadd.f32 %v7336, %v7364
      %7366 = vmatmul.bf16.gmra.mxu0 %v5955
      %v7367 = vpop.f32.mrf.mxu0
      %v7368 = vadd.f32 %v7339, %v7367
      %v7369 = vpop.f32.mrf.mxu0
      %v7370 = vadd.f32 %v7341, %v7369
      %7371 = vmatmul.bf16.gmra.mxu0 %v5963
      %v7372 = vpop.f32.mrf.mxu0
      %v7373 = vadd.f32 %v7344, %v7372
      %v7374 = vpop.f32.mrf.mxu0
      %v7375 = vadd.f32 %v7346, %v7374
      %7376 = vmatmul.bf16.gmra.mxu0 %v5969
      %v7377 = vpop.f32.mrf.mxu0
      %v7378 = vadd.f32 %v7349, %v7377
      %v7379 = vpop.f32.mrf.mxu0
      %v7380 = vadd.f32 %v7351, %v7379
      %7381 = vdwg.mxu0
      %7382 = vmatpush.bf16.msra.mxu0 %v6752
      %7383 = vmatpush.bf16.msra.mxu0 %v6746
      %7384 = vmatpush.bf16.msra.mxu0 %v6740
      %7385 = vmatpush.bf16.msra.mxu0 %v6734
      %7386 = vmatpush.bf16.msra.mxu0 %v6728
      %7387 = vmatpush.bf16.msra.mxu0 %v6722
      %7388 = vmatpush.bf16.msra.mxu0 %v6716
      %7389 = vmatpush.bf16.msra.mxu0 %v6710
      %7390 = vmatmul.bf16.gmra.mxu0 %v5949
      %v7391 = vpop.f32.mrf.mxu0
      %v7392 = vadd.f32 %v7363, %v7391
      %v7393 = vpop.f32.mrf.mxu0
      %v7394 = vadd.f32 %v7365, %v7393
      %7395 = vmatmul.bf16.gmra.mxu0 %v5957
      %v7396 = vpop.f32.mrf.mxu0
      %v7397 = vadd.f32 %v7368, %v7396
      %v7398 = vpop.f32.mrf.mxu0
      %v7399 = vadd.f32 %v7370, %v7398
      %7400 = vmatmul.bf16.gmra.mxu0 %v5965
      %v7401 = vpop.f32.mrf.mxu0
      %v7402 = vadd.f32 %v7373, %v7401
      %v7403 = vpop.f32.mrf.mxu0
      %v7404 = vadd.f32 %v7375, %v7403
      %7405 = vmatmul.bf16.gmra.mxu0 %v5970
      %v7406 = vpop.f32.mrf.mxu0
      %v7407 = vadd.f32 %v7378, %v7406
      %v7408 = vpop.f32.mrf.mxu0
      %v7409 = vadd.f32 %v7380, %v7408
      %7410 = vdwg.mxu0
      %7411 = vmatpush.bf16.msra.mxu0 %v6609
      %7412 = vmatpush.bf16.msra.mxu0 %v6603
      %7413 = vmatpush.bf16.msra.mxu0 %v6597
      %7414 = vmatpush.bf16.msra.mxu0 %v6591
      %7415 = vmatpush.bf16.msra.mxu0 %v6585
      %7416 = vmatpush.bf16.msra.mxu0 %v6579
      %7417 = vmatpush.bf16.msra.mxu0 %v6573
      %7418 = vmatpush.bf16.msra.mxu0 %v6567
      %7419 = vmatmul.bf16.gmra.mxu0 %v5940
      %v7420 = vpop.f32.mrf.mxu0
      %v7421 = vadd.f32 0.0, %v7420
      %v7422 = vpop.f32.mrf.mxu0
      %v7423 = vadd.f32 0.0, %v7422
      %7424 = vmatmul.bf16.gmra.mxu0 %v5951
      %v7425 = vpop.f32.mrf.mxu0
      %v7426 = vadd.f32 0.0, %v7425
      %v7427 = vpop.f32.mrf.mxu0
      %v7428 = vadd.f32 0.0, %v7427
      %7429 = vmatmul.bf16.gmra.mxu0 %v5959
      %v7430 = vpop.f32.mrf.mxu0
      %v7431 = vadd.f32 0.0, %v7430
      %v7432 = vpop.f32.mrf.mxu0
      %v7433 = vadd.f32 0.0, %v7432
      %7434 = vmatmul.bf16.gmra.mxu0 %v5967
      %v7435 = vpop.f32.mrf.mxu0
      %v7436 = vadd.f32 0.0, %v7435
      %v7437 = vpop.f32.mrf.mxu0
      %v7438 = vadd.f32 0.0, %v7437
      %7439 = vdwg.mxu0
      %7440 = vmatpush.bf16.msra.mxu0 %v6657
      %7441 = vmatpush.bf16.msra.mxu0 %v6651
      %7442 = vmatpush.bf16.msra.mxu0 %v6645
      %7443 = vmatpush.bf16.msra.mxu0 %v6639
      %7444 = vmatpush.bf16.msra.mxu0 %v6633
      %7445 = vmatpush.bf16.msra.mxu0 %v6627
      %7446 = vmatpush.bf16.msra.mxu0 %v6621
      %7447 = vmatpush.bf16.msra.mxu0 %v6615
      %7448 = vmatmul.bf16.gmra.mxu0 %v5943
      %v7449 = vpop.f32.mrf.mxu0
      %v7450 = vadd.f32 %v7421, %v7449
      %v7451 = vpop.f32.mrf.mxu0
      %v7452 = vadd.f32 %v7423, %v7451
      %7453 = vmatmul.bf16.gmra.mxu0 %v5953
      %v7454 = vpop.f32.mrf.mxu0
      %v7455 = vadd.f32 %v7426, %v7454
      %v7456 = vpop.f32.mrf.mxu0
      %v7457 = vadd.f32 %v7428, %v7456
      %7458 = vmatmul.bf16.gmra.mxu0 %v5961
      %v7459 = vpop.f32.mrf.mxu0
      %v7460 = vadd.f32 %v7431, %v7459
      %v7461 = vpop.f32.mrf.mxu0
      %v7462 = vadd.f32 %v7433, %v7461
      %7463 = vmatmul.bf16.gmra.mxu0 %v5968
      %v7464 = vpop.f32.mrf.mxu0
      %v7465 = vadd.f32 %v7436, %v7464
      %v7466 = vpop.f32.mrf.mxu0
      %v7467 = vadd.f32 %v7438, %v7466
      %7468 = vdwg.mxu0
      %7469 = vmatpush.bf16.msra.mxu0 %v6705
      %7470 = vmatpush.bf16.msra.mxu0 %v6699
      %7471 = vmatpush.bf16.msra.mxu0 %v6693
      %7472 = vmatpush.bf16.msra.mxu0 %v6687
      %7473 = vmatpush.bf16.msra.mxu0 %v6681
      %7474 = vmatpush.bf16.msra.mxu0 %v6675
      %7475 = vmatpush.bf16.msra.mxu0 %v6669
      %7476 = vmatpush.bf16.msra.mxu0 %v6663
      %7477 = vmatmul.bf16.gmra.mxu0 %v5946
      %v7478 = vpop.f32.mrf.mxu0
      %v7479 = vadd.f32 %v7450, %v7478
      %v7480 = vpop.f32.mrf.mxu0
      %v7481 = vadd.f32 %v7452, %v7480
      %7482 = vmatmul.bf16.gmra.mxu0 %v5955
      %v7483 = vpop.f32.mrf.mxu0
      %v7484 = vadd.f32 %v7455, %v7483
      %v7485 = vpop.f32.mrf.mxu0
      %v7486 = vadd.f32 %v7457, %v7485
      %7487 = vmatmul.bf16.gmra.mxu0 %v5963
      %v7488 = vpop.f32.mrf.mxu0
      %v7489 = vadd.f32 %v7460, %v7488
      %v7490 = vpop.f32.mrf.mxu0
      %v7491 = vadd.f32 %v7462, %v7490
      %7492 = vmatmul.bf16.gmra.mxu0 %v5969
      %v7493 = vpop.f32.mrf.mxu0
      %v7494 = vadd.f32 %v7465, %v7493
      %v7495 = vpop.f32.mrf.mxu0
      %v7496 = vadd.f32 %v7467, %v7495
      %7497 = vdwg.mxu0
      %7498 = vmatpush.bf16.msra.mxu0 %v6753
      %7499 = vmatpush.bf16.msra.mxu0 %v6747
      %7500 = vmatpush.bf16.msra.mxu0 %v6741
      %7501 = vmatpush.bf16.msra.mxu0 %v6735
      %7502 = vmatpush.bf16.msra.mxu0 %v6729
      %7503 = vmatpush.bf16.msra.mxu0 %v6723
      %7504 = vmatpush.bf16.msra.mxu0 %v6717
      %7505 = vmatpush.bf16.msra.mxu0 %v6711
      %7506 = vmatmul.bf16.gmra.mxu0 %v5949
      %v7507 = vpop.f32.mrf.mxu0
      %v7508 = vadd.f32 %v7479, %v7507
      %v7509 = vpop.f32.mrf.mxu0
      %v7510 = vadd.f32 %v7481, %v7509
      %7511 = vmatmul.bf16.gmra.mxu0 %v5957
      %v7512 = vpop.f32.mrf.mxu0
      %v7513 = vadd.f32 %v7484, %v7512
      %v7514 = vpop.f32.mrf.mxu0
      %v7515 = vadd.f32 %v7486, %v7514
      %7516 = vmatmul.bf16.gmra.mxu0 %v5965
      %v7517 = vpop.f32.mrf.mxu0
      %v7518 = vadd.f32 %v7489, %v7517
      %v7519 = vpop.f32.mrf.mxu0
      %v7520 = vadd.f32 %v7491, %v7519
      %7521 = vmatmul.bf16.gmra.mxu0 %v5970
      %v7522 = vpop.f32.mrf.mxu0
      %v7523 = vadd.f32 %v7494, %v7522
      %v7524 = vpop.f32.mrf.mxu0
      %v7525 = vadd.f32 %v7496, %v7524
      %7526 = vdwg.mxu0
      %7527 = vmatpush.bf16.msra.mxu0 %v6610
      %7528 = vmatpush.bf16.msra.mxu0 %v6604
      %7529 = vmatpush.bf16.msra.mxu0 %v6598
      %7530 = vmatpush.bf16.msra.mxu0 %v6592
      %7531 = vmatpush.bf16.msra.mxu0 %v6586
      %7532 = vmatpush.bf16.msra.mxu0 %v6580
      %7533 = vmatpush.bf16.msra.mxu0 %v6574
      %7534 = vmatpush.bf16.msra.mxu0 %v6568
      %7535 = vmatmul.bf16.gmra.mxu0 %v5940
      %v7536 = vpop.f32.mrf.mxu0
      %v7537 = vadd.f32 0.0, %v7536
      %v7538 = vpop.f32.mrf.mxu0
      %v7539 = vadd.f32 0.0, %v7538
      %7540 = vmatmul.bf16.gmra.mxu0 %v5951
      %v7541 = vpop.f32.mrf.mxu0
      %v7542 = vadd.f32 0.0, %v7541
      %v7543 = vpop.f32.mrf.mxu0
      %v7544 = vadd.f32 0.0, %v7543
      %7545 = vmatmul.bf16.gmra.mxu0 %v5959
      %v7546 = vpop.f32.mrf.mxu0
      %v7547 = vadd.f32 0.0, %v7546
      %v7548 = vpop.f32.mrf.mxu0
      %v7549 = vadd.f32 0.0, %v7548
      %7550 = vmatmul.bf16.gmra.mxu0 %v5967
      %v7551 = vpop.f32.mrf.mxu0
      %v7552 = vadd.f32 0.0, %v7551
      %v7553 = vpop.f32.mrf.mxu0
      %v7554 = vadd.f32 0.0, %v7553
      %7555 = vdwg.mxu0
      %7556 = vmatpush.bf16.msra.mxu0 %v6658
      %7557 = vmatpush.bf16.msra.mxu0 %v6652
      %7558 = vmatpush.bf16.msra.mxu0 %v6646
      %7559 = vmatpush.bf16.msra.mxu0 %v6640
      %7560 = vmatpush.bf16.msra.mxu0 %v6634
      %7561 = vmatpush.bf16.msra.mxu0 %v6628
      %7562 = vmatpush.bf16.msra.mxu0 %v6622
      %7563 = vmatpush.bf16.msra.mxu0 %v6616
      %7564 = vmatmul.bf16.gmra.mxu0 %v5943
      %v7565 = vpop.f32.mrf.mxu0
      %v7566 = vadd.f32 %v7537, %v7565
      %v7567 = vpop.f32.mrf.mxu0
      %v7568 = vadd.f32 %v7539, %v7567
      %7569 = vmatmul.bf16.gmra.mxu0 %v5953
      %v7570 = vpop.f32.mrf.mxu0
      %v7571 = vadd.f32 %v7542, %v7570
      %v7572 = vpop.f32.mrf.mxu0
      %v7573 = vadd.f32 %v7544, %v7572
      %7574 = vmatmul.bf16.gmra.mxu0 %v5961
      %v7575 = vpop.f32.mrf.mxu0
      %v7576 = vadd.f32 %v7547, %v7575
      %v7577 = vpop.f32.mrf.mxu0
      %v7578 = vadd.f32 %v7549, %v7577
      %7579 = vmatmul.bf16.gmra.mxu0 %v5968
      %v7580 = vpop.f32.mrf.mxu0
      %v7581 = vadd.f32 %v7552, %v7580
      %v7582 = vpop.f32.mrf.mxu0
      %v7583 = vadd.f32 %v7554, %v7582
      %7584 = vdwg.mxu0
      %7585 = vmatpush.bf16.msra.mxu0 %v6706
      %7586 = vmatpush.bf16.msra.mxu0 %v6700
      %7587 = vmatpush.bf16.msra.mxu0 %v6694
      %7588 = vmatpush.bf16.msra.mxu0 %v6688
      %7589 = vmatpush.bf16.msra.mxu0 %v6682
      %7590 = vmatpush.bf16.msra.mxu0 %v6676
      %7591 = vmatpush.bf16.msra.mxu0 %v6670
      %7592 = vmatpush.bf16.msra.mxu0 %v6664
      %7593 = vmatmul.bf16.gmra.mxu0 %v5946
      %v7594 = vpop.f32.mrf.mxu0
      %v7595 = vadd.f32 %v7566, %v7594
      %v7596 = vpop.f32.mrf.mxu0
      %v7597 = vadd.f32 %v7568, %v7596
      %7598 = vmatmul.bf16.gmra.mxu0 %v5955
      %v7599 = vpop.f32.mrf.mxu0
      %v7600 = vadd.f32 %v7571, %v7599
      %v7601 = vpop.f32.mrf.mxu0
      %v7602 = vadd.f32 %v7573, %v7601
      %7603 = vmatmul.bf16.gmra.mxu0 %v5963
      %v7604 = vpop.f32.mrf.mxu0
      %v7605 = vadd.f32 %v7576, %v7604
      %v7606 = vpop.f32.mrf.mxu0
      %v7607 = vadd.f32 %v7578, %v7606
      %7608 = vmatmul.bf16.gmra.mxu0 %v5969
      %v7609 = vpop.f32.mrf.mxu0
      %v7610 = vadd.f32 %v7581, %v7609
      %v7611 = vpop.f32.mrf.mxu0
      %v7612 = vadd.f32 %v7583, %v7611
      %7613 = vdwg.mxu0
      %7614 = vmatpush.bf16.msra.mxu0 %v6754
      %7615 = vmatpush.bf16.msra.mxu0 %v6748
      %7616 = vmatpush.bf16.msra.mxu0 %v6742
      %7617 = vmatpush.bf16.msra.mxu0 %v6736
      %7618 = vmatpush.bf16.msra.mxu0 %v6730
      %7619 = vmatpush.bf16.msra.mxu0 %v6724
      %7620 = vmatpush.bf16.msra.mxu0 %v6718
      %7621 = vmatpush.bf16.msra.mxu0 %v6712
      %7622 = vmatmul.bf16.gmra.mxu0 %v5949
      %v7623 = vpop.f32.mrf.mxu0
      %v7624 = vadd.f32 %v7595, %v7623
      %v7625 = vpop.f32.mrf.mxu0
      %v7626 = vadd.f32 %v7597, %v7625
      %7627 = vmatmul.bf16.gmra.mxu0 %v5957
      %v7628 = vpop.f32.mrf.mxu0
      %v7629 = vadd.f32 %v7600, %v7628
      %v7630 = vpop.f32.mrf.mxu0
      %v7631 = vadd.f32 %v7602, %v7630
      %7632 = vmatmul.bf16.gmra.mxu0 %v5965
      %v7633 = vpop.f32.mrf.mxu0
      %v7634 = vadd.f32 %v7605, %v7633
      %v7635 = vpop.f32.mrf.mxu0
      %v7636 = vadd.f32 %v7607, %v7635
      %7637 = vmatmul.bf16.gmra.mxu0 %v5970
      %v7638 = vpop.f32.mrf.mxu0
      %v7639 = vadd.f32 %v7610, %v7638
      %v7640 = vpop.f32.mrf.mxu0
      %v7641 = vadd.f32 %v7612, %v7640
      %7642 = vdwg.mxu0
      %v7643 = vadd.f32 %v5695, %v7044
      %v7644 = vadd.f32 %v5696, %v7160
      %v7645 = vadd.f32 %v5697, %v7276
      %v7646 = vadd.f32 %v5698, %v7392
      %v7647 = vadd.f32 %v5699, %v7508
      %v7648 = vadd.f32 %v5700, %v7624
      %v7649 = vadd.f32 %v5701, %v7046
      %v7650 = vadd.f32 %v5702, %v7162
      %v7651 = vadd.f32 %v5703, %v7278
      %v7652 = vadd.f32 %v5704, %v7394
      %v7653 = vadd.f32 %v5705, %v7510
      %v7654 = vadd.f32 %v5706, %v7626
      %v7655 = vadd.f32 %v5707, %v7049
      %v7656 = vadd.f32 %v5708, %v7165
      %v7657 = vadd.f32 %v5709, %v7281
      %v7658 = vadd.f32 %v5710, %v7397
      %v7659 = vadd.f32 %v5711, %v7513
      %v7660 = vadd.f32 %v5712, %v7629
      %v7661 = vadd.f32 %v5713, %v7051
      %v7662 = vadd.f32 %v5714, %v7167
      %v7663 = vadd.f32 %v5715, %v7283
      %v7664 = vadd.f32 %v5716, %v7399
      %v7665 = vadd.f32 %v5717, %v7515
      %v7666 = vadd.f32 %v5718, %v7631
      %v7667 = vadd.f32 %v5719, %v7054
      %v7668 = vadd.f32 %v5720, %v7170
      %v7669 = vadd.f32 %v5721, %v7286
      %v7670 = vadd.f32 %v5722, %v7402
      %v7671 = vadd.f32 %v5723, %v7518
      %v7672 = vadd.f32 %v5724, %v7634
      %v7673 = vadd.f32 %v5725, %v7056
      %v7674 = vadd.f32 %v5726, %v7172
      %v7675 = vadd.f32 %v5727, %v7288
      %v7676 = vadd.f32 %v5728, %v7404
      %v7677 = vadd.f32 %v5729, %v7520
      %v7678 = vadd.f32 %v5730, %v7636
      %v7679 = vadd.f32 %v5731, %v7059
      %v7680 = vadd.f32 %v5732, %v7175
      %v7681 = vadd.f32 %v5733, %v7291
      %v7682 = vadd.f32 %v5734, %v7407
      %v7683 = vadd.f32 %v5735, %v7523
      %v7684 = vadd.f32 %v5736, %v7639
      %v7685 = vadd.f32 %v5737, %v7061
      %v7686 = vadd.f32 %v5738, %v7177
      %v7687 = vadd.f32 %v5739, %v7293
      %v7688 = vadd.f32 %v5740, %v7409
      %v7689 = vadd.f32 %v5741, %v7525
      %v7690 = vadd.f32 %v5742, %v7641
      %v7691 = vmax.f32 %v7643, %v7646
      %v7692 = vmax.f32 %v7644, %v7647
      %v7693 = vmax.f32 %v7645, %v7648
      %v7694 = vmax.f32 %v7649, %v7652
      %v7695 = vmax.f32 %v7650, %v7653
      %v7696 = vmax.f32 %v7651, %v7654
      %v7697 = vmax.f32 %v7655, %v7658
      %v7698 = vmax.f32 %v7656, %v7659
      %v7699 = vmax.f32 %v7657, %v7660
      %v7700 = vmax.f32 %v7661, %v7664
      %v7701 = vmax.f32 %v7662, %v7665
      %v7702 = vmax.f32 %v7663, %v7666
      %v7703 = vmax.f32 %v7667, %v7670
      %v7704 = vmax.f32 %v7668, %v7671
      %v7705 = vmax.f32 %v7669, %v7672
      %v7706 = vmax.f32 %v7673, %v7676
      %v7707 = vmax.f32 %v7674, %v7677
      %v7708 = vmax.f32 %v7675, %v7678
      %v7709 = vmax.f32 %v7679, %v7682
      %v7710 = vmax.f32 %v7680, %v7683
      %v7711 = vmax.f32 %v7681, %v7684
      %v7712 = vmax.f32 %v7685, %v7688
      %v7713 = vmax.f32 %v7686, %v7689
      %v7714 = vmax.f32 %v7687, %v7690
      %vm7739 = vcmask 1046528
      %v7740 = vrot.slane %v7691, 1
      %v7741 = vrot.slane %v7694, 1
      %v7742 = vsel %vm7739, %v7740, %v7741
      %v7743 = vrot.slane %v7692, 1
      %v7744 = vrot.slane %v7695, 1
      %v7745 = vsel %vm7739, %v7743, %v7744
      %v7746 = vrot.slane %v7693, 1
      %v7747 = vrot.slane %v7696, 1
      %v7748 = vsel %vm7739, %v7746, %v7747
      %v7749 = vrot.slane %v7697, 1
      %v7750 = vsel %vm7739, %v7741, %v7749
      %v7751 = vrot.slane %v7698, 1
      %v7752 = vsel %vm7739, %v7744, %v7751
      %v7753 = vrot.slane %v7699, 1
      %v7754 = vsel %vm7739, %v7747, %v7753
      %v7755 = vrot.slane %v7700, 1
      %v7756 = vsel %vm7739, %v7749, %v7755
      %v7757 = vrot.slane %v7701, 1
      %v7758 = vsel %vm7739, %v7751, %v7757
      %v7759 = vrot.slane %v7702, 1
      %v7760 = vsel %vm7739, %v7753, %v7759
      %v7761 = vrot.slane %v7703, 1
      %v7762 = vsel %vm7739, %v7755, %v7761
      %v7763 = vrot.slane %v7704, 1
      %v7764 = vsel %vm7739, %v7757, %v7763
      %v7765 = vrot.slane %v7705, 1
      %v7766 = vsel %vm7739, %v7759, %v7765
      %v7767 = vrot.slane %v7706, 1
      %v7768 = vsel %vm7739, %v7761, %v7767
      %v7769 = vrot.slane %v7707, 1
      %v7770 = vsel %vm7739, %v7763, %v7769
      %v7771 = vrot.slane %v7708, 1
      %v7772 = vsel %vm7739, %v7765, %v7771
      %v7773 = vrot.slane %v7709, 1
      %v7774 = vsel %vm7739, %v7767, %v7773
      %v7775 = vrot.slane %v7710, 1
      %v7776 = vsel %vm7739, %v7769, %v7775
      %v7777 = vrot.slane %v7711, 1
      %v7778 = vsel %vm7739, %v7771, %v7777
      %v7779 = vrot.slane %v7712, 1
      %v7780 = vsel %vm7739, %v7773, %v7779
      %v7781 = vrot.slane %v7713, 1
      %v7782 = vsel %vm7739, %v7775, %v7781
      %v7783 = vrot.slane %v7714, 1
      %v7784 = vsel %vm7739, %v7777, %v7783
      %v7809 = vsel %vm7739, %v7779, 0.0
      %v7810 = vsel %vm7739, %v7781, 0.0
      %v7811 = vsel %vm7739, %v7783, 0.0
      %v7812 = vmax.f32 %v7691, %v7742
      %v7813 = vmax.f32 %v7692, %v7745
      %v7814 = vmax.f32 %v7693, %v7748
      %v7815 = vmax.f32 %v7694, %v7750
      %v7816 = vmax.f32 %v7695, %v7752
      %v7817 = vmax.f32 %v7696, %v7754
      %v7818 = vmax.f32 %v7697, %v7756
      %v7819 = vmax.f32 %v7698, %v7758
      %v7820 = vmax.f32 %v7699, %v7760
      %v7821 = vmax.f32 %v7700, %v7762
      %v7822 = vmax.f32 %v7701, %v7764
      %v7823 = vmax.f32 %v7702, %v7766
      %v7824 = vmax.f32 %v7703, %v7768
      %v7825 = vmax.f32 %v7704, %v7770
      %v7826 = vmax.f32 %v7705, %v7772
      %v7827 = vmax.f32 %v7706, %v7774
      %v7828 = vmax.f32 %v7707, %v7776
      %v7829 = vmax.f32 %v7708, %v7778
      %v7830 = vmax.f32 %v7709, %v7780
      %v7831 = vmax.f32 %v7710, %v7782
      %v7832 = vmax.f32 %v7711, %v7784
      %v7833 = vmax.f32 %v7712, %v7809
      %v7834 = vmax.f32 %v7713, %v7810
      %v7835 = vmax.f32 %v7714, %v7811
      %7836 = vst [vmem:[%s231] sm:$0xff] %v7812
      %7837 = vst [vmem:[%s231 + $0x8] sm:$0xff] %v7813
      %7838 = vst [vmem:[%s231 + $0x10] sm:$0xff] %v7814
      %7839 = vst [vmem:[%s231 + $0x18] sm:$0xff] %v7815
      %7840 = vst [vmem:[%s231 + $0x20] sm:$0xff] %v7816
      %7841 = vst [vmem:[%s231 + $0x28] sm:$0xff] %v7817
      %7842 = vst [vmem:[%s231 + $0x30] sm:$0xff] %v7818
      %7843 = vst [vmem:[%s231 + $0x38] sm:$0xff] %v7819
      %7844 = vst [vmem:[%s231 + $0x40] sm:$0xff] %v7820
      %7845 = vst [vmem:[%s231 + $0x48] sm:$0xff] %v7821
      %7846 = vst [vmem:[%s231 + $0x50] sm:$0xff] %v7822
      %7847 = vst [vmem:[%s231 + $0x58] sm:$0xff] %v7823
      %7848 = vst [vmem:[%s231 + $0x60] sm:$0xff] %v7824
      %7849 = vst [vmem:[%s231 + $0x68] sm:$0xff] %v7825
      %7850 = vst [vmem:[%s231 + $0x70] sm:$0xff] %v7826
      %7851 = vst [vmem:[%s231 + $0x78] sm:$0xff] %v7827
      %7852 = vst [vmem:[%s231 + $0x80] sm:$0xff] %v7828
      %7853 = vst [vmem:[%s231 + $0x88] sm:$0xff] %v7829
      %7854 = vst [vmem:[%s231 + $0x90] sm:$0xff] %v7830
      %7855 = vst [vmem:[%s231 + $0x98] sm:$0xff] %v7831
      %7856 = vst [vmem:[%s231 + $0xa0] sm:$0xff] %v7832
      %7857 = vst [vmem:[%s231 + $0xa8] sm:$0xff] %v7833
      %7858 = vst [vmem:[%s231 + $0xb0] sm:$0xff] %v7834
      %7859 = vst [vmem:[%s231 + $0xb8] sm:$0xff] %v7835
      %s7860 = smul.u32 4, %s16
      %p7861 = scmp.lt.s32.totalorder %s7860, 7
      %s7862 = scalar_select %p7861, %s7860, 7
      %s7863 = smul.addr %s7862, 6
      %s7864 = smul.addr %s7863, 8
      %s7865 = scalar_lea.vmem %s5, %s7864
      // Predicated region
      $region41: #{net_forward.1} parent=39 // pred_check
        %p7866 = pneg %p144
      $region42: #{net_forward.1} parent=39 // pred_check_branch
        %7868 = sbr.rel (%p7866) target = $region44
      $region43: #{net_forward.1} parent=39 // pred_region
        %s7869 = smul.u32 4, %s16
      $region44: #{net_forward.1} parent=39 // pred_fallthru
        _
    $region40: #{net_forward.1} parent=5 // pred_fallthru
      _
    %p7870 = scmp.le.s32.totalorder 2, %s11
    // Predicated region
    $region45: #{net_forward.1} parent=5 // pred_check
      %p7871 = pneg %p7870
    $region46: #{net_forward.1} parent=5 // pred_check_branch
      %7873 = sbr.rel (%p7871) target = $region48
    $region47: #{net_forward.1} parent=5 // pred_region
      %s7874 = ssub.s32 %s11, 2
      // Predicated region
      $region49: #{net_forward.1} parent=47 // pred_check
        %p7875 = pneg %p150
      $region50: #{net_forward.1} parent=47 // pred_check_branch
        %7877 = sbr.rel (%p7875) target = $region52
      $region51: #{net_forward.1} parent=47 // pred_region
        %s7878 = smul.u32 4, %s17
        %p7879 = scmp.lt.s32.totalorder %s7878, 7
        %s7880 = scalar_select %p7879, %s7878, 7
        %s7881 = smul.addr %s7880, 6
        %s7882 = smul.addr %s7881, 8
        %s7883 = scalar_lea.vmem %s5, %s7882
      $region52: #{net_forward.1} parent=47 // pred_fallthru
        _
    $region48: #{net_forward.1} parent=5 // pred_fallthru
      _
  $region6: #{net_forward.1} parent=0 // loop_footer
    %s15 = sadd.s32 1, %s11
  $region7: #{net_forward.1} parent=0 // loop_footer_branch
    %10 = sbr.rel target = $region3
  $region8: #{net_forward.1} parent=0 // loop_exit
    _

</llo_original>
